<compile_context>
chip_gen: v7x
topology: tpu7x:2x2x1
jax: 0.10.0
libtpu: 0.0.40
codegen_flags: <defaults>
</compile_context>

<pallas_src>
import functools

import jax
import jax.numpy as jnp
from jax.experimental import pallas as pl
from jax.experimental.pallas import tpu as pltpu

F_K, F_S, F_P = 4, 2, 1          # kernel / stride / padding of every (de)conv
LEAK_SLOPE = 0.2
BN_EPS = 1e-5

TM_MAX, TN_MAX, TK_MAX = 512, 256, 512   # GEMM tile caps (bf16 in, f32 acc)
BN_TM_MAX = 1024                         # BatchNorm row-tile cap
VMEM_LIMIT = 32 * 1024 * 1024            # safe scoped-VMEM raise on v5e/v6e/v7x


def _pick_div_tile(dim, tmax, unit):
    """Largest tile <= tmax that equals `dim`, or is a multiple of `unit`
    evenly dividing `dim`; None if no such tile exists."""
    if dim <= tmax:
        return dim
    t = (tmax // unit) * unit
    while t >= unit:
        if dim % t == 0:
            return t
        t -= unit
    return None


# ----------------------------------------------------------------------------
# Pallas kernel 1: batched fused GEMM
#   out[g] = post_act( pre_act(a[g]) @ w[g] + bias )
# ----------------------------------------------------------------------------
def _gemm_kernel(a_ref, w_ref, b_ref, o_ref, acc_ref, *, pre_act, post_act, slope):
    k = pl.program_id(3)

    @pl.when(k == 0)
    def _():
        acc_ref[...] = jnp.zeros_like(acc_ref)

    a = a_ref[...]                                       # (TM, TK) bf16
    if pre_act == "lrelu":
        a = jnp.where(a > 0, a, a * slope)
    elif pre_act == "relu":
        a = jnp.maximum(a, jnp.zeros_like(a))
    acc_ref[...] += jnp.dot(a, w_ref[...], preferred_element_type=jnp.float32)

    @pl.when(k == pl.num_programs(3) - 1)
    def _():
        out = acc_ref[...] + b_ref[...]                  # (TM,TN) + (1,TN), f32
        if post_act == "tanh":
            out = jnp.tanh(out)
        o_ref[...] = out.astype(o_ref.dtype)


def gemm_bias_act(a, w, b, *, pre_act=None, post_act=None,
                  out_dtype=jnp.bfloat16, slope=LEAK_SLOPE):
    """a: (G, M, K), w: (G, K, N), b: (N,).  bf16 MXU inputs, f32 accumulate."""
    G, M, K = a.shape
    _, _, N = w.shape
    a = a.astype(jnp.bfloat16)
    w = w.astype(jnp.bfloat16)
    b = b.reshape(1, 1, N).astype(jnp.float32)

    tk = _pick_div_tile(K, TK_MAX, 128)
    if tk is None:                                       # rare fallback: pad K only
        kp = pl.cdiv(K, 128) * 128
        a = jnp.pad(a, ((0, 0), (0, 0), (0, kp - K)))
        w = jnp.pad(w, ((0, 0), (0, kp - K), (0, 0)))
        K = kp
        tk = _pick_div_tile(K, TK_MAX, 128)
    tm = M if M <= TM_MAX else TM_MAX
    tn = N if N <= TN_MAX else TN_MAX

    grid = (G, pl.cdiv(M, tm), pl.cdiv(N, tn), K // tk)
    kernel = functools.partial(_gemm_kernel, pre_act=pre_act,
                               post_act=post_act, slope=slope)
    return pl.pallas_call(
        kernel,
        out_shape=jax.ShapeDtypeStruct((G, M, N), out_dtype),
        grid_spec=pltpu.PrefetchScalarGridSpec(
            num_scalar_prefetch=0,
            grid=grid,
            in_specs=[
                pl.BlockSpec((None, tm, tk), lambda g, i, j, k: (g, i, k)),
                pl.BlockSpec((None, tk, tn), lambda g, i, j, k: (g, k, j)),
                pl.BlockSpec((None, 1, tn), lambda g, i, j, k: (0, 0, j)),
            ],
            out_specs=pl.BlockSpec((None, tm, tn), lambda g, i, j, k: (g, i, j)),
            scratch_shapes=[pltpu.VMEM((tm, tn), jnp.float32)],
        ),
        compiler_params=pltpu.CompilerParams(
            dimension_semantics=("parallel", "parallel", "parallel", "arbitrary"),
            vmem_limit_bytes=VMEM_LIMIT),
    )(a, w, b)


# ----------------------------------------------------------------------------
# Pallas kernels 2+3: tiled two-pass BatchNorm (train-mode batch stats,
# affine weight=1 / bias=0 as at nn.BatchNorm2d init)
# ----------------------------------------------------------------------------
def _bn_stats_kernel(y_ref, sum_ref, sq_ref, acc_s, acc_q):
    i = pl.program_id(0)

    @pl.when(i == 0)
    def _():
        acc_s[...] = jnp.zeros_like(acc_s)
        acc_q[...] = jnp.zeros_like(acc_q)

    y = y_ref[...].astype(jnp.float32)
    acc_s[...] += jnp.sum(y, axis=0, keepdims=True)
    acc_q[...] += jnp.sum(y * y, axis=0, keepdims=True)

    @pl.when(i == pl.num_programs(0) - 1)
    def _():
        sum_ref[...] = acc_s[...]
        sq_ref[...] = acc_q[...]


def _bn_apply_kernel(y_ref, scale_ref, shift_ref, o_ref):
    y = y_ref[...].astype(jnp.float32)
    o_ref[...] = (y * scale_ref[...] + shift_ref[...]).astype(o_ref.dtype)


def batchnorm_rows(y, *, eps=BN_EPS, out_dtype=jnp.bfloat16):
    """y: (M, C) rows = all B*H*W samples; per-channel batch-stat normalize."""
    M, C = y.shape
    tm = _pick_div_tile(M, BN_TM_MAX, 8)
    if tm is None:
        tm = M                       # correctness fallback: single block
    grid = (M // tm,)

    s, q = pl.pallas_call(
        _bn_stats_kernel,
        out_shape=(jax.ShapeDtypeStruct((1, C), jnp.float32),
                   jax.ShapeDtypeStruct((1, C), jnp.float32)),
        grid_spec=pltpu.PrefetchScalarGridSpec(
            num_scalar_prefetch=0,
            grid=grid,
            in_specs=[pl.BlockSpec((tm, C), lambda i: (i, 0))],
            out_specs=(pl.BlockSpec((1, C), lambda i: (0, 0)),
                       pl.BlockSpec((1, C), lambda i: (0, 0))),
            scratch_shapes=[pltpu.VMEM((1, C), jnp.float32),
                            pltpu.VMEM((1, C), jnp.float32)],
        ),
        compiler_params=pltpu.CompilerParams(
            dimension_semantics=("arbitrary",)),
    )(y)

    mean = s / M
    var = jnp.maximum(q / M - mean * mean, 0.0)          # guard f32 cancellation
    inv = jax.lax.rsqrt(var + eps)
    scale = inv
    shift = -mean * inv

    return pl.pallas_call(
        _bn_apply_kernel,
        out_shape=jax.ShapeDtypeStruct((M, C), out_dtype),
        grid_spec=pltpu.PrefetchScalarGridSpec(
            num_scalar_prefetch=0,
            grid=grid,
            in_specs=[pl.BlockSpec((tm, C), lambda i: (i, 0)),
                      pl.BlockSpec((1, C), lambda i: (0, 0)),
                      pl.BlockSpec((1, C), lambda i: (0, 0))],
            out_specs=pl.BlockSpec((tm, C), lambda i: (i, 0)),
        ),
        compiler_params=pltpu.CompilerParams(
            dimension_semantics=("parallel",)),
    )(y, scale, shift)


# ----------------------------------------------------------------------------
# Conv / ConvTranspose layers (patch extraction in JAX glue, GEMM in Pallas)
# ----------------------------------------------------------------------------
def conv_down(x, w, b, *, pre_act, bn):
    """[pre_act ->] Conv2d(k=4,s=2,p=1) [-> BatchNorm].  x: NHWC bf16."""
    B, H, W, Cin = x.shape
    Cout = w.shape[0]                        # torch Conv2d weight: (Cout,Cin,4,4)
    Ho, Wo = H // 2, W // 2
    xp = jnp.pad(x, ((0, 0), (F_P, F_P), (F_P, F_P), (0, 0)))
    # im2col patch matrix in bf16 (pre-activation is fused in the GEMM; it
    # commutes with zero padding since lrelu(0)=relu(0)=0).
    taps = [xp[:, di:di + F_S * Ho:F_S, dj:dj + F_S * Wo:F_S, :]
            for di in range(F_K) for dj in range(F_K)]
    a = jnp.stack(taps, axis=3).reshape(B * Ho * Wo, F_K * F_K * Cin)
    wmat = jnp.transpose(w, (2, 3, 1, 0)).reshape(F_K * F_K * Cin, Cout)
    y = gemm_bias_act(a[None], wmat[None], b, pre_act=pre_act)[0]   # (M, Cout) bf16
    if bn:
        y = batchnorm_rows(y)
    return y.reshape(B, Ho, Wo, Cout)


def conv_up(x, w, b, *, pre_act, post_act, bn):
    """[pre_act ->] ConvTranspose2d(k=4,s=2,p=1) [-> BatchNorm] [-> post_act].

    Exact 4-phase sub-pixel decomposition: output pixel (2m+pr, 2n+pc) only
    receives the 2x2 input neighbourhood around (m, n) through the 4 kernel
    taps of matching parity.  Each phase is a stride-1 2x2 conv (K = 4*Cin);
    all 4 phases run as one batched Pallas GEMM (leading grid axis).
    """
    B, H, W, Cin = x.shape
    Cout = w.shape[1]                        # torch ConvTranspose2d weight: (Cin,Cout,4,4)
    xp = jnp.pad(x, ((0, 0), (1, 1), (1, 1), (0, 0)))

    def kidx(p, r):                          # kernel tap for phase p, patch offset r
        return 3 - 2 * r if p == 0 else 2 - 2 * r

    a_list, w_list = [], []
    for pr in (0, 1):
        for pc in (0, 1):
            taps = [xp[:, pr + r:pr + r + H, pc + c:pc + c + W, :]
                    for r in (0, 1) for c in (0, 1)]
            a_list.append(jnp.stack(taps, axis=3).reshape(B * H * W, 4 * Cin))
            w_list.append(jnp.stack([w[:, :, kidx(pr, r), kidx(pc, c)]
                                     for r in (0, 1) for c in (0, 1)],
                                    axis=0).reshape(4 * Cin, Cout))
    a4 = jnp.stack(a_list, axis=0)                        # (4, B*H*W, 4*Cin)
    w4 = jnp.stack(w_list, axis=0)                        # (4, 4*Cin, Cout)

    out_dtype = jnp.float32 if post_act == "tanh" else jnp.bfloat16
    y = gemm_bias_act(a4, w4, b, pre_act=pre_act, post_act=post_act,
                      out_dtype=out_dtype)                # (4, B*H*W, Cout)
    if bn:
        y = batchnorm_rows(y.reshape(4 * B * H * W, Cout))
    # Interleave phases: out[b, 2m+pr, 2n+pc, :] = y[pr, pc, b, m, n, :]
    y = y.reshape(2, 2, B, H, W, Cout)
    y = jnp.transpose(y, (2, 3, 0, 4, 1, 5)).reshape(B, 2 * H, 2 * W, Cout)
    return y


# ----------------------------------------------------------------------------
# U-Net parameter construction (mirrors Unet.__init__ / pile_encoder / decoder)
# ----------------------------------------------------------------------------
def unet_layer_specs(img_size, in_chan, out_chan, f):
    N, L = img_size, 0
    while N != 1:
        assert (N - F_K + 2 * F_P) % F_S == 0
        N = (N - F_K + 2 * F_P) // F_S + 1
        L += 1
    assert L >= 5, "architecture (like the 256px original) needs >= 5 down-steps"
    enc, dec = [], []
    for n in range(L):
        if n == 0:
            enc.append((in_chan, f))
        elif n < 4:
            enc.append((f * 2 ** (n - 1), f * 2 ** n))
        else:
            enc.append((f * 8, f * 8))
    for n in range(L):
        if n == 0:
            dec.append((2 * f, out_chan))
        elif n < 4:
            dec.append((2 * (f * 2 ** n), f * 2 ** (n - 1)))
        elif n == L - 1:
            dec.append((f * 8, f * 8))
        else:
            dec.append((2 * (f * 8), f * 8))
    return L, enc, dec


def init_unet_params(key, img_size, in_chan, out_chan, f, w_std=0.02):
    L, enc_spec, dec_spec = unet_layer_specs(img_size, in_chan, out_chan, f)
    params = {"L": L, "enc": [], "dec": []}
    for ci, co in enc_spec:                  # Conv2d weight: (Cout,Cin,4,4)
        key, kw, kb = jax.random.split(key, 3)
        w = w_std * jax.random.normal(kw, (co, ci, F_K, F_K), jnp.float32)
        b = w_std * jax.random.normal(kb, (co,), jnp.float32)
        params["enc"].append((w, b))
    for ci, co in dec_spec:                  # ConvTranspose2d weight: (Cin,Cout,4,4)
        key, kw, kb = jax.random.split(key, 3)
        w = w_std * jax.random.normal(kw, (ci, co, F_K, F_K), jnp.float32)
        b = w_std * jax.random.normal(kb, (co,), jnp.float32)
        params["dec"].append((w, b))
    return params


def unet_forward(params, x_nchw):
    """x_nchw: (B, in_chan, H, W) -> (B, out_chan, H, W), matching Unet.forward."""
    x = jnp.transpose(x_nchw, (0, 2, 3, 1)).astype(jnp.bfloat16)  # NCHW -> NHWC
    L = params["L"]

    skips, h = [], x
    for n in range(L):                                            # encoder
        w, b = params["enc"][n]
        h = conv_down(h, w, b,
                      pre_act=("lrelu" if n != 0 else None),
                      bn=(n != 0 and n != L - 1))
        skips.append(h)

    h = skips[-1]                                                 # latent
    for n in range(L - 1, -1, -1):                                # decoder
        w, b = params["dec"][n]
        h = conv_up(h, w, b,
                    pre_act="relu",
                    post_act=("tanh" if n == 0 else None),
                    bn=(n != 0))
        # TODO(synk): nn.Dropout(0.5) (train mode, stochastic) -> identity here.
        if n != 0:
            h = jnp.concatenate([h, skips[n - 1]], axis=-1)       # cat along C
    return jnp.transpose(h, (0, 3, 1, 2)).astype(jnp.float32)     # NHWC -> NCHW


# ----------------------------------------------------------------------------
if __name__ == "__main__":
    B, IN_CH, OUT_CH, IMG, FST = 2, 3, 3, 32, 8   # small U-Net: 5 down / 5 up steps

    key = jax.random.PRNGKey(0)
    kp, kx = jax.random.split(key)
    params = init_unet_params(kp, IMG, IN_CH, OUT_CH, FST)
    x = jax.random.normal(kx, (B, IN_CH, IMG, IMG), jnp.float32)

    fwd = jax.jit(lambda inp: unet_forward(params, inp))
    y = jax.block_until_ready(fwd(x))

    assert y.shape == (B, OUT_CH, IMG, IMG), y.shape
    assert bool(jnp.all(jnp.isfinite(y)))
    assert bool(jnp.all(jnp.abs(y) <= 1.0 + 1e-6))   # final Tanh bound
    print("KERNEL_OK")
</pallas_src>

<mosaic_0001>
module attributes {stable_mosaic.version = 11 : i64} {
  func.func @_gemm_kernel(%arg0: i32, %arg1: i32, %arg2: i32, %arg3: i32, %arg4: memref<1x512x48xbf16, #tpu.memory_space<vmem>>, %arg5: memref<1x48x8xbf16, #tpu.memory_space<vmem>>, %arg6: memref<1x1x8xf32, #tpu.memory_space<vmem>>, %arg7: memref<1x512x8xbf16, #tpu.memory_space<vmem>>, %arg8: memref<512x8xf32, #tpu.memory_space<vmem>>) attributes {dimension_semantics = [#tpu.dimension_semantics<parallel>, #tpu.dimension_semantics<parallel>, #tpu.dimension_semantics<parallel>, #tpu.dimension_semantics<arbitrary>], iteration_bounds = array<i64: 1, 1, 1, 1>, scalar_prefetch = 0 : i64, scratch_operands = 1 : i64, tpu.core_type = #tpu.core_type<tc>, window_params = [{transform_indices = @transform_0, window_bounds = array<i64: 1, 512, 48>}, {transform_indices = @transform_1, window_bounds = array<i64: 1, 48, 8>}, {transform_indices = @transform_2, window_bounds = array<i64: 1, 1, 8>}, {transform_indices = @transform_3, window_bounds = array<i64: 1, 512, 8>}]} {
    %c0_i32 = arith.constant 0 : i32
    %0 = arith.cmpi eq, %arg3, %c0_i32 : i32
    %1 = arith.extui %0 : i1 to i32
    %c0_i32_0 = arith.constant 0 : i32
    %2 = arith.cmpi ne, %1, %c0_i32_0 : i32
    scf.if %2 {
      %cst_12 = arith.constant 0.000000e+00 : f32
      %14 = vector.broadcast %cst_12 : f32 to vector<512x8xf32>
      %c0_13 = arith.constant 0 : index
      %c0_14 = arith.constant 0 : index
      %15 = vector.load %arg8[%c0_13, %c0_14] : memref<512x8xf32, #tpu.memory_space<vmem>>, vector<512x8xf32>
      tpu.vector_store %arg8[%c0_13, %c0_14], %14 {strides = array<i32>} : memref<512x8xf32, #tpu.memory_space<vmem>>, vector<512x8xf32>,
    } else {
    }
    %c0 = arith.constant 0 : index
    %c0_1 = arith.constant 0 : index
    %c0_2 = arith.constant 0 : index
    %3 = vector.load %arg4[%c0, %c0_1, %c0_2] : memref<1x512x48xbf16, #tpu.memory_space<vmem>>, vector<1x512x48xbf16>
    %4 = vector.shape_cast %3 : vector<1x512x48xbf16> to vector<512x48xbf16>
    %c0_3 = arith.constant 0 : index
    %c0_4 = arith.constant 0 : index
    %5 = vector.load %arg8[%c0_3, %c0_4] : memref<512x8xf32, #tpu.memory_space<vmem>>, vector<512x8xf32>
    %c0_5 = arith.constant 0 : index
    %c0_6 = arith.constant 0 : index
    %c0_7 = arith.constant 0 : index
    %6 = vector.load %arg5[%c0_5, %c0_6, %c0_7] : memref<1x48x8xbf16, #tpu.memory_space<vmem>>, vector<1x48x8xbf16>
    %7 = vector.shape_cast %6 : vector<1x48x8xbf16> to vector<48x8xbf16>
    %cst = arith.constant dense<0.000000e+00> : vector<512x8xf32>
    %8 = tpu.matmul %4, %7, %cst {dimension_numbers = #tpu.dot_dimension_numbers<[1], [0], [0], [1], [0, 0, 1, 1], [], []>} : vector<512x48xbf16>, vector<48x8xbf16>, vector<512x8xf32> -> vector<512x8xf32>
    %9 = arith.addf %5, %8 : vector<512x8xf32>
    %c0_8 = arith.constant 0 : index
    %c0_9 = arith.constant 0 : index
    %10 = vector.load %arg8[%c0_8, %c0_9] : memref<512x8xf32, #tpu.memory_space<vmem>>, vector<512x8xf32>
    tpu.vector_store %arg8[%c0_8, %c0_9], %9 {strides = array<i32>} : memref<512x8xf32, #tpu.memory_space<vmem>>, vector<512x8xf32>,
    %c0_i32_10 = arith.constant 0 : i32
    %11 = arith.cmpi eq, %arg3, %c0_i32_10 : i32
    %12 = arith.extui %11 : i1 to i32
    %c0_i32_11 = arith.constant 0 : i32
    %13 = arith.cmpi ne, %12, %c0_i32_11 : i32
    scf.if %13 {
      %c0_12 = arith.constant 0 : index
      %c0_13 = arith.constant 0 : index
      %14 = vector.load %arg8[%c0_12, %c0_13] : memref<512x8xf32, #tpu.memory_space<vmem>>, vector<512x8xf32>
      %c0_14 = arith.constant 0 : index
      %c0_15 = arith.constant 0 : index
      %c0_16 = arith.constant 0 : index
      %15 = vector.load %arg6[%c0_14, %c0_15, %c0_16] : memref<1x1x8xf32, #tpu.memory_space<vmem>>, vector<1x1x8xf32>
      %16 = vector.shape_cast %15 : vector<1x1x8xf32> to vector<1x8xf32>
      %17 = vector.broadcast %16 : vector<1x8xf32> to vector<512x8xf32>
      %18 = arith.addf %14, %17 : vector<512x8xf32>
      %19 = arith.truncf %18 : vector<512x8xf32> to vector<512x8xbf16>
      %c0_17 = arith.constant 0 : index
      %c0_18 = arith.constant 0 : index
      %c0_19 = arith.constant 0 : index
      %20 = vector.load %arg7[%c0_17, %c0_18, %c0_19] : memref<1x512x8xbf16, #tpu.memory_space<vmem>>, vector<1x512x8xbf16>
      %21 = vector.shape_cast %20 : vector<1x512x8xbf16> to vector<512x8xbf16>
      %22 = vector.shape_cast %19 : vector<512x8xbf16> to vector<1x512x8xbf16>
      tpu.vector_store %arg7[%c0_17, %c0_18, %c0_19], %22 {strides = array<i32>} : memref<1x512x8xbf16, #tpu.memory_space<vmem>>, vector<1x512x8xbf16>,
    } else {
    }
    return
  }
  func.func @transform_0(%arg0: i32, %arg1: i32, %arg2: i32, %arg3: i32) -> (i32, i32, i32) {
    %c0_i32 = arith.constant 0 : i32
    return %arg0, %arg1, %arg3 : i32, i32, i32
  }
  func.func @transform_1(%arg0: i32, %arg1: i32, %arg2: i32, %arg3: i32) -> (i32, i32, i32) {
    %c0_i32 = arith.constant 0 : i32
    return %arg0, %arg3, %arg2 : i32, i32, i32
  }
  func.func @transform_2(%arg0: i32, %arg1: i32, %arg2: i32, %arg3: i32) -> (i32, i32, i32) {
    %c0_i32 = arith.constant 0 : i32
    %c0_i32_0 = arith.constant 0 : i32
    %c0_i32_1 = arith.constant 0 : i32
    return %c0_i32, %c0_i32_0, %arg2 : i32, i32, i32
  }
  func.func @transform_3(%arg0: i32, %arg1: i32, %arg2: i32, %arg3: i32) -> (i32, i32, i32) {
    %c0_i32 = arith.constant 0 : i32
    return %arg0, %arg1, %arg2 : i32, i32, i32
  }
}

module attributes {stable_mosaic.version = 11 : i64} {
  func.func @_gemm_kernel(%arg0: i32, %arg1: i32, %arg2: i32, %arg3: i32, %arg4: memref<1x128x128xbf16, #tpu.memory_space<vmem>>, %arg5: memref<1x128x16xbf16, #tpu.memory_space<vmem>>, %arg6: memref<1x1x16xf32, #tpu.memory_space<vmem>>, %arg7: memref<1x128x16xbf16, #tpu.memory_space<vmem>>, %arg8: memref<128x16xf32, #tpu.memory_space<vmem>>) attributes {dimension_semantics = [#tpu.dimension_semantics<parallel>, #tpu.dimension_semantics<parallel>, #tpu.dimension_semantics<parallel>, #tpu.dimension_semantics<arbitrary>], iteration_bounds = array<i64: 1, 1, 1, 1>, scalar_prefetch = 0 : i64, scratch_operands = 1 : i64, tpu.core_type = #tpu.core_type<tc>, window_params = [{transform_indices = @transform_0, window_bounds = array<i64: 1, 128, 128>}, {transform_indices = @transform_1, window_bounds = array<i64: 1, 128, 16>}, {transform_indices = @transform_2, window_bounds = array<i64: 1, 1, 16>}, {transform_indices = @transform_3, window_bounds = array<i64: 1, 128, 16>}]} {
    %c0_i32 = arith.constant 0 : i32
    %0 = arith.cmpi eq, %arg3, %c0_i32 : i32
    %1 = arith.extui %0 : i1 to i32
    %c0_i32_0 = arith.constant 0 : i32
    %2 = arith.cmpi ne, %1, %c0_i32_0 : i32
    scf.if %2 {
      %cst_14 = arith.constant 0.000000e+00 : f32
      %19 = vector.broadcast %cst_14 : f32 to vector<128x16xf32>
      %c0_15 = arith.constant 0 : index
      %c0_16 = arith.constant 0 : index
      %20 = vector.load %arg8[%c0_15, %c0_16] : memref<128x16xf32, #tpu.memory_space<vmem>>, vector<128x16xf32>
      tpu.vector_store %arg8[%c0_15, %c0_16], %19 {strides = array<i32>} : memref<128x16xf32, #tpu.memory_space<vmem>>, vector<128x16xf32>,
    } else {
    }
    %c0 = arith.constant 0 : index
    %c0_1 = arith.constant 0 : index
    %c0_2 = arith.constant 0 : index
    %3 = vector.load %arg4[%c0, %c0_1, %c0_2] : memref<1x128x128xbf16, #tpu.memory_space<vmem>>, vector<1x128x128xbf16>
    %4 = vector.shape_cast %3 : vector<1x128x128xbf16> to vector<128x128xbf16>
    %cst = arith.constant 0.000000e+00 : bf16
    %5 = vector.broadcast %cst : bf16 to vector<128x128xbf16>
    %6 = arith.cmpf ogt, %4, %5 : vector<128x128xbf16>
    %cst_3 = arith.constant 2.001950e-01 : bf16
    %7 = vector.broadcast %cst_3 : bf16 to vector<128x128xbf16>
    %8 = arith.mulf %4, %7 : vector<128x128xbf16>
    %9 = arith.select %6, %4, %8 : vector<128x128xi1>, vector<128x128xbf16>
    %c0_4 = arith.constant 0 : index
    %c0_5 = arith.constant 0 : index
    %10 = vector.load %arg8[%c0_4, %c0_5] : memref<128x16xf32, #tpu.memory_space<vmem>>, vector<128x16xf32>
    %c0_6 = arith.constant 0 : index
    %c0_7 = arith.constant 0 : index
    %c0_8 = arith.constant 0 : index
    %11 = vector.load %arg5[%c0_6, %c0_7, %c0_8] : memref<1x128x16xbf16, #tpu.memory_space<vmem>>, vector<1x128x16xbf16>
    %12 = vector.shape_cast %11 : vector<1x128x16xbf16> to vector<128x16xbf16>
    %cst_9 = arith.constant dense<0.000000e+00> : vector<128x16xf32>
    %13 = tpu.matmul %9, %12, %cst_9 {dimension_numbers = #tpu.dot_dimension_numbers<[1], [0], [0], [1], [0, 0, 1, 1], [], []>} : vector<128x128xbf16>, vector<128x16xbf16>, vector<128x16xf32> -> vector<128x16xf32>
    %14 = arith.addf %10, %13 : vector<128x16xf32>
    %c0_10 = arith.constant 0 : index
    %c0_11 = arith.constant 0 : index
    %15 = vector.load %arg8[%c0_10, %c0_11] : memref<128x16xf32, #tpu.memory_space<vmem>>, vector<128x16xf32>
    tpu.vector_store %arg8[%c0_10, %c0_11], %14 {strides = array<i32>} : memref<128x16xf32, #tpu.memory_space<vmem>>, vector<128x16xf32>,
    %c0_i32_12 = arith.constant 0 : i32
    %16 = arith.cmpi eq, %arg3, %c0_i32_12 : i32
    %17 = arith.extui %16 : i1 to i32
    %c0_i32_13 = arith.constant 0 : i32
    %18 = arith.cmpi ne, %17, %c0_i32_13 : i32
    scf.if %18 {
      %c0_14 = arith.constant 0 : index
      %c0_15 = arith.constant 0 : index
      %19 = vector.load %arg8[%c0_14, %c0_15] : memref<128x16xf32, #tpu.memory_space<vmem>>, vector<128x16xf32>
      %c0_16 = arith.constant 0 : index
      %c0_17 = arith.constant 0 : index
      %c0_18 = arith.constant 0 : index
      %20 = vector.load %arg6[%c0_16, %c0_17, %c0_18] : memref<1x1x16xf32, #tpu.memory_space<vmem>>, vector<1x1x16xf32>
      %21 = vector.shape_cast %20 : vector<1x1x16xf32> to vector<1x16xf32>
      %22 = vector.broadcast %21 : vector<1x16xf32> to vector<128x16xf32>
      %23 = arith.addf %19, %22 : vector<128x16xf32>
      %24 = arith.truncf %23 : vector<128x16xf32> to vector<128x16xbf16>
      %c0_19 = arith.constant 0 : index
      %c0_20 = arith.constant 0 : index
      %c0_21 = arith.constant 0 : index
      %25 = vector.load %arg7[%c0_19, %c0_20, %c0_21] : memref<1x128x16xbf16, #tpu.memory_space<vmem>>, vector<1x128x16xbf16>
      %26 = vector.shape_cast %25 : vector<1x128x16xbf16> to vector<128x16xbf16>
      %27 = vector.shape_cast %24 : vector<128x16xbf16> to vector<1x128x16xbf16>
      tpu.vector_store %arg7[%c0_19, %c0_20, %c0_21], %27 {strides = array<i32>} : memref<1x128x16xbf16, #tpu.memory_space<vmem>>, vector<1x128x16xbf16>,
    } else {
    }
    return
  }
  func.func @transform_0(%arg0: i32, %arg1: i32, %arg2: i32, %arg3: i32) -> (i32, i32, i32) {
    %c0_i32 = arith.constant 0 : i32
    return %arg0, %arg1, %arg3 : i32, i32, i32
  }
  func.func @transform_1(%arg0: i32, %arg1: i32, %arg2: i32, %arg3: i32) -> (i32, i32, i32) {
    %c0_i32 = arith.constant 0 : i32
    return %arg0, %arg3, %arg2 : i32, i32, i32
  }
  func.func @transform_2(%arg0: i32, %arg1: i32, %arg2: i32, %arg3: i32) -> (i32, i32, i32) {
    %c0_i32 = arith.constant 0 : i32
    %c0_i32_0 = arith.constant 0 : i32
    %c0_i32_1 = arith.constant 0 : i32
    return %c0_i32, %c0_i32_0, %arg2 : i32, i32, i32
  }
  func.func @transform_3(%arg0: i32, %arg1: i32, %arg2: i32, %arg3: i32) -> (i32, i32, i32) {
    %c0_i32 = arith.constant 0 : i32
    return %arg0, %arg1, %arg2 : i32, i32, i32
  }
}

module attributes {stable_mosaic.version = 11 : i64} {
  func.func @_bn_stats_kernel(%arg0: i32, %arg1: memref<128x16xbf16, #tpu.memory_space<vmem>>, %arg2: memref<1x16xf32, #tpu.memory_space<vmem>>, %arg3: memref<1x16xf32, #tpu.memory_space<vmem>>, %arg4: memref<1x16xf32, #tpu.memory_space<vmem>>, %arg5: memref<1x16xf32, #tpu.memory_space<vmem>>) attributes {dimension_semantics = [#tpu.dimension_semantics<arbitrary>], iteration_bounds = array<i64: 1>, scalar_prefetch = 0 : i64, scratch_operands = 2 : i64, tpu.core_type = #tpu.core_type<tc>, window_params = [{transform_indices = @transform_0, window_bounds = array<i64: 128, 16>}, {pipeline_mode = #tpu.pipeline_mode<synchronous>, transform_indices = @transform_1, window_bounds = array<i64: 1, 16>}, {pipeline_mode = #tpu.pipeline_mode<synchronous>, transform_indices = @transform_2, window_bounds = array<i64: 1, 16>}]} {
    %c0_i32 = arith.constant 0 : i32
    %0 = arith.cmpi eq, %arg0, %c0_i32 : i32
    %1 = arith.extui %0 : i1 to i32
    %c0_i32_0 = arith.constant 0 : i32
    %2 = arith.cmpi ne, %1, %c0_i32_0 : i32
    scf.if %2 {
      %cst_13 = arith.constant 0.000000e+00 : f32
      %19 = vector.broadcast %cst_13 : f32 to vector<1x16xf32>
      %c0_14 = arith.constant 0 : index
      %c0_15 = arith.constant 0 : index
      %20 = vector.load %arg4[%c0_14, %c0_15] : memref<1x16xf32, #tpu.memory_space<vmem>>, vector<1x16xf32>
      tpu.vector_store %arg4[%c0_14, %c0_15], %19 {strides = array<i32>} : memref<1x16xf32, #tpu.memory_space<vmem>>, vector<1x16xf32>,
      %cst_16 = arith.constant 0.000000e+00 : f32
      %21 = vector.broadcast %cst_16 : f32 to vector<1x16xf32>
      %c0_17 = arith.constant 0 : index
      %c0_18 = arith.constant 0 : index
      %22 = vector.load %arg5[%c0_17, %c0_18] : memref<1x16xf32, #tpu.memory_space<vmem>>, vector<1x16xf32>
      tpu.vector_store %arg5[%c0_17, %c0_18], %21 {strides = array<i32>} : memref<1x16xf32, #tpu.memory_space<vmem>>, vector<1x16xf32>,
    } else {
    }
    %c0 = arith.constant 0 : index
    %c0_1 = arith.constant 0 : index
    %3 = vector.load %arg1[%c0, %c0_1] : memref<128x16xbf16, #tpu.memory_space<vmem>>, vector<128x16xbf16>
    %4 = arith.extf %3 : vector<128x16xbf16> to vector<128x16xf32>
    %c0_2 = arith.constant 0 : index
    %c0_3 = arith.constant 0 : index
    %5 = vector.load %arg4[%c0_2, %c0_3] : memref<1x16xf32, #tpu.memory_space<vmem>>, vector<1x16xf32>
    %cst = arith.constant dense<0.000000e+00> : vector<16xf32>
    %6 = vector.multi_reduction <add>, %4, %cst [0] : vector<128x16xf32> to vector<16xf32>
    %7 = vector.shape_cast %6 : vector<16xf32> to vector<1x16xf32>
    %8 = arith.addf %5, %7 : vector<1x16xf32>
    %c0_4 = arith.constant 0 : index
    %c0_5 = arith.constant 0 : index
    %9 = vector.load %arg4[%c0_4, %c0_5] : memref<1x16xf32, #tpu.memory_space<vmem>>, vector<1x16xf32>
    tpu.vector_store %arg4[%c0_4, %c0_5], %8 {strides = array<i32>} : memref<1x16xf32, #tpu.memory_space<vmem>>, vector<1x16xf32>,
    %c0_6 = arith.constant 0 : index
    %c0_7 = arith.constant 0 : index
    %10 = vector.load %arg5[%c0_6, %c0_7] : memref<1x16xf32, #tpu.memory_space<vmem>>, vector<1x16xf32>
    %11 = arith.mulf %4, %4 : vector<128x16xf32>
    %cst_8 = arith.constant dense<0.000000e+00> : vector<16xf32>
    %12 = vector.multi_reduction <add>, %11, %cst_8 [0] : vector<128x16xf32> to vector<16xf32>
    %13 = vector.shape_cast %12 : vector<16xf32> to vector<1x16xf32>
    %14 = arith.addf %10, %13 : vector<1x16xf32>
    %c0_9 = arith.constant 0 : index
    %c0_10 = arith.constant 0 : index
    %15 = vector.load %arg5[%c0_9, %c0_10] : memref<1x16xf32, #tpu.memory_space<vmem>>, vector<1x16xf32>
    tpu.vector_store %arg5[%c0_9, %c0_10], %14 {strides = array<i32>} : memref<1x16xf32, #tpu.memory_space<vmem>>, vector<1x16xf32>,
    %c0_i32_11 = arith.constant 0 : i32
    %16 = arith.cmpi eq, %arg0, %c0_i32_11 : i32
    %17 = arith.extui %16 : i1 to i32
    %c0_i32_12 = arith.constant 0 : i32
    %18 = arith.cmpi ne, %17, %c0_i32_12 : i32
    scf.if %18 {
      %c0_13 = arith.constant 0 : index
      %c0_14 = arith.constant 0 : index
      %19 = vector.load %arg4[%c0_13, %c0_14] : memref<1x16xf32, #tpu.memory_space<vmem>>, vector<1x16xf32>
      %c0_15 = arith.constant 0 : index
      %c0_16 = arith.constant 0 : index
      %20 = vector.load %arg2[%c0_15, %c0_16] : memref<1x16xf32, #tpu.memory_space<vmem>>, vector<1x16xf32>
      tpu.vector_store %arg2[%c0_15, %c0_16], %19 {strides = array<i32>} : memref<1x16xf32, #tpu.memory_space<vmem>>, vector<1x16xf32>,
      %c0_17 = arith.constant 0 : index
      %c0_18 = arith.constant 0 : index
      %21 = vector.load %arg5[%c0_17, %c0_18] : memref<1x16xf32, #tpu.memory_space<vmem>>, vector<1x16xf32>
      %c0_19 = arith.constant 0 : index
      %c0_20 = arith.constant 0 : index
      %22 = vector.load %arg3[%c0_19, %c0_20] : memref<1x16xf32, #tpu.memory_space<vmem>>, vector<1x16xf32>
      tpu.vector_store %arg3[%c0_19, %c0_20], %21 {strides = array<i32>} : memref<1x16xf32, #tpu.memory_space<vmem>>, vector<1x16xf32>,
    } else {
    }
    return
  }
  func.func @transform_0(%arg0: i32) -> (i32, i32) {
    %c0_i32 = arith.constant 0 : i32
    %c0_i32_0 = arith.constant 0 : i32
    return %arg0, %c0_i32 : i32, i32
  }
  func.func @transform_1(%arg0: i32) -> (i32, i32) {
    %c0_i32 = arith.constant 0 : i32
    %c0_i32_0 = arith.constant 0 : i32
    %c0_i32_1 = arith.constant 0 : i32
    return %c0_i32, %c0_i32_0 : i32, i32
  }
  func.func @transform_2(%arg0: i32) -> (i32, i32) {
    %c0_i32 = arith.constant 0 : i32
    %c0_i32_0 = arith.constant 0 : i32
    %c0_i32_1 = arith.constant 0 : i32
    return %c0_i32, %c0_i32_0 : i32, i32
  }
}

module attributes {stable_mosaic.version = 11 : i64} {
  func.func @_bn_apply_kernel(%arg0: i32, %arg1: memref<128x16xbf16, #tpu.memory_space<vmem>>, %arg2: memref<1x16xf32, #tpu.memory_space<vmem>>, %arg3: memref<1x16xf32, #tpu.memory_space<vmem>>, %arg4: memref<128x16xbf16, #tpu.memory_space<vmem>>) attributes {dimension_semantics = [#tpu.dimension_semantics<parallel>], iteration_bounds = array<i64: 1>, scalar_prefetch = 0 : i64, scratch_operands = 0 : i64, tpu.core_type = #tpu.core_type<tc>, window_params = [{transform_indices = @transform_0, window_bounds = array<i64: 128, 16>}, {pipeline_mode = #tpu.pipeline_mode<synchronous>, transform_indices = @transform_1, window_bounds = array<i64: 1, 16>}, {pipeline_mode = #tpu.pipeline_mode<synchronous>, transform_indices = @transform_2, window_bounds = array<i64: 1, 16>}, {transform_indices = @transform_3, window_bounds = array<i64: 128, 16>}]} {
    %c0 = arith.constant 0 : index
    %c0_0 = arith.constant 0 : index
    %0 = vector.load %arg1[%c0, %c0_0] : memref<128x16xbf16, #tpu.memory_space<vmem>>, vector<128x16xbf16>
    %1 = arith.extf %0 : vector<128x16xbf16> to vector<128x16xf32>
    %c0_1 = arith.constant 0 : index
    %c0_2 = arith.constant 0 : index
    %2 = vector.load %arg2[%c0_1, %c0_2] : memref<1x16xf32, #tpu.memory_space<vmem>>, vector<1x16xf32>
    %3 = vector.broadcast %2 : vector<1x16xf32> to vector<128x16xf32>
    %4 = arith.mulf %1, %3 : vector<128x16xf32>
    %c0_3 = arith.constant 0 : index
    %c0_4 = arith.constant 0 : index
    %5 = vector.load %arg3[%c0_3, %c0_4] : memref<1x16xf32, #tpu.memory_space<vmem>>, vector<1x16xf32>
    %6 = vector.broadcast %5 : vector<1x16xf32> to vector<128x16xf32>
    %7 = arith.addf %4, %6 : vector<128x16xf32>
    %8 = arith.truncf %7 : vector<128x16xf32> to vector<128x16xbf16>
    %c0_5 = arith.constant 0 : index
    %c0_6 = arith.constant 0 : index
    %9 = vector.load %arg4[%c0_5, %c0_6] : memref<128x16xbf16, #tpu.memory_space<vmem>>, vector<128x16xbf16>
    tpu.vector_store %arg4[%c0_5, %c0_6], %8 {strides = array<i32>} : memref<128x16xbf16, #tpu.memory_space<vmem>>, vector<128x16xbf16>,
    return
  }
  func.func @transform_0(%arg0: i32) -> (i32, i32) {
    %c0_i32 = arith.constant 0 : i32
    %c0_i32_0 = arith.constant 0 : i32
    return %arg0, %c0_i32 : i32, i32
  }
  func.func @transform_1(%arg0: i32) -> (i32, i32) {
    %c0_i32 = arith.constant 0 : i32
    %c0_i32_0 = arith.constant 0 : i32
    %c0_i32_1 = arith.constant 0 : i32
    return %c0_i32, %c0_i32_0 : i32, i32
  }
  func.func @transform_2(%arg0: i32) -> (i32, i32) {
    %c0_i32 = arith.constant 0 : i32
    %c0_i32_0 = arith.constant 0 : i32
    %c0_i32_1 = arith.constant 0 : i32
    return %c0_i32, %c0_i32_0 : i32, i32
  }
  func.func @transform_3(%arg0: i32) -> (i32, i32) {
    %c0_i32 = arith.constant 0 : i32
    %c0_i32_0 = arith.constant 0 : i32
    return %arg0, %c0_i32 : i32, i32
  }
}

module attributes {stable_mosaic.version = 11 : i64} {
  func.func @_bn_stats_kernel(%arg0: i32, %arg1: memref<32x32xbf16, #tpu.memory_space<vmem>>, %arg2: memref<1x32xf32, #tpu.memory_space<vmem>>, %arg3: memref<1x32xf32, #tpu.memory_space<vmem>>, %arg4: memref<1x32xf32, #tpu.memory_space<vmem>>, %arg5: memref<1x32xf32, #tpu.memory_space<vmem>>) attributes {dimension_semantics = [#tpu.dimension_semantics<arbitrary>], iteration_bounds = array<i64: 1>, scalar_prefetch = 0 : i64, scratch_operands = 2 : i64, tpu.core_type = #tpu.core_type<tc>, window_params = [{transform_indices = @transform_0, window_bounds = array<i64: 32, 32>}, {pipeline_mode = #tpu.pipeline_mode<synchronous>, transform_indices = @transform_1, window_bounds = array<i64: 1, 32>}, {pipeline_mode = #tpu.pipeline_mode<synchronous>, transform_indices = @transform_2, window_bounds = array<i64: 1, 32>}]} {
    %c0_i32 = arith.constant 0 : i32
    %0 = arith.cmpi eq, %arg0, %c0_i32 : i32
    %1 = arith.extui %0 : i1 to i32
    %c0_i32_0 = arith.constant 0 : i32
    %2 = arith.cmpi ne, %1, %c0_i32_0 : i32
    scf.if %2 {
      %cst_13 = arith.constant 0.000000e+00 : f32
      %19 = vector.broadcast %cst_13 : f32 to vector<1x32xf32>
      %c0_14 = arith.constant 0 : index
      %c0_15 = arith.constant 0 : index
      %20 = vector.load %arg4[%c0_14, %c0_15] : memref<1x32xf32, #tpu.memory_space<vmem>>, vector<1x32xf32>
      tpu.vector_store %arg4[%c0_14, %c0_15], %19 {strides = array<i32>} : memref<1x32xf32, #tpu.memory_space<vmem>>, vector<1x32xf32>,
      %cst_16 = arith.constant 0.000000e+00 : f32
      %21 = vector.broadcast %cst_16 : f32 to vector<1x32xf32>
      %c0_17 = arith.constant 0 : index
      %c0_18 = arith.constant 0 : index
      %22 = vector.load %arg5[%c0_17, %c0_18] : memref<1x32xf32, #tpu.memory_space<vmem>>, vector<1x32xf32>
      tpu.vector_store %arg5[%c0_17, %c0_18], %21 {strides = array<i32>} : memref<1x32xf32, #tpu.memory_space<vmem>>, vector<1x32xf32>,
    } else {
    }
    %c0 = arith.constant 0 : index
    %c0_1 = arith.constant 0 : index
    %3 = vector.load %arg1[%c0, %c0_1] : memref<32x32xbf16, #tpu.memory_space<vmem>>, vector<32x32xbf16>
    %4 = arith.extf %3 : vector<32x32xbf16> to vector<32x32xf32>
    %c0_2 = arith.constant 0 : index
    %c0_3 = arith.constant 0 : index
    %5 = vector.load %arg4[%c0_2, %c0_3] : memref<1x32xf32, #tpu.memory_space<vmem>>, vector<1x32xf32>
    %cst = arith.constant dense<0.000000e+00> : vector<32xf32>
    %6 = vector.multi_reduction <add>, %4, %cst [0] : vector<32x32xf32> to vector<32xf32>
    %7 = vector.shape_cast %6 : vector<32xf32> to vector<1x32xf32>
    %8 = arith.addf %5, %7 : vector<1x32xf32>
    %c0_4 = arith.constant 0 : index
    %c0_5 = arith.constant 0 : index
    %9 = vector.load %arg4[%c0_4, %c0_5] : memref<1x32xf32, #tpu.memory_space<vmem>>, vector<1x32xf32>
    tpu.vector_store %arg4[%c0_4, %c0_5], %8 {strides = array<i32>} : memref<1x32xf32, #tpu.memory_space<vmem>>, vector<1x32xf32>,
    %c0_6 = arith.constant 0 : index
    %c0_7 = arith.constant 0 : index
    %10 = vector.load %arg5[%c0_6, %c0_7] : memref<1x32xf32, #tpu.memory_space<vmem>>, vector<1x32xf32>
    %11 = arith.mulf %4, %4 : vector<32x32xf32>
    %cst_8 = arith.constant dense<0.000000e+00> : vector<32xf32>
    %12 = vector.multi_reduction <add>, %11, %cst_8 [0] : vector<32x32xf32> to vector<32xf32>
    %13 = vector.shape_cast %12 : vector<32xf32> to vector<1x32xf32>
    %14 = arith.addf %10, %13 : vector<1x32xf32>
    %c0_9 = arith.constant 0 : index
    %c0_10 = arith.constant 0 : index
    %15 = vector.load %arg5[%c0_9, %c0_10] : memref<1x32xf32, #tpu.memory_space<vmem>>, vector<1x32xf32>
    tpu.vector_store %arg5[%c0_9, %c0_10], %14 {strides = array<i32>} : memref<1x32xf32, #tpu.memory_space<vmem>>, vector<1x32xf32>,
    %c0_i32_11 = arith.constant 0 : i32
    %16 = arith.cmpi eq, %arg0, %c0_i32_11 : i32
    %17 = arith.extui %16 : i1 to i32
    %c0_i32_12 = arith.constant 0 : i32
    %18 = arith.cmpi ne, %17, %c0_i32_12 : i32
    scf.if %18 {
      %c0_13 = arith.constant 0 : index
      %c0_14 = arith.constant 0 : index
      %19 = vector.load %arg4[%c0_13, %c0_14] : memref<1x32xf32, #tpu.memory_space<vmem>>, vector<1x32xf32>
      %c0_15 = arith.constant 0 : index
      %c0_16 = arith.constant 0 : index
      %20 = vector.load %arg2[%c0_15, %c0_16] : memref<1x32xf32, #tpu.memory_space<vmem>>, vector<1x32xf32>
      tpu.vector_store %arg2[%c0_15, %c0_16], %19 {strides = array<i32>} : memref<1x32xf32, #tpu.memory_space<vmem>>, vector<1x32xf32>,
      %c0_17 = arith.constant 0 : index
      %c0_18 = arith.constant 0 : index
      %21 = vector.load %arg5[%c0_17, %c0_18] : memref<1x32xf32, #tpu.memory_space<vmem>>, vector<1x32xf32>
      %c0_19 = arith.constant 0 : index
      %c0_20 = arith.constant 0 : index
      %22 = vector.load %arg3[%c0_19, %c0_20] : memref<1x32xf32, #tpu.memory_space<vmem>>, vector<1x32xf32>
      tpu.vector_store %arg3[%c0_19, %c0_20], %21 {strides = array<i32>} : memref<1x32xf32, #tpu.memory_space<vmem>>, vector<1x32xf32>,
    } else {
    }
    return
  }
  func.func @transform_0(%arg0: i32) -> (i32, i32) {
    %c0_i32 = arith.constant 0 : i32
    %c0_i32_0 = arith.constant 0 : i32
    return %arg0, %c0_i32 : i32, i32
  }
  func.func @transform_1(%arg0: i32) -> (i32, i32) {
    %c0_i32 = arith.constant 0 : i32
    %c0_i32_0 = arith.constant 0 : i32
    %c0_i32_1 = arith.constant 0 : i32
    return %c0_i32, %c0_i32_0 : i32, i32
  }
  func.func @transform_2(%arg0: i32) -> (i32, i32) {
    %c0_i32 = arith.constant 0 : i32
    %c0_i32_0 = arith.constant 0 : i32
    %c0_i32_1 = arith.constant 0 : i32
    return %c0_i32, %c0_i32_0 : i32, i32
  }
}

module attributes {stable_mosaic.version = 11 : i64} {
  func.func @_gemm_kernel(%arg0: i32, %arg1: i32, %arg2: i32, %arg3: i32, %arg4: memref<1x32x256xbf16, #tpu.memory_space<vmem>>, %arg5: memref<1x256x32xbf16, #tpu.memory_space<vmem>>, %arg6: memref<1x1x32xf32, #tpu.memory_space<vmem>>, %arg7: memref<1x32x32xbf16, #tpu.memory_space<vmem>>, %arg8: memref<32x32xf32, #tpu.memory_space<vmem>>) attributes {dimension_semantics = [#tpu.dimension_semantics<parallel>, #tpu.dimension_semantics<parallel>, #tpu.dimension_semantics<parallel>, #tpu.dimension_semantics<arbitrary>], iteration_bounds = array<i64: 1, 1, 1, 1>, scalar_prefetch = 0 : i64, scratch_operands = 1 : i64, tpu.core_type = #tpu.core_type<tc>, window_params = [{transform_indices = @transform_0, window_bounds = array<i64: 1, 32, 256>}, {transform_indices = @transform_1, window_bounds = array<i64: 1, 256, 32>}, {transform_indices = @transform_2, window_bounds = array<i64: 1, 1, 32>}, {transform_indices = @transform_3, window_bounds = array<i64: 1, 32, 32>}]} {
    %c0_i32 = arith.constant 0 : i32
    %0 = arith.cmpi eq, %arg3, %c0_i32 : i32
    %1 = arith.extui %0 : i1 to i32
    %c0_i32_0 = arith.constant 0 : i32
    %2 = arith.cmpi ne, %1, %c0_i32_0 : i32
    scf.if %2 {
      %cst_14 = arith.constant 0.000000e+00 : f32
      %19 = vector.broadcast %cst_14 : f32 to vector<32x32xf32>
      %c0_15 = arith.constant 0 : index
      %c0_16 = arith.constant 0 : index
      %20 = vector.load %arg8[%c0_15, %c0_16] : memref<32x32xf32, #tpu.memory_space<vmem>>, vector<32x32xf32>
      tpu.vector_store %arg8[%c0_15, %c0_16], %19 {strides = array<i32>} : memref<32x32xf32, #tpu.memory_space<vmem>>, vector<32x32xf32>,
    } else {
    }
    %c0 = arith.constant 0 : index
    %c0_1 = arith.constant 0 : index
    %c0_2 = arith.constant 0 : index
    %3 = vector.load %arg4[%c0, %c0_1, %c0_2] : memref<1x32x256xbf16, #tpu.memory_space<vmem>>, vector<1x32x256xbf16>
    %4 = vector.shape_cast %3 : vector<1x32x256xbf16> to vector<32x256xbf16>
    %cst = arith.constant 0.000000e+00 : bf16
    %5 = vector.broadcast %cst : bf16 to vector<32x256xbf16>
    %6 = arith.cmpf ogt, %4, %5 : vector<32x256xbf16>
    %cst_3 = arith.constant 2.001950e-01 : bf16
    %7 = vector.broadcast %cst_3 : bf16 to vector<32x256xbf16>
    %8 = arith.mulf %4, %7 : vector<32x256xbf16>
    %9 = arith.select %6, %4, %8 : vector<32x256xi1>, vector<32x256xbf16>
    %c0_4 = arith.constant 0 : index
    %c0_5 = arith.constant 0 : index
    %10 = vector.load %arg8[%c0_4, %c0_5] : memref<32x32xf32, #tpu.memory_space<vmem>>, vector<32x32xf32>
    %c0_6 = arith.constant 0 : index
    %c0_7 = arith.constant 0 : index
    %c0_8 = arith.constant 0 : index
    %11 = vector.load %arg5[%c0_6, %c0_7, %c0_8] : memref<1x256x32xbf16, #tpu.memory_space<vmem>>, vector<1x256x32xbf16>
    %12 = vector.shape_cast %11 : vector<1x256x32xbf16> to vector<256x32xbf16>
    %cst_9 = arith.constant dense<0.000000e+00> : vector<32x32xf32>
    %13 = tpu.matmul %9, %12, %cst_9 {dimension_numbers = #tpu.dot_dimension_numbers<[1], [0], [0], [1], [0, 0, 1, 1], [], []>} : vector<32x256xbf16>, vector<256x32xbf16>, vector<32x32xf32> -> vector<32x32xf32>
    %14 = arith.addf %10, %13 : vector<32x32xf32>
    %c0_10 = arith.constant 0 : index
    %c0_11 = arith.constant 0 : index
    %15 = vector.load %arg8[%c0_10, %c0_11] : memref<32x32xf32, #tpu.memory_space<vmem>>, vector<32x32xf32>
    tpu.vector_store %arg8[%c0_10, %c0_11], %14 {strides = array<i32>} : memref<32x32xf32, #tpu.memory_space<vmem>>, vector<32x32xf32>,
    %c0_i32_12 = arith.constant 0 : i32
    %16 = arith.cmpi eq, %arg3, %c0_i32_12 : i32
    %17 = arith.extui %16 : i1 to i32
    %c0_i32_13 = arith.constant 0 : i32
    %18 = arith.cmpi ne, %17, %c0_i32_13 : i32
    scf.if %18 {
      %c0_14 = arith.constant 0 : index
      %c0_15 = arith.constant 0 : index
      %19 = vector.load %arg8[%c0_14, %c0_15] : memref<32x32xf32, #tpu.memory_space<vmem>>, vector<32x32xf32>
      %c0_16 = arith.constant 0 : index
      %c0_17 = arith.constant 0 : index
      %c0_18 = arith.constant 0 : index
      %20 = vector.load %arg6[%c0_16, %c0_17, %c0_18] : memref<1x1x32xf32, #tpu.memory_space<vmem>>, vector<1x1x32xf32>
      %21 = vector.shape_cast %20 : vector<1x1x32xf32> to vector<1x32xf32>
      %22 = vector.broadcast %21 : vector<1x32xf32> to vector<32x32xf32>
      %23 = arith.addf %19, %22 : vector<32x32xf32>
      %24 = arith.truncf %23 : vector<32x32xf32> to vector<32x32xbf16>
      %c0_19 = arith.constant 0 : index
      %c0_20 = arith.constant 0 : index
      %c0_21 = arith.constant 0 : index
      %25 = vector.load %arg7[%c0_19, %c0_20, %c0_21] : memref<1x32x32xbf16, #tpu.memory_space<vmem>>, vector<1x32x32xbf16>
      %26 = vector.shape_cast %25 : vector<1x32x32xbf16> to vector<32x32xbf16>
      %27 = vector.shape_cast %24 : vector<32x32xbf16> to vector<1x32x32xbf16>
      tpu.vector_store %arg7[%c0_19, %c0_20, %c0_21], %27 {strides = array<i32>} : memref<1x32x32xbf16, #tpu.memory_space<vmem>>, vector<1x32x32xbf16>,
    } else {
    }
    return
  }
  func.func @transform_0(%arg0: i32, %arg1: i32, %arg2: i32, %arg3: i32) -> (i32, i32, i32) {
    %c0_i32 = arith.constant 0 : i32
    return %arg0, %arg1, %arg3 : i32, i32, i32
  }
  func.func @transform_1(%arg0: i32, %arg1: i32, %arg2: i32, %arg3: i32) -> (i32, i32, i32) {
    %c0_i32 = arith.constant 0 : i32
    return %arg0, %arg3, %arg2 : i32, i32, i32
  }
  func.func @transform_2(%arg0: i32, %arg1: i32, %arg2: i32, %arg3: i32) -> (i32, i32, i32) {
    %c0_i32 = arith.constant 0 : i32
    %c0_i32_0 = arith.constant 0 : i32
    %c0_i32_1 = arith.constant 0 : i32
    return %c0_i32, %c0_i32_0, %arg2 : i32, i32, i32
  }
  func.func @transform_3(%arg0: i32, %arg1: i32, %arg2: i32, %arg3: i32) -> (i32, i32, i32) {
    %c0_i32 = arith.constant 0 : i32
    return %arg0, %arg1, %arg2 : i32, i32, i32
  }
}

module attributes {stable_mosaic.version = 11 : i64} {
  func.func @_bn_apply_kernel(%arg0: i32, %arg1: memref<32x32xbf16, #tpu.memory_space<vmem>>, %arg2: memref<1x32xf32, #tpu.memory_space<vmem>>, %arg3: memref<1x32xf32, #tpu.memory_space<vmem>>, %arg4: memref<32x32xbf16, #tpu.memory_space<vmem>>) attributes {dimension_semantics = [#tpu.dimension_semantics<parallel>], iteration_bounds = array<i64: 1>, scalar_prefetch = 0 : i64, scratch_operands = 0 : i64, tpu.core_type = #tpu.core_type<tc>, window_params = [{transform_indices = @transform_0, window_bounds = array<i64: 32, 32>}, {pipeline_mode = #tpu.pipeline_mode<synchronous>, transform_indices = @transform_1, window_bounds = array<i64: 1, 32>}, {pipeline_mode = #tpu.pipeline_mode<synchronous>, transform_indices = @transform_2, window_bounds = array<i64: 1, 32>}, {transform_indices = @transform_3, window_bounds = array<i64: 32, 32>}]} {
    %c0 = arith.constant 0 : index
    %c0_0 = arith.constant 0 : index
    %0 = vector.load %arg1[%c0, %c0_0] : memref<32x32xbf16, #tpu.memory_space<vmem>>, vector<32x32xbf16>
    %1 = arith.extf %0 : vector<32x32xbf16> to vector<32x32xf32>
    %c0_1 = arith.constant 0 : index
    %c0_2 = arith.constant 0 : index
    %2 = vector.load %arg2[%c0_1, %c0_2] : memref<1x32xf32, #tpu.memory_space<vmem>>, vector<1x32xf32>
    %3 = vector.broadcast %2 : vector<1x32xf32> to vector<32x32xf32>
    %4 = arith.mulf %1, %3 : vector<32x32xf32>
    %c0_3 = arith.constant 0 : index
    %c0_4 = arith.constant 0 : index
    %5 = vector.load %arg3[%c0_3, %c0_4] : memref<1x32xf32, #tpu.memory_space<vmem>>, vector<1x32xf32>
    %6 = vector.broadcast %5 : vector<1x32xf32> to vector<32x32xf32>
    %7 = arith.addf %4, %6 : vector<32x32xf32>
    %8 = arith.truncf %7 : vector<32x32xf32> to vector<32x32xbf16>
    %c0_5 = arith.constant 0 : index
    %c0_6 = arith.constant 0 : index
    %9 = vector.load %arg4[%c0_5, %c0_6] : memref<32x32xbf16, #tpu.memory_space<vmem>>, vector<32x32xbf16>
    tpu.vector_store %arg4[%c0_5, %c0_6], %8 {strides = array<i32>} : memref<32x32xbf16, #tpu.memory_space<vmem>>, vector<32x32xbf16>,
    return
  }
  func.func @transform_0(%arg0: i32) -> (i32, i32) {
    %c0_i32 = arith.constant 0 : i32
    %c0_i32_0 = arith.constant 0 : i32
    return %arg0, %c0_i32 : i32, i32
  }
  func.func @transform_1(%arg0: i32) -> (i32, i32) {
    %c0_i32 = arith.constant 0 : i32
    %c0_i32_0 = arith.constant 0 : i32
    %c0_i32_1 = arith.constant 0 : i32
    return %c0_i32, %c0_i32_0 : i32, i32
  }
  func.func @transform_2(%arg0: i32) -> (i32, i32) {
    %c0_i32 = arith.constant 0 : i32
    %c0_i32_0 = arith.constant 0 : i32
    %c0_i32_1 = arith.constant 0 : i32
    return %c0_i32, %c0_i32_0 : i32, i32
  }
  func.func @transform_3(%arg0: i32) -> (i32, i32) {
    %c0_i32 = arith.constant 0 : i32
    %c0_i32_0 = arith.constant 0 : i32
    return %arg0, %c0_i32 : i32, i32
  }
}

module attributes {stable_mosaic.version = 11 : i64} {
  func.func @_gemm_kernel(%arg0: i32, %arg1: i32, %arg2: i32, %arg3: i32, %arg4: memref<1x8x512xbf16, #tpu.memory_space<vmem>>, %arg5: memref<1x512x64xbf16, #tpu.memory_space<vmem>>, %arg6: memref<1x1x64xf32, #tpu.memory_space<vmem>>, %arg7: memref<1x8x64xbf16, #tpu.memory_space<vmem>>, %arg8: memref<8x64xf32, #tpu.memory_space<vmem>>) attributes {dimension_semantics = [#tpu.dimension_semantics<parallel>, #tpu.dimension_semantics<parallel>, #tpu.dimension_semantics<parallel>, #tpu.dimension_semantics<arbitrary>], iteration_bounds = array<i64: 1, 1, 1, 1>, scalar_prefetch = 0 : i64, scratch_operands = 1 : i64, tpu.core_type = #tpu.core_type<tc>, window_params = [{transform_indices = @transform_0, window_bounds = array<i64: 1, 8, 512>}, {transform_indices = @transform_1, window_bounds = array<i64: 1, 512, 64>}, {transform_indices = @transform_2, window_bounds = array<i64: 1, 1, 64>}, {transform_indices = @transform_3, window_bounds = array<i64: 1, 8, 64>}]} {
    %c0_i32 = arith.constant 0 : i32
    %0 = arith.cmpi eq, %arg3, %c0_i32 : i32
    %1 = arith.extui %0 : i1 to i32
    %c0_i32_0 = arith.constant 0 : i32
    %2 = arith.cmpi ne, %1, %c0_i32_0 : i32
    scf.if %2 {
      %cst_14 = arith.constant 0.000000e+00 : f32
      %19 = vector.broadcast %cst_14 : f32 to vector<8x64xf32>
      %c0_15 = arith.constant 0 : index
      %c0_16 = arith.constant 0 : index
      %20 = vector.load %arg8[%c0_15, %c0_16] : memref<8x64xf32, #tpu.memory_space<vmem>>, vector<8x64xf32>
      tpu.vector_store %arg8[%c0_15, %c0_16], %19 {strides = array<i32>} : memref<8x64xf32, #tpu.memory_space<vmem>>, vector<8x64xf32>,
    } else {
    }
    %c0 = arith.constant 0 : index
    %c0_1 = arith.constant 0 : index
    %c0_2 = arith.constant 0 : index
    %3 = vector.load %arg4[%c0, %c0_1, %c0_2] : memref<1x8x512xbf16, #tpu.memory_space<vmem>>, vector<1x8x512xbf16>
    %4 = vector.shape_cast %3 : vector<1x8x512xbf16> to vector<8x512xbf16>
    %cst = arith.constant 0.000000e+00 : bf16
    %5 = vector.broadcast %cst : bf16 to vector<8x512xbf16>
    %6 = arith.cmpf ogt, %4, %5 : vector<8x512xbf16>
    %cst_3 = arith.constant 2.001950e-01 : bf16
    %7 = vector.broadcast %cst_3 : bf16 to vector<8x512xbf16>
    %8 = arith.mulf %4, %7 : vector<8x512xbf16>
    %9 = arith.select %6, %4, %8 : vector<8x512xi1>, vector<8x512xbf16>
    %c0_4 = arith.constant 0 : index
    %c0_5 = arith.constant 0 : index
    %10 = vector.load %arg8[%c0_4, %c0_5] : memref<8x64xf32, #tpu.memory_space<vmem>>, vector<8x64xf32>
    %c0_6 = arith.constant 0 : index
    %c0_7 = arith.constant 0 : index
    %c0_8 = arith.constant 0 : index
    %11 = vector.load %arg5[%c0_6, %c0_7, %c0_8] : memref<1x512x64xbf16, #tpu.memory_space<vmem>>, vector<1x512x64xbf16>
    %12 = vector.shape_cast %11 : vector<1x512x64xbf16> to vector<512x64xbf16>
    %cst_9 = arith.constant dense<0.000000e+00> : vector<8x64xf32>
    %13 = tpu.matmul %9, %12, %cst_9 {dimension_numbers = #tpu.dot_dimension_numbers<[1], [0], [0], [1], [0, 0, 1, 1], [], []>} : vector<8x512xbf16>, vector<512x64xbf16>, vector<8x64xf32> -> vector<8x64xf32>
    %14 = arith.addf %10, %13 : vector<8x64xf32>
    %c0_10 = arith.constant 0 : index
    %c0_11 = arith.constant 0 : index
    %15 = vector.load %arg8[%c0_10, %c0_11] : memref<8x64xf32, #tpu.memory_space<vmem>>, vector<8x64xf32>
    tpu.vector_store %arg8[%c0_10, %c0_11], %14 {strides = array<i32>} : memref<8x64xf32, #tpu.memory_space<vmem>>, vector<8x64xf32>,
    %c0_i32_12 = arith.constant 0 : i32
    %16 = arith.cmpi eq, %arg3, %c0_i32_12 : i32
    %17 = arith.extui %16 : i1 to i32
    %c0_i32_13 = arith.constant 0 : i32
    %18 = arith.cmpi ne, %17, %c0_i32_13 : i32
    scf.if %18 {
      %c0_14 = arith.constant 0 : index
      %c0_15 = arith.constant 0 : index
      %19 = vector.load %arg8[%c0_14, %c0_15] : memref<8x64xf32, #tpu.memory_space<vmem>>, vector<8x64xf32>
      %c0_16 = arith.constant 0 : index
      %c0_17 = arith.constant 0 : index
      %c0_18 = arith.constant 0 : index
      %20 = vector.load %arg6[%c0_16, %c0_17, %c0_18] : memref<1x1x64xf32, #tpu.memory_space<vmem>>, vector<1x1x64xf32>
      %21 = vector.shape_cast %20 : vector<1x1x64xf32> to vector<1x64xf32>
      %22 = vector.broadcast %21 : vector<1x64xf32> to vector<8x64xf32>
      %23 = arith.addf %19, %22 : vector<8x64xf32>
      %24 = arith.truncf %23 : vector<8x64xf32> to vector<8x64xbf16>
      %c0_19 = arith.constant 0 : index
      %c0_20 = arith.constant 0 : index
      %c0_21 = arith.constant 0 : index
      %25 = vector.load %arg7[%c0_19, %c0_20, %c0_21] : memref<1x8x64xbf16, #tpu.memory_space<vmem>>, vector<1x8x64xbf16>
      %26 = vector.shape_cast %25 : vector<1x8x64xbf16> to vector<8x64xbf16>
      %27 = vector.shape_cast %24 : vector<8x64xbf16> to vector<1x8x64xbf16>
      tpu.vector_store %arg7[%c0_19, %c0_20, %c0_21], %27 {strides = array<i32>} : memref<1x8x64xbf16, #tpu.memory_space<vmem>>, vector<1x8x64xbf16>,
    } else {
    }
    return
  }
  func.func @transform_0(%arg0: i32, %arg1: i32, %arg2: i32, %arg3: i32) -> (i32, i32, i32) {
    %c0_i32 = arith.constant 0 : i32
    return %arg0, %arg1, %arg3 : i32, i32, i32
  }
  func.func @transform_1(%arg0: i32, %arg1: i32, %arg2: i32, %arg3: i32) -> (i32, i32, i32) {
    %c0_i32 = arith.constant 0 : i32
    return %arg0, %arg3, %arg2 : i32, i32, i32
  }
  func.func @transform_2(%arg0: i32, %arg1: i32, %arg2: i32, %arg3: i32) -> (i32, i32, i32) {
    %c0_i32 = arith.constant 0 : i32
    %c0_i32_0 = arith.constant 0 : i32
    %c0_i32_1 = arith.constant 0 : i32
    return %c0_i32, %c0_i32_0, %arg2 : i32, i32, i32
  }
  func.func @transform_3(%arg0: i32, %arg1: i32, %arg2: i32, %arg3: i32) -> (i32, i32, i32) {
    %c0_i32 = arith.constant 0 : i32
    return %arg0, %arg1, %arg2 : i32, i32, i32
  }
}

module attributes {stable_mosaic.version = 11 : i64} {
  func.func @_bn_stats_kernel(%arg0: i32, %arg1: memref<8x64xbf16, #tpu.memory_space<vmem>>, %arg2: memref<1x64xf32, #tpu.memory_space<vmem>>, %arg3: memref<1x64xf32, #tpu.memory_space<vmem>>, %arg4: memref<1x64xf32, #tpu.memory_space<vmem>>, %arg5: memref<1x64xf32, #tpu.memory_space<vmem>>) attributes {dimension_semantics = [#tpu.dimension_semantics<arbitrary>], iteration_bounds = array<i64: 1>, scalar_prefetch = 0 : i64, scratch_operands = 2 : i64, tpu.core_type = #tpu.core_type<tc>, window_params = [{transform_indices = @transform_0, window_bounds = array<i64: 8, 64>}, {pipeline_mode = #tpu.pipeline_mode<synchronous>, transform_indices = @transform_1, window_bounds = array<i64: 1, 64>}, {pipeline_mode = #tpu.pipeline_mode<synchronous>, transform_indices = @transform_2, window_bounds = array<i64: 1, 64>}]} {
    %c0_i32 = arith.constant 0 : i32
    %0 = arith.cmpi eq, %arg0, %c0_i32 : i32
    %1 = arith.extui %0 : i1 to i32
    %c0_i32_0 = arith.constant 0 : i32
    %2 = arith.cmpi ne, %1, %c0_i32_0 : i32
    scf.if %2 {
      %cst_13 = arith.constant 0.000000e+00 : f32
      %19 = vector.broadcast %cst_13 : f32 to vector<1x64xf32>
      %c0_14 = arith.constant 0 : index
      %c0_15 = arith.constant 0 : index
      %20 = vector.load %arg4[%c0_14, %c0_15] : memref<1x64xf32, #tpu.memory_space<vmem>>, vector<1x64xf32>
      tpu.vector_store %arg4[%c0_14, %c0_15], %19 {strides = array<i32>} : memref<1x64xf32, #tpu.memory_space<vmem>>, vector<1x64xf32>,
      %cst_16 = arith.constant 0.000000e+00 : f32
      %21 = vector.broadcast %cst_16 : f32 to vector<1x64xf32>
      %c0_17 = arith.constant 0 : index
      %c0_18 = arith.constant 0 : index
      %22 = vector.load %arg5[%c0_17, %c0_18] : memref<1x64xf32, #tpu.memory_space<vmem>>, vector<1x64xf32>
      tpu.vector_store %arg5[%c0_17, %c0_18], %21 {strides = array<i32>} : memref<1x64xf32, #tpu.memory_space<vmem>>, vector<1x64xf32>,
    } else {
    }
    %c0 = arith.constant 0 : index
    %c0_1 = arith.constant 0 : index
    %3 = vector.load %arg1[%c0, %c0_1] : memref<8x64xbf16, #tpu.memory_space<vmem>>, vector<8x64xbf16>
    %4 = arith.extf %3 : vector<8x64xbf16> to vector<8x64xf32>
    %c0_2 = arith.constant 0 : index
    %c0_3 = arith.constant 0 : index
    %5 = vector.load %arg4[%c0_2, %c0_3] : memref<1x64xf32, #tpu.memory_space<vmem>>, vector<1x64xf32>
    %cst = arith.constant dense<0.000000e+00> : vector<64xf32>
    %6 = vector.multi_reduction <add>, %4, %cst [0] : vector<8x64xf32> to vector<64xf32>
    %7 = vector.shape_cast %6 : vector<64xf32> to vector<1x64xf32>
    %8 = arith.addf %5, %7 : vector<1x64xf32>
    %c0_4 = arith.constant 0 : index
    %c0_5 = arith.constant 0 : index
    %9 = vector.load %arg4[%c0_4, %c0_5] : memref<1x64xf32, #tpu.memory_space<vmem>>, vector<1x64xf32>
    tpu.vector_store %arg4[%c0_4, %c0_5], %8 {strides = array<i32>} : memref<1x64xf32, #tpu.memory_space<vmem>>, vector<1x64xf32>,
    %c0_6 = arith.constant 0 : index
    %c0_7 = arith.constant 0 : index
    %10 = vector.load %arg5[%c0_6, %c0_7] : memref<1x64xf32, #tpu.memory_space<vmem>>, vector<1x64xf32>
    %11 = arith.mulf %4, %4 : vector<8x64xf32>
    %cst_8 = arith.constant dense<0.000000e+00> : vector<64xf32>
    %12 = vector.multi_reduction <add>, %11, %cst_8 [0] : vector<8x64xf32> to vector<64xf32>
    %13 = vector.shape_cast %12 : vector<64xf32> to vector<1x64xf32>
    %14 = arith.addf %10, %13 : vector<1x64xf32>
    %c0_9 = arith.constant 0 : index
    %c0_10 = arith.constant 0 : index
    %15 = vector.load %arg5[%c0_9, %c0_10] : memref<1x64xf32, #tpu.memory_space<vmem>>, vector<1x64xf32>
    tpu.vector_store %arg5[%c0_9, %c0_10], %14 {strides = array<i32>} : memref<1x64xf32, #tpu.memory_space<vmem>>, vector<1x64xf32>,
    %c0_i32_11 = arith.constant 0 : i32
    %16 = arith.cmpi eq, %arg0, %c0_i32_11 : i32
    %17 = arith.extui %16 : i1 to i32
    %c0_i32_12 = arith.constant 0 : i32
    %18 = arith.cmpi ne, %17, %c0_i32_12 : i32
    scf.if %18 {
      %c0_13 = arith.constant 0 : index
      %c0_14 = arith.constant 0 : index
      %19 = vector.load %arg4[%c0_13, %c0_14] : memref<1x64xf32, #tpu.memory_space<vmem>>, vector<1x64xf32>
      %c0_15 = arith.constant 0 : index
      %c0_16 = arith.constant 0 : index
      %20 = vector.load %arg2[%c0_15, %c0_16] : memref<1x64xf32, #tpu.memory_space<vmem>>, vector<1x64xf32>
      tpu.vector_store %arg2[%c0_15, %c0_16], %19 {strides = array<i32>} : memref<1x64xf32, #tpu.memory_space<vmem>>, vector<1x64xf32>,
      %c0_17 = arith.constant 0 : index
      %c0_18 = arith.constant 0 : index
      %21 = vector.load %arg5[%c0_17, %c0_18] : memref<1x64xf32, #tpu.memory_space<vmem>>, vector<1x64xf32>
      %c0_19 = arith.constant 0 : index
      %c0_20 = arith.constant 0 : index
      %22 = vector.load %arg3[%c0_19, %c0_20] : memref<1x64xf32, #tpu.memory_space<vmem>>, vector<1x64xf32>
      tpu.vector_store %arg3[%c0_19, %c0_20], %21 {strides = array<i32>} : memref<1x64xf32, #tpu.memory_space<vmem>>, vector<1x64xf32>,
    } else {
    }
    return
  }
  func.func @transform_0(%arg0: i32) -> (i32, i32) {
    %c0_i32 = arith.constant 0 : i32
    %c0_i32_0 = arith.constant 0 : i32
    return %arg0, %c0_i32 : i32, i32
  }
  func.func @transform_1(%arg0: i32) -> (i32, i32) {
    %c0_i32 = arith.constant 0 : i32
    %c0_i32_0 = arith.constant 0 : i32
    %c0_i32_1 = arith.constant 0 : i32
    return %c0_i32, %c0_i32_0 : i32, i32
  }
  func.func @transform_2(%arg0: i32) -> (i32, i32) {
    %c0_i32 = arith.constant 0 : i32
    %c0_i32_0 = arith.constant 0 : i32
    %c0_i32_1 = arith.constant 0 : i32
    return %c0_i32, %c0_i32_0 : i32, i32
  }
}

module attributes {stable_mosaic.version = 11 : i64} {
  func.func @_bn_apply_kernel(%arg0: i32, %arg1: memref<8x64xbf16, #tpu.memory_space<vmem>>, %arg2: memref<1x64xf32, #tpu.memory_space<vmem>>, %arg3: memref<1x64xf32, #tpu.memory_space<vmem>>, %arg4: memref<8x64xbf16, #tpu.memory_space<vmem>>) attributes {dimension_semantics = [#tpu.dimension_semantics<parallel>], iteration_bounds = array<i64: 1>, scalar_prefetch = 0 : i64, scratch_operands = 0 : i64, tpu.core_type = #tpu.core_type<tc>, window_params = [{transform_indices = @transform_0, window_bounds = array<i64: 8, 64>}, {pipeline_mode = #tpu.pipeline_mode<synchronous>, transform_indices = @transform_1, window_bounds = array<i64: 1, 64>}, {pipeline_mode = #tpu.pipeline_mode<synchronous>, transform_indices = @transform_2, window_bounds = array<i64: 1, 64>}, {transform_indices = @transform_3, window_bounds = array<i64: 8, 64>}]} {
    %c0 = arith.constant 0 : index
    %c0_0 = arith.constant 0 : index
    %0 = vector.load %arg1[%c0, %c0_0] : memref<8x64xbf16, #tpu.memory_space<vmem>>, vector<8x64xbf16>
    %1 = arith.extf %0 : vector<8x64xbf16> to vector<8x64xf32>
    %c0_1 = arith.constant 0 : index
    %c0_2 = arith.constant 0 : index
    %2 = vector.load %arg2[%c0_1, %c0_2] : memref<1x64xf32, #tpu.memory_space<vmem>>, vector<1x64xf32>
    %3 = vector.broadcast %2 : vector<1x64xf32> to vector<8x64xf32>
    %4 = arith.mulf %1, %3 : vector<8x64xf32>
    %c0_3 = arith.constant 0 : index
    %c0_4 = arith.constant 0 : index
    %5 = vector.load %arg3[%c0_3, %c0_4] : memref<1x64xf32, #tpu.memory_space<vmem>>, vector<1x64xf32>
    %6 = vector.broadcast %5 : vector<1x64xf32> to vector<8x64xf32>
    %7 = arith.addf %4, %6 : vector<8x64xf32>
    %8 = arith.truncf %7 : vector<8x64xf32> to vector<8x64xbf16>
    %c0_5 = arith.constant 0 : index
    %c0_6 = arith.constant 0 : index
    %9 = vector.load %arg4[%c0_5, %c0_6] : memref<8x64xbf16, #tpu.memory_space<vmem>>, vector<8x64xbf16>
    tpu.vector_store %arg4[%c0_5, %c0_6], %8 {strides = array<i32>} : memref<8x64xbf16, #tpu.memory_space<vmem>>, vector<8x64xbf16>,
    return
  }
  func.func @transform_0(%arg0: i32) -> (i32, i32) {
    %c0_i32 = arith.constant 0 : i32
    %c0_i32_0 = arith.constant 0 : i32
    return %arg0, %c0_i32 : i32, i32
  }
  func.func @transform_1(%arg0: i32) -> (i32, i32) {
    %c0_i32 = arith.constant 0 : i32
    %c0_i32_0 = arith.constant 0 : i32
    %c0_i32_1 = arith.constant 0 : i32
    return %c0_i32, %c0_i32_0 : i32, i32
  }
  func.func @transform_2(%arg0: i32) -> (i32, i32) {
    %c0_i32 = arith.constant 0 : i32
    %c0_i32_0 = arith.constant 0 : i32
    %c0_i32_1 = arith.constant 0 : i32
    return %c0_i32, %c0_i32_0 : i32, i32
  }
  func.func @transform_3(%arg0: i32) -> (i32, i32) {
    %c0_i32 = arith.constant 0 : i32
    %c0_i32_0 = arith.constant 0 : i32
    return %arg0, %c0_i32 : i32, i32
  }
}

module attributes {stable_mosaic.version = 11 : i64} {
  func.func @_gemm_kernel(%arg0: i32, %arg1: i32, %arg2: i32, %arg3: i32, %arg4: memref<1x2x512xbf16, #tpu.memory_space<vmem>>, %arg5: memref<1x512x64xbf16, #tpu.memory_space<vmem>>, %arg6: memref<1x1x64xf32, #tpu.memory_space<vmem>>, %arg7: memref<1x2x64xbf16, #tpu.memory_space<vmem>>, %arg8: memref<2x64xf32, #tpu.memory_space<vmem>>) attributes {dimension_semantics = [#tpu.dimension_semantics<parallel>, #tpu.dimension_semantics<parallel>, #tpu.dimension_semantics<parallel>, #tpu.dimension_semantics<arbitrary>], iteration_bounds = array<i64: 1, 1, 1, 2>, scalar_prefetch = 0 : i64, scratch_operands = 1 : i64, tpu.core_type = #tpu.core_type<tc>, window_params = [{transform_indices = @transform_0, window_bounds = array<i64: 1, 2, 512>}, {transform_indices = @transform_1, window_bounds = array<i64: 1, 512, 64>}, {transform_indices = @transform_2, window_bounds = array<i64: 1, 1, 64>}, {transform_indices = @transform_3, window_bounds = array<i64: 1, 2, 64>}]} {
    %c0_i32 = arith.constant 0 : i32
    %0 = arith.cmpi eq, %arg3, %c0_i32 : i32
    %1 = arith.extui %0 : i1 to i32
    %c0_i32_0 = arith.constant 0 : i32
    %2 = arith.cmpi ne, %1, %c0_i32_0 : i32
    scf.if %2 {
      %cst_13 = arith.constant 0.000000e+00 : f32
      %19 = vector.broadcast %cst_13 : f32 to vector<2x64xf32>
      %c0_14 = arith.constant 0 : index
      %c0_15 = arith.constant 0 : index
      %20 = vector.load %arg8[%c0_14, %c0_15] : memref<2x64xf32, #tpu.memory_space<vmem>>, vector<2x64xf32>
      tpu.vector_store %arg8[%c0_14, %c0_15], %19 {strides = array<i32>} : memref<2x64xf32, #tpu.memory_space<vmem>>, vector<2x64xf32>,
    } else {
    }
    %c0 = arith.constant 0 : index
    %c0_1 = arith.constant 0 : index
    %c0_2 = arith.constant 0 : index
    %3 = vector.load %arg4[%c0, %c0_1, %c0_2] : memref<1x2x512xbf16, #tpu.memory_space<vmem>>, vector<1x2x512xbf16>
    %4 = vector.shape_cast %3 : vector<1x2x512xbf16> to vector<2x512xbf16>
    %cst = arith.constant 0.000000e+00 : bf16
    %5 = vector.broadcast %cst : bf16 to vector<2x512xbf16>
    %6 = arith.cmpf ogt, %4, %5 : vector<2x512xbf16>
    %cst_3 = arith.constant 2.001950e-01 : bf16
    %7 = vector.broadcast %cst_3 : bf16 to vector<2x512xbf16>
    %8 = arith.mulf %4, %7 : vector<2x512xbf16>
    %9 = arith.select %6, %4, %8 : vector<2x512xi1>, vector<2x512xbf16>
    %c0_4 = arith.constant 0 : index
    %c0_5 = arith.constant 0 : index
    %10 = vector.load %arg8[%c0_4, %c0_5] : memref<2x64xf32, #tpu.memory_space<vmem>>, vector<2x64xf32>
    %c0_6 = arith.constant 0 : index
    %c0_7 = arith.constant 0 : index
    %c0_8 = arith.constant 0 : index
    %11 = vector.load %arg5[%c0_6, %c0_7, %c0_8] : memref<1x512x64xbf16, #tpu.memory_space<vmem>>, vector<1x512x64xbf16>
    %12 = vector.shape_cast %11 : vector<1x512x64xbf16> to vector<512x64xbf16>
    %cst_9 = arith.constant dense<0.000000e+00> : vector<2x64xf32>
    %13 = tpu.matmul %9, %12, %cst_9 {dimension_numbers = #tpu.dot_dimension_numbers<[1], [0], [0], [1], [0, 0, 1, 1], [], []>} : vector<2x512xbf16>, vector<512x64xbf16>, vector<2x64xf32> -> vector<2x64xf32>
    %14 = arith.addf %10, %13 : vector<2x64xf32>
    %c0_10 = arith.constant 0 : index
    %c0_11 = arith.constant 0 : index
    %15 = vector.load %arg8[%c0_10, %c0_11] : memref<2x64xf32, #tpu.memory_space<vmem>>, vector<2x64xf32>
    tpu.vector_store %arg8[%c0_10, %c0_11], %14 {strides = array<i32>} : memref<2x64xf32, #tpu.memory_space<vmem>>, vector<2x64xf32>,
    %c1_i32 = arith.constant 1 : i32
    %16 = arith.cmpi eq, %arg3, %c1_i32 : i32
    %17 = arith.extui %16 : i1 to i32
    %c0_i32_12 = arith.constant 0 : i32
    %18 = arith.cmpi ne, %17, %c0_i32_12 : i32
    scf.if %18 {
      %c0_13 = arith.constant 0 : index
      %c0_14 = arith.constant 0 : index
      %19 = vector.load %arg8[%c0_13, %c0_14] : memref<2x64xf32, #tpu.memory_space<vmem>>, vector<2x64xf32>
      %c0_15 = arith.constant 0 : index
      %c0_16 = arith.constant 0 : index
      %c0_17 = arith.constant 0 : index
      %20 = vector.load %arg6[%c0_15, %c0_16, %c0_17] : memref<1x1x64xf32, #tpu.memory_space<vmem>>, vector<1x1x64xf32>
      %21 = vector.shape_cast %20 : vector<1x1x64xf32> to vector<1x64xf32>
      %22 = vector.broadcast %21 : vector<1x64xf32> to vector<2x64xf32>
      %23 = arith.addf %19, %22 : vector<2x64xf32>
      %24 = arith.truncf %23 : vector<2x64xf32> to vector<2x64xbf16>
      %c0_18 = arith.constant 0 : index
      %c0_19 = arith.constant 0 : index
      %c0_20 = arith.constant 0 : index
      %25 = vector.load %arg7[%c0_18, %c0_19, %c0_20] : memref<1x2x64xbf16, #tpu.memory_space<vmem>>, vector<1x2x64xbf16>
      %26 = vector.shape_cast %25 : vector<1x2x64xbf16> to vector<2x64xbf16>
      %27 = vector.shape_cast %24 : vector<2x64xbf16> to vector<1x2x64xbf16>
      tpu.vector_store %arg7[%c0_18, %c0_19, %c0_20], %27 {strides = array<i32>} : memref<1x2x64xbf16, #tpu.memory_space<vmem>>, vector<1x2x64xbf16>,
    } else {
    }
    return
  }
  func.func @transform_0(%arg0: i32, %arg1: i32, %arg2: i32, %arg3: i32) -> (i32, i32, i32) {
    %c0_i32 = arith.constant 0 : i32
    return %arg0, %arg1, %arg3 : i32, i32, i32
  }
  func.func @transform_1(%arg0: i32, %arg1: i32, %arg2: i32, %arg3: i32) -> (i32, i32, i32) {
    %c0_i32 = arith.constant 0 : i32
    return %arg0, %arg3, %arg2 : i32, i32, i32
  }
  func.func @transform_2(%arg0: i32, %arg1: i32, %arg2: i32, %arg3: i32) -> (i32, i32, i32) {
    %c0_i32 = arith.constant 0 : i32
    %c0_i32_0 = arith.constant 0 : i32
    %c0_i32_1 = arith.constant 0 : i32
    return %c0_i32, %c0_i32_0, %arg2 : i32, i32, i32
  }
  func.func @transform_3(%arg0: i32, %arg1: i32, %arg2: i32, %arg3: i32) -> (i32, i32, i32) {
    %c0_i32 = arith.constant 0 : i32
    return %arg0, %arg1, %arg2 : i32, i32, i32
  }
}

module attributes {stable_mosaic.version = 11 : i64} {
  func.func @_gemm_kernel(%arg0: i32, %arg1: i32, %arg2: i32, %arg3: i32, %arg4: memref<1x2x256xbf16, #tpu.memory_space<vmem>>, %arg5: memref<1x256x64xbf16, #tpu.memory_space<vmem>>, %arg6: memref<1x1x64xf32, #tpu.memory_space<vmem>>, %arg7: memref<1x2x64xbf16, #tpu.memory_space<vmem>>, %arg8: memref<2x64xf32, #tpu.memory_space<vmem>>) attributes {dimension_semantics = [#tpu.dimension_semantics<parallel>, #tpu.dimension_semantics<parallel>, #tpu.dimension_semantics<parallel>, #tpu.dimension_semantics<arbitrary>], iteration_bounds = array<i64: 4, 1, 1, 1>, scalar_prefetch = 0 : i64, scratch_operands = 1 : i64, tpu.core_type = #tpu.core_type<tc>, window_params = [{transform_indices = @transform_0, window_bounds = array<i64: 1, 2, 256>}, {transform_indices = @transform_1, window_bounds = array<i64: 1, 256, 64>}, {transform_indices = @transform_2, window_bounds = array<i64: 1, 1, 64>}, {transform_indices = @transform_3, window_bounds = array<i64: 1, 2, 64>}]} {
    %c0_i32 = arith.constant 0 : i32
    %0 = arith.cmpi eq, %arg3, %c0_i32 : i32
    %1 = arith.extui %0 : i1 to i32
    %c0_i32_0 = arith.constant 0 : i32
    %2 = arith.cmpi ne, %1, %c0_i32_0 : i32
    scf.if %2 {
      %cst_13 = arith.constant 0.000000e+00 : f32
      %16 = vector.broadcast %cst_13 : f32 to vector<2x64xf32>
      %c0_14 = arith.constant 0 : index
      %c0_15 = arith.constant 0 : index
      %17 = vector.load %arg8[%c0_14, %c0_15] : memref<2x64xf32, #tpu.memory_space<vmem>>, vector<2x64xf32>
      tpu.vector_store %arg8[%c0_14, %c0_15], %16 {strides = array<i32>} : memref<2x64xf32, #tpu.memory_space<vmem>>, vector<2x64xf32>,
    } else {
    }
    %c0 = arith.constant 0 : index
    %c0_1 = arith.constant 0 : index
    %c0_2 = arith.constant 0 : index
    %3 = vector.load %arg4[%c0, %c0_1, %c0_2] : memref<1x2x256xbf16, #tpu.memory_space<vmem>>, vector<1x2x256xbf16>
    %4 = vector.shape_cast %3 : vector<1x2x256xbf16> to vector<2x256xbf16>
    %cst = arith.constant 0.000000e+00 : bf16
    %5 = vector.broadcast %cst : bf16 to vector<2x256xbf16>
    %6 = arith.maximumf %4, %5 : vector<2x256xbf16>
    %c0_3 = arith.constant 0 : index
    %c0_4 = arith.constant 0 : index
    %7 = vector.load %arg8[%c0_3, %c0_4] : memref<2x64xf32, #tpu.memory_space<vmem>>, vector<2x64xf32>
    %c0_5 = arith.constant 0 : index
    %c0_6 = arith.constant 0 : index
    %c0_7 = arith.constant 0 : index
    %8 = vector.load %arg5[%c0_5, %c0_6, %c0_7] : memref<1x256x64xbf16, #tpu.memory_space<vmem>>, vector<1x256x64xbf16>
    %9 = vector.shape_cast %8 : vector<1x256x64xbf16> to vector<256x64xbf16>
    %cst_8 = arith.constant dense<0.000000e+00> : vector<2x64xf32>
    %10 = tpu.matmul %6, %9, %cst_8 {dimension_numbers = #tpu.dot_dimension_numbers<[1], [0], [0], [1], [0, 0, 1, 1], [], []>} : vector<2x256xbf16>, vector<256x64xbf16>, vector<2x64xf32> -> vector<2x64xf32>
    %11 = arith.addf %7, %10 : vector<2x64xf32>
    %c0_9 = arith.constant 0 : index
    %c0_10 = arith.constant 0 : index
    %12 = vector.load %arg8[%c0_9, %c0_10] : memref<2x64xf32, #tpu.memory_space<vmem>>, vector<2x64xf32>
    tpu.vector_store %arg8[%c0_9, %c0_10], %11 {strides = array<i32>} : memref<2x64xf32, #tpu.memory_space<vmem>>, vector<2x64xf32>,
    %c0_i32_11 = arith.constant 0 : i32
    %13 = arith.cmpi eq, %arg3, %c0_i32_11 : i32
    %14 = arith.extui %13 : i1 to i32
    %c0_i32_12 = arith.constant 0 : i32
    %15 = arith.cmpi ne, %14, %c0_i32_12 : i32
    scf.if %15 {
      %c0_13 = arith.constant 0 : index
      %c0_14 = arith.constant 0 : index
      %16 = vector.load %arg8[%c0_13, %c0_14] : memref<2x64xf32, #tpu.memory_space<vmem>>, vector<2x64xf32>
      %c0_15 = arith.constant 0 : index
      %c0_16 = arith.constant 0 : index
      %c0_17 = arith.constant 0 : index
      %17 = vector.load %arg6[%c0_15, %c0_16, %c0_17] : memref<1x1x64xf32, #tpu.memory_space<vmem>>, vector<1x1x64xf32>
      %18 = vector.shape_cast %17 : vector<1x1x64xf32> to vector<1x64xf32>
      %19 = vector.broadcast %18 : vector<1x64xf32> to vector<2x64xf32>
      %20 = arith.addf %16, %19 : vector<2x64xf32>
      %21 = arith.truncf %20 : vector<2x64xf32> to vector<2x64xbf16>
      %c0_18 = arith.constant 0 : index
      %c0_19 = arith.constant 0 : index
      %c0_20 = arith.constant 0 : index
      %22 = vector.load %arg7[%c0_18, %c0_19, %c0_20] : memref<1x2x64xbf16, #tpu.memory_space<vmem>>, vector<1x2x64xbf16>
      %23 = vector.shape_cast %22 : vector<1x2x64xbf16> to vector<2x64xbf16>
      %24 = vector.shape_cast %21 : vector<2x64xbf16> to vector<1x2x64xbf16>
      tpu.vector_store %arg7[%c0_18, %c0_19, %c0_20], %24 {strides = array<i32>} : memref<1x2x64xbf16, #tpu.memory_space<vmem>>, vector<1x2x64xbf16>,
    } else {
    }
    return
  }
  func.func @transform_0(%arg0: i32, %arg1: i32, %arg2: i32, %arg3: i32) -> (i32, i32, i32) {
    %c0_i32 = arith.constant 0 : i32
    return %arg0, %arg1, %arg3 : i32, i32, i32
  }
  func.func @transform_1(%arg0: i32, %arg1: i32, %arg2: i32, %arg3: i32) -> (i32, i32, i32) {
    %c0_i32 = arith.constant 0 : i32
    return %arg0, %arg3, %arg2 : i32, i32, i32
  }
  func.func @transform_2(%arg0: i32, %arg1: i32, %arg2: i32, %arg3: i32) -> (i32, i32, i32) {
    %c0_i32 = arith.constant 0 : i32
    %c0_i32_0 = arith.constant 0 : i32
    %c0_i32_1 = arith.constant 0 : i32
    return %c0_i32, %c0_i32_0, %arg2 : i32, i32, i32
  }
  func.func @transform_3(%arg0: i32, %arg1: i32, %arg2: i32, %arg3: i32) -> (i32, i32, i32) {
    %c0_i32 = arith.constant 0 : i32
    return %arg0, %arg1, %arg2 : i32, i32, i32
  }
}

module attributes {stable_mosaic.version = 11 : i64} {
  func.func @_gemm_kernel(%arg0: i32, %arg1: i32, %arg2: i32, %arg3: i32, %arg4: memref<1x8x512xbf16, #tpu.memory_space<vmem>>, %arg5: memref<1x512x32xbf16, #tpu.memory_space<vmem>>, %arg6: memref<1x1x32xf32, #tpu.memory_space<vmem>>, %arg7: memref<1x8x32xbf16, #tpu.memory_space<vmem>>, %arg8: memref<8x32xf32, #tpu.memory_space<vmem>>) attributes {dimension_semantics = [#tpu.dimension_semantics<parallel>, #tpu.dimension_semantics<parallel>, #tpu.dimension_semantics<parallel>, #tpu.dimension_semantics<arbitrary>], iteration_bounds = array<i64: 4, 1, 1, 1>, scalar_prefetch = 0 : i64, scratch_operands = 1 : i64, tpu.core_type = #tpu.core_type<tc>, window_params = [{transform_indices = @transform_0, window_bounds = array<i64: 1, 8, 512>}, {transform_indices = @transform_1, window_bounds = array<i64: 1, 512, 32>}, {transform_indices = @transform_2, window_bounds = array<i64: 1, 1, 32>}, {transform_indices = @transform_3, window_bounds = array<i64: 1, 8, 32>}]} {
    %c0_i32 = arith.constant 0 : i32
    %0 = arith.cmpi eq, %arg3, %c0_i32 : i32
    %1 = arith.extui %0 : i1 to i32
    %c0_i32_0 = arith.constant 0 : i32
    %2 = arith.cmpi ne, %1, %c0_i32_0 : i32
    scf.if %2 {
      %cst_13 = arith.constant 0.000000e+00 : f32
      %16 = vector.broadcast %cst_13 : f32 to vector<8x32xf32>
      %c0_14 = arith.constant 0 : index
      %c0_15 = arith.constant 0 : index
      %17 = vector.load %arg8[%c0_14, %c0_15] : memref<8x32xf32, #tpu.memory_space<vmem>>, vector<8x32xf32>
      tpu.vector_store %arg8[%c0_14, %c0_15], %16 {strides = array<i32>} : memref<8x32xf32, #tpu.memory_space<vmem>>, vector<8x32xf32>,
    } else {
    }
    %c0 = arith.constant 0 : index
    %c0_1 = arith.constant 0 : index
    %c0_2 = arith.constant 0 : index
    %3 = vector.load %arg4[%c0, %c0_1, %c0_2] : memref<1x8x512xbf16, #tpu.memory_space<vmem>>, vector<1x8x512xbf16>
    %4 = vector.shape_cast %3 : vector<1x8x512xbf16> to vector<8x512xbf16>
    %cst = arith.constant 0.000000e+00 : bf16
    %5 = vector.broadcast %cst : bf16 to vector<8x512xbf16>
    %6 = arith.maximumf %4, %5 : vector<8x512xbf16>
    %c0_3 = arith.constant 0 : index
    %c0_4 = arith.constant 0 : index
    %7 = vector.load %arg8[%c0_3, %c0_4] : memref<8x32xf32, #tpu.memory_space<vmem>>, vector<8x32xf32>
    %c0_5 = arith.constant 0 : index
    %c0_6 = arith.constant 0 : index
    %c0_7 = arith.constant 0 : index
    %8 = vector.load %arg5[%c0_5, %c0_6, %c0_7] : memref<1x512x32xbf16, #tpu.memory_space<vmem>>, vector<1x512x32xbf16>
    %9 = vector.shape_cast %8 : vector<1x512x32xbf16> to vector<512x32xbf16>
    %cst_8 = arith.constant dense<0.000000e+00> : vector<8x32xf32>
    %10 = tpu.matmul %6, %9, %cst_8 {dimension_numbers = #tpu.dot_dimension_numbers<[1], [0], [0], [1], [0, 0, 1, 1], [], []>} : vector<8x512xbf16>, vector<512x32xbf16>, vector<8x32xf32> -> vector<8x32xf32>
    %11 = arith.addf %7, %10 : vector<8x32xf32>
    %c0_9 = arith.constant 0 : index
    %c0_10 = arith.constant 0 : index
    %12 = vector.load %arg8[%c0_9, %c0_10] : memref<8x32xf32, #tpu.memory_space<vmem>>, vector<8x32xf32>
    tpu.vector_store %arg8[%c0_9, %c0_10], %11 {strides = array<i32>} : memref<8x32xf32, #tpu.memory_space<vmem>>, vector<8x32xf32>,
    %c0_i32_11 = arith.constant 0 : i32
    %13 = arith.cmpi eq, %arg3, %c0_i32_11 : i32
    %14 = arith.extui %13 : i1 to i32
    %c0_i32_12 = arith.constant 0 : i32
    %15 = arith.cmpi ne, %14, %c0_i32_12 : i32
    scf.if %15 {
      %c0_13 = arith.constant 0 : index
      %c0_14 = arith.constant 0 : index
      %16 = vector.load %arg8[%c0_13, %c0_14] : memref<8x32xf32, #tpu.memory_space<vmem>>, vector<8x32xf32>
      %c0_15 = arith.constant 0 : index
      %c0_16 = arith.constant 0 : index
      %c0_17 = arith.constant 0 : index
      %17 = vector.load %arg6[%c0_15, %c0_16, %c0_17] : memref<1x1x32xf32, #tpu.memory_space<vmem>>, vector<1x1x32xf32>
      %18 = vector.shape_cast %17 : vector<1x1x32xf32> to vector<1x32xf32>
      %19 = vector.broadcast %18 : vector<1x32xf32> to vector<8x32xf32>
      %20 = arith.addf %16, %19 : vector<8x32xf32>
      %21 = arith.truncf %20 : vector<8x32xf32> to vector<8x32xbf16>
      %c0_18 = arith.constant 0 : index
      %c0_19 = arith.constant 0 : index
      %c0_20 = arith.constant 0 : index
      %22 = vector.load %arg7[%c0_18, %c0_19, %c0_20] : memref<1x8x32xbf16, #tpu.memory_space<vmem>>, vector<1x8x32xbf16>
      %23 = vector.shape_cast %22 : vector<1x8x32xbf16> to vector<8x32xbf16>
      %24 = vector.shape_cast %21 : vector<8x32xbf16> to vector<1x8x32xbf16>
      tpu.vector_store %arg7[%c0_18, %c0_19, %c0_20], %24 {strides = array<i32>} : memref<1x8x32xbf16, #tpu.memory_space<vmem>>, vector<1x8x32xbf16>,
    } else {
    }
    return
  }
  func.func @transform_0(%arg0: i32, %arg1: i32, %arg2: i32, %arg3: i32) -> (i32, i32, i32) {
    %c0_i32 = arith.constant 0 : i32
    return %arg0, %arg1, %arg3 : i32, i32, i32
  }
  func.func @transform_1(%arg0: i32, %arg1: i32, %arg2: i32, %arg3: i32) -> (i32, i32, i32) {
    %c0_i32 = arith.constant 0 : i32
    return %arg0, %arg3, %arg2 : i32, i32, i32
  }
  func.func @transform_2(%arg0: i32, %arg1: i32, %arg2: i32, %arg3: i32) -> (i32, i32, i32) {
    %c0_i32 = arith.constant 0 : i32
    %c0_i32_0 = arith.constant 0 : i32
    %c0_i32_1 = arith.constant 0 : i32
    return %c0_i32, %c0_i32_0, %arg2 : i32, i32, i32
  }
  func.func @transform_3(%arg0: i32, %arg1: i32, %arg2: i32, %arg3: i32) -> (i32, i32, i32) {
    %c0_i32 = arith.constant 0 : i32
    return %arg0, %arg1, %arg2 : i32, i32, i32
  }
}

module attributes {stable_mosaic.version = 11 : i64} {
  func.func @_gemm_kernel(%arg0: i32, %arg1: i32, %arg2: i32, %arg3: i32, %arg4: memref<1x32x256xbf16, #tpu.memory_space<vmem>>, %arg5: memref<1x256x16xbf16, #tpu.memory_space<vmem>>, %arg6: memref<1x1x16xf32, #tpu.memory_space<vmem>>, %arg7: memref<1x32x16xbf16, #tpu.memory_space<vmem>>, %arg8: memref<32x16xf32, #tpu.memory_space<vmem>>) attributes {dimension_semantics = [#tpu.dimension_semantics<parallel>, #tpu.dimension_semantics<parallel>, #tpu.dimension_semantics<parallel>, #tpu.dimension_semantics<arbitrary>], iteration_bounds = array<i64: 4, 1, 1, 1>, scalar_prefetch = 0 : i64, scratch_operands = 1 : i64, tpu.core_type = #tpu.core_type<tc>, window_params = [{transform_indices = @transform_0, window_bounds = array<i64: 1, 32, 256>}, {transform_indices = @transform_1, window_bounds = array<i64: 1, 256, 16>}, {transform_indices = @transform_2, window_bounds = array<i64: 1, 1, 16>}, {transform_indices = @transform_3, window_bounds = array<i64: 1, 32, 16>}]} {
    %c0_i32 = arith.constant 0 : i32
    %0 = arith.cmpi eq, %arg3, %c0_i32 : i32
    %1 = arith.extui %0 : i1 to i32
    %c0_i32_0 = arith.constant 0 : i32
    %2 = arith.cmpi ne, %1, %c0_i32_0 : i32
    scf.if %2 {
      %cst_13 = arith.constant 0.000000e+00 : f32
      %16 = vector.broadcast %cst_13 : f32 to vector<32x16xf32>
      %c0_14 = arith.constant 0 : index
      %c0_15 = arith.constant 0 : index
      %17 = vector.load %arg8[%c0_14, %c0_15] : memref<32x16xf32, #tpu.memory_space<vmem>>, vector<32x16xf32>
      tpu.vector_store %arg8[%c0_14, %c0_15], %16 {strides = array<i32>} : memref<32x16xf32, #tpu.memory_space<vmem>>, vector<32x16xf32>,
    } else {
    }
    %c0 = arith.constant 0 : index
    %c0_1 = arith.constant 0 : index
    %c0_2 = arith.constant 0 : index
    %3 = vector.load %arg4[%c0, %c0_1, %c0_2] : memref<1x32x256xbf16, #tpu.memory_space<vmem>>, vector<1x32x256xbf16>
    %4 = vector.shape_cast %3 : vector<1x32x256xbf16> to vector<32x256xbf16>
    %cst = arith.constant 0.000000e+00 : bf16
    %5 = vector.broadcast %cst : bf16 to vector<32x256xbf16>
    %6 = arith.maximumf %4, %5 : vector<32x256xbf16>
    %c0_3 = arith.constant 0 : index
    %c0_4 = arith.constant 0 : index
    %7 = vector.load %arg8[%c0_3, %c0_4] : memref<32x16xf32, #tpu.memory_space<vmem>>, vector<32x16xf32>
    %c0_5 = arith.constant 0 : index
    %c0_6 = arith.constant 0 : index
    %c0_7 = arith.constant 0 : index
    %8 = vector.load %arg5[%c0_5, %c0_6, %c0_7] : memref<1x256x16xbf16, #tpu.memory_space<vmem>>, vector<1x256x16xbf16>
    %9 = vector.shape_cast %8 : vector<1x256x16xbf16> to vector<256x16xbf16>
    %cst_8 = arith.constant dense<0.000000e+00> : vector<32x16xf32>
    %10 = tpu.matmul %6, %9, %cst_8 {dimension_numbers = #tpu.dot_dimension_numbers<[1], [0], [0], [1], [0, 0, 1, 1], [], []>} : vector<32x256xbf16>, vector<256x16xbf16>, vector<32x16xf32> -> vector<32x16xf32>
    %11 = arith.addf %7, %10 : vector<32x16xf32>
    %c0_9 = arith.constant 0 : index
    %c0_10 = arith.constant 0 : index
    %12 = vector.load %arg8[%c0_9, %c0_10] : memref<32x16xf32, #tpu.memory_space<vmem>>, vector<32x16xf32>
    tpu.vector_store %arg8[%c0_9, %c0_10], %11 {strides = array<i32>} : memref<32x16xf32, #tpu.memory_space<vmem>>, vector<32x16xf32>,
    %c0_i32_11 = arith.constant 0 : i32
    %13 = arith.cmpi eq, %arg3, %c0_i32_11 : i32
    %14 = arith.extui %13 : i1 to i32
    %c0_i32_12 = arith.constant 0 : i32
    %15 = arith.cmpi ne, %14, %c0_i32_12 : i32
    scf.if %15 {
      %c0_13 = arith.constant 0 : index
      %c0_14 = arith.constant 0 : index
      %16 = vector.load %arg8[%c0_13, %c0_14] : memref<32x16xf32, #tpu.memory_space<vmem>>, vector<32x16xf32>
      %c0_15 = arith.constant 0 : index
      %c0_16 = arith.constant 0 : index
      %c0_17 = arith.constant 0 : index
      %17 = vector.load %arg6[%c0_15, %c0_16, %c0_17] : memref<1x1x16xf32, #tpu.memory_space<vmem>>, vector<1x1x16xf32>
      %18 = vector.shape_cast %17 : vector<1x1x16xf32> to vector<1x16xf32>
      %19 = vector.broadcast %18 : vector<1x16xf32> to vector<32x16xf32>
      %20 = arith.addf %16, %19 : vector<32x16xf32>
      %21 = arith.truncf %20 : vector<32x16xf32> to vector<32x16xbf16>
      %c0_18 = arith.constant 0 : index
      %c0_19 = arith.constant 0 : index
      %c0_20 = arith.constant 0 : index
      %22 = vector.load %arg7[%c0_18, %c0_19, %c0_20] : memref<1x32x16xbf16, #tpu.memory_space<vmem>>, vector<1x32x16xbf16>
      %23 = vector.shape_cast %22 : vector<1x32x16xbf16> to vector<32x16xbf16>
      %24 = vector.shape_cast %21 : vector<32x16xbf16> to vector<1x32x16xbf16>
      tpu.vector_store %arg7[%c0_18, %c0_19, %c0_20], %24 {strides = array<i32>} : memref<1x32x16xbf16, #tpu.memory_space<vmem>>, vector<1x32x16xbf16>,
    } else {
    }
    return
  }
  func.func @transform_0(%arg0: i32, %arg1: i32, %arg2: i32, %arg3: i32) -> (i32, i32, i32) {
    %c0_i32 = arith.constant 0 : i32
    return %arg0, %arg1, %arg3 : i32, i32, i32
  }
  func.func @transform_1(%arg0: i32, %arg1: i32, %arg2: i32, %arg3: i32) -> (i32, i32, i32) {
    %c0_i32 = arith.constant 0 : i32
    return %arg0, %arg3, %arg2 : i32, i32, i32
  }
  func.func @transform_2(%arg0: i32, %arg1: i32, %arg2: i32, %arg3: i32) -> (i32, i32, i32) {
    %c0_i32 = arith.constant 0 : i32
    %c0_i32_0 = arith.constant 0 : i32
    %c0_i32_1 = arith.constant 0 : i32
    return %c0_i32, %c0_i32_0, %arg2 : i32, i32, i32
  }
  func.func @transform_3(%arg0: i32, %arg1: i32, %arg2: i32, %arg3: i32) -> (i32, i32, i32) {
    %c0_i32 = arith.constant 0 : i32
    return %arg0, %arg1, %arg2 : i32, i32, i32
  }
}

module attributes {stable_mosaic.version = 11 : i64} {
  func.func @_gemm_kernel(%arg0: i32, %arg1: i32, %arg2: i32, %arg3: i32, %arg4: memref<1x128x128xbf16, #tpu.memory_space<vmem>>, %arg5: memref<1x128x8xbf16, #tpu.memory_space<vmem>>, %arg6: memref<1x1x8xf32, #tpu.memory_space<vmem>>, %arg7: memref<1x128x8xbf16, #tpu.memory_space<vmem>>, %arg8: memref<128x8xf32, #tpu.memory_space<vmem>>) attributes {dimension_semantics = [#tpu.dimension_semantics<parallel>, #tpu.dimension_semantics<parallel>, #tpu.dimension_semantics<parallel>, #tpu.dimension_semantics<arbitrary>], iteration_bounds = array<i64: 4, 1, 1, 1>, scalar_prefetch = 0 : i64, scratch_operands = 1 : i64, tpu.core_type = #tpu.core_type<tc>, window_params = [{transform_indices = @transform_0, window_bounds = array<i64: 1, 128, 128>}, {transform_indices = @transform_1, window_bounds = array<i64: 1, 128, 8>}, {transform_indices = @transform_2, window_bounds = array<i64: 1, 1, 8>}, {transform_indices = @transform_3, window_bounds = array<i64: 1, 128, 8>}]} {
    %c0_i32 = arith.constant 0 : i32
    %0 = arith.cmpi eq, %arg3, %c0_i32 : i32
    %1 = arith.extui %0 : i1 to i32
    %c0_i32_0 = arith.constant 0 : i32
    %2 = arith.cmpi ne, %1, %c0_i32_0 : i32
    scf.if %2 {
      %cst_13 = arith.constant 0.000000e+00 : f32
      %16 = vector.broadcast %cst_13 : f32 to vector<128x8xf32>
      %c0_14 = arith.constant 0 : index
      %c0_15 = arith.constant 0 : index
      %17 = vector.load %arg8[%c0_14, %c0_15] : memref<128x8xf32, #tpu.memory_space<vmem>>, vector<128x8xf32>
      tpu.vector_store %arg8[%c0_14, %c0_15], %16 {strides = array<i32>} : memref<128x8xf32, #tpu.memory_space<vmem>>, vector<128x8xf32>,
    } else {
    }
    %c0 = arith.constant 0 : index
    %c0_1 = arith.constant 0 : index
    %c0_2 = arith.constant 0 : index
    %3 = vector.load %arg4[%c0, %c0_1, %c0_2] : memref<1x128x128xbf16, #tpu.memory_space<vmem>>, vector<1x128x128xbf16>
    %4 = vector.shape_cast %3 : vector<1x128x128xbf16> to vector<128x128xbf16>
    %cst = arith.constant 0.000000e+00 : bf16
    %5 = vector.broadcast %cst : bf16 to vector<128x128xbf16>
    %6 = arith.maximumf %4, %5 : vector<128x128xbf16>
    %c0_3 = arith.constant 0 : index
    %c0_4 = arith.constant 0 : index
    %7 = vector.load %arg8[%c0_3, %c0_4] : memref<128x8xf32, #tpu.memory_space<vmem>>, vector<128x8xf32>
    %c0_5 = arith.constant 0 : index
    %c0_6 = arith.constant 0 : index
    %c0_7 = arith.constant 0 : index
    %8 = vector.load %arg5[%c0_5, %c0_6, %c0_7] : memref<1x128x8xbf16, #tpu.memory_space<vmem>>, vector<1x128x8xbf16>
    %9 = vector.shape_cast %8 : vector<1x128x8xbf16> to vector<128x8xbf16>
    %cst_8 = arith.constant dense<0.000000e+00> : vector<128x8xf32>
    %10 = tpu.matmul %6, %9, %cst_8 {dimension_numbers = #tpu.dot_dimension_numbers<[1], [0], [0], [1], [0, 0, 1, 1], [], []>} : vector<128x128xbf16>, vector<128x8xbf16>, vector<128x8xf32> -> vector<128x8xf32>
    %11 = arith.addf %7, %10 : vector<128x8xf32>
    %c0_9 = arith.constant 0 : index
    %c0_10 = arith.constant 0 : index
    %12 = vector.load %arg8[%c0_9, %c0_10] : memref<128x8xf32, #tpu.memory_space<vmem>>, vector<128x8xf32>
    tpu.vector_store %arg8[%c0_9, %c0_10], %11 {strides = array<i32>} : memref<128x8xf32, #tpu.memory_space<vmem>>, vector<128x8xf32>,
    %c0_i32_11 = arith.constant 0 : i32
    %13 = arith.cmpi eq, %arg3, %c0_i32_11 : i32
    %14 = arith.extui %13 : i1 to i32
    %c0_i32_12 = arith.constant 0 : i32
    %15 = arith.cmpi ne, %14, %c0_i32_12 : i32
    scf.if %15 {
      %c0_13 = arith.constant 0 : index
      %c0_14 = arith.constant 0 : index
      %16 = vector.load %arg8[%c0_13, %c0_14] : memref<128x8xf32, #tpu.memory_space<vmem>>, vector<128x8xf32>
      %c0_15 = arith.constant 0 : index
      %c0_16 = arith.constant 0 : index
      %c0_17 = arith.constant 0 : index
      %17 = vector.load %arg6[%c0_15, %c0_16, %c0_17] : memref<1x1x8xf32, #tpu.memory_space<vmem>>, vector<1x1x8xf32>
      %18 = vector.shape_cast %17 : vector<1x1x8xf32> to vector<1x8xf32>
      %19 = vector.broadcast %18 : vector<1x8xf32> to vector<128x8xf32>
      %20 = arith.addf %16, %19 : vector<128x8xf32>
      %21 = arith.truncf %20 : vector<128x8xf32> to vector<128x8xbf16>
      %c0_18 = arith.constant 0 : index
      %c0_19 = arith.constant 0 : index
      %c0_20 = arith.constant 0 : index
      %22 = vector.load %arg7[%c0_18, %c0_19, %c0_20] : memref<1x128x8xbf16, #tpu.memory_space<vmem>>, vector<1x128x8xbf16>
      %23 = vector.shape_cast %22 : vector<1x128x8xbf16> to vector<128x8xbf16>
      %24 = vector.shape_cast %21 : vector<128x8xbf16> to vector<1x128x8xbf16>
      tpu.vector_store %arg7[%c0_18, %c0_19, %c0_20], %24 {strides = array<i32>} : memref<1x128x8xbf16, #tpu.memory_space<vmem>>, vector<1x128x8xbf16>,
    } else {
    }
    return
  }
  func.func @transform_0(%arg0: i32, %arg1: i32, %arg2: i32, %arg3: i32) -> (i32, i32, i32) {
    %c0_i32 = arith.constant 0 : i32
    return %arg0, %arg1, %arg3 : i32, i32, i32
  }
  func.func @transform_1(%arg0: i32, %arg1: i32, %arg2: i32, %arg3: i32) -> (i32, i32, i32) {
    %c0_i32 = arith.constant 0 : i32
    return %arg0, %arg3, %arg2 : i32, i32, i32
  }
  func.func @transform_2(%arg0: i32, %arg1: i32, %arg2: i32, %arg3: i32) -> (i32, i32, i32) {
    %c0_i32 = arith.constant 0 : i32
    %c0_i32_0 = arith.constant 0 : i32
    %c0_i32_1 = arith.constant 0 : i32
    return %c0_i32, %c0_i32_0, %arg2 : i32, i32, i32
  }
  func.func @transform_3(%arg0: i32, %arg1: i32, %arg2: i32, %arg3: i32) -> (i32, i32, i32) {
    %c0_i32 = arith.constant 0 : i32
    return %arg0, %arg1, %arg2 : i32, i32, i32
  }
}

module attributes {stable_mosaic.version = 11 : i64} {
  func.func @_bn_stats_kernel(%arg0: i32, %arg1: memref<512x8xbf16, #tpu.memory_space<vmem>>, %arg2: memref<1x8xf32, #tpu.memory_space<vmem>>, %arg3: memref<1x8xf32, #tpu.memory_space<vmem>>, %arg4: memref<1x8xf32, #tpu.memory_space<vmem>>, %arg5: memref<1x8xf32, #tpu.memory_space<vmem>>) attributes {dimension_semantics = [#tpu.dimension_semantics<arbitrary>], iteration_bounds = array<i64: 1>, scalar_prefetch = 0 : i64, scratch_operands = 2 : i64, tpu.core_type = #tpu.core_type<tc>, window_params = [{transform_indices = @transform_0, window_bounds = array<i64: 512, 8>}, {pipeline_mode = #tpu.pipeline_mode<synchronous>, transform_indices = @transform_1, window_bounds = array<i64: 1, 8>}, {pipeline_mode = #tpu.pipeline_mode<synchronous>, transform_indices = @transform_2, window_bounds = array<i64: 1, 8>}]} {
    %c0_i32 = arith.constant 0 : i32
    %0 = arith.cmpi eq, %arg0, %c0_i32 : i32
    %1 = arith.extui %0 : i1 to i32
    %c0_i32_0 = arith.constant 0 : i32
    %2 = arith.cmpi ne, %1, %c0_i32_0 : i32
    scf.if %2 {
      %cst_13 = arith.constant 0.000000e+00 : f32
      %19 = vector.broadcast %cst_13 : f32 to vector<1x8xf32>
      %c0_14 = arith.constant 0 : index
      %c0_15 = arith.constant 0 : index
      %20 = vector.load %arg4[%c0_14, %c0_15] : memref<1x8xf32, #tpu.memory_space<vmem>>, vector<1x8xf32>
      tpu.vector_store %arg4[%c0_14, %c0_15], %19 {strides = array<i32>} : memref<1x8xf32, #tpu.memory_space<vmem>>, vector<1x8xf32>,
      %cst_16 = arith.constant 0.000000e+00 : f32
      %21 = vector.broadcast %cst_16 : f32 to vector<1x8xf32>
      %c0_17 = arith.constant 0 : index
      %c0_18 = arith.constant 0 : index
      %22 = vector.load %arg5[%c0_17, %c0_18] : memref<1x8xf32, #tpu.memory_space<vmem>>, vector<1x8xf32>
      tpu.vector_store %arg5[%c0_17, %c0_18], %21 {strides = array<i32>} : memref<1x8xf32, #tpu.memory_space<vmem>>, vector<1x8xf32>,
    } else {
    }
    %c0 = arith.constant 0 : index
    %c0_1 = arith.constant 0 : index
    %3 = vector.load %arg1[%c0, %c0_1] : memref<512x8xbf16, #tpu.memory_space<vmem>>, vector<512x8xbf16>
    %4 = arith.extf %3 : vector<512x8xbf16> to vector<512x8xf32>
    %c0_2 = arith.constant 0 : index
    %c0_3 = arith.constant 0 : index
    %5 = vector.load %arg4[%c0_2, %c0_3] : memref<1x8xf32, #tpu.memory_space<vmem>>, vector<1x8xf32>
    %cst = arith.constant dense<0.000000e+00> : vector<8xf32>
    %6 = vector.multi_reduction <add>, %4, %cst [0] : vector<512x8xf32> to vector<8xf32>
    %7 = vector.shape_cast %6 : vector<8xf32> to vector<1x8xf32>
    %8 = arith.addf %5, %7 : vector<1x8xf32>
    %c0_4 = arith.constant 0 : index
    %c0_5 = arith.constant 0 : index
    %9 = vector.load %arg4[%c0_4, %c0_5] : memref<1x8xf32, #tpu.memory_space<vmem>>, vector<1x8xf32>
    tpu.vector_store %arg4[%c0_4, %c0_5], %8 {strides = array<i32>} : memref<1x8xf32, #tpu.memory_space<vmem>>, vector<1x8xf32>,
    %c0_6 = arith.constant 0 : index
    %c0_7 = arith.constant 0 : index
    %10 = vector.load %arg5[%c0_6, %c0_7] : memref<1x8xf32, #tpu.memory_space<vmem>>, vector<1x8xf32>
    %11 = arith.mulf %4, %4 : vector<512x8xf32>
    %cst_8 = arith.constant dense<0.000000e+00> : vector<8xf32>
    %12 = vector.multi_reduction <add>, %11, %cst_8 [0] : vector<512x8xf32> to vector<8xf32>
    %13 = vector.shape_cast %12 : vector<8xf32> to vector<1x8xf32>
    %14 = arith.addf %10, %13 : vector<1x8xf32>
    %c0_9 = arith.constant 0 : index
    %c0_10 = arith.constant 0 : index
    %15 = vector.load %arg5[%c0_9, %c0_10] : memref<1x8xf32, #tpu.memory_space<vmem>>, vector<1x8xf32>
    tpu.vector_store %arg5[%c0_9, %c0_10], %14 {strides = array<i32>} : memref<1x8xf32, #tpu.memory_space<vmem>>, vector<1x8xf32>,
    %c0_i32_11 = arith.constant 0 : i32
    %16 = arith.cmpi eq, %arg0, %c0_i32_11 : i32
    %17 = arith.extui %16 : i1 to i32
    %c0_i32_12 = arith.constant 0 : i32
    %18 = arith.cmpi ne, %17, %c0_i32_12 : i32
    scf.if %18 {
      %c0_13 = arith.constant 0 : index
      %c0_14 = arith.constant 0 : index
      %19 = vector.load %arg4[%c0_13, %c0_14] : memref<1x8xf32, #tpu.memory_space<vmem>>, vector<1x8xf32>
      %c0_15 = arith.constant 0 : index
      %c0_16 = arith.constant 0 : index
      %20 = vector.load %arg2[%c0_15, %c0_16] : memref<1x8xf32, #tpu.memory_space<vmem>>, vector<1x8xf32>
      tpu.vector_store %arg2[%c0_15, %c0_16], %19 {strides = array<i32>} : memref<1x8xf32, #tpu.memory_space<vmem>>, vector<1x8xf32>,
      %c0_17 = arith.constant 0 : index
      %c0_18 = arith.constant 0 : index
      %21 = vector.load %arg5[%c0_17, %c0_18] : memref<1x8xf32, #tpu.memory_space<vmem>>, vector<1x8xf32>
      %c0_19 = arith.constant 0 : index
      %c0_20 = arith.constant 0 : index
      %22 = vector.load %arg3[%c0_19, %c0_20] : memref<1x8xf32, #tpu.memory_space<vmem>>, vector<1x8xf32>
      tpu.vector_store %arg3[%c0_19, %c0_20], %21 {strides = array<i32>} : memref<1x8xf32, #tpu.memory_space<vmem>>, vector<1x8xf32>,
    } else {
    }
    return
  }
  func.func @transform_0(%arg0: i32) -> (i32, i32) {
    %c0_i32 = arith.constant 0 : i32
    %c0_i32_0 = arith.constant 0 : i32
    return %arg0, %c0_i32 : i32, i32
  }
  func.func @transform_1(%arg0: i32) -> (i32, i32) {
    %c0_i32 = arith.constant 0 : i32
    %c0_i32_0 = arith.constant 0 : i32
    %c0_i32_1 = arith.constant 0 : i32
    return %c0_i32, %c0_i32_0 : i32, i32
  }
  func.func @transform_2(%arg0: i32) -> (i32, i32) {
    %c0_i32 = arith.constant 0 : i32
    %c0_i32_0 = arith.constant 0 : i32
    %c0_i32_1 = arith.constant 0 : i32
    return %c0_i32, %c0_i32_0 : i32, i32
  }
}

module attributes {stable_mosaic.version = 11 : i64} {
  func.func @_bn_apply_kernel(%arg0: i32, %arg1: memref<512x8xbf16, #tpu.memory_space<vmem>>, %arg2: memref<1x8xf32, #tpu.memory_space<vmem>>, %arg3: memref<1x8xf32, #tpu.memory_space<vmem>>, %arg4: memref<512x8xbf16, #tpu.memory_space<vmem>>) attributes {dimension_semantics = [#tpu.dimension_semantics<parallel>], iteration_bounds = array<i64: 1>, scalar_prefetch = 0 : i64, scratch_operands = 0 : i64, tpu.core_type = #tpu.core_type<tc>, window_params = [{transform_indices = @transform_0, window_bounds = array<i64: 512, 8>}, {pipeline_mode = #tpu.pipeline_mode<synchronous>, transform_indices = @transform_1, window_bounds = array<i64: 1, 8>}, {pipeline_mode = #tpu.pipeline_mode<synchronous>, transform_indices = @transform_2, window_bounds = array<i64: 1, 8>}, {transform_indices = @transform_3, window_bounds = array<i64: 512, 8>}]} {
    %c0 = arith.constant 0 : index
    %c0_0 = arith.constant 0 : index
    %0 = vector.load %arg1[%c0, %c0_0] : memref<512x8xbf16, #tpu.memory_space<vmem>>, vector<512x8xbf16>
    %1 = arith.extf %0 : vector<512x8xbf16> to vector<512x8xf32>
    %c0_1 = arith.constant 0 : index
    %c0_2 = arith.constant 0 : index
    %2 = vector.load %arg2[%c0_1, %c0_2] : memref<1x8xf32, #tpu.memory_space<vmem>>, vector<1x8xf32>
    %3 = vector.broadcast %2 : vector<1x8xf32> to vector<512x8xf32>
    %4 = arith.mulf %1, %3 : vector<512x8xf32>
    %c0_3 = arith.constant 0 : index
    %c0_4 = arith.constant 0 : index
    %5 = vector.load %arg3[%c0_3, %c0_4] : memref<1x8xf32, #tpu.memory_space<vmem>>, vector<1x8xf32>
    %6 = vector.broadcast %5 : vector<1x8xf32> to vector<512x8xf32>
    %7 = arith.addf %4, %6 : vector<512x8xf32>
    %8 = arith.truncf %7 : vector<512x8xf32> to vector<512x8xbf16>
    %c0_5 = arith.constant 0 : index
    %c0_6 = arith.constant 0 : index
    %9 = vector.load %arg4[%c0_5, %c0_6] : memref<512x8xbf16, #tpu.memory_space<vmem>>, vector<512x8xbf16>
    tpu.vector_store %arg4[%c0_5, %c0_6], %8 {strides = array<i32>} : memref<512x8xbf16, #tpu.memory_space<vmem>>, vector<512x8xbf16>,
    return
  }
  func.func @transform_0(%arg0: i32) -> (i32, i32) {
    %c0_i32 = arith.constant 0 : i32
    %c0_i32_0 = arith.constant 0 : i32
    return %arg0, %c0_i32 : i32, i32
  }
  func.func @transform_1(%arg0: i32) -> (i32, i32) {
    %c0_i32 = arith.constant 0 : i32
    %c0_i32_0 = arith.constant 0 : i32
    %c0_i32_1 = arith.constant 0 : i32
    return %c0_i32, %c0_i32_0 : i32, i32
  }
  func.func @transform_2(%arg0: i32) -> (i32, i32) {
    %c0_i32 = arith.constant 0 : i32
    %c0_i32_0 = arith.constant 0 : i32
    %c0_i32_1 = arith.constant 0 : i32
    return %c0_i32, %c0_i32_0 : i32, i32
  }
  func.func @transform_3(%arg0: i32) -> (i32, i32) {
    %c0_i32 = arith.constant 0 : i32
    %c0_i32_0 = arith.constant 0 : i32
    return %arg0, %c0_i32 : i32, i32
  }
}

module attributes {stable_mosaic.version = 11 : i64} {
  func.func @_gemm_kernel(%arg0: i32, %arg1: i32, %arg2: i32, %arg3: i32, %arg4: memref<1x512x64xbf16, #tpu.memory_space<vmem>>, %arg5: memref<1x64x3xbf16, #tpu.memory_space<vmem>>, %arg6: memref<1x1x3xf32, #tpu.memory_space<vmem>>, %arg7: memref<1x512x3xf32, #tpu.memory_space<vmem>>, %arg8: memref<512x3xf32, #tpu.memory_space<vmem>>) attributes {dimension_semantics = [#tpu.dimension_semantics<parallel>, #tpu.dimension_semantics<parallel>, #tpu.dimension_semantics<parallel>, #tpu.dimension_semantics<arbitrary>], iteration_bounds = array<i64: 4, 1, 1, 1>, scalar_prefetch = 0 : i64, scratch_operands = 1 : i64, tpu.core_type = #tpu.core_type<tc>, window_params = [{transform_indices = @transform_0, window_bounds = array<i64: 1, 512, 64>}, {transform_indices = @transform_1, window_bounds = array<i64: 1, 64, 3>}, {transform_indices = @transform_2, window_bounds = array<i64: 1, 1, 3>}, {transform_indices = @transform_3, window_bounds = array<i64: 1, 512, 3>}]} {
    %c0_i32 = arith.constant 0 : i32
    %0 = arith.cmpi eq, %arg3, %c0_i32 : i32
    %1 = arith.extui %0 : i1 to i32
    %c0_i32_0 = arith.constant 0 : i32
    %2 = arith.cmpi ne, %1, %c0_i32_0 : i32
    scf.if %2 {
      %cst_13 = arith.constant 0.000000e+00 : f32
      %16 = vector.broadcast %cst_13 : f32 to vector<512x3xf32>
      %c0_14 = arith.constant 0 : index
      %c0_15 = arith.constant 0 : index
      %17 = vector.load %arg8[%c0_14, %c0_15] : memref<512x3xf32, #tpu.memory_space<vmem>>, vector<512x3xf32>
      tpu.vector_store %arg8[%c0_14, %c0_15], %16 {strides = array<i32>} : memref<512x3xf32, #tpu.memory_space<vmem>>, vector<512x3xf32>,
    } else {
    }
    %c0 = arith.constant 0 : index
    %c0_1 = arith.constant 0 : index
    %c0_2 = arith.constant 0 : index
    %3 = vector.load %arg4[%c0, %c0_1, %c0_2] : memref<1x512x64xbf16, #tpu.memory_space<vmem>>, vector<1x512x64xbf16>
    %4 = vector.shape_cast %3 : vector<1x512x64xbf16> to vector<512x64xbf16>
    %cst = arith.constant 0.000000e+00 : bf16
    %5 = vector.broadcast %cst : bf16 to vector<512x64xbf16>
    %6 = arith.maximumf %4, %5 : vector<512x64xbf16>
    %c0_3 = arith.constant 0 : index
    %c0_4 = arith.constant 0 : index
    %7 = vector.load %arg8[%c0_3, %c0_4] : memref<512x3xf32, #tpu.memory_space<vmem>>, vector<512x3xf32>
    %c0_5 = arith.constant 0 : index
    %c0_6 = arith.constant 0 : index
    %c0_7 = arith.constant 0 : index
    %8 = vector.load %arg5[%c0_5, %c0_6, %c0_7] : memref<1x64x3xbf16, #tpu.memory_space<vmem>>, vector<1x64x3xbf16>
    %9 = vector.shape_cast %8 : vector<1x64x3xbf16> to vector<64x3xbf16>
    %cst_8 = arith.constant dense<0.000000e+00> : vector<512x3xf32>
    %10 = tpu.matmul %6, %9, %cst_8 {dimension_numbers = #tpu.dot_dimension_numbers<[1], [0], [0], [1], [0, 0, 1, 1], [], []>} : vector<512x64xbf16>, vector<64x3xbf16>, vector<512x3xf32> -> vector<512x3xf32>
    %11 = arith.addf %7, %10 : vector<512x3xf32>
    %c0_9 = arith.constant 0 : index
    %c0_10 = arith.constant 0 : index
    %12 = vector.load %arg8[%c0_9, %c0_10] : memref<512x3xf32, #tpu.memory_space<vmem>>, vector<512x3xf32>
    tpu.vector_store %arg8[%c0_9, %c0_10], %11 {strides = array<i32>} : memref<512x3xf32, #tpu.memory_space<vmem>>, vector<512x3xf32>,
    %c0_i32_11 = arith.constant 0 : i32
    %13 = arith.cmpi eq, %arg3, %c0_i32_11 : i32
    %14 = arith.extui %13 : i1 to i32
    %c0_i32_12 = arith.constant 0 : i32
    %15 = arith.cmpi ne, %14, %c0_i32_12 : i32
    scf.if %15 {
      %c0_13 = arith.constant 0 : index
      %c0_14 = arith.constant 0 : index
      %16 = vector.load %arg8[%c0_13, %c0_14] : memref<512x3xf32, #tpu.memory_space<vmem>>, vector<512x3xf32>
      %c0_15 = arith.constant 0 : index
      %c0_16 = arith.constant 0 : index
      %c0_17 = arith.constant 0 : index
      %17 = vector.load %arg6[%c0_15, %c0_16, %c0_17] : memref<1x1x3xf32, #tpu.memory_space<vmem>>, vector<1x1x3xf32>
      %18 = vector.shape_cast %17 : vector<1x1x3xf32> to vector<1x3xf32>
      %19 = vector.broadcast %18 : vector<1x3xf32> to vector<512x3xf32>
      %20 = arith.addf %16, %19 : vector<512x3xf32>
      %21 = math.tanh %20 : vector<512x3xf32>
      %c0_18 = arith.constant 0 : index
      %c0_19 = arith.constant 0 : index
      %c0_20 = arith.constant 0 : index
      %22 = vector.load %arg7[%c0_18, %c0_19, %c0_20] : memref<1x512x3xf32, #tpu.memory_space<vmem>>, vector<1x512x3xf32>
      %23 = vector.shape_cast %22 : vector<1x512x3xf32> to vector<512x3xf32>
      %24 = vector.shape_cast %21 : vector<512x3xf32> to vector<1x512x3xf32>
      tpu.vector_store %arg7[%c0_18, %c0_19, %c0_20], %24 {strides = array<i32>} : memref<1x512x3xf32, #tpu.memory_space<vmem>>, vector<1x512x3xf32>,
    } else {
    }
    return
  }
  func.func @transform_0(%arg0: i32, %arg1: i32, %arg2: i32, %arg3: i32) -> (i32, i32, i32) {
    %c0_i32 = arith.constant 0 : i32
    return %arg0, %arg1, %arg3 : i32, i32, i32
  }
  func.func @transform_1(%arg0: i32, %arg1: i32, %arg2: i32, %arg3: i32) -> (i32, i32, i32) {
    %c0_i32 = arith.constant 0 : i32
    return %arg0, %arg3, %arg2 : i32, i32, i32
  }
  func.func @transform_2(%arg0: i32, %arg1: i32, %arg2: i32, %arg3: i32) -> (i32, i32, i32) {
    %c0_i32 = arith.constant 0 : i32
    %c0_i32_0 = arith.constant 0 : i32
    %c0_i32_1 = arith.constant 0 : i32
    return %c0_i32, %c0_i32_0, %arg2 : i32, i32, i32
  }
  func.func @transform_3(%arg0: i32, %arg1: i32, %arg2: i32, %arg3: i32) -> (i32, i32, i32) {
    %c0_i32 = arith.constant 0 : i32
    return %arg0, %arg1, %arg2 : i32, i32, i32
  }
}

</mosaic_0001>

<llo_original>
// kernel: _lambda_.24
$region0: #{_lambda_.24}
  #allocation0 [shape = 'u32[]', space=smem, size = 0x4, offset = 0x4, fixed_abs, tag = 'smem constant byte address 0x4 - core index']
  #allocation1 [shape = 'u32[144,128]{1,0:T(1,128)}', space=vmem, size = 0x12000, scoped, tag = 'internal scratch']
  #allocation2 [shape = 'f32[512,8]{1,0:T(8,128)}', space=vmem, size = 0x40000, scoped, tag = 'scratch operand']
  %s0 = inlined_call_operand.vmem [shape: bf16[1,512,48], index: 0, kind: input, shape index: {}]
  %s1 = inlined_call_operand.vmem [shape: bf16[1,48,8], index: 1, kind: input, shape index: {}]
  %s2 = inlined_call_operand.vmem [shape: f32[1,1,8], index: 2, kind: input, shape index: {}]
  %s3 = inlined_call_operand.vmem [shape: bf16[1,512,8], index: 3, kind: output, shape index: {}]
  %s4 = sld [smem:[#allocation0]]
  $region30: #{_lambda_.24} parent=0
    _
  %s6 = ssub.s32 1, %s4
  %s7 = scalar_select 0, %s6, %s4
  // Predicated region
  $region2: #{_lambda_.24} parent=0 // pred_check
    _
  $region3: #{_lambda_.24} parent=0 // pred_check_branch
    %9 = sbr.rel (0) target = $region5
  $region4: #{_lambda_.24} parent=0 // pred_region
    _
  $region5: #{_lambda_.24} parent=0 // pred_fallthru
    _
  // Predicated region
  $region6: #{_lambda_.24} parent=0 // pred_check
    _
  $region7: #{_lambda_.24} parent=0 // pred_check_branch
    %11 = sbr.rel (0) target = $region9
  $region8: #{_lambda_.24} parent=0 // pred_region
    _
  $region9: #{_lambda_.24} parent=0 // pred_fallthru
    _
  // Predicated region
  $region10: #{_lambda_.24} parent=0 // pred_check
    _
  $region11: #{_lambda_.24} parent=0 // pred_check_branch
    %13 = sbr.rel (0) target = $region13
  $region12: #{_lambda_.24} parent=0 // pred_region
    _
  $region13: #{_lambda_.24} parent=0 // pred_fallthru
    _
  %p15 = scmp.eq.s32.totalorder 0, 0
  // Predicated region
  $region14: #{_lambda_.24} parent=0 // pred_check
    %p16 = pneg %p15
  $region15: #{_lambda_.24} parent=0 // pred_check_branch
    %18 = sbr.rel (%p16) target = $region17
  $region16: #{_lambda_.24} parent=0 // pred_region
    %vm19 = vcmask 64512
    %20 = vst.msk [vmem:[#allocation2] sm:$0xff] %vm19, 0.0
    %21 = vst.msk [vmem:[#allocation2 + $0x8] sm:$0xff] %vm19, 0.0
    %22 = vst.msk [vmem:[#allocation2 + $0x10] sm:$0xff] %vm19, 0.0
    %23 = vst.msk [vmem:[#allocation2 + $0x18] sm:$0xff] %vm19, 0.0
    %24 = vst.msk [vmem:[#allocation2 + $0x20] sm:$0xff] %vm19, 0.0
    %25 = vst.msk [vmem:[#allocation2 + $0x28] sm:$0xff] %vm19, 0.0
    %26 = vst.msk [vmem:[#allocation2 + $0x30] sm:$0xff] %vm19, 0.0
    %27 = vst.msk [vmem:[#allocation2 + $0x38] sm:$0xff] %vm19, 0.0
    %28 = vst.msk [vmem:[#allocation2 + $0x40] sm:$0xff] %vm19, 0.0
    %29 = vst.msk [vmem:[#allocation2 + $0x48] sm:$0xff] %vm19, 0.0
    %30 = vst.msk [vmem:[#allocation2 + $0x50] sm:$0xff] %vm19, 0.0
    %31 = vst.msk [vmem:[#allocation2 + $0x58] sm:$0xff] %vm19, 0.0
    %32 = vst.msk [vmem:[#allocation2 + $0x60] sm:$0xff] %vm19, 0.0
    %33 = vst.msk [vmem:[#allocation2 + $0x68] sm:$0xff] %vm19, 0.0
    %34 = vst.msk [vmem:[#allocation2 + $0x70] sm:$0xff] %vm19, 0.0
    %35 = vst.msk [vmem:[#allocation2 + $0x78] sm:$0xff] %vm19, 0.0
    %36 = vst.msk [vmem:[#allocation2 + $0x80] sm:$0xff] %vm19, 0.0
    %37 = vst.msk [vmem:[#allocation2 + $0x88] sm:$0xff] %vm19, 0.0
    %38 = vst.msk [vmem:[#allocation2 + $0x90] sm:$0xff] %vm19, 0.0
    %39 = vst.msk [vmem:[#allocation2 + $0x98] sm:$0xff] %vm19, 0.0
    %40 = vst.msk [vmem:[#allocation2 + $0xa0] sm:$0xff] %vm19, 0.0
    %41 = vst.msk [vmem:[#allocation2 + $0xa8] sm:$0xff] %vm19, 0.0
    %42 = vst.msk [vmem:[#allocation2 + $0xb0] sm:$0xff] %vm19, 0.0
    %43 = vst.msk [vmem:[#allocation2 + $0xb8] sm:$0xff] %vm19, 0.0
    %44 = vst.msk [vmem:[#allocation2 + $0xc0] sm:$0xff] %vm19, 0.0
    %45 = vst.msk [vmem:[#allocation2 + $0xc8] sm:$0xff] %vm19, 0.0
    %46 = vst.msk [vmem:[#allocation2 + $0xd0] sm:$0xff] %vm19, 0.0
    %47 = vst.msk [vmem:[#allocation2 + $0xd8] sm:$0xff] %vm19, 0.0
    %48 = vst.msk [vmem:[#allocation2 + $0xe0] sm:$0xff] %vm19, 0.0
    %49 = vst.msk [vmem:[#allocation2 + $0xe8] sm:$0xff] %vm19, 0.0
    %50 = vst.msk [vmem:[#allocation2 + $0xf0] sm:$0xff] %vm19, 0.0
    %51 = vst.msk [vmem:[#allocation2 + $0xf8] sm:$0xff] %vm19, 0.0
    %52 = vst.msk [vmem:[#allocation2 + $0x100] sm:$0xff] %vm19, 0.0
    %53 = vst.msk [vmem:[#allocation2 + $0x108] sm:$0xff] %vm19, 0.0
    %54 = vst.msk [vmem:[#allocation2 + $0x110] sm:$0xff] %vm19, 0.0
    %55 = vst.msk [vmem:[#allocation2 + $0x118] sm:$0xff] %vm19, 0.0
    %56 = vst.msk [vmem:[#allocation2 + $0x120] sm:$0xff] %vm19, 0.0
    %57 = vst.msk [vmem:[#allocation2 + $0x128] sm:$0xff] %vm19, 0.0
    %58 = vst.msk [vmem:[#allocation2 + $0x130] sm:$0xff] %vm19, 0.0
    %59 = vst.msk [vmem:[#allocation2 + $0x138] sm:$0xff] %vm19, 0.0
    %60 = vst.msk [vmem:[#allocation2 + $0x140] sm:$0xff] %vm19, 0.0
    %61 = vst.msk [vmem:[#allocation2 + $0x148] sm:$0xff] %vm19, 0.0
    %62 = vst.msk [vmem:[#allocation2 + $0x150] sm:$0xff] %vm19, 0.0
    %63 = vst.msk [vmem:[#allocation2 + $0x158] sm:$0xff] %vm19, 0.0
    %64 = vst.msk [vmem:[#allocation2 + $0x160] sm:$0xff] %vm19, 0.0
    %65 = vst.msk [vmem:[#allocation2 + $0x168] sm:$0xff] %vm19, 0.0
    %66 = vst.msk [vmem:[#allocation2 + $0x170] sm:$0xff] %vm19, 0.0
    %67 = vst.msk [vmem:[#allocation2 + $0x178] sm:$0xff] %vm19, 0.0
    %68 = vst.msk [vmem:[#allocation2 + $0x180] sm:$0xff] %vm19, 0.0
    %69 = vst.msk [vmem:[#allocation2 + $0x188] sm:$0xff] %vm19, 0.0
    %70 = vst.msk [vmem:[#allocation2 + $0x190] sm:$0xff] %vm19, 0.0
    %71 = vst.msk [vmem:[#allocation2 + $0x198] sm:$0xff] %vm19, 0.0
    %72 = vst.msk [vmem:[#allocation2 + $0x1a0] sm:$0xff] %vm19, 0.0
    %73 = vst.msk [vmem:[#allocation2 + $0x1a8] sm:$0xff] %vm19, 0.0
    %74 = vst.msk [vmem:[#allocation2 + $0x1b0] sm:$0xff] %vm19, 0.0
    %75 = vst.msk [vmem:[#allocation2 + $0x1b8] sm:$0xff] %vm19, 0.0
    %76 = vst.msk [vmem:[#allocation2 + $0x1c0] sm:$0xff] %vm19, 0.0
    %77 = vst.msk [vmem:[#allocation2 + $0x1c8] sm:$0xff] %vm19, 0.0
    %78 = vst.msk [vmem:[#allocation2 + $0x1d0] sm:$0xff] %vm19, 0.0
    %79 = vst.msk [vmem:[#allocation2 + $0x1d8] sm:$0xff] %vm19, 0.0
    %80 = vst.msk [vmem:[#allocation2 + $0x1e0] sm:$0xff] %vm19, 0.0
    %81 = vst.msk [vmem:[#allocation2 + $0x1e8] sm:$0xff] %vm19, 0.0
    %82 = vst.msk [vmem:[#allocation2 + $0x1f0] sm:$0xff] %vm19, 0.0
    %83 = vst.msk [vmem:[#allocation2 + $0x1f8] sm:$0xff] %vm19, 0.0
  $region17: #{_lambda_.24} parent=0 // pred_fallthru
    _
  %v84 = vld [vmem:[%s0] sm:$0xf]
  %v85 = vld [vmem:[%s0 + $0x4] sm:$0xf]
  %v86 = vld [vmem:[%s0 + $0x8] sm:$0xf]
  %v87 = vld [vmem:[%s0 + $0xc] sm:$0xf]
  %v88 = vld [vmem:[%s0 + $0x10] sm:$0xf]
  %v89 = vld [vmem:[%s0 + $0x14] sm:$0xf]
  %v90 = vld [vmem:[%s0 + $0x18] sm:$0xf]
  %v91 = vld [vmem:[%s0 + $0x1c] sm:$0xf]
  %v92 = vld [vmem:[%s0 + $0x20] sm:$0xf]
  %v93 = vld [vmem:[%s0 + $0x24] sm:$0xf]
  %v94 = vld [vmem:[%s0 + $0x28] sm:$0xf]
  %v95 = vld [vmem:[%s0 + $0x2c] sm:$0xf]
  %v96 = vld [vmem:[%s0 + $0x30] sm:$0xf]
  %v97 = vld [vmem:[%s0 + $0x34] sm:$0xf]
  %v98 = vld [vmem:[%s0 + $0x38] sm:$0xf]
  %v99 = vld [vmem:[%s0 + $0x3c] sm:$0xf]
  %v100 = vld [vmem:[%s0 + $0x40] sm:$0xf]
  %v101 = vld [vmem:[%s0 + $0x44] sm:$0xf]
  %v102 = vld [vmem:[%s0 + $0x48] sm:$0xf]
  %v103 = vld [vmem:[%s0 + $0x4c] sm:$0xf]
  %v104 = vld [vmem:[%s0 + $0x50] sm:$0xf]
  %v105 = vld [vmem:[%s0 + $0x54] sm:$0xf]
  %v106 = vld [vmem:[%s0 + $0x58] sm:$0xf]
  %v107 = vld [vmem:[%s0 + $0x5c] sm:$0xf]
  %v108 = vld [vmem:[%s0 + $0x60] sm:$0xf]
  %v109 = vld [vmem:[%s0 + $0x64] sm:$0xf]
  %v110 = vld [vmem:[%s0 + $0x68] sm:$0xf]
  %v111 = vld [vmem:[%s0 + $0x6c] sm:$0xf]
  %v112 = vld [vmem:[%s0 + $0x70] sm:$0xf]
  %v113 = vld [vmem:[%s0 + $0x74] sm:$0xf]
  %v114 = vld [vmem:[%s0 + $0x78] sm:$0xf]
  %v115 = vld [vmem:[%s0 + $0x7c] sm:$0xf]
  %v116 = vld [vmem:[%s0 + $0x80] sm:$0xf]
  %v117 = vld [vmem:[%s0 + $0x84] sm:$0xf]
  %v118 = vld [vmem:[%s0 + $0x88] sm:$0xf]
  %v119 = vld [vmem:[%s0 + $0x8c] sm:$0xf]
  %v120 = vld [vmem:[%s0 + $0x90] sm:$0xf]
  %v121 = vld [vmem:[%s0 + $0x94] sm:$0xf]
  %v122 = vld [vmem:[%s0 + $0x98] sm:$0xf]
  %v123 = vld [vmem:[%s0 + $0x9c] sm:$0xf]
  %v124 = vld [vmem:[%s0 + $0xa0] sm:$0xf]
  %v125 = vld [vmem:[%s0 + $0xa4] sm:$0xf]
  %v126 = vld [vmem:[%s0 + $0xa8] sm:$0xf]
  %v127 = vld [vmem:[%s0 + $0xac] sm:$0xf]
  %v128 = vld [vmem:[%s0 + $0xb0] sm:$0xf]
  %v129 = vld [vmem:[%s0 + $0xb4] sm:$0xf]
  %v130 = vld [vmem:[%s0 + $0xb8] sm:$0xf]
  %v131 = vld [vmem:[%s0 + $0xbc] sm:$0xf]
  %v132 = vld [vmem:[%s0 + $0xc0] sm:$0xf]
  %v133 = vld [vmem:[%s0 + $0xc4] sm:$0xf]
  %v134 = vld [vmem:[%s0 + $0xc8] sm:$0xf]
  %v135 = vld [vmem:[%s0 + $0xcc] sm:$0xf]
  %v136 = vld [vmem:[%s0 + $0xd0] sm:$0xf]
  %v137 = vld [vmem:[%s0 + $0xd4] sm:$0xf]
  %v138 = vld [vmem:[%s0 + $0xd8] sm:$0xf]
  %v139 = vld [vmem:[%s0 + $0xdc] sm:$0xf]
  %v140 = vld [vmem:[%s0 + $0xe0] sm:$0xf]
  %v141 = vld [vmem:[%s0 + $0xe4] sm:$0xf]
  %v142 = vld [vmem:[%s0 + $0xe8] sm:$0xf]
  %v143 = vld [vmem:[%s0 + $0xec] sm:$0xf]
  %v144 = vld [vmem:[%s0 + $0xf0] sm:$0xf]
  %v145 = vld [vmem:[%s0 + $0xf4] sm:$0xf]
  %v146 = vld [vmem:[%s0 + $0xf8] sm:$0xf]
  %v147 = vld [vmem:[%s0 + $0xfc] sm:$0xf]
  %v148 = vld [vmem:[#allocation2] sm:$0xff]
  %v149 = vld [vmem:[#allocation2 + $0x8] sm:$0xff]
  %v150 = vld [vmem:[#allocation2 + $0x10] sm:$0xff]
  %v151 = vld [vmem:[#allocation2 + $0x18] sm:$0xff]
  %v152 = vld [vmem:[#allocation2 + $0x20] sm:$0xff]
  %v153 = vld [vmem:[#allocation2 + $0x28] sm:$0xff]
  %v154 = vld [vmem:[#allocation2 + $0x30] sm:$0xff]
  %v155 = vld [vmem:[#allocation2 + $0x38] sm:$0xff]
  %v156 = vld [vmem:[#allocation2 + $0x40] sm:$0xff]
  %v157 = vld [vmem:[#allocation2 + $0x48] sm:$0xff]
  %v158 = vld [vmem:[#allocation2 + $0x50] sm:$0xff]
  %v159 = vld [vmem:[#allocation2 + $0x58] sm:$0xff]
  %v160 = vld [vmem:[#allocation2 + $0x60] sm:$0xff]
  %v161 = vld [vmem:[#allocation2 + $0x68] sm:$0xff]
  %v162 = vld [vmem:[#allocation2 + $0x70] sm:$0xff]
  %v163 = vld [vmem:[#allocation2 + $0x78] sm:$0xff]
  %v164 = vld [vmem:[#allocation2 + $0x80] sm:$0xff]
  %v165 = vld [vmem:[#allocation2 + $0x88] sm:$0xff]
  %v166 = vld [vmem:[#allocation2 + $0x90] sm:$0xff]
  %v167 = vld [vmem:[#allocation2 + $0x98] sm:$0xff]
  %v168 = vld [vmem:[#allocation2 + $0xa0] sm:$0xff]
  %v169 = vld [vmem:[#allocation2 + $0xa8] sm:$0xff]
  %v170 = vld [vmem:[#allocation2 + $0xb0] sm:$0xff]
  %v171 = vld [vmem:[#allocation2 + $0xb8] sm:$0xff]
  %v172 = vld [vmem:[#allocation2 + $0xc0] sm:$0xff]
  %v173 = vld [vmem:[#allocation2 + $0xc8] sm:$0xff]
  %v174 = vld [vmem:[#allocation2 + $0xd0] sm:$0xff]
  %v175 = vld [vmem:[#allocation2 + $0xd8] sm:$0xff]
  %v176 = vld [vmem:[#allocation2 + $0xe0] sm:$0xff]
  %v177 = vld [vmem:[#allocation2 + $0xe8] sm:$0xff]
  %v178 = vld [vmem:[#allocation2 + $0xf0] sm:$0xff]
  %v179 = vld [vmem:[#allocation2 + $0xf8] sm:$0xff]
  %v180 = vld [vmem:[#allocation2 + $0x100] sm:$0xff]
  %v181 = vld [vmem:[#allocation2 + $0x108] sm:$0xff]
  %v182 = vld [vmem:[#allocation2 + $0x110] sm:$0xff]
  %v183 = vld [vmem:[#allocation2 + $0x118] sm:$0xff]
  %v184 = vld [vmem:[#allocation2 + $0x120] sm:$0xff]
  %v185 = vld [vmem:[#allocation2 + $0x128] sm:$0xff]
  %v186 = vld [vmem:[#allocation2 + $0x130] sm:$0xff]
  %v187 = vld [vmem:[#allocation2 + $0x138] sm:$0xff]
  %v188 = vld [vmem:[#allocation2 + $0x140] sm:$0xff]
  %v189 = vld [vmem:[#allocation2 + $0x148] sm:$0xff]
  %v190 = vld [vmem:[#allocation2 + $0x150] sm:$0xff]
  %v191 = vld [vmem:[#allocation2 + $0x158] sm:$0xff]
  %v192 = vld [vmem:[#allocation2 + $0x160] sm:$0xff]
  %v193 = vld [vmem:[#allocation2 + $0x168] sm:$0xff]
  %v194 = vld [vmem:[#allocation2 + $0x170] sm:$0xff]
  %v195 = vld [vmem:[#allocation2 + $0x178] sm:$0xff]
  %v196 = vld [vmem:[#allocation2 + $0x180] sm:$0xff]
  %v197 = vld [vmem:[#allocation2 + $0x188] sm:$0xff]
  %v198 = vld [vmem:[#allocation2 + $0x190] sm:$0xff]
  %v199 = vld [vmem:[#allocation2 + $0x198] sm:$0xff]
  %v200 = vld [vmem:[#allocation2 + $0x1a0] sm:$0xff]
  %v201 = vld [vmem:[#allocation2 + $0x1a8] sm:$0xff]
  %v202 = vld [vmem:[#allocation2 + $0x1b0] sm:$0xff]
  %v203 = vld [vmem:[#allocation2 + $0x1b8] sm:$0xff]
  %v204 = vld [vmem:[#allocation2 + $0x1c0] sm:$0xff]
  %v205 = vld [vmem:[#allocation2 + $0x1c8] sm:$0xff]
  %v206 = vld [vmem:[#allocation2 + $0x1d0] sm:$0xff]
  %v207 = vld [vmem:[#allocation2 + $0x1d8] sm:$0xff]
  %v208 = vld [vmem:[#allocation2 + $0x1e0] sm:$0xff]
  %v209 = vld [vmem:[#allocation2 + $0x1e8] sm:$0xff]
  %v210 = vld [vmem:[#allocation2 + $0x1f0] sm:$0xff]
  %v211 = vld [vmem:[#allocation2 + $0x1f8] sm:$0xff]
  %v212 = vld [vmem:[%s1] sm:$0xf]
  %v213 = vld [vmem:[%s1 + $0x4] sm:$0xf]
  %v214 = vld [vmem:[%s1 + $0x8] sm:$0xf]
  %v215 = vld [vmem:[%s1 + $0xc] sm:$0xf]
  %v216 = vld [vmem:[%s1 + $0x10] sm:$0xf]
  %v217 = vld [vmem:[%s1 + $0x14] sm:$0xf]
  %v282 = vunpack.c.l.b16 %v84
  %v283 = vunpack.c.l.b16 %v85
  %v284 = vunpack.c.l.b16 %v86
  %v285 = vunpack.c.l.b16 %v87
  %v286 = vunpack.c.l.b16 %v88
  %v287 = vunpack.c.l.b16 %v89
  %v288 = vunpack.c.l.b16 %v90
  %v289 = vunpack.c.l.b16 %v91
  %v290 = vunpack.c.l.b16 %v92
  %v291 = vunpack.c.l.b16 %v93
  %v292 = vunpack.c.l.b16 %v94
  %v293 = vunpack.c.l.b16 %v95
  %v294 = vunpack.c.l.b16 %v96
  %v295 = vunpack.c.l.b16 %v97
  %v296 = vunpack.c.l.b16 %v98
  %v297 = vunpack.c.l.b16 %v99
  %v298 = vunpack.c.l.b16 %v100
  %v299 = vunpack.c.l.b16 %v101
  %v300 = vunpack.c.l.b16 %v102
  %v301 = vunpack.c.l.b16 %v103
  %v302 = vunpack.c.l.b16 %v104
  %v303 = vunpack.c.l.b16 %v105
  %v304 = vunpack.c.l.b16 %v106
  %v305 = vunpack.c.l.b16 %v107
  %v306 = vunpack.c.l.b16 %v108
  %v307 = vunpack.c.l.b16 %v109
  %v308 = vunpack.c.l.b16 %v110
  %v309 = vunpack.c.l.b16 %v111
  %v310 = vunpack.c.l.b16 %v112
  %v311 = vunpack.c.l.b16 %v113
  %v312 = vunpack.c.l.b16 %v114
  %v313 = vunpack.c.l.b16 %v115
  %v314 = vunpack.c.l.b16 %v116
  %v315 = vunpack.c.l.b16 %v117
  %v316 = vunpack.c.l.b16 %v118
  %v317 = vunpack.c.l.b16 %v119
  %v318 = vunpack.c.l.b16 %v120
  %v319 = vunpack.c.l.b16 %v121
  %v320 = vunpack.c.l.b16 %v122
  %v321 = vunpack.c.l.b16 %v123
  %v322 = vunpack.c.l.b16 %v124
  %v323 = vunpack.c.l.b16 %v125
  %v324 = vunpack.c.l.b16 %v126
  %v325 = vunpack.c.l.b16 %v127
  %v326 = vunpack.c.l.b16 %v128
  %v327 = vunpack.c.l.b16 %v129
  %v328 = vunpack.c.l.b16 %v130
  %v329 = vunpack.c.l.b16 %v131
  %v330 = vunpack.c.l.b16 %v132
  %v331 = vunpack.c.l.b16 %v133
  %v332 = vunpack.c.l.b16 %v134
  %v333 = vunpack.c.l.b16 %v135
  %v334 = vunpack.c.l.b16 %v136
  %v335 = vunpack.c.l.b16 %v137
  %v336 = vunpack.c.l.b16 %v138
  %v337 = vunpack.c.l.b16 %v139
  %v338 = vunpack.c.l.b16 %v140
  %v339 = vunpack.c.l.b16 %v141
  %v340 = vunpack.c.l.b16 %v142
  %v341 = vunpack.c.l.b16 %v143
  %v342 = vunpack.c.l.b16 %v144
  %v343 = vunpack.c.l.b16 %v145
  %v344 = vunpack.c.l.b16 %v146
  %v345 = vunpack.c.l.b16 %v147
  %v346 = vpack.c.b16 %v283, %v282
  %v347 = vpack.c.b16 %v285, %v284
  %v348 = vpack.c.b16 %v287, %v286
  %v349 = vpack.c.b16 %v289, %v288
  %v350 = vpack.c.b16 %v291, %v290
  %v351 = vpack.c.b16 %v293, %v292
  %v352 = vpack.c.b16 %v295, %v294
  %v353 = vpack.c.b16 %v297, %v296
  %v354 = vpack.c.b16 %v299, %v298
  %v355 = vpack.c.b16 %v301, %v300
  %v356 = vpack.c.b16 %v303, %v302
  %v357 = vpack.c.b16 %v305, %v304
  %v358 = vpack.c.b16 %v307, %v306
  %v359 = vpack.c.b16 %v309, %v308
  %v360 = vpack.c.b16 %v311, %v310
  %v361 = vpack.c.b16 %v313, %v312
  %v362 = vpack.c.b16 %v315, %v314
  %v363 = vpack.c.b16 %v317, %v316
  %v364 = vpack.c.b16 %v319, %v318
  %v365 = vpack.c.b16 %v321, %v320
  %v366 = vpack.c.b16 %v323, %v322
  %v367 = vpack.c.b16 %v325, %v324
  %v368 = vpack.c.b16 %v327, %v326
  %v369 = vpack.c.b16 %v329, %v328
  %v370 = vpack.c.b16 %v331, %v330
  %v371 = vpack.c.b16 %v333, %v332
  %v372 = vpack.c.b16 %v335, %v334
  %v373 = vpack.c.b16 %v337, %v336
  %v374 = vpack.c.b16 %v339, %v338
  %v375 = vpack.c.b16 %v341, %v340
  %v376 = vpack.c.b16 %v343, %v342
  %v377 = vpack.c.b16 %v345, %v344
  %v384 = vunpack.c.l.b16 %v212
  %v385 = vunpack.c.l.b16 %v213
  %v386 = vunpack.c.l.b16 %v214
  %v387 = vunpack.c.l.b16 %v215
  %v388 = vunpack.c.l.b16 %v216
  %v389 = vunpack.c.l.b16 %v217
  %v390 = vpack.c.b16 %v385, %v384
  %v391 = vpack.c.b16 %v387, %v386
  %v392 = vpack.c.b16 %v389, %v388
  %vm396 = vcmask 392192
  %v398 = vsel %vm396, %v346, 0
  %v401 = vsel %vm396, %v347, 0
  %v404 = vsel %vm396, %v348, 0
  %v407 = vsel %vm396, %v349, 0
  %v410 = vsel %vm396, %v350, 0
  %v413 = vsel %vm396, %v351, 0
  %v416 = vsel %vm396, %v352, 0
  %v419 = vsel %vm396, %v353, 0
  %v422 = vsel %vm396, %v354, 0
  %v425 = vsel %vm396, %v355, 0
  %v428 = vsel %vm396, %v356, 0
  %v431 = vsel %vm396, %v357, 0
  %v434 = vsel %vm396, %v358, 0
  %v437 = vsel %vm396, %v359, 0
  %v440 = vsel %vm396, %v360, 0
  %v443 = vsel %vm396, %v361, 0
  %v446 = vsel %vm396, %v362, 0
  %v449 = vsel %vm396, %v363, 0
  %v452 = vsel %vm396, %v364, 0
  %v455 = vsel %vm396, %v365, 0
  %v458 = vsel %vm396, %v366, 0
  %v461 = vsel %vm396, %v367, 0
  %v464 = vsel %vm396, %v368, 0
  %v467 = vsel %vm396, %v369, 0
  %v470 = vsel %vm396, %v370, 0
  %v473 = vsel %vm396, %v371, 0
  %v476 = vsel %vm396, %v372, 0
  %v479 = vsel %vm396, %v373, 0
  %v482 = vsel %vm396, %v374, 0
  %v485 = vsel %vm396, %v375, 0
  %v488 = vsel %vm396, %v376, 0
  %v491 = vsel %vm396, %v377, 0
  %493 = vmatprep.subr.bf16.mxu0 0
  %494 = vmatpush1.bf16.msra.mxu0 %v390
  %495 = vmatprep.subr.bf16.mxu0 0
  %496 = vmatpush1.bf16.msra.mxu0 %v391
  %497 = vmatprep.subr.bf16.mxu0 0
  %498 = vmatpush1.bf16.msra.mxu0 %v392
  %499 = vmatprep.subr.bf16.mxu0 0
  %500 = vmatpush1.bf16.msra.mxu0 0
  %501 = vmatprep.subr.bf16.mxu0 0
  %502 = vmatpush1.bf16.msra.mxu0 0
  %503 = vmatprep.subr.bf16.mxu0 0
  %504 = vmatpush1.bf16.msra.mxu0 0
  %505 = vmatprep.subr.bf16.mxu0 0
  %506 = vmatpush1.bf16.msra.mxu0 0
  %507 = vmatprep.subr.bf16.mxu0 0
  %508 = vmatpush1.bf16.msra.mxu0 0
  %509 = vmatprep.subr.bf16.mxu0 0
  %510 = vmatpush1.bf16.msra.mxu0 0
  %511 = vmatprep.subr.bf16.mxu0 0
  %512 = vmatpush1.bf16.msra.mxu0 0
  %513 = vmatprep.subr.bf16.mxu0 0
  %514 = vmatpush1.bf16.msra.mxu0 0
  %515 = vmatprep.subr.bf16.mxu0 0
  %516 = vmatpush1.bf16.msra.mxu0 0
  %517 = vmatprep.subr.bf16.mxu0 0
  %518 = vmatpush1.bf16.msra.mxu0 0
  %519 = vmatprep.subr.bf16.mxu0 0
  %520 = vmatpush1.bf16.msra.mxu0 0
  %521 = vmatprep.subr.bf16.mxu0 0
  %522 = vmatpush1.bf16.msra.mxu0 0
  %523 = vmatprep.subr.bf16.mxu0 0
  %524 = vmatpush1.bf16.msra.mxu0 0
  %525 = vmatprep.mubr.bf16.mxu0 0
  %526 = vmatmul.mubr.bf16.gmra.mrb[0].mxu0 %v398
  %v527 = vpop.f32.mrb[0].mxu0
  %v528 = vadd.f32 0.0, %v527
  %v529 = vpop.f32.mrb[0].mxu0
  %v530 = vpop.f32.mrb[0].mxu0
  %v531 = vadd.f32 0.0, %v530
  %v532 = vpop.f32.mrb[0].mxu0
  %533 = vmatprep.mubr.bf16.mxu0 0
  %534 = vmatmul.mubr.bf16.gmra.mrb[0].mxu0 %v401
  %v535 = vpop.f32.mrb[0].mxu0
  %v536 = vadd.f32 0.0, %v535
  %v537 = vpop.f32.mrb[0].mxu0
  %v538 = vpop.f32.mrb[0].mxu0
  %v539 = vadd.f32 0.0, %v538
  %v540 = vpop.f32.mrb[0].mxu0
  %541 = vmatprep.mubr.bf16.mxu0 0
  %542 = vmatmul.mubr.bf16.gmra.mrb[0].mxu0 %v404
  %v543 = vpop.f32.mrb[0].mxu0
  %v544 = vadd.f32 0.0, %v543
  %v545 = vpop.f32.mrb[0].mxu0
  %v546 = vpop.f32.mrb[0].mxu0
  %v547 = vadd.f32 0.0, %v546
  %v548 = vpop.f32.mrb[0].mxu0
  %549 = vmatprep.mubr.bf16.mxu0 0
  %550 = vmatmul.mubr.bf16.gmra.mrb[0].mxu0 %v407
  %v551 = vpop.f32.mrb[0].mxu0
  %v552 = vadd.f32 0.0, %v551
  %v553 = vpop.f32.mrb[0].mxu0
  %v554 = vpop.f32.mrb[0].mxu0
  %v555 = vadd.f32 0.0, %v554
  %v556 = vpop.f32.mrb[0].mxu0
  %557 = vmatprep.mubr.bf16.mxu0 0
  %558 = vmatmul.mubr.bf16.gmra.mrb[0].mxu0 %v410
  %v559 = vpop.f32.mrb[0].mxu0
  %v560 = vadd.f32 0.0, %v559
  %v561 = vpop.f32.mrb[0].mxu0
  %v562 = vpop.f32.mrb[0].mxu0
  %v563 = vadd.f32 0.0, %v562
  %v564 = vpop.f32.mrb[0].mxu0
  %565 = vmatprep.mubr.bf16.mxu0 0
  %566 = vmatmul.mubr.bf16.gmra.mrb[0].mxu0 %v413
  %v567 = vpop.f32.mrb[0].mxu0
  %v568 = vadd.f32 0.0, %v567
  %v569 = vpop.f32.mrb[0].mxu0
  %v570 = vpop.f32.mrb[0].mxu0
  %v571 = vadd.f32 0.0, %v570
  %v572 = vpop.f32.mrb[0].mxu0
  %573 = vmatprep.mubr.bf16.mxu0 0
  %574 = vmatmul.mubr.bf16.gmra.mrb[0].mxu0 %v416
  %v575 = vpop.f32.mrb[0].mxu0
  %v576 = vadd.f32 0.0, %v575
  %v577 = vpop.f32.mrb[0].mxu0
  %v578 = vpop.f32.mrb[0].mxu0
  %v579 = vadd.f32 0.0, %v578
  %v580 = vpop.f32.mrb[0].mxu0
  %581 = vmatprep.mubr.bf16.mxu0 0
  %582 = vmatmul.mubr.bf16.gmra.mrb[0].mxu0 %v419
  %v583 = vpop.f32.mrb[0].mxu0
  %v584 = vadd.f32 0.0, %v583
  %v585 = vpop.f32.mrb[0].mxu0
  %v586 = vpop.f32.mrb[0].mxu0
  %v587 = vadd.f32 0.0, %v586
  %v588 = vpop.f32.mrb[0].mxu0
  %589 = vmatprep.mubr.bf16.mxu0 0
  %590 = vmatmul.mubr.bf16.gmra.mrb[0].mxu0 %v422
  %v591 = vpop.f32.mrb[0].mxu0
  %v592 = vadd.f32 0.0, %v591
  %v593 = vpop.f32.mrb[0].mxu0
  %v594 = vpop.f32.mrb[0].mxu0
  %v595 = vadd.f32 0.0, %v594
  %v596 = vpop.f32.mrb[0].mxu0
  %597 = vmatprep.mubr.bf16.mxu0 0
  %598 = vmatmul.mubr.bf16.gmra.mrb[0].mxu0 %v425
  %v599 = vpop.f32.mrb[0].mxu0
  %v600 = vadd.f32 0.0, %v599
  %v601 = vpop.f32.mrb[0].mxu0
  %v602 = vpop.f32.mrb[0].mxu0
  %v603 = vadd.f32 0.0, %v602
  %v604 = vpop.f32.mrb[0].mxu0
  %605 = vmatprep.mubr.bf16.mxu0 0
  %606 = vmatmul.mubr.bf16.gmra.mrb[0].mxu0 %v428
  %v607 = vpop.f32.mrb[0].mxu0
  %v608 = vadd.f32 0.0, %v607
  %v609 = vpop.f32.mrb[0].mxu0
  %v610 = vpop.f32.mrb[0].mxu0
  %v611 = vadd.f32 0.0, %v610
  %v612 = vpop.f32.mrb[0].mxu0
  %613 = vmatprep.mubr.bf16.mxu0 0
  %614 = vmatmul.mubr.bf16.gmra.mrb[0].mxu0 %v431
  %v615 = vpop.f32.mrb[0].mxu0
  %v616 = vadd.f32 0.0, %v615
  %v617 = vpop.f32.mrb[0].mxu0
  %v618 = vpop.f32.mrb[0].mxu0
  %v619 = vadd.f32 0.0, %v618
  %v620 = vpop.f32.mrb[0].mxu0
  %621 = vmatprep.mubr.bf16.mxu0 0
  %622 = vmatmul.mubr.bf16.gmra.mrb[0].mxu0 %v434
  %v623 = vpop.f32.mrb[0].mxu0
  %v624 = vadd.f32 0.0, %v623
  %v625 = vpop.f32.mrb[0].mxu0
  %v626 = vpop.f32.mrb[0].mxu0
  %v627 = vadd.f32 0.0, %v626
  %v628 = vpop.f32.mrb[0].mxu0
  %629 = vmatprep.mubr.bf16.mxu0 0
  %630 = vmatmul.mubr.bf16.gmra.mrb[0].mxu0 %v437
  %v631 = vpop.f32.mrb[0].mxu0
  %v632 = vadd.f32 0.0, %v631
  %v633 = vpop.f32.mrb[0].mxu0
  %v634 = vpop.f32.mrb[0].mxu0
  %v635 = vadd.f32 0.0, %v634
  %v636 = vpop.f32.mrb[0].mxu0
  %637 = vmatprep.mubr.bf16.mxu0 0
  %638 = vmatmul.mubr.bf16.gmra.mrb[0].mxu0 %v440
  %v639 = vpop.f32.mrb[0].mxu0
  %v640 = vadd.f32 0.0, %v639
  %v641 = vpop.f32.mrb[0].mxu0
  %v642 = vpop.f32.mrb[0].mxu0
  %v643 = vadd.f32 0.0, %v642
  %v644 = vpop.f32.mrb[0].mxu0
  %645 = vmatprep.mubr.bf16.mxu0 0
  %646 = vmatmul.mubr.bf16.gmra.mrb[0].mxu0 %v443
  %v647 = vpop.f32.mrb[0].mxu0
  %v648 = vadd.f32 0.0, %v647
  %v649 = vpop.f32.mrb[0].mxu0
  %v650 = vpop.f32.mrb[0].mxu0
  %v651 = vadd.f32 0.0, %v650
  %v652 = vpop.f32.mrb[0].mxu0
  %653 = vmatprep.mubr.bf16.mxu0 0
  %654 = vmatmul.mubr.bf16.gmra.mrb[0].mxu0 %v446
  %v655 = vpop.f32.mrb[0].mxu0
  %v656 = vadd.f32 0.0, %v655
  %v657 = vpop.f32.mrb[0].mxu0
  %v658 = vpop.f32.mrb[0].mxu0
  %v659 = vadd.f32 0.0, %v658
  %v660 = vpop.f32.mrb[0].mxu0
  %661 = vmatprep.mubr.bf16.mxu0 0
  %662 = vmatmul.mubr.bf16.gmra.mrb[0].mxu0 %v449
  %v663 = vpop.f32.mrb[0].mxu0
  %v664 = vadd.f32 0.0, %v663
  %v665 = vpop.f32.mrb[0].mxu0
  %v666 = vpop.f32.mrb[0].mxu0
  %v667 = vadd.f32 0.0, %v666
  %v668 = vpop.f32.mrb[0].mxu0
  %669 = vmatprep.mubr.bf16.mxu0 0
  %670 = vmatmul.mubr.bf16.gmra.mrb[0].mxu0 %v452
  %v671 = vpop.f32.mrb[0].mxu0
  %v672 = vadd.f32 0.0, %v671
  %v673 = vpop.f32.mrb[0].mxu0
  %v674 = vpop.f32.mrb[0].mxu0
  %v675 = vadd.f32 0.0, %v674
  %v676 = vpop.f32.mrb[0].mxu0
  %677 = vmatprep.mubr.bf16.mxu0 0
  %678 = vmatmul.mubr.bf16.gmra.mrb[0].mxu0 %v455
  %v679 = vpop.f32.mrb[0].mxu0
  %v680 = vadd.f32 0.0, %v679
  %v681 = vpop.f32.mrb[0].mxu0
  %v682 = vpop.f32.mrb[0].mxu0
  %v683 = vadd.f32 0.0, %v682
  %v684 = vpop.f32.mrb[0].mxu0
  %685 = vmatprep.mubr.bf16.mxu0 0
  %686 = vmatmul.mubr.bf16.gmra.mrb[0].mxu0 %v458
  %v687 = vpop.f32.mrb[0].mxu0
  %v688 = vadd.f32 0.0, %v687
  %v689 = vpop.f32.mrb[0].mxu0
  %v690 = vpop.f32.mrb[0].mxu0
  %v691 = vadd.f32 0.0, %v690
  %v692 = vpop.f32.mrb[0].mxu0
  %693 = vmatprep.mubr.bf16.mxu0 0
  %694 = vmatmul.mubr.bf16.gmra.mrb[0].mxu0 %v461
  %v695 = vpop.f32.mrb[0].mxu0
  %v696 = vadd.f32 0.0, %v695
  %v697 = vpop.f32.mrb[0].mxu0
  %v698 = vpop.f32.mrb[0].mxu0
  %v699 = vadd.f32 0.0, %v698
  %v700 = vpop.f32.mrb[0].mxu0
  %701 = vmatprep.mubr.bf16.mxu0 0
  %702 = vmatmul.mubr.bf16.gmra.mrb[0].mxu0 %v464
  %v703 = vpop.f32.mrb[0].mxu0
  %v704 = vadd.f32 0.0, %v703
  %v705 = vpop.f32.mrb[0].mxu0
  %v706 = vpop.f32.mrb[0].mxu0
  %v707 = vadd.f32 0.0, %v706
  %v708 = vpop.f32.mrb[0].mxu0
  %709 = vmatprep.mubr.bf16.mxu0 0
  %710 = vmatmul.mubr.bf16.gmra.mrb[0].mxu0 %v467
  %v711 = vpop.f32.mrb[0].mxu0
  %v712 = vadd.f32 0.0, %v711
  %v713 = vpop.f32.mrb[0].mxu0
  %v714 = vpop.f32.mrb[0].mxu0
  %v715 = vadd.f32 0.0, %v714
  %v716 = vpop.f32.mrb[0].mxu0
  %717 = vmatprep.mubr.bf16.mxu0 0
  %718 = vmatmul.mubr.bf16.gmra.mrb[0].mxu0 %v470
  %v719 = vpop.f32.mrb[0].mxu0
  %v720 = vadd.f32 0.0, %v719
  %v721 = vpop.f32.mrb[0].mxu0
  %v722 = vpop.f32.mrb[0].mxu0
  %v723 = vadd.f32 0.0, %v722
  %v724 = vpop.f32.mrb[0].mxu0
  %725 = vmatprep.mubr.bf16.mxu0 0
  %726 = vmatmul.mubr.bf16.gmra.mrb[0].mxu0 %v473
  %v727 = vpop.f32.mrb[0].mxu0
  %v728 = vadd.f32 0.0, %v727
  %v729 = vpop.f32.mrb[0].mxu0
  %v730 = vpop.f32.mrb[0].mxu0
  %v731 = vadd.f32 0.0, %v730
  %v732 = vpop.f32.mrb[0].mxu0
  %733 = vmatprep.mubr.bf16.mxu0 0
  %734 = vmatmul.mubr.bf16.gmra.mrb[0].mxu0 %v476
  %v735 = vpop.f32.mrb[0].mxu0
  %v736 = vadd.f32 0.0, %v735
  %v737 = vpop.f32.mrb[0].mxu0
  %v738 = vpop.f32.mrb[0].mxu0
  %v739 = vadd.f32 0.0, %v738
  %v740 = vpop.f32.mrb[0].mxu0
  %741 = vmatprep.mubr.bf16.mxu0 0
  %742 = vmatmul.mubr.bf16.gmra.mrb[0].mxu0 %v479
  %v743 = vpop.f32.mrb[0].mxu0
  %v744 = vadd.f32 0.0, %v743
  %v745 = vpop.f32.mrb[0].mxu0
  %v746 = vpop.f32.mrb[0].mxu0
  %v747 = vadd.f32 0.0, %v746
  %v748 = vpop.f32.mrb[0].mxu0
  %749 = vmatprep.mubr.bf16.mxu0 0
  %750 = vmatmul.mubr.bf16.gmra.mrb[0].mxu0 %v482
  %v751 = vpop.f32.mrb[0].mxu0
  %v752 = vadd.f32 0.0, %v751
  %v753 = vpop.f32.mrb[0].mxu0
  %v754 = vpop.f32.mrb[0].mxu0
  %v755 = vadd.f32 0.0, %v754
  %v756 = vpop.f32.mrb[0].mxu0
  %757 = vmatprep.mubr.bf16.mxu0 0
  %758 = vmatmul.mubr.bf16.gmra.mrb[0].mxu0 %v485
  %v759 = vpop.f32.mrb[0].mxu0
  %v760 = vadd.f32 0.0, %v759
  %v761 = vpop.f32.mrb[0].mxu0
  %v762 = vpop.f32.mrb[0].mxu0
  %v763 = vadd.f32 0.0, %v762
  %v764 = vpop.f32.mrb[0].mxu0
  %765 = vmatprep.mubr.bf16.mxu0 0
  %766 = vmatmul.mubr.bf16.gmra.mrb[0].mxu0 %v488
  %v767 = vpop.f32.mrb[0].mxu0
  %v768 = vadd.f32 0.0, %v767
  %v769 = vpop.f32.mrb[0].mxu0
  %v770 = vpop.f32.mrb[0].mxu0
  %v771 = vadd.f32 0.0, %v770
  %v772 = vpop.f32.mrb[0].mxu0
  %773 = vmatprep.mubr.bf16.mxu0 0
  %774 = vmatmul.mubr.bf16.gmra.mrb[0].mxu0 %v491
  %v775 = vpop.f32.mrb[0].mxu0
  %v776 = vadd.f32 0.0, %v775
  %v777 = vpop.f32.mrb[0].mxu0
  %v778 = vpop.f32.mrb[0].mxu0
  %v779 = vadd.f32 0.0, %v778
  %v780 = vpop.f32.mrb[0].mxu0
  %781 = vdwg.mxu0
  %v782 = vadd.f32 %v148, %v528
  %v783 = vadd.f32 %v149, %v531
  %v784 = vadd.f32 %v150, %v536
  %v785 = vadd.f32 %v151, %v539
  %v786 = vadd.f32 %v152, %v544
  %v787 = vadd.f32 %v153, %v547
  %v788 = vadd.f32 %v154, %v552
  %v789 = vadd.f32 %v155, %v555
  %v790 = vadd.f32 %v156, %v560
  %v791 = vadd.f32 %v157, %v563
  %v792 = vadd.f32 %v158, %v568
  %v793 = vadd.f32 %v159, %v571
  %v794 = vadd.f32 %v160, %v576
  %v795 = vadd.f32 %v161, %v579
  %v796 = vadd.f32 %v162, %v584
  %v797 = vadd.f32 %v163, %v587
  %v798 = vadd.f32 %v164, %v592
  %v799 = vadd.f32 %v165, %v595
  %v800 = vadd.f32 %v166, %v600
  %v801 = vadd.f32 %v167, %v603
  %v802 = vadd.f32 %v168, %v608
  %v803 = vadd.f32 %v169, %v611
  %v804 = vadd.f32 %v170, %v616
  %v805 = vadd.f32 %v171, %v619
  %v806 = vadd.f32 %v172, %v624
  %v807 = vadd.f32 %v173, %v627
  %v808 = vadd.f32 %v174, %v632
  %v809 = vadd.f32 %v175, %v635
  %v810 = vadd.f32 %v176, %v640
  %v811 = vadd.f32 %v177, %v643
  %v812 = vadd.f32 %v178, %v648
  %v813 = vadd.f32 %v179, %v651
  %v814 = vadd.f32 %v180, %v656
  %v815 = vadd.f32 %v181, %v659
  %v816 = vadd.f32 %v182, %v664
  %v817 = vadd.f32 %v183, %v667
  %v818 = vadd.f32 %v184, %v672
  %v819 = vadd.f32 %v185, %v675
  %v820 = vadd.f32 %v186, %v680
  %v821 = vadd.f32 %v187, %v683
  %v822 = vadd.f32 %v188, %v688
  %v823 = vadd.f32 %v189, %v691
  %v824 = vadd.f32 %v190, %v696
  %v825 = vadd.f32 %v191, %v699
  %v826 = vadd.f32 %v192, %v704
  %v827 = vadd.f32 %v193, %v707
  %v828 = vadd.f32 %v194, %v712
  %v829 = vadd.f32 %v195, %v715
  %v830 = vadd.f32 %v196, %v720
  %v831 = vadd.f32 %v197, %v723
  %v832 = vadd.f32 %v198, %v728
  %v833 = vadd.f32 %v199, %v731
  %v834 = vadd.f32 %v200, %v736
  %v835 = vadd.f32 %v201, %v739
  %v836 = vadd.f32 %v202, %v744
  %v837 = vadd.f32 %v203, %v747
  %v838 = vadd.f32 %v204, %v752
  %v839 = vadd.f32 %v205, %v755
  %v840 = vadd.f32 %v206, %v760
  %v841 = vadd.f32 %v207, %v763
  %v842 = vadd.f32 %v208, %v768
  %v843 = vadd.f32 %v209, %v771
  %v844 = vadd.f32 %v210, %v776
  %v845 = vadd.f32 %v211, %v779
  %vm846 = vcmask 64512
  %847 = vst.msk [vmem:[#allocation2] sm:$0xff] %vm846, %v782
  %848 = vst.msk [vmem:[#allocation2 + $0x8] sm:$0xff] %vm846, %v783
  %849 = vst.msk [vmem:[#allocation2 + $0x10] sm:$0xff] %vm846, %v784
  %850 = vst.msk [vmem:[#allocation2 + $0x18] sm:$0xff] %vm846, %v785
  %851 = vst.msk [vmem:[#allocation2 + $0x20] sm:$0xff] %vm846, %v786
  %852 = vst.msk [vmem:[#allocation2 + $0x28] sm:$0xff] %vm846, %v787
  %853 = vst.msk [vmem:[#allocation2 + $0x30] sm:$0xff] %vm846, %v788
  %854 = vst.msk [vmem:[#allocation2 + $0x38] sm:$0xff] %vm846, %v789
  %855 = vst.msk [vmem:[#allocation2 + $0x40] sm:$0xff] %vm846, %v790
  %856 = vst.msk [vmem:[#allocation2 + $0x48] sm:$0xff] %vm846, %v791
  %857 = vst.msk [vmem:[#allocation2 + $0x50] sm:$0xff] %vm846, %v792
  %858 = vst.msk [vmem:[#allocation2 + $0x58] sm:$0xff] %vm846, %v793
  %859 = vst.msk [vmem:[#allocation2 + $0x60] sm:$0xff] %vm846, %v794
  %860 = vst.msk [vmem:[#allocation2 + $0x68] sm:$0xff] %vm846, %v795
  %861 = vst.msk [vmem:[#allocation2 + $0x70] sm:$0xff] %vm846, %v796
  %862 = vst.msk [vmem:[#allocation2 + $0x78] sm:$0xff] %vm846, %v797
  %863 = vst.msk [vmem:[#allocation2 + $0x80] sm:$0xff] %vm846, %v798
  %864 = vst.msk [vmem:[#allocation2 + $0x88] sm:$0xff] %vm846, %v799
  %865 = vst.msk [vmem:[#allocation2 + $0x90] sm:$0xff] %vm846, %v800
  %866 = vst.msk [vmem:[#allocation2 + $0x98] sm:$0xff] %vm846, %v801
  %867 = vst.msk [vmem:[#allocation2 + $0xa0] sm:$0xff] %vm846, %v802
  %868 = vst.msk [vmem:[#allocation2 + $0xa8] sm:$0xff] %vm846, %v803
  %869 = vst.msk [vmem:[#allocation2 + $0xb0] sm:$0xff] %vm846, %v804
  %870 = vst.msk [vmem:[#allocation2 + $0xb8] sm:$0xff] %vm846, %v805
  %871 = vst.msk [vmem:[#allocation2 + $0xc0] sm:$0xff] %vm846, %v806
  %872 = vst.msk [vmem:[#allocation2 + $0xc8] sm:$0xff] %vm846, %v807
  %873 = vst.msk [vmem:[#allocation2 + $0xd0] sm:$0xff] %vm846, %v808
  %874 = vst.msk [vmem:[#allocation2 + $0xd8] sm:$0xff] %vm846, %v809
  %875 = vst.msk [vmem:[#allocation2 + $0xe0] sm:$0xff] %vm846, %v810
  %876 = vst.msk [vmem:[#allocation2 + $0xe8] sm:$0xff] %vm846, %v811
  %877 = vst.msk [vmem:[#allocation2 + $0xf0] sm:$0xff] %vm846, %v812
  %878 = vst.msk [vmem:[#allocation2 + $0xf8] sm:$0xff] %vm846, %v813
  %879 = vst.msk [vmem:[#allocation2 + $0x100] sm:$0xff] %vm846, %v814
  %880 = vst.msk [vmem:[#allocation2 + $0x108] sm:$0xff] %vm846, %v815
  %881 = vst.msk [vmem:[#allocation2 + $0x110] sm:$0xff] %vm846, %v816
  %882 = vst.msk [vmem:[#allocation2 + $0x118] sm:$0xff] %vm846, %v817
  %883 = vst.msk [vmem:[#allocation2 + $0x120] sm:$0xff] %vm846, %v818
  %884 = vst.msk [vmem:[#allocation2 + $0x128] sm:$0xff] %vm846, %v819
  %885 = vst.msk [vmem:[#allocation2 + $0x130] sm:$0xff] %vm846, %v820
  %886 = vst.msk [vmem:[#allocation2 + $0x138] sm:$0xff] %vm846, %v821
  %887 = vst.msk [vmem:[#allocation2 + $0x140] sm:$0xff] %vm846, %v822
  %888 = vst.msk [vmem:[#allocation2 + $0x148] sm:$0xff] %vm846, %v823
  %889 = vst.msk [vmem:[#allocation2 + $0x150] sm:$0xff] %vm846, %v824
  %890 = vst.msk [vmem:[#allocation2 + $0x158] sm:$0xff] %vm846, %v825
  %891 = vst.msk [vmem:[#allocation2 + $0x160] sm:$0xff] %vm846, %v826
  %892 = vst.msk [vmem:[#allocation2 + $0x168] sm:$0xff] %vm846, %v827
  %893 = vst.msk [vmem:[#allocation2 + $0x170] sm:$0xff] %vm846, %v828
  %894 = vst.msk [vmem:[#allocation2 + $0x178] sm:$0xff] %vm846, %v829
  %895 = vst.msk [vmem:[#allocation2 + $0x180] sm:$0xff] %vm846, %v830
  %896 = vst.msk [vmem:[#allocation2 + $0x188] sm:$0xff] %vm846, %v831
  %897 = vst.msk [vmem:[#allocation2 + $0x190] sm:$0xff] %vm846, %v832
  %898 = vst.msk [vmem:[#allocation2 + $0x198] sm:$0xff] %vm846, %v833
  %899 = vst.msk [vmem:[#allocation2 + $0x1a0] sm:$0xff] %vm846, %v834
  %900 = vst.msk [vmem:[#allocation2 + $0x1a8] sm:$0xff] %vm846, %v835
  %901 = vst.msk [vmem:[#allocation2 + $0x1b0] sm:$0xff] %vm846, %v836
  %902 = vst.msk [vmem:[#allocation2 + $0x1b8] sm:$0xff] %vm846, %v837
  %903 = vst.msk [vmem:[#allocation2 + $0x1c0] sm:$0xff] %vm846, %v838
  %904 = vst.msk [vmem:[#allocation2 + $0x1c8] sm:$0xff] %vm846, %v839
  %905 = vst.msk [vmem:[#allocation2 + $0x1d0] sm:$0xff] %vm846, %v840
  %906 = vst.msk [vmem:[#allocation2 + $0x1d8] sm:$0xff] %vm846, %v841
  %907 = vst.msk [vmem:[#allocation2 + $0x1e0] sm:$0xff] %vm846, %v842
  %908 = vst.msk [vmem:[#allocation2 + $0x1e8] sm:$0xff] %vm846, %v843
  %909 = vst.msk [vmem:[#allocation2 + $0x1f0] sm:$0xff] %vm846, %v844
  %910 = vst.msk [vmem:[#allocation2 + $0x1f8] sm:$0xff] %vm846, %v845
  // Predicated region
  $region18: #{_lambda_.24} parent=0 // pred_check
    %p911 = pneg %p15
  $region19: #{_lambda_.24} parent=0 // pred_check_branch
    %913 = sbr.rel (%p911) target = $region21
  $region20: #{_lambda_.24} parent=0 // pred_region
    %v914 = vld [vmem:[#allocation2] sm:$0xff]
    %v915 = vld [vmem:[#allocation2 + $0x8] sm:$0xff]
    %v916 = vld [vmem:[#allocation2 + $0x10] sm:$0xff]
    %v917 = vld [vmem:[#allocation2 + $0x18] sm:$0xff]
    %v918 = vld [vmem:[#allocation2 + $0x20] sm:$0xff]
    %v919 = vld [vmem:[#allocation2 + $0x28] sm:$0xff]
    %v920 = vld [vmem:[#allocation2 + $0x30] sm:$0xff]
    %v921 = vld [vmem:[#allocation2 + $0x38] sm:$0xff]
    %v922 = vld [vmem:[#allocation2 + $0x40] sm:$0xff]
    %v923 = vld [vmem:[#allocation2 + $0x48] sm:$0xff]
    %v924 = vld [vmem:[#allocation2 + $0x50] sm:$0xff]
    %v925 = vld [vmem:[#allocation2 + $0x58] sm:$0xff]
    %v926 = vld [vmem:[#allocation2 + $0x60] sm:$0xff]
    %v927 = vld [vmem:[#allocation2 + $0x68] sm:$0xff]
    %v928 = vld [vmem:[#allocation2 + $0x70] sm:$0xff]
    %v929 = vld [vmem:[#allocation2 + $0x78] sm:$0xff]
    %v930 = vld [vmem:[#allocation2 + $0x80] sm:$0xff]
    %v931 = vld [vmem:[#allocation2 + $0x88] sm:$0xff]
    %v932 = vld [vmem:[#allocation2 + $0x90] sm:$0xff]
    %v933 = vld [vmem:[#allocation2 + $0x98] sm:$0xff]
    %v934 = vld [vmem:[#allocation2 + $0xa0] sm:$0xff]
    %v935 = vld [vmem:[#allocation2 + $0xa8] sm:$0xff]
    %v936 = vld [vmem:[#allocation2 + $0xb0] sm:$0xff]
    %v937 = vld [vmem:[#allocation2 + $0xb8] sm:$0xff]
    %v938 = vld [vmem:[#allocation2 + $0xc0] sm:$0xff]
    %v939 = vld [vmem:[#allocation2 + $0xc8] sm:$0xff]
    %v940 = vld [vmem:[#allocation2 + $0xd0] sm:$0xff]
    %v941 = vld [vmem:[#allocation2 + $0xd8] sm:$0xff]
    %v942 = vld [vmem:[#allocation2 + $0xe0] sm:$0xff]
    %v943 = vld [vmem:[#allocation2 + $0xe8] sm:$0xff]
    %v944 = vld [vmem:[#allocation2 + $0xf0] sm:$0xff]
    %v945 = vld [vmem:[#allocation2 + $0xf8] sm:$0xff]
    %v946 = vld [vmem:[#allocation2 + $0x100] sm:$0xff]
    %v947 = vld [vmem:[#allocation2 + $0x108] sm:$0xff]
    %v948 = vld [vmem:[#allocation2 + $0x110] sm:$0xff]
    %v949 = vld [vmem:[#allocation2 + $0x118] sm:$0xff]
    %v950 = vld [vmem:[#allocation2 + $0x120] sm:$0xff]
    %v951 = vld [vmem:[#allocation2 + $0x128] sm:$0xff]
    %v952 = vld [vmem:[#allocation2 + $0x130] sm:$0xff]
    %v953 = vld [vmem:[#allocation2 + $0x138] sm:$0xff]
    %v954 = vld [vmem:[#allocation2 + $0x140] sm:$0xff]
    %v955 = vld [vmem:[#allocation2 + $0x148] sm:$0xff]
    %v956 = vld [vmem:[#allocation2 + $0x150] sm:$0xff]
    %v957 = vld [vmem:[#allocation2 + $0x158] sm:$0xff]
    %v958 = vld [vmem:[#allocation2 + $0x160] sm:$0xff]
    %v959 = vld [vmem:[#allocation2 + $0x168] sm:$0xff]
    %v960 = vld [vmem:[#allocation2 + $0x170] sm:$0xff]
    %v961 = vld [vmem:[#allocation2 + $0x178] sm:$0xff]
    %v962 = vld [vmem:[#allocation2 + $0x180] sm:$0xff]
    %v963 = vld [vmem:[#allocation2 + $0x188] sm:$0xff]
    %v964 = vld [vmem:[#allocation2 + $0x190] sm:$0xff]
    %v965 = vld [vmem:[#allocation2 + $0x198] sm:$0xff]
    %v966 = vld [vmem:[#allocation2 + $0x1a0] sm:$0xff]
    %v967 = vld [vmem:[#allocation2 + $0x1a8] sm:$0xff]
    %v968 = vld [vmem:[#allocation2 + $0x1b0] sm:$0xff]
    %v969 = vld [vmem:[#allocation2 + $0x1b8] sm:$0xff]
    %v970 = vld [vmem:[#allocation2 + $0x1c0] sm:$0xff]
    %v971 = vld [vmem:[#allocation2 + $0x1c8] sm:$0xff]
    %v972 = vld [vmem:[#allocation2 + $0x1d0] sm:$0xff]
    %v973 = vld [vmem:[#allocation2 + $0x1d8] sm:$0xff]
    %v974 = vld [vmem:[#allocation2 + $0x1e0] sm:$0xff]
    %v975 = vld [vmem:[#allocation2 + $0x1e8] sm:$0xff]
    %v976 = vld [vmem:[#allocation2 + $0x1f0] sm:$0xff]
    %v977 = vld [vmem:[#allocation2 + $0x1f8] sm:$0xff]
    %v978 = vld [vmem:[%s2] sm:$0x1]
    %v980 = vlaneseq
    %v981 = vshrl.u32 %v980, 7
    %v982 = vsub.s32 0, %v981
    %v983 = vrot.slane %v978, %v982
    %v985 = vadd.f32 %v914, %v983
    %v986 = vadd.f32 %v915, %v983
    %v987 = vadd.f32 %v916, %v983
    %v988 = vadd.f32 %v917, %v983
    %v989 = vadd.f32 %v918, %v983
    %v990 = vadd.f32 %v919, %v983
    %v991 = vadd.f32 %v920, %v983
    %v992 = vadd.f32 %v921, %v983
    %v993 = vadd.f32 %v922, %v983
    %v994 = vadd.f32 %v923, %v983
    %v995 = vadd.f32 %v924, %v983
    %v996 = vadd.f32 %v925, %v983
    %v997 = vadd.f32 %v926, %v983
    %v998 = vadd.f32 %v927, %v983
    %v999 = vadd.f32 %v928, %v983
    %v1000 = vadd.f32 %v929, %v983
    %v1001 = vadd.f32 %v930, %v983
    %v1002 = vadd.f32 %v931, %v983
    %v1003 = vadd.f32 %v932, %v983
    %v1004 = vadd.f32 %v933, %v983
    %v1005 = vadd.f32 %v934, %v983
    %v1006 = vadd.f32 %v935, %v983
    %v1007 = vadd.f32 %v936, %v983
    %v1008 = vadd.f32 %v937, %v983
    %v1009 = vadd.f32 %v938, %v983
    %v1010 = vadd.f32 %v939, %v983
    %v1011 = vadd.f32 %v940, %v983
    %v1012 = vadd.f32 %v941, %v983
    %v1013 = vadd.f32 %v942, %v983
    %v1014 = vadd.f32 %v943, %v983
    %v1015 = vadd.f32 %v944, %v983
    %v1016 = vadd.f32 %v945, %v983
    %v1017 = vadd.f32 %v946, %v983
    %v1018 = vadd.f32 %v947, %v983
    %v1019 = vadd.f32 %v948, %v983
    %v1020 = vadd.f32 %v949, %v983
    %v1021 = vadd.f32 %v950, %v983
    %v1022 = vadd.f32 %v951, %v983
    %v1023 = vadd.f32 %v952, %v983
    %v1024 = vadd.f32 %v953, %v983
    %v1025 = vadd.f32 %v954, %v983
    %v1026 = vadd.f32 %v955, %v983
    %v1027 = vadd.f32 %v956, %v983
    %v1028 = vadd.f32 %v957, %v983
    %v1029 = vadd.f32 %v958, %v983
    %v1030 = vadd.f32 %v959, %v983
    %v1031 = vadd.f32 %v960, %v983
    %v1032 = vadd.f32 %v961, %v983
    %v1033 = vadd.f32 %v962, %v983
    %v1034 = vadd.f32 %v963, %v983
    %v1035 = vadd.f32 %v964, %v983
    %v1036 = vadd.f32 %v965, %v983
    %v1037 = vadd.f32 %v966, %v983
    %v1038 = vadd.f32 %v967, %v983
    %v1039 = vadd.f32 %v968, %v983
    %v1040 = vadd.f32 %v969, %v983
    %v1041 = vadd.f32 %v970, %v983
    %v1042 = vadd.f32 %v971, %v983
    %v1043 = vadd.f32 %v972, %v983
    %v1044 = vadd.f32 %v973, %v983
    %v1045 = vadd.f32 %v974, %v983
    %v1046 = vadd.f32 %v975, %v983
    %v1047 = vadd.f32 %v976, %v983
    %v1048 = vadd.f32 %v977, %v983
    %v1049 = vpack.c.bf16 %v986, %v985
    %v1050 = vpack.c.bf16 %v988, %v987
    %v1051 = vpack.c.bf16 %v990, %v989
    %v1052 = vpack.c.bf16 %v992, %v991
    %v1053 = vpack.c.bf16 %v994, %v993
    %v1054 = vpack.c.bf16 %v996, %v995
    %v1055 = vpack.c.bf16 %v998, %v997
    %v1056 = vpack.c.bf16 %v1000, %v999
    %v1057 = vpack.c.bf16 %v1002, %v1001
    %v1058 = vpack.c.bf16 %v1004, %v1003
    %v1059 = vpack.c.bf16 %v1006, %v1005
    %v1060 = vpack.c.bf16 %v1008, %v1007
    %v1061 = vpack.c.bf16 %v1010, %v1009
    %v1062 = vpack.c.bf16 %v1012, %v1011
    %v1063 = vpack.c.bf16 %v1014, %v1013
    %v1064 = vpack.c.bf16 %v1016, %v1015
    %v1065 = vpack.c.bf16 %v1018, %v1017
    %v1066 = vpack.c.bf16 %v1020, %v1019
    %v1067 = vpack.c.bf16 %v1022, %v1021
    %v1068 = vpack.c.bf16 %v1024, %v1023
    %v1069 = vpack.c.bf16 %v1026, %v1025
    %v1070 = vpack.c.bf16 %v1028, %v1027
    %v1071 = vpack.c.bf16 %v1030, %v1029
    %v1072 = vpack.c.bf16 %v1032, %v1031
    %v1073 = vpack.c.bf16 %v1034, %v1033
    %v1074 = vpack.c.bf16 %v1036, %v1035
    %v1075 = vpack.c.bf16 %v1038, %v1037
    %v1076 = vpack.c.bf16 %v1040, %v1039
    %v1077 = vpack.c.bf16 %v1042, %v1041
    %v1078 = vpack.c.bf16 %v1044, %v1043
    %v1079 = vpack.c.bf16 %v1046, %v1045
    %v1080 = vpack.c.bf16 %v1048, %v1047
    %v1113 = vunpack.c.l.b16 %v1049
    %v1114 = vunpack.c.h.b16 %v1049
    %v1115 = vunpack.c.l.b16 %v1050
    %v1116 = vunpack.c.h.b16 %v1050
    %v1117 = vunpack.c.l.b16 %v1051
    %v1118 = vunpack.c.h.b16 %v1051
    %v1119 = vunpack.c.l.b16 %v1052
    %v1120 = vunpack.c.h.b16 %v1052
    %v1121 = vunpack.c.l.b16 %v1053
    %v1122 = vunpack.c.h.b16 %v1053
    %v1123 = vunpack.c.l.b16 %v1054
    %v1124 = vunpack.c.h.b16 %v1054
    %v1125 = vunpack.c.l.b16 %v1055
    %v1126 = vunpack.c.h.b16 %v1055
    %v1127 = vunpack.c.l.b16 %v1056
    %v1128 = vunpack.c.h.b16 %v1056
    %v1129 = vunpack.c.l.b16 %v1057
    %v1130 = vunpack.c.h.b16 %v1057
    %v1131 = vunpack.c.l.b16 %v1058
    %v1132 = vunpack.c.h.b16 %v1058
    %v1133 = vunpack.c.l.b16 %v1059
    %v1134 = vunpack.c.h.b16 %v1059
    %v1135 = vunpack.c.l.b16 %v1060
    %v1136 = vunpack.c.h.b16 %v1060
    %v1137 = vunpack.c.l.b16 %v1061
    %v1138 = vunpack.c.h.b16 %v1061
    %v1139 = vunpack.c.l.b16 %v1062
    %v1140 = vunpack.c.h.b16 %v1062
    %v1141 = vunpack.c.l.b16 %v1063
    %v1142 = vunpack.c.h.b16 %v1063
    %v1143 = vunpack.c.l.b16 %v1064
    %v1144 = vunpack.c.h.b16 %v1064
    %v1145 = vunpack.c.l.b16 %v1065
    %v1146 = vunpack.c.h.b16 %v1065
    %v1147 = vunpack.c.l.b16 %v1066
    %v1148 = vunpack.c.h.b16 %v1066
    %v1149 = vunpack.c.l.b16 %v1067
    %v1150 = vunpack.c.h.b16 %v1067
    %v1151 = vunpack.c.l.b16 %v1068
    %v1152 = vunpack.c.h.b16 %v1068
    %v1153 = vunpack.c.l.b16 %v1069
    %v1154 = vunpack.c.h.b16 %v1069
    %v1155 = vunpack.c.l.b16 %v1070
    %v1156 = vunpack.c.h.b16 %v1070
    %v1157 = vunpack.c.l.b16 %v1071
    %v1158 = vunpack.c.h.b16 %v1071
    %v1159 = vunpack.c.l.b16 %v1072
    %v1160 = vunpack.c.h.b16 %v1072
    %v1161 = vunpack.c.l.b16 %v1073
    %v1162 = vunpack.c.h.b16 %v1073
    %v1163 = vunpack.c.l.b16 %v1074
    %v1164 = vunpack.c.h.b16 %v1074
    %v1165 = vunpack.c.l.b16 %v1075
    %v1166 = vunpack.c.h.b16 %v1075
    %v1167 = vunpack.c.l.b16 %v1076
    %v1168 = vunpack.c.h.b16 %v1076
    %v1169 = vunpack.c.l.b16 %v1077
    %v1170 = vunpack.c.h.b16 %v1077
    %v1171 = vunpack.c.l.b16 %v1078
    %v1172 = vunpack.c.h.b16 %v1078
    %v1173 = vunpack.c.l.b16 %v1079
    %v1174 = vunpack.c.h.b16 %v1079
    %v1175 = vunpack.c.l.b16 %v1080
    %v1176 = vunpack.c.h.b16 %v1080
    %v1177 = vpack.c.b16 %v1113, %v1113
    %v1178 = vpack.c.b16 %v1114, %v1114
    %v1179 = vpack.c.b16 %v1115, %v1115
    %v1180 = vpack.c.b16 %v1116, %v1116
    %v1181 = vpack.c.b16 %v1117, %v1117
    %v1182 = vpack.c.b16 %v1118, %v1118
    %v1183 = vpack.c.b16 %v1119, %v1119
    %v1184 = vpack.c.b16 %v1120, %v1120
    %v1185 = vpack.c.b16 %v1121, %v1121
    %v1186 = vpack.c.b16 %v1122, %v1122
    %v1187 = vpack.c.b16 %v1123, %v1123
    %v1188 = vpack.c.b16 %v1124, %v1124
    %v1189 = vpack.c.b16 %v1125, %v1125
    %v1190 = vpack.c.b16 %v1126, %v1126
    %v1191 = vpack.c.b16 %v1127, %v1127
    %v1192 = vpack.c.b16 %v1128, %v1128
    %v1193 = vpack.c.b16 %v1129, %v1129
    %v1194 = vpack.c.b16 %v1130, %v1130
    %v1195 = vpack.c.b16 %v1131, %v1131
    %v1196 = vpack.c.b16 %v1132, %v1132
    %v1197 = vpack.c.b16 %v1133, %v1133
    %v1198 = vpack.c.b16 %v1134, %v1134
    %v1199 = vpack.c.b16 %v1135, %v1135
    %v1200 = vpack.c.b16 %v1136, %v1136
    %v1201 = vpack.c.b16 %v1137, %v1137
    %v1202 = vpack.c.b16 %v1138, %v1138
    %v1203 = vpack.c.b16 %v1139, %v1139
    %v1204 = vpack.c.b16 %v1140, %v1140
    %v1205 = vpack.c.b16 %v1141, %v1141
    %v1206 = vpack.c.b16 %v1142, %v1142
    %v1207 = vpack.c.b16 %v1143, %v1143
    %v1208 = vpack.c.b16 %v1144, %v1144
    %v1209 = vpack.c.b16 %v1145, %v1145
    %v1210 = vpack.c.b16 %v1146, %v1146
    %v1211 = vpack.c.b16 %v1147, %v1147
    %v1212 = vpack.c.b16 %v1148, %v1148
    %v1213 = vpack.c.b16 %v1149, %v1149
    %v1214 = vpack.c.b16 %v1150, %v1150
    %v1215 = vpack.c.b16 %v1151, %v1151
    %v1216 = vpack.c.b16 %v1152, %v1152
    %v1217 = vpack.c.b16 %v1153, %v1153
    %v1218 = vpack.c.b16 %v1154, %v1154
    %v1219 = vpack.c.b16 %v1155, %v1155
    %v1220 = vpack.c.b16 %v1156, %v1156
    %v1221 = vpack.c.b16 %v1157, %v1157
    %v1222 = vpack.c.b16 %v1158, %v1158
    %v1223 = vpack.c.b16 %v1159, %v1159
    %v1224 = vpack.c.b16 %v1160, %v1160
    %v1225 = vpack.c.b16 %v1161, %v1161
    %v1226 = vpack.c.b16 %v1162, %v1162
    %v1227 = vpack.c.b16 %v1163, %v1163
    %v1228 = vpack.c.b16 %v1164, %v1164
    %v1229 = vpack.c.b16 %v1165, %v1165
    %v1230 = vpack.c.b16 %v1166, %v1166
    %v1231 = vpack.c.b16 %v1167, %v1167
    %v1232 = vpack.c.b16 %v1168, %v1168
    %v1233 = vpack.c.b16 %v1169, %v1169
    %v1234 = vpack.c.b16 %v1170, %v1170
    %v1235 = vpack.c.b16 %v1171, %v1171
    %v1236 = vpack.c.b16 %v1172, %v1172
    %v1237 = vpack.c.b16 %v1173, %v1173
    %v1238 = vpack.c.b16 %v1174, %v1174
    %v1239 = vpack.c.b16 %v1175, %v1175
    %v1240 = vpack.c.b16 %v1176, %v1176
    %vm1305 = vcmask 60416
    %1306 = vst.msk [vmem:[%s3] sm:$0xf] %vm1305, %v1177
    %1307 = vst.msk [vmem:[%s3 + $0x4] sm:$0xf] %vm1305, %v1178
    %1308 = vst.msk [vmem:[%s3 + $0x8] sm:$0xf] %vm1305, %v1179
    %1309 = vst.msk [vmem:[%s3 + $0xc] sm:$0xf] %vm1305, %v1180
    %1310 = vst.msk [vmem:[%s3 + $0x10] sm:$0xf] %vm1305, %v1181
    %1311 = vst.msk [vmem:[%s3 + $0x14] sm:$0xf] %vm1305, %v1182
    %1312 = vst.msk [vmem:[%s3 + $0x18] sm:$0xf] %vm1305, %v1183
    %1313 = vst.msk [vmem:[%s3 + $0x1c] sm:$0xf] %vm1305, %v1184
    %1314 = vst.msk [vmem:[%s3 + $0x20] sm:$0xf] %vm1305, %v1185
    %1315 = vst.msk [vmem:[%s3 + $0x24] sm:$0xf] %vm1305, %v1186
    %1316 = vst.msk [vmem:[%s3 + $0x28] sm:$0xf] %vm1305, %v1187
    %1317 = vst.msk [vmem:[%s3 + $0x2c] sm:$0xf] %vm1305, %v1188
    %1318 = vst.msk [vmem:[%s3 + $0x30] sm:$0xf] %vm1305, %v1189
    %1319 = vst.msk [vmem:[%s3 + $0x34] sm:$0xf] %vm1305, %v1190
    %1320 = vst.msk [vmem:[%s3 + $0x38] sm:$0xf] %vm1305, %v1191
    %1321 = vst.msk [vmem:[%s3 + $0x3c] sm:$0xf] %vm1305, %v1192
    %1322 = vst.msk [vmem:[%s3 + $0x40] sm:$0xf] %vm1305, %v1193
    %1323 = vst.msk [vmem:[%s3 + $0x44] sm:$0xf] %vm1305, %v1194
    %1324 = vst.msk [vmem:[%s3 + $0x48] sm:$0xf] %vm1305, %v1195
    %1325 = vst.msk [vmem:[%s3 + $0x4c] sm:$0xf] %vm1305, %v1196
    %1326 = vst.msk [vmem:[%s3 + $0x50] sm:$0xf] %vm1305, %v1197
    %1327 = vst.msk [vmem:[%s3 + $0x54] sm:$0xf] %vm1305, %v1198
    %1328 = vst.msk [vmem:[%s3 + $0x58] sm:$0xf] %vm1305, %v1199
    %1329 = vst.msk [vmem:[%s3 + $0x5c] sm:$0xf] %vm1305, %v1200
    %1330 = vst.msk [vmem:[%s3 + $0x60] sm:$0xf] %vm1305, %v1201
    %1331 = vst.msk [vmem:[%s3 + $0x64] sm:$0xf] %vm1305, %v1202
    %1332 = vst.msk [vmem:[%s3 + $0x68] sm:$0xf] %vm1305, %v1203
    %1333 = vst.msk [vmem:[%s3 + $0x6c] sm:$0xf] %vm1305, %v1204
    %1334 = vst.msk [vmem:[%s3 + $0x70] sm:$0xf] %vm1305, %v1205
    %1335 = vst.msk [vmem:[%s3 + $0x74] sm:$0xf] %vm1305, %v1206
    %1336 = vst.msk [vmem:[%s3 + $0x78] sm:$0xf] %vm1305, %v1207
    %1337 = vst.msk [vmem:[%s3 + $0x7c] sm:$0xf] %vm1305, %v1208
    %1338 = vst.msk [vmem:[%s3 + $0x80] sm:$0xf] %vm1305, %v1209
    %1339 = vst.msk [vmem:[%s3 + $0x84] sm:$0xf] %vm1305, %v1210
    %1340 = vst.msk [vmem:[%s3 + $0x88] sm:$0xf] %vm1305, %v1211
    %1341 = vst.msk [vmem:[%s3 + $0x8c] sm:$0xf] %vm1305, %v1212
    %1342 = vst.msk [vmem:[%s3 + $0x90] sm:$0xf] %vm1305, %v1213
    %1343 = vst.msk [vmem:[%s3 + $0x94] sm:$0xf] %vm1305, %v1214
    %1344 = vst.msk [vmem:[%s3 + $0x98] sm:$0xf] %vm1305, %v1215
    %1345 = vst.msk [vmem:[%s3 + $0x9c] sm:$0xf] %vm1305, %v1216
    %1346 = vst.msk [vmem:[%s3 + $0xa0] sm:$0xf] %vm1305, %v1217
    %1347 = vst.msk [vmem:[%s3 + $0xa4] sm:$0xf] %vm1305, %v1218
    %1348 = vst.msk [vmem:[%s3 + $0xa8] sm:$0xf] %vm1305, %v1219
    %1349 = vst.msk [vmem:[%s3 + $0xac] sm:$0xf] %vm1305, %v1220
    %1350 = vst.msk [vmem:[%s3 + $0xb0] sm:$0xf] %vm1305, %v1221
    %1351 = vst.msk [vmem:[%s3 + $0xb4] sm:$0xf] %vm1305, %v1222
    %1352 = vst.msk [vmem:[%s3 + $0xb8] sm:$0xf] %vm1305, %v1223
    %1353 = vst.msk [vmem:[%s3 + $0xbc] sm:$0xf] %vm1305, %v1224
    %1354 = vst.msk [vmem:[%s3 + $0xc0] sm:$0xf] %vm1305, %v1225
    %1355 = vst.msk [vmem:[%s3 + $0xc4] sm:$0xf] %vm1305, %v1226
    %1356 = vst.msk [vmem:[%s3 + $0xc8] sm:$0xf] %vm1305, %v1227
    %1357 = vst.msk [vmem:[%s3 + $0xcc] sm:$0xf] %vm1305, %v1228
    %1358 = vst.msk [vmem:[%s3 + $0xd0] sm:$0xf] %vm1305, %v1229
    %1359 = vst.msk [vmem:[%s3 + $0xd4] sm:$0xf] %vm1305, %v1230
    %1360 = vst.msk [vmem:[%s3 + $0xd8] sm:$0xf] %vm1305, %v1231
    %1361 = vst.msk [vmem:[%s3 + $0xdc] sm:$0xf] %vm1305, %v1232
    %1362 = vst.msk [vmem:[%s3 + $0xe0] sm:$0xf] %vm1305, %v1233
    %1363 = vst.msk [vmem:[%s3 + $0xe4] sm:$0xf] %vm1305, %v1234
    %1364 = vst.msk [vmem:[%s3 + $0xe8] sm:$0xf] %vm1305, %v1235
    %1365 = vst.msk [vmem:[%s3 + $0xec] sm:$0xf] %vm1305, %v1236
    %1366 = vst.msk [vmem:[%s3 + $0xf0] sm:$0xf] %vm1305, %v1237
    %1367 = vst.msk [vmem:[%s3 + $0xf4] sm:$0xf] %vm1305, %v1238
    %1368 = vst.msk [vmem:[%s3 + $0xf8] sm:$0xf] %vm1305, %v1239
    %1369 = vst.msk [vmem:[%s3 + $0xfc] sm:$0xf] %vm1305, %v1240
  $region21: #{_lambda_.24} parent=0 // pred_fallthru
    _
  // Predicated region
  $region22: #{_lambda_.24} parent=0 // pred_check
    _
  $region23: #{_lambda_.24} parent=0 // pred_check_branch
    %1371 = sbr.rel (0) target = $region25
  $region24: #{_lambda_.24} parent=0 // pred_region
    _
  $region25: #{_lambda_.24} parent=0 // pred_fallthru
    _
  // Predicated region
  $region26: #{_lambda_.24} parent=0 // pred_check
    _
  $region27: #{_lambda_.24} parent=0 // pred_check_branch
    %1373 = sbr.rel (0) target = $region29
  $region28: #{_lambda_.24} parent=0 // pred_region
    _
  $region29: #{_lambda_.24} parent=0 // pred_fallthru
    _

// kernel: _lambda_.25
$region0: #{_lambda_.25}
  #allocation0 [shape = 'u32[]', space=smem, size = 0x4, offset = 0x4, fixed_abs, tag = 'smem constant byte address 0x4 - core index']
  #allocation1 [shape = 'u32[144,128]{1,0:T(1,128)}', space=vmem, size = 0x12000, scoped, tag = 'internal scratch']
  #allocation2 [shape = 'f32[128,16]{1,0:T(8,128)}', space=vmem, size = 0x10000, scoped, tag = 'scratch operand']
  %s0 = inlined_call_operand.vmem [shape: bf16[1,128,128], index: 0, kind: input, shape index: {}]
  %s1 = inlined_call_operand.vmem [shape: bf16[1,128,16], index: 1, kind: input, shape index: {}]
  %s2 = inlined_call_operand.vmem [shape: f32[1,1,16], index: 2, kind: input, shape index: {}]
  %s3 = inlined_call_operand.vmem [shape: bf16[1,128,16], index: 3, kind: output, shape index: {}]
  %s4 = sld [smem:[#allocation0]]
  $region30: #{_lambda_.25} parent=0
    _
  %s6 = ssub.s32 1, %s4
  %s7 = scalar_select 0, %s6, %s4
  // Predicated region
  $region2: #{_lambda_.25} parent=0 // pred_check
    _
  $region3: #{_lambda_.25} parent=0 // pred_check_branch
    %9 = sbr.rel (0) target = $region5
  $region4: #{_lambda_.25} parent=0 // pred_region
    _
  $region5: #{_lambda_.25} parent=0 // pred_fallthru
    _
  // Predicated region
  $region6: #{_lambda_.25} parent=0 // pred_check
    _
  $region7: #{_lambda_.25} parent=0 // pred_check_branch
    %11 = sbr.rel (0) target = $region9
  $region8: #{_lambda_.25} parent=0 // pred_region
    _
  $region9: #{_lambda_.25} parent=0 // pred_fallthru
    _
  // Predicated region
  $region10: #{_lambda_.25} parent=0 // pred_check
    _
  $region11: #{_lambda_.25} parent=0 // pred_check_branch
    %13 = sbr.rel (0) target = $region13
  $region12: #{_lambda_.25} parent=0 // pred_region
    _
  $region13: #{_lambda_.25} parent=0 // pred_fallthru
    _
  %p16 = scmp.eq.s32.totalorder 0, 0
  // Predicated region
  $region14: #{_lambda_.25} parent=0 // pred_check
    %p17 = pneg %p16
  $region15: #{_lambda_.25} parent=0 // pred_check_branch
    %19 = sbr.rel (%p17) target = $region17
  $region16: #{_lambda_.25} parent=0 // pred_region
    %vm20 = vcmask 130048
    %21 = vst.msk [vmem:[#allocation2] sm:$0xff] %vm20, 0.0
    %22 = vst.msk [vmem:[#allocation2 + $0x8] sm:$0xff] %vm20, 0.0
    %23 = vst.msk [vmem:[#allocation2 + $0x10] sm:$0xff] %vm20, 0.0
    %24 = vst.msk [vmem:[#allocation2 + $0x18] sm:$0xff] %vm20, 0.0
    %25 = vst.msk [vmem:[#allocation2 + $0x20] sm:$0xff] %vm20, 0.0
    %26 = vst.msk [vmem:[#allocation2 + $0x28] sm:$0xff] %vm20, 0.0
    %27 = vst.msk [vmem:[#allocation2 + $0x30] sm:$0xff] %vm20, 0.0
    %28 = vst.msk [vmem:[#allocation2 + $0x38] sm:$0xff] %vm20, 0.0
    %29 = vst.msk [vmem:[#allocation2 + $0x40] sm:$0xff] %vm20, 0.0
    %30 = vst.msk [vmem:[#allocation2 + $0x48] sm:$0xff] %vm20, 0.0
    %31 = vst.msk [vmem:[#allocation2 + $0x50] sm:$0xff] %vm20, 0.0
    %32 = vst.msk [vmem:[#allocation2 + $0x58] sm:$0xff] %vm20, 0.0
    %33 = vst.msk [vmem:[#allocation2 + $0x60] sm:$0xff] %vm20, 0.0
    %34 = vst.msk [vmem:[#allocation2 + $0x68] sm:$0xff] %vm20, 0.0
    %35 = vst.msk [vmem:[#allocation2 + $0x70] sm:$0xff] %vm20, 0.0
    %36 = vst.msk [vmem:[#allocation2 + $0x78] sm:$0xff] %vm20, 0.0
  $region17: #{_lambda_.25} parent=0 // pred_fallthru
    _
  %v37 = vld [vmem:[%s0] sm:$0xf]
  %v38 = vld [vmem:[%s0 + $0x4] sm:$0xf]
  %v39 = vld [vmem:[%s0 + $0x8] sm:$0xf]
  %v40 = vld [vmem:[%s0 + $0xc] sm:$0xf]
  %v41 = vld [vmem:[%s0 + $0x10] sm:$0xf]
  %v42 = vld [vmem:[%s0 + $0x14] sm:$0xf]
  %v43 = vld [vmem:[%s0 + $0x18] sm:$0xf]
  %v44 = vld [vmem:[%s0 + $0x1c] sm:$0xf]
  %v45 = vld [vmem:[%s0 + $0x20] sm:$0xf]
  %v46 = vld [vmem:[%s0 + $0x24] sm:$0xf]
  %v47 = vld [vmem:[%s0 + $0x28] sm:$0xf]
  %v48 = vld [vmem:[%s0 + $0x2c] sm:$0xf]
  %v49 = vld [vmem:[%s0 + $0x30] sm:$0xf]
  %v50 = vld [vmem:[%s0 + $0x34] sm:$0xf]
  %v51 = vld [vmem:[%s0 + $0x38] sm:$0xf]
  %v52 = vld [vmem:[%s0 + $0x3c] sm:$0xf]
  %vm53 = vcmp.gt.bf16.partialorder %v37, 0
  %vm54 = vcmp.gt.bf16.partialorder %v38, 0
  %vm55 = vcmp.gt.bf16.partialorder %v39, 0
  %vm56 = vcmp.gt.bf16.partialorder %v40, 0
  %vm57 = vcmp.gt.bf16.partialorder %v41, 0
  %vm58 = vcmp.gt.bf16.partialorder %v42, 0
  %vm59 = vcmp.gt.bf16.partialorder %v43, 0
  %vm60 = vcmp.gt.bf16.partialorder %v44, 0
  %vm61 = vcmp.gt.bf16.partialorder %v45, 0
  %vm62 = vcmp.gt.bf16.partialorder %v46, 0
  %vm63 = vcmp.gt.bf16.partialorder %v47, 0
  %vm64 = vcmp.gt.bf16.partialorder %v48, 0
  %vm65 = vcmp.gt.bf16.partialorder %v49, 0
  %vm66 = vcmp.gt.bf16.partialorder %v50, 0
  %vm67 = vcmp.gt.bf16.partialorder %v51, 0
  %vm68 = vcmp.gt.bf16.partialorder %v52, 0
  %v69 = vmul.bf16 %v37, 1045249613
  %v70 = vmul.bf16 %v38, 1045249613
  %v71 = vmul.bf16 %v39, 1045249613
  %v72 = vmul.bf16 %v40, 1045249613
  %v73 = vmul.bf16 %v41, 1045249613
  %v74 = vmul.bf16 %v42, 1045249613
  %v75 = vmul.bf16 %v43, 1045249613
  %v76 = vmul.bf16 %v44, 1045249613
  %v77 = vmul.bf16 %v45, 1045249613
  %v78 = vmul.bf16 %v46, 1045249613
  %v79 = vmul.bf16 %v47, 1045249613
  %v80 = vmul.bf16 %v48, 1045249613
  %v81 = vmul.bf16 %v49, 1045249613
  %v82 = vmul.bf16 %v50, 1045249613
  %v83 = vmul.bf16 %v51, 1045249613
  %v84 = vmul.bf16 %v52, 1045249613
  %v85 = vsel %vm53, %v37, %v69
  %v86 = vsel %vm54, %v38, %v70
  %v87 = vsel %vm55, %v39, %v71
  %v88 = vsel %vm56, %v40, %v72
  %v89 = vsel %vm57, %v41, %v73
  %v90 = vsel %vm58, %v42, %v74
  %v91 = vsel %vm59, %v43, %v75
  %v92 = vsel %vm60, %v44, %v76
  %v93 = vsel %vm61, %v45, %v77
  %v94 = vsel %vm62, %v46, %v78
  %v95 = vsel %vm63, %v47, %v79
  %v96 = vsel %vm64, %v48, %v80
  %v97 = vsel %vm65, %v49, %v81
  %v98 = vsel %vm66, %v50, %v82
  %v99 = vsel %vm67, %v51, %v83
  %v100 = vsel %vm68, %v52, %v84
  %v101 = vld [vmem:[#allocation2] sm:$0xff]
  %v102 = vld [vmem:[#allocation2 + $0x8] sm:$0xff]
  %v103 = vld [vmem:[#allocation2 + $0x10] sm:$0xff]
  %v104 = vld [vmem:[#allocation2 + $0x18] sm:$0xff]
  %v105 = vld [vmem:[#allocation2 + $0x20] sm:$0xff]
  %v106 = vld [vmem:[#allocation2 + $0x28] sm:$0xff]
  %v107 = vld [vmem:[#allocation2 + $0x30] sm:$0xff]
  %v108 = vld [vmem:[#allocation2 + $0x38] sm:$0xff]
  %v109 = vld [vmem:[#allocation2 + $0x40] sm:$0xff]
  %v110 = vld [vmem:[#allocation2 + $0x48] sm:$0xff]
  %v111 = vld [vmem:[#allocation2 + $0x50] sm:$0xff]
  %v112 = vld [vmem:[#allocation2 + $0x58] sm:$0xff]
  %v113 = vld [vmem:[#allocation2 + $0x60] sm:$0xff]
  %v114 = vld [vmem:[#allocation2 + $0x68] sm:$0xff]
  %v115 = vld [vmem:[#allocation2 + $0x70] sm:$0xff]
  %v116 = vld [vmem:[#allocation2 + $0x78] sm:$0xff]
  %v117 = vld [vmem:[%s1] sm:$0xf]
  %v118 = vld [vmem:[%s1 + $0x4] sm:$0xf]
  %v119 = vld [vmem:[%s1 + $0x8] sm:$0xf]
  %v120 = vld [vmem:[%s1 + $0xc] sm:$0xf]
  %v121 = vld [vmem:[%s1 + $0x10] sm:$0xf]
  %v122 = vld [vmem:[%s1 + $0x14] sm:$0xf]
  %v123 = vld [vmem:[%s1 + $0x18] sm:$0xf]
  %v124 = vld [vmem:[%s1 + $0x1c] sm:$0xf]
  %v125 = vld [vmem:[%s1 + $0x20] sm:$0xf]
  %v126 = vld [vmem:[%s1 + $0x24] sm:$0xf]
  %v127 = vld [vmem:[%s1 + $0x28] sm:$0xf]
  %v128 = vld [vmem:[%s1 + $0x2c] sm:$0xf]
  %v129 = vld [vmem:[%s1 + $0x30] sm:$0xf]
  %v130 = vld [vmem:[%s1 + $0x34] sm:$0xf]
  %v131 = vld [vmem:[%s1 + $0x38] sm:$0xf]
  %v132 = vld [vmem:[%s1 + $0x3c] sm:$0xf]
  %v149 = vunpack.c.l.b16 %v85
  %v150 = vunpack.c.l.b16 %v86
  %v151 = vunpack.c.l.b16 %v87
  %v152 = vunpack.c.l.b16 %v88
  %v153 = vunpack.c.l.b16 %v89
  %v154 = vunpack.c.l.b16 %v90
  %v155 = vunpack.c.l.b16 %v91
  %v156 = vunpack.c.l.b16 %v92
  %v157 = vunpack.c.l.b16 %v93
  %v158 = vunpack.c.l.b16 %v94
  %v159 = vunpack.c.l.b16 %v95
  %v160 = vunpack.c.l.b16 %v96
  %v161 = vunpack.c.l.b16 %v97
  %v162 = vunpack.c.l.b16 %v98
  %v163 = vunpack.c.l.b16 %v99
  %v164 = vunpack.c.l.b16 %v100
  %v165 = vpack.c.b16 %v150, %v149
  %v166 = vpack.c.b16 %v152, %v151
  %v167 = vpack.c.b16 %v154, %v153
  %v168 = vpack.c.b16 %v156, %v155
  %v169 = vpack.c.b16 %v158, %v157
  %v170 = vpack.c.b16 %v160, %v159
  %v171 = vpack.c.b16 %v162, %v161
  %v172 = vpack.c.b16 %v164, %v163
  %v197 = vunpack.c.l.b16 %v117
  %v198 = vunpack.c.l.b16 %v118
  %v199 = vunpack.c.l.b16 %v119
  %v200 = vunpack.c.l.b16 %v120
  %v201 = vunpack.c.l.b16 %v121
  %v202 = vunpack.c.l.b16 %v122
  %v203 = vunpack.c.l.b16 %v123
  %v204 = vunpack.c.l.b16 %v124
  %v205 = vunpack.c.l.b16 %v125
  %v206 = vunpack.c.l.b16 %v126
  %v207 = vunpack.c.l.b16 %v127
  %v208 = vunpack.c.l.b16 %v128
  %v209 = vunpack.c.l.b16 %v129
  %v210 = vunpack.c.l.b16 %v130
  %v211 = vunpack.c.l.b16 %v131
  %v212 = vunpack.c.l.b16 %v132
  %v213 = vpack.c.b16 %v198, %v197
  %v214 = vpack.c.b16 %v200, %v199
  %v215 = vpack.c.b16 %v202, %v201
  %v216 = vpack.c.b16 %v204, %v203
  %v217 = vpack.c.b16 %v206, %v205
  %v218 = vpack.c.b16 %v208, %v207
  %v219 = vpack.c.b16 %v210, %v209
  %v220 = vpack.c.b16 %v212, %v211
  %229 = vmatprep.subr.bf16.mxu0 0
  %230 = vmatpush1.bf16.msra.mxu0 %v213
  %231 = vmatprep.subr.bf16.mxu0 0
  %232 = vmatpush1.bf16.msra.mxu0 %v214
  %233 = vmatprep.subr.bf16.mxu0 0
  %234 = vmatpush1.bf16.msra.mxu0 %v215
  %235 = vmatprep.subr.bf16.mxu0 0
  %236 = vmatpush1.bf16.msra.mxu0 %v216
  %237 = vmatprep.subr.bf16.mxu0 0
  %238 = vmatpush1.bf16.msra.mxu0 %v217
  %239 = vmatprep.subr.bf16.mxu0 0
  %240 = vmatpush1.bf16.msra.mxu0 %v218
  %241 = vmatprep.subr.bf16.mxu0 0
  %242 = vmatpush1.bf16.msra.mxu0 %v219
  %243 = vmatprep.subr.bf16.mxu0 0
  %244 = vmatpush1.bf16.msra.mxu0 %v220
  %245 = vmatprep.subr.bf16.mxu0 0
  %246 = vmatpush1.bf16.msra.mxu0 0
  %247 = vmatprep.subr.bf16.mxu0 0
  %248 = vmatpush1.bf16.msra.mxu0 0
  %249 = vmatprep.subr.bf16.mxu0 0
  %250 = vmatpush1.bf16.msra.mxu0 0
  %251 = vmatprep.subr.bf16.mxu0 0
  %252 = vmatpush1.bf16.msra.mxu0 0
  %253 = vmatprep.subr.bf16.mxu0 0
  %254 = vmatpush1.bf16.msra.mxu0 0
  %255 = vmatprep.subr.bf16.mxu0 0
  %256 = vmatpush1.bf16.msra.mxu0 0
  %257 = vmatprep.subr.bf16.mxu0 0
  %258 = vmatpush1.bf16.msra.mxu0 0
  %259 = vmatprep.subr.bf16.mxu0 0
  %260 = vmatpush1.bf16.msra.mxu0 0
  %261 = vmatprep.mubr.bf16.mxu0 0
  %262 = vmatmul.mubr.bf16.gmra.mrb[0].mxu0 %v165
  %v263 = vpop.f32.mrb[0].mxu0
  %v264 = vadd.f32 0.0, %v263
  %v265 = vpop.f32.mrb[0].mxu0
  %v266 = vpop.f32.mrb[0].mxu0
  %v267 = vadd.f32 0.0, %v266
  %v268 = vpop.f32.mrb[0].mxu0
  %269 = vmatprep.mubr.bf16.mxu0 0
  %270 = vmatmul.mubr.bf16.gmra.mrb[0].mxu0 %v166
  %v271 = vpop.f32.mrb[0].mxu0
  %v272 = vadd.f32 0.0, %v271
  %v273 = vpop.f32.mrb[0].mxu0
  %v274 = vpop.f32.mrb[0].mxu0
  %v275 = vadd.f32 0.0, %v274
  %v276 = vpop.f32.mrb[0].mxu0
  %277 = vmatprep.mubr.bf16.mxu0 0
  %278 = vmatmul.mubr.bf16.gmra.mrb[0].mxu0 %v167
  %v279 = vpop.f32.mrb[0].mxu0
  %v280 = vadd.f32 0.0, %v279
  %v281 = vpop.f32.mrb[0].mxu0
  %v282 = vpop.f32.mrb[0].mxu0
  %v283 = vadd.f32 0.0, %v282
  %v284 = vpop.f32.mrb[0].mxu0
  %285 = vmatprep.mubr.bf16.mxu0 0
  %286 = vmatmul.mubr.bf16.gmra.mrb[0].mxu0 %v168
  %v287 = vpop.f32.mrb[0].mxu0
  %v288 = vadd.f32 0.0, %v287
  %v289 = vpop.f32.mrb[0].mxu0
  %v290 = vpop.f32.mrb[0].mxu0
  %v291 = vadd.f32 0.0, %v290
  %v292 = vpop.f32.mrb[0].mxu0
  %293 = vmatprep.mubr.bf16.mxu0 0
  %294 = vmatmul.mubr.bf16.gmra.mrb[0].mxu0 %v169
  %v295 = vpop.f32.mrb[0].mxu0
  %v296 = vadd.f32 0.0, %v295
  %v297 = vpop.f32.mrb[0].mxu0
  %v298 = vpop.f32.mrb[0].mxu0
  %v299 = vadd.f32 0.0, %v298
  %v300 = vpop.f32.mrb[0].mxu0
  %301 = vmatprep.mubr.bf16.mxu0 0
  %302 = vmatmul.mubr.bf16.gmra.mrb[0].mxu0 %v170
  %v303 = vpop.f32.mrb[0].mxu0
  %v304 = vadd.f32 0.0, %v303
  %v305 = vpop.f32.mrb[0].mxu0
  %v306 = vpop.f32.mrb[0].mxu0
  %v307 = vadd.f32 0.0, %v306
  %v308 = vpop.f32.mrb[0].mxu0
  %309 = vmatprep.mubr.bf16.mxu0 0
  %310 = vmatmul.mubr.bf16.gmra.mrb[0].mxu0 %v171
  %v311 = vpop.f32.mrb[0].mxu0
  %v312 = vadd.f32 0.0, %v311
  %v313 = vpop.f32.mrb[0].mxu0
  %v314 = vpop.f32.mrb[0].mxu0
  %v315 = vadd.f32 0.0, %v314
  %v316 = vpop.f32.mrb[0].mxu0
  %317 = vmatprep.mubr.bf16.mxu0 0
  %318 = vmatmul.mubr.bf16.gmra.mrb[0].mxu0 %v172
  %v319 = vpop.f32.mrb[0].mxu0
  %v320 = vadd.f32 0.0, %v319
  %v321 = vpop.f32.mrb[0].mxu0
  %v322 = vpop.f32.mrb[0].mxu0
  %v323 = vadd.f32 0.0, %v322
  %v324 = vpop.f32.mrb[0].mxu0
  %325 = vdwg.mxu0
  %v326 = vadd.f32 %v101, %v264
  %v327 = vadd.f32 %v102, %v267
  %v328 = vadd.f32 %v103, %v272
  %v329 = vadd.f32 %v104, %v275
  %v330 = vadd.f32 %v105, %v280
  %v331 = vadd.f32 %v106, %v283
  %v332 = vadd.f32 %v107, %v288
  %v333 = vadd.f32 %v108, %v291
  %v334 = vadd.f32 %v109, %v296
  %v335 = vadd.f32 %v110, %v299
  %v336 = vadd.f32 %v111, %v304
  %v337 = vadd.f32 %v112, %v307
  %v338 = vadd.f32 %v113, %v312
  %v339 = vadd.f32 %v114, %v315
  %v340 = vadd.f32 %v115, %v320
  %v341 = vadd.f32 %v116, %v323
  %vm342 = vcmask 130048
  %343 = vst.msk [vmem:[#allocation2] sm:$0xff] %vm342, %v326
  %344 = vst.msk [vmem:[#allocation2 + $0x8] sm:$0xff] %vm342, %v327
  %345 = vst.msk [vmem:[#allocation2 + $0x10] sm:$0xff] %vm342, %v328
  %346 = vst.msk [vmem:[#allocation2 + $0x18] sm:$0xff] %vm342, %v329
  %347 = vst.msk [vmem:[#allocation2 + $0x20] sm:$0xff] %vm342, %v330
  %348 = vst.msk [vmem:[#allocation2 + $0x28] sm:$0xff] %vm342, %v331
  %349 = vst.msk [vmem:[#allocation2 + $0x30] sm:$0xff] %vm342, %v332
  %350 = vst.msk [vmem:[#allocation2 + $0x38] sm:$0xff] %vm342, %v333
  %351 = vst.msk [vmem:[#allocation2 + $0x40] sm:$0xff] %vm342, %v334
  %352 = vst.msk [vmem:[#allocation2 + $0x48] sm:$0xff] %vm342, %v335
  %353 = vst.msk [vmem:[#allocation2 + $0x50] sm:$0xff] %vm342, %v336
  %354 = vst.msk [vmem:[#allocation2 + $0x58] sm:$0xff] %vm342, %v337
  %355 = vst.msk [vmem:[#allocation2 + $0x60] sm:$0xff] %vm342, %v338
  %356 = vst.msk [vmem:[#allocation2 + $0x68] sm:$0xff] %vm342, %v339
  %357 = vst.msk [vmem:[#allocation2 + $0x70] sm:$0xff] %vm342, %v340
  %358 = vst.msk [vmem:[#allocation2 + $0x78] sm:$0xff] %vm342, %v341
  // Predicated region
  $region18: #{_lambda_.25} parent=0 // pred_check
    %p359 = pneg %p16
  $region19: #{_lambda_.25} parent=0 // pred_check_branch
    %361 = sbr.rel (%p359) target = $region21
  $region20: #{_lambda_.25} parent=0 // pred_region
    %v362 = vld [vmem:[#allocation2] sm:$0xff]
    %v363 = vld [vmem:[#allocation2 + $0x8] sm:$0xff]
    %v364 = vld [vmem:[#allocation2 + $0x10] sm:$0xff]
    %v365 = vld [vmem:[#allocation2 + $0x18] sm:$0xff]
    %v366 = vld [vmem:[#allocation2 + $0x20] sm:$0xff]
    %v367 = vld [vmem:[#allocation2 + $0x28] sm:$0xff]
    %v368 = vld [vmem:[#allocation2 + $0x30] sm:$0xff]
    %v369 = vld [vmem:[#allocation2 + $0x38] sm:$0xff]
    %v370 = vld [vmem:[#allocation2 + $0x40] sm:$0xff]
    %v371 = vld [vmem:[#allocation2 + $0x48] sm:$0xff]
    %v372 = vld [vmem:[#allocation2 + $0x50] sm:$0xff]
    %v373 = vld [vmem:[#allocation2 + $0x58] sm:$0xff]
    %v374 = vld [vmem:[#allocation2 + $0x60] sm:$0xff]
    %v375 = vld [vmem:[#allocation2 + $0x68] sm:$0xff]
    %v376 = vld [vmem:[#allocation2 + $0x70] sm:$0xff]
    %v377 = vld [vmem:[#allocation2 + $0x78] sm:$0xff]
    %v378 = vld [vmem:[%s2] sm:$0x1]
    %v380 = vlaneseq
    %v381 = vshrl.u32 %v380, 7
    %v382 = vsub.s32 0, %v381
    %v383 = vrot.slane %v378, %v382
    %v385 = vadd.f32 %v362, %v383
    %v386 = vadd.f32 %v363, %v383
    %v387 = vadd.f32 %v364, %v383
    %v388 = vadd.f32 %v365, %v383
    %v389 = vadd.f32 %v366, %v383
    %v390 = vadd.f32 %v367, %v383
    %v391 = vadd.f32 %v368, %v383
    %v392 = vadd.f32 %v369, %v383
    %v393 = vadd.f32 %v370, %v383
    %v394 = vadd.f32 %v371, %v383
    %v395 = vadd.f32 %v372, %v383
    %v396 = vadd.f32 %v373, %v383
    %v397 = vadd.f32 %v374, %v383
    %v398 = vadd.f32 %v375, %v383
    %v399 = vadd.f32 %v376, %v383
    %v400 = vadd.f32 %v377, %v383
    %v401 = vpack.c.bf16 %v386, %v385
    %v402 = vpack.c.bf16 %v388, %v387
    %v403 = vpack.c.bf16 %v390, %v389
    %v404 = vpack.c.bf16 %v392, %v391
    %v405 = vpack.c.bf16 %v394, %v393
    %v406 = vpack.c.bf16 %v396, %v395
    %v407 = vpack.c.bf16 %v398, %v397
    %v408 = vpack.c.bf16 %v400, %v399
    %v417 = vunpack.c.l.b16 %v401
    %v418 = vunpack.c.h.b16 %v401
    %v419 = vunpack.c.l.b16 %v402
    %v420 = vunpack.c.h.b16 %v402
    %v421 = vunpack.c.l.b16 %v403
    %v422 = vunpack.c.h.b16 %v403
    %v423 = vunpack.c.l.b16 %v404
    %v424 = vunpack.c.h.b16 %v404
    %v425 = vunpack.c.l.b16 %v405
    %v426 = vunpack.c.h.b16 %v405
    %v427 = vunpack.c.l.b16 %v406
    %v428 = vunpack.c.h.b16 %v406
    %v429 = vunpack.c.l.b16 %v407
    %v430 = vunpack.c.h.b16 %v407
    %v431 = vunpack.c.l.b16 %v408
    %v432 = vunpack.c.h.b16 %v408
    %v433 = vpack.c.b16 %v417, %v417
    %v434 = vpack.c.b16 %v418, %v418
    %v435 = vpack.c.b16 %v419, %v419
    %v436 = vpack.c.b16 %v420, %v420
    %v437 = vpack.c.b16 %v421, %v421
    %v438 = vpack.c.b16 %v422, %v422
    %v439 = vpack.c.b16 %v423, %v423
    %v440 = vpack.c.b16 %v424, %v424
    %v441 = vpack.c.b16 %v425, %v425
    %v442 = vpack.c.b16 %v426, %v426
    %v443 = vpack.c.b16 %v427, %v427
    %v444 = vpack.c.b16 %v428, %v428
    %v445 = vpack.c.b16 %v429, %v429
    %v446 = vpack.c.b16 %v430, %v430
    %v447 = vpack.c.b16 %v431, %v431
    %v448 = vpack.c.b16 %v432, %v432
    %vm465 = vcmask 125952
    %466 = vst.msk [vmem:[%s3] sm:$0xf] %vm465, %v433
    %467 = vst.msk [vmem:[%s3 + $0x4] sm:$0xf] %vm465, %v434
    %468 = vst.msk [vmem:[%s3 + $0x8] sm:$0xf] %vm465, %v435
    %469 = vst.msk [vmem:[%s3 + $0xc] sm:$0xf] %vm465, %v436
    %470 = vst.msk [vmem:[%s3 + $0x10] sm:$0xf] %vm465, %v437
    %471 = vst.msk [vmem:[%s3 + $0x14] sm:$0xf] %vm465, %v438
    %472 = vst.msk [vmem:[%s3 + $0x18] sm:$0xf] %vm465, %v439
    %473 = vst.msk [vmem:[%s3 + $0x1c] sm:$0xf] %vm465, %v440
    %474 = vst.msk [vmem:[%s3 + $0x20] sm:$0xf] %vm465, %v441
    %475 = vst.msk [vmem:[%s3 + $0x24] sm:$0xf] %vm465, %v442
    %476 = vst.msk [vmem:[%s3 + $0x28] sm:$0xf] %vm465, %v443
    %477 = vst.msk [vmem:[%s3 + $0x2c] sm:$0xf] %vm465, %v444
    %478 = vst.msk [vmem:[%s3 + $0x30] sm:$0xf] %vm465, %v445
    %479 = vst.msk [vmem:[%s3 + $0x34] sm:$0xf] %vm465, %v446
    %480 = vst.msk [vmem:[%s3 + $0x38] sm:$0xf] %vm465, %v447
    %481 = vst.msk [vmem:[%s3 + $0x3c] sm:$0xf] %vm465, %v448
  $region21: #{_lambda_.25} parent=0 // pred_fallthru
    _
  // Predicated region
  $region22: #{_lambda_.25} parent=0 // pred_check
    _
  $region23: #{_lambda_.25} parent=0 // pred_check_branch
    %483 = sbr.rel (0) target = $region25
  $region24: #{_lambda_.25} parent=0 // pred_region
    _
  $region25: #{_lambda_.25} parent=0 // pred_fallthru
    _
  // Predicated region
  $region26: #{_lambda_.25} parent=0 // pred_check
    _
  $region27: #{_lambda_.25} parent=0 // pred_check_branch
    %485 = sbr.rel (0) target = $region29
  $region28: #{_lambda_.25} parent=0 // pred_region
    _
  $region29: #{_lambda_.25} parent=0 // pred_fallthru
    _

// kernel: _lambda_.26
$region0: #{_lambda_.26}
  #allocation0 [shape = 'u32[]', space=smem, size = 0x4, offset = 0x4, fixed_abs, tag = 'smem constant byte address 0x4 - core index']
  #allocation1 [shape = 'u32[144,128]{1,0:T(1,128)}', space=vmem, size = 0x12000, scoped, tag = 'internal scratch']
  #allocation2 [shape = 'f32[1,16]{1,0:T(1,128)}', space=vmem, size = 0x200, scoped, tag = 'scratch operand']
  #allocation3 [shape = 'f32[1,16]{1,0:T(1,128)}', space=vmem, size = 0x200, scoped, tag = 'scratch operand']
  %s0 = inlined_call_operand.vmem [shape: bf16[128,16], index: 0, kind: input, shape index: {}]
  %s1 = inlined_call_operand.vmem [shape: f32[1,16], index: 1, kind: output, shape index: {0}]
  %s2 = inlined_call_operand.vmem [shape: f32[1,16], index: 2, kind: output, shape index: {1}]
  %3 = xla_tuple %s1, %s2
  %s4 = sld [smem:[#allocation0]]
  $region30: #{_lambda_.26} parent=0
    _
  %s6 = ssub.s32 1, %s4
  %s7 = scalar_select 0, %s6, %s4
  // Predicated region
  $region2: #{_lambda_.26} parent=0 // pred_check
    _
  $region3: #{_lambda_.26} parent=0 // pred_check_branch
    %9 = sbr.rel (0) target = $region5
  $region4: #{_lambda_.26} parent=0 // pred_region
    _
  $region5: #{_lambda_.26} parent=0 // pred_fallthru
    _
  %p10 = scmp.eq.s32.totalorder 0, 0
  // Predicated region
  $region6: #{_lambda_.26} parent=0 // pred_check
    %p11 = pneg %p10
  $region7: #{_lambda_.26} parent=0 // pred_check_branch
    %13 = sbr.rel (%p11) target = $region9
  $region8: #{_lambda_.26} parent=0 // pred_region
    %vm14 = vcmask 122880
    %15 = vst.msk [vmem:[#allocation2] sm:$0x1] %vm14, 0.0
    %16 = vst.msk [vmem:[#allocation3] sm:$0x1] %vm14, 0.0
  $region9: #{_lambda_.26} parent=0 // pred_fallthru
    _
  %v17 = vld [vmem:[%s0] sm:$0xf]
  %v18 = vld [vmem:[%s0 + $0x4] sm:$0xf]
  %v19 = vld [vmem:[%s0 + $0x8] sm:$0xf]
  %v20 = vld [vmem:[%s0 + $0xc] sm:$0xf]
  %v21 = vld [vmem:[%s0 + $0x10] sm:$0xf]
  %v22 = vld [vmem:[%s0 + $0x14] sm:$0xf]
  %v23 = vld [vmem:[%s0 + $0x18] sm:$0xf]
  %v24 = vld [vmem:[%s0 + $0x1c] sm:$0xf]
  %v25 = vld [vmem:[%s0 + $0x20] sm:$0xf]
  %v26 = vld [vmem:[%s0 + $0x24] sm:$0xf]
  %v27 = vld [vmem:[%s0 + $0x28] sm:$0xf]
  %v28 = vld [vmem:[%s0 + $0x2c] sm:$0xf]
  %v29 = vld [vmem:[%s0 + $0x30] sm:$0xf]
  %v30 = vld [vmem:[%s0 + $0x34] sm:$0xf]
  %v31 = vld [vmem:[%s0 + $0x38] sm:$0xf]
  %v32 = vld [vmem:[%s0 + $0x3c] sm:$0xf]
  %v33 = vunpack.c.l.bf16 %v17
  %v34 = vunpack.c.l.bf16 %v18
  %v35 = vunpack.c.l.bf16 %v19
  %v36 = vunpack.c.l.bf16 %v20
  %v37 = vunpack.c.l.bf16 %v21
  %v38 = vunpack.c.l.bf16 %v22
  %v39 = vunpack.c.l.bf16 %v23
  %v40 = vunpack.c.l.bf16 %v24
  %v41 = vunpack.c.l.bf16 %v25
  %v42 = vunpack.c.l.bf16 %v26
  %v43 = vunpack.c.l.bf16 %v27
  %v44 = vunpack.c.l.bf16 %v28
  %v45 = vunpack.c.l.bf16 %v29
  %v46 = vunpack.c.l.bf16 %v30
  %v47 = vunpack.c.l.bf16 %v31
  %v48 = vunpack.c.l.bf16 %v32
  %v49 = vld [vmem:[#allocation2] sm:$0x1]
  %vm50 = vcmask 130048
  %v51 = vsel %vm50, %v33, 0.0
  %v52 = vsel %vm50, %v34, 0.0
  %v53 = vadd.f32 %v51, %v52
  %v54 = vsel %vm50, %v35, 0.0
  %v55 = vadd.f32 %v53, %v54
  %v56 = vsel %vm50, %v36, 0.0
  %v57 = vadd.f32 %v55, %v56
  %v58 = vsel %vm50, %v37, 0.0
  %v59 = vadd.f32 %v57, %v58
  %v60 = vsel %vm50, %v38, 0.0
  %v61 = vadd.f32 %v59, %v60
  %v62 = vsel %vm50, %v39, 0.0
  %v63 = vadd.f32 %v61, %v62
  %v64 = vsel %vm50, %v40, 0.0
  %v65 = vadd.f32 %v63, %v64
  %v66 = vsel %vm50, %v41, 0.0
  %v67 = vadd.f32 %v65, %v66
  %v68 = vsel %vm50, %v42, 0.0
  %v69 = vadd.f32 %v67, %v68
  %v70 = vsel %vm50, %v43, 0.0
  %v71 = vadd.f32 %v69, %v70
  %v72 = vsel %vm50, %v44, 0.0
  %v73 = vadd.f32 %v71, %v72
  %v74 = vsel %vm50, %v45, 0.0
  %v75 = vadd.f32 %v73, %v74
  %v76 = vsel %vm50, %v46, 0.0
  %v77 = vadd.f32 %v75, %v76
  %v78 = vsel %vm50, %v47, 0.0
  %v79 = vadd.f32 %v77, %v78
  %v80 = vsel %vm50, %v48, 0.0
  %v81 = vadd.f32 %v79, %v80
  %v82 = vrot.slane %v81, 4
  %v83 = vadd.f32 %v81, %v82
  %v84 = vrot.slane %v83, 2
  %v85 = vadd.f32 %v83, %v84
  %v86 = vrot.slane %v85, 1
  %v87 = vadd.f32 %v85, %v86
  %v88 = vadd.f32 %v49, %v87
  %vm89 = vcmask 122880
  %90 = vst.msk [vmem:[#allocation2] sm:$0x1] %vm89, %v88
  %v91 = vld [vmem:[#allocation3] sm:$0x1]
  %v92 = vmul.f32 %v33, %v33
  %v93 = vmul.f32 %v34, %v34
  %v94 = vmul.f32 %v35, %v35
  %v95 = vmul.f32 %v36, %v36
  %v96 = vmul.f32 %v37, %v37
  %v97 = vmul.f32 %v38, %v38
  %v98 = vmul.f32 %v39, %v39
  %v99 = vmul.f32 %v40, %v40
  %v100 = vmul.f32 %v41, %v41
  %v101 = vmul.f32 %v42, %v42
  %v102 = vmul.f32 %v43, %v43
  %v103 = vmul.f32 %v44, %v44
  %v104 = vmul.f32 %v45, %v45
  %v105 = vmul.f32 %v46, %v46
  %v106 = vmul.f32 %v47, %v47
  %v107 = vmul.f32 %v48, %v48
  %v108 = vsel %vm50, %v92, 0.0
  %v109 = vsel %vm50, %v93, 0.0
  %v110 = vadd.f32 %v108, %v109
  %v111 = vsel %vm50, %v94, 0.0
  %v112 = vadd.f32 %v110, %v111
  %v113 = vsel %vm50, %v95, 0.0
  %v114 = vadd.f32 %v112, %v113
  %v115 = vsel %vm50, %v96, 0.0
  %v116 = vadd.f32 %v114, %v115
  %v117 = vsel %vm50, %v97, 0.0
  %v118 = vadd.f32 %v116, %v117
  %v119 = vsel %vm50, %v98, 0.0
  %v120 = vadd.f32 %v118, %v119
  %v121 = vsel %vm50, %v99, 0.0
  %v122 = vadd.f32 %v120, %v121
  %v123 = vsel %vm50, %v100, 0.0
  %v124 = vadd.f32 %v122, %v123
  %v125 = vsel %vm50, %v101, 0.0
  %v126 = vadd.f32 %v124, %v125
  %v127 = vsel %vm50, %v102, 0.0
  %v128 = vadd.f32 %v126, %v127
  %v129 = vsel %vm50, %v103, 0.0
  %v130 = vadd.f32 %v128, %v129
  %v131 = vsel %vm50, %v104, 0.0
  %v132 = vadd.f32 %v130, %v131
  %v133 = vsel %vm50, %v105, 0.0
  %v134 = vadd.f32 %v132, %v133
  %v135 = vsel %vm50, %v106, 0.0
  %v136 = vadd.f32 %v134, %v135
  %v137 = vsel %vm50, %v107, 0.0
  %v138 = vadd.f32 %v136, %v137
  %v139 = vrot.slane %v138, 4
  %v140 = vadd.f32 %v138, %v139
  %v141 = vrot.slane %v140, 2
  %v142 = vadd.f32 %v140, %v141
  %v143 = vrot.slane %v142, 1
  %v144 = vadd.f32 %v142, %v143
  %v145 = vadd.f32 %v91, %v144
  %146 = vst.msk [vmem:[#allocation3] sm:$0x1] %vm89, %v145
  // Predicated region
  $region10: #{_lambda_.26} parent=0 // pred_check
    %p147 = pneg %p10
  $region11: #{_lambda_.26} parent=0 // pred_check_branch
    %149 = sbr.rel (%p147) target = $region13
  $region12: #{_lambda_.26} parent=0 // pred_region
    %v150 = vld [vmem:[#allocation2] sm:$0x1]
    %151 = vst.msk [vmem:[%s1] sm:$0x1] %vm89, %v150
    %v152 = vld [vmem:[#allocation3] sm:$0x1]
    %153 = vst.msk [vmem:[%s2] sm:$0x1] %vm89, %v152
  $region13: #{_lambda_.26} parent=0 // pred_fallthru
    _
  // Predicated region
  $region14: #{_lambda_.26} parent=0 // pred_check
    _
  $region15: #{_lambda_.26} parent=0 // pred_check_branch
    %155 = sbr.rel (0) target = $region17
  $region16: #{_lambda_.26} parent=0 // pred_region
    _
  $region17: #{_lambda_.26} parent=0 // pred_fallthru
    _
  // Predicated region
  $region18: #{_lambda_.26} parent=0 // pred_check
    _
  $region19: #{_lambda_.26} parent=0 // pred_check_branch
    %157 = sbr.rel (0) target = $region21
  $region20: #{_lambda_.26} parent=0 // pred_region
    _
  $region21: #{_lambda_.26} parent=0 // pred_fallthru
    _
  // Predicated region
  $region22: #{_lambda_.26} parent=0 // pred_check
    _
  $region23: #{_lambda_.26} parent=0 // pred_check_branch
    %159 = sbr.rel (0) target = $region25
  $region24: #{_lambda_.26} parent=0 // pred_region
    _
  $region25: #{_lambda_.26} parent=0 // pred_fallthru
    _
  // Predicated region
  $region26: #{_lambda_.26} parent=0 // pred_check
    _
  $region27: #{_lambda_.26} parent=0 // pred_check_branch
    %161 = sbr.rel (0) target = $region29
  $region28: #{_lambda_.26} parent=0 // pred_region
    _
  $region29: #{_lambda_.26} parent=0 // pred_fallthru
    _

// kernel: _lambda_.27
$region0: #{_lambda_.27}
  #allocation0 [shape = 'u32[]', space=smem, size = 0x4, offset = 0x4, fixed_abs, tag = 'smem constant byte address 0x4 - core index']
  #allocation1 [shape = 'u32[144,128]{1,0:T(1,128)}', space=vmem, size = 0x12000, scoped, tag = 'internal scratch']
  %s0 = inlined_call_operand.vmem [shape: bf16[128,16], index: 0, kind: input, shape index: {}]
  %s1 = inlined_call_operand.vmem [shape: f32[1,16], index: 1, kind: input, shape index: {}]
  %s2 = inlined_call_operand.vmem [shape: f32[1,16], index: 2, kind: input, shape index: {}]
  %s3 = inlined_call_operand.vmem [shape: bf16[128,16], index: 3, kind: output, shape index: {}]
  %s4 = sld [smem:[#allocation0]]
  $region22: #{_lambda_.27} parent=0
    _
  %s6 = ssub.s32 1, %s4
  %s7 = scalar_select 0, %s6, %s4
  // Predicated region
  $region2: #{_lambda_.27} parent=0 // pred_check
    _
  $region3: #{_lambda_.27} parent=0 // pred_check_branch
    %9 = sbr.rel (0) target = $region5
  $region4: #{_lambda_.27} parent=0 // pred_region
    _
  $region5: #{_lambda_.27} parent=0 // pred_fallthru
    _
  // Predicated region
  $region6: #{_lambda_.27} parent=0 // pred_check
    _
  $region7: #{_lambda_.27} parent=0 // pred_check_branch
    %11 = sbr.rel (0) target = $region9
  $region8: #{_lambda_.27} parent=0 // pred_region
    _
  $region9: #{_lambda_.27} parent=0 // pred_fallthru
    _
  // Predicated region
  $region10: #{_lambda_.27} parent=0 // pred_check
    _
  $region11: #{_lambda_.27} parent=0 // pred_check_branch
    %13 = sbr.rel (0) target = $region13
  $region12: #{_lambda_.27} parent=0 // pred_region
    _
  $region13: #{_lambda_.27} parent=0 // pred_fallthru
    _
  %v14 = vld [vmem:[%s0] sm:$0xf]
  %v15 = vld [vmem:[%s0 + $0x4] sm:$0xf]
  %v16 = vld [vmem:[%s0 + $0x8] sm:$0xf]
  %v17 = vld [vmem:[%s0 + $0xc] sm:$0xf]
  %v18 = vld [vmem:[%s0 + $0x10] sm:$0xf]
  %v19 = vld [vmem:[%s0 + $0x14] sm:$0xf]
  %v20 = vld [vmem:[%s0 + $0x18] sm:$0xf]
  %v21 = vld [vmem:[%s0 + $0x1c] sm:$0xf]
  %v22 = vld [vmem:[%s0 + $0x20] sm:$0xf]
  %v23 = vld [vmem:[%s0 + $0x24] sm:$0xf]
  %v24 = vld [vmem:[%s0 + $0x28] sm:$0xf]
  %v25 = vld [vmem:[%s0 + $0x2c] sm:$0xf]
  %v26 = vld [vmem:[%s0 + $0x30] sm:$0xf]
  %v27 = vld [vmem:[%s0 + $0x34] sm:$0xf]
  %v28 = vld [vmem:[%s0 + $0x38] sm:$0xf]
  %v29 = vld [vmem:[%s0 + $0x3c] sm:$0xf]
  %v30 = vunpack.c.l.bf16 %v14
  %v31 = vunpack.c.l.bf16 %v15
  %v32 = vunpack.c.l.bf16 %v16
  %v33 = vunpack.c.l.bf16 %v17
  %v34 = vunpack.c.l.bf16 %v18
  %v35 = vunpack.c.l.bf16 %v19
  %v36 = vunpack.c.l.bf16 %v20
  %v37 = vunpack.c.l.bf16 %v21
  %v38 = vunpack.c.l.bf16 %v22
  %v39 = vunpack.c.l.bf16 %v23
  %v40 = vunpack.c.l.bf16 %v24
  %v41 = vunpack.c.l.bf16 %v25
  %v42 = vunpack.c.l.bf16 %v26
  %v43 = vunpack.c.l.bf16 %v27
  %v44 = vunpack.c.l.bf16 %v28
  %v45 = vunpack.c.l.bf16 %v29
  %v46 = vld [vmem:[%s1] sm:$0x1]
  %v48 = vlaneseq
  %v49 = vshrl.u32 %v48, 7
  %v50 = vsub.s32 0, %v49
  %v51 = vrot.slane %v46, %v50
  %v53 = vmul.f32 %v30, %v51
  %v54 = vmul.f32 %v31, %v51
  %v55 = vmul.f32 %v32, %v51
  %v56 = vmul.f32 %v33, %v51
  %v57 = vmul.f32 %v34, %v51
  %v58 = vmul.f32 %v35, %v51
  %v59 = vmul.f32 %v36, %v51
  %v60 = vmul.f32 %v37, %v51
  %v61 = vmul.f32 %v38, %v51
  %v62 = vmul.f32 %v39, %v51
  %v63 = vmul.f32 %v40, %v51
  %v64 = vmul.f32 %v41, %v51
  %v65 = vmul.f32 %v42, %v51
  %v66 = vmul.f32 %v43, %v51
  %v67 = vmul.f32 %v44, %v51
  %v68 = vmul.f32 %v45, %v51
  %v69 = vld [vmem:[%s2] sm:$0x1]
  %v71 = vlaneseq
  %v72 = vshrl.u32 %v71, 7
  %v73 = vsub.s32 0, %v72
  %v74 = vrot.slane %v69, %v73
  %v76 = vadd.f32 %v53, %v74
  %v77 = vadd.f32 %v54, %v74
  %v78 = vadd.f32 %v55, %v74
  %v79 = vadd.f32 %v56, %v74
  %v80 = vadd.f32 %v57, %v74
  %v81 = vadd.f32 %v58, %v74
  %v82 = vadd.f32 %v59, %v74
  %v83 = vadd.f32 %v60, %v74
  %v84 = vadd.f32 %v61, %v74
  %v85 = vadd.f32 %v62, %v74
  %v86 = vadd.f32 %v63, %v74
  %v87 = vadd.f32 %v64, %v74
  %v88 = vadd.f32 %v65, %v74
  %v89 = vadd.f32 %v66, %v74
  %v90 = vadd.f32 %v67, %v74
  %v91 = vadd.f32 %v68, %v74
  %v92 = vpack.c.bf16 %v77, %v76
  %v93 = vpack.c.bf16 %v79, %v78
  %v94 = vpack.c.bf16 %v81, %v80
  %v95 = vpack.c.bf16 %v83, %v82
  %v96 = vpack.c.bf16 %v85, %v84
  %v97 = vpack.c.bf16 %v87, %v86
  %v98 = vpack.c.bf16 %v89, %v88
  %v99 = vpack.c.bf16 %v91, %v90
  %v108 = vunpack.c.l.b16 %v92
  %v109 = vunpack.c.h.b16 %v92
  %v110 = vunpack.c.l.b16 %v93
  %v111 = vunpack.c.h.b16 %v93
  %v112 = vunpack.c.l.b16 %v94
  %v113 = vunpack.c.h.b16 %v94
  %v114 = vunpack.c.l.b16 %v95
  %v115 = vunpack.c.h.b16 %v95
  %v116 = vunpack.c.l.b16 %v96
  %v117 = vunpack.c.h.b16 %v96
  %v118 = vunpack.c.l.b16 %v97
  %v119 = vunpack.c.h.b16 %v97
  %v120 = vunpack.c.l.b16 %v98
  %v121 = vunpack.c.h.b16 %v98
  %v122 = vunpack.c.l.b16 %v99
  %v123 = vunpack.c.h.b16 %v99
  %v124 = vpack.c.b16 %v108, %v108
  %v125 = vpack.c.b16 %v109, %v109
  %v126 = vpack.c.b16 %v110, %v110
  %v127 = vpack.c.b16 %v111, %v111
  %v128 = vpack.c.b16 %v112, %v112
  %v129 = vpack.c.b16 %v113, %v113
  %v130 = vpack.c.b16 %v114, %v114
  %v131 = vpack.c.b16 %v115, %v115
  %v132 = vpack.c.b16 %v116, %v116
  %v133 = vpack.c.b16 %v117, %v117
  %v134 = vpack.c.b16 %v118, %v118
  %v135 = vpack.c.b16 %v119, %v119
  %v136 = vpack.c.b16 %v120, %v120
  %v137 = vpack.c.b16 %v121, %v121
  %v138 = vpack.c.b16 %v122, %v122
  %v139 = vpack.c.b16 %v123, %v123
  %vm156 = vcmask 125952
  %157 = vst.msk [vmem:[%s3] sm:$0xf] %vm156, %v124
  %158 = vst.msk [vmem:[%s3 + $0x4] sm:$0xf] %vm156, %v125
  %159 = vst.msk [vmem:[%s3 + $0x8] sm:$0xf] %vm156, %v126
  %160 = vst.msk [vmem:[%s3 + $0xc] sm:$0xf] %vm156, %v127
  %161 = vst.msk [vmem:[%s3 + $0x10] sm:$0xf] %vm156, %v128
  %162 = vst.msk [vmem:[%s3 + $0x14] sm:$0xf] %vm156, %v129
  %163 = vst.msk [vmem:[%s3 + $0x18] sm:$0xf] %vm156, %v130
  %164 = vst.msk [vmem:[%s3 + $0x1c] sm:$0xf] %vm156, %v131
  %165 = vst.msk [vmem:[%s3 + $0x20] sm:$0xf] %vm156, %v132
  %166 = vst.msk [vmem:[%s3 + $0x24] sm:$0xf] %vm156, %v133
  %167 = vst.msk [vmem:[%s3 + $0x28] sm:$0xf] %vm156, %v134
  %168 = vst.msk [vmem:[%s3 + $0x2c] sm:$0xf] %vm156, %v135
  %169 = vst.msk [vmem:[%s3 + $0x30] sm:$0xf] %vm156, %v136
  %170 = vst.msk [vmem:[%s3 + $0x34] sm:$0xf] %vm156, %v137
  %171 = vst.msk [vmem:[%s3 + $0x38] sm:$0xf] %vm156, %v138
  %172 = vst.msk [vmem:[%s3 + $0x3c] sm:$0xf] %vm156, %v139
  // Predicated region
  $region14: #{_lambda_.27} parent=0 // pred_check
    _
  $region15: #{_lambda_.27} parent=0 // pred_check_branch
    %174 = sbr.rel (0) target = $region17
  $region16: #{_lambda_.27} parent=0 // pred_region
    _
  $region17: #{_lambda_.27} parent=0 // pred_fallthru
    _
  // Predicated region
  $region18: #{_lambda_.27} parent=0 // pred_check
    _
  $region19: #{_lambda_.27} parent=0 // pred_check_branch
    %176 = sbr.rel (0) target = $region21
  $region20: #{_lambda_.27} parent=0 // pred_region
    _
  $region21: #{_lambda_.27} parent=0 // pred_fallthru
    _

// kernel: _lambda_.29
$region0: #{_lambda_.29}
  #allocation0 [shape = 'u32[]', space=smem, size = 0x4, offset = 0x4, fixed_abs, tag = 'smem constant byte address 0x4 - core index']
  #allocation1 [shape = 'u32[144,128]{1,0:T(1,128)}', space=vmem, size = 0x12000, scoped, tag = 'internal scratch']
  #allocation2 [shape = 'f32[1,32]{1,0:T(1,128)}', space=vmem, size = 0x200, scoped, tag = 'scratch operand']
  #allocation3 [shape = 'f32[1,32]{1,0:T(1,128)}', space=vmem, size = 0x200, scoped, tag = 'scratch operand']
  %s0 = inlined_call_operand.vmem [shape: bf16[32,32], index: 0, kind: input, shape index: {}]
  %s1 = inlined_call_operand.vmem [shape: f32[1,32], index: 1, kind: output, shape index: {0}]
  %s2 = inlined_call_operand.vmem [shape: f32[1,32], index: 2, kind: output, shape index: {1}]
  %3 = xla_tuple %s1, %s2
  %s4 = sld [smem:[#allocation0]]
  $region30: #{_lambda_.29} parent=0
    _
  %s6 = ssub.s32 1, %s4
  %s7 = scalar_select 0, %s6, %s4
  // Predicated region
  $region2: #{_lambda_.29} parent=0 // pred_check
    _
  $region3: #{_lambda_.29} parent=0 // pred_check_branch
    %9 = sbr.rel (0) target = $region5
  $region4: #{_lambda_.29} parent=0 // pred_region
    _
  $region5: #{_lambda_.29} parent=0 // pred_fallthru
    _
  %p10 = scmp.eq.s32.totalorder 0, 0
  // Predicated region
  $region6: #{_lambda_.29} parent=0 // pred_check
    %p11 = pneg %p10
  $region7: #{_lambda_.29} parent=0 // pred_check_branch
    %13 = sbr.rel (%p11) target = $region9
  $region8: #{_lambda_.29} parent=0 // pred_region
    %vm14 = vcmask 253952
    %15 = vst.msk [vmem:[#allocation2] sm:$0x1] %vm14, 0.0
    %16 = vst.msk [vmem:[#allocation3] sm:$0x1] %vm14, 0.0
  $region9: #{_lambda_.29} parent=0 // pred_fallthru
    _
  %v17 = vld [vmem:[%s0] sm:$0xf]
  %v18 = vld [vmem:[%s0 + $0x4] sm:$0xf]
  %v19 = vld [vmem:[%s0 + $0x8] sm:$0xf]
  %v20 = vld [vmem:[%s0 + $0xc] sm:$0xf]
  %v21 = vunpack.c.l.bf16 %v17
  %v22 = vunpack.c.l.bf16 %v18
  %v23 = vunpack.c.l.bf16 %v19
  %v24 = vunpack.c.l.bf16 %v20
  %v25 = vld [vmem:[#allocation2] sm:$0x1]
  %vm26 = vcmask 261120
  %v27 = vsel %vm26, %v21, 0.0
  %v28 = vsel %vm26, %v22, 0.0
  %v29 = vadd.f32 %v27, %v28
  %v30 = vsel %vm26, %v23, 0.0
  %v31 = vadd.f32 %v29, %v30
  %v32 = vsel %vm26, %v24, 0.0
  %v33 = vadd.f32 %v31, %v32
  %v34 = vrot.slane %v33, 4
  %v35 = vadd.f32 %v33, %v34
  %v36 = vrot.slane %v35, 2
  %v37 = vadd.f32 %v35, %v36
  %v38 = vrot.slane %v37, 1
  %v39 = vadd.f32 %v37, %v38
  %v40 = vadd.f32 %v25, %v39
  %vm41 = vcmask 253952
  %42 = vst.msk [vmem:[#allocation2] sm:$0x1] %vm41, %v40
  %v43 = vld [vmem:[#allocation3] sm:$0x1]
  %v44 = vmul.f32 %v21, %v21
  %v45 = vmul.f32 %v22, %v22
  %v46 = vmul.f32 %v23, %v23
  %v47 = vmul.f32 %v24, %v24
  %v48 = vsel %vm26, %v44, 0.0
  %v49 = vsel %vm26, %v45, 0.0
  %v50 = vadd.f32 %v48, %v49
  %v51 = vsel %vm26, %v46, 0.0
  %v52 = vadd.f32 %v50, %v51
  %v53 = vsel %vm26, %v47, 0.0
  %v54 = vadd.f32 %v52, %v53
  %v55 = vrot.slane %v54, 4
  %v56 = vadd.f32 %v54, %v55
  %v57 = vrot.slane %v56, 2
  %v58 = vadd.f32 %v56, %v57
  %v59 = vrot.slane %v58, 1
  %v60 = vadd.f32 %v58, %v59
  %v61 = vadd.f32 %v43, %v60
  %62 = vst.msk [vmem:[#allocation3] sm:$0x1] %vm41, %v61
  // Predicated region
  $region10: #{_lambda_.29} parent=0 // pred_check
    %p63 = pneg %p10
  $region11: #{_lambda_.29} parent=0 // pred_check_branch
    %65 = sbr.rel (%p63) target = $region13
  $region12: #{_lambda_.29} parent=0 // pred_region
    %v66 = vld [vmem:[#allocation2] sm:$0x1]
    %67 = vst.msk [vmem:[%s1] sm:$0x1] %vm41, %v66
    %v68 = vld [vmem:[#allocation3] sm:$0x1]
    %69 = vst.msk [vmem:[%s2] sm:$0x1] %vm41, %v68
  $region13: #{_lambda_.29} parent=0 // pred_fallthru
    _
  // Predicated region
  $region14: #{_lambda_.29} parent=0 // pred_check
    _
  $region15: #{_lambda_.29} parent=0 // pred_check_branch
    %71 = sbr.rel (0) target = $region17
  $region16: #{_lambda_.29} parent=0 // pred_region
    _
  $region17: #{_lambda_.29} parent=0 // pred_fallthru
    _
  // Predicated region
  $region18: #{_lambda_.29} parent=0 // pred_check
    _
  $region19: #{_lambda_.29} parent=0 // pred_check_branch
    %73 = sbr.rel (0) target = $region21
  $region20: #{_lambda_.29} parent=0 // pred_region
    _
  $region21: #{_lambda_.29} parent=0 // pred_fallthru
    _
  // Predicated region
  $region22: #{_lambda_.29} parent=0 // pred_check
    _
  $region23: #{_lambda_.29} parent=0 // pred_check_branch
    %75 = sbr.rel (0) target = $region25
  $region24: #{_lambda_.29} parent=0 // pred_region
    _
  $region25: #{_lambda_.29} parent=0 // pred_fallthru
    _
  // Predicated region
  $region26: #{_lambda_.29} parent=0 // pred_check
    _
  $region27: #{_lambda_.29} parent=0 // pred_check_branch
    %77 = sbr.rel (0) target = $region29
  $region28: #{_lambda_.29} parent=0 // pred_region
    _
  $region29: #{_lambda_.29} parent=0 // pred_fallthru
    _

// kernel: _lambda_.30
$region0: #{_lambda_.30}
  #allocation0 [shape = 'u32[]', space=smem, size = 0x4, offset = 0x4, fixed_abs, tag = 'smem constant byte address 0x4 - core index']
  #allocation1 [shape = 'u32[144,128]{1,0:T(1,128)}', space=vmem, size = 0x12000, scoped, tag = 'internal scratch']
  %s0 = inlined_call_operand.vmem [shape: bf16[32,32], index: 0, kind: input, shape index: {}]
  %s1 = inlined_call_operand.vmem [shape: f32[1,32], index: 1, kind: input, shape index: {}]
  %s2 = inlined_call_operand.vmem [shape: f32[1,32], index: 2, kind: input, shape index: {}]
  %s3 = inlined_call_operand.vmem [shape: bf16[32,32], index: 3, kind: output, shape index: {}]
  %s4 = sld [smem:[#allocation0]]
  $region22: #{_lambda_.30} parent=0
    _
  %s6 = ssub.s32 1, %s4
  %s7 = scalar_select 0, %s6, %s4
  // Predicated region
  $region2: #{_lambda_.30} parent=0 // pred_check
    _
  $region3: #{_lambda_.30} parent=0 // pred_check_branch
    %9 = sbr.rel (0) target = $region5
  $region4: #{_lambda_.30} parent=0 // pred_region
    _
  $region5: #{_lambda_.30} parent=0 // pred_fallthru
    _
  // Predicated region
  $region6: #{_lambda_.30} parent=0 // pred_check
    _
  $region7: #{_lambda_.30} parent=0 // pred_check_branch
    %11 = sbr.rel (0) target = $region9
  $region8: #{_lambda_.30} parent=0 // pred_region
    _
  $region9: #{_lambda_.30} parent=0 // pred_fallthru
    _
  // Predicated region
  $region10: #{_lambda_.30} parent=0 // pred_check
    _
  $region11: #{_lambda_.30} parent=0 // pred_check_branch
    %13 = sbr.rel (0) target = $region13
  $region12: #{_lambda_.30} parent=0 // pred_region
    _
  $region13: #{_lambda_.30} parent=0 // pred_fallthru
    _
  %v14 = vld [vmem:[%s0] sm:$0xf]
  %v15 = vld [vmem:[%s0 + $0x4] sm:$0xf]
  %v16 = vld [vmem:[%s0 + $0x8] sm:$0xf]
  %v17 = vld [vmem:[%s0 + $0xc] sm:$0xf]
  %v18 = vunpack.c.l.bf16 %v14
  %v19 = vunpack.c.l.bf16 %v15
  %v20 = vunpack.c.l.bf16 %v16
  %v21 = vunpack.c.l.bf16 %v17
  %v22 = vld [vmem:[%s1] sm:$0x1]
  %v24 = vlaneseq
  %v25 = vshrl.u32 %v24, 7
  %v26 = vsub.s32 0, %v25
  %v27 = vrot.slane %v22, %v26
  %v29 = vmul.f32 %v18, %v27
  %v30 = vmul.f32 %v19, %v27
  %v31 = vmul.f32 %v20, %v27
  %v32 = vmul.f32 %v21, %v27
  %v33 = vld [vmem:[%s2] sm:$0x1]
  %v35 = vlaneseq
  %v36 = vshrl.u32 %v35, 7
  %v37 = vsub.s32 0, %v36
  %v38 = vrot.slane %v33, %v37
  %v40 = vadd.f32 %v29, %v38
  %v41 = vadd.f32 %v30, %v38
  %v42 = vadd.f32 %v31, %v38
  %v43 = vadd.f32 %v32, %v38
  %v44 = vpack.c.bf16 %v41, %v40
  %v45 = vpack.c.bf16 %v43, %v42
  %v48 = vunpack.c.l.b16 %v44
  %v49 = vunpack.c.h.b16 %v44
  %v50 = vunpack.c.l.b16 %v45
  %v51 = vunpack.c.h.b16 %v45
  %v52 = vpack.c.b16 %v48, %v48
  %v53 = vpack.c.b16 %v49, %v49
  %v54 = vpack.c.b16 %v50, %v50
  %v55 = vpack.c.b16 %v51, %v51
  %vm60 = vcmask 257024
  %61 = vst.msk [vmem:[%s3] sm:$0xf] %vm60, %v52
  %62 = vst.msk [vmem:[%s3 + $0x4] sm:$0xf] %vm60, %v53
  %63 = vst.msk [vmem:[%s3 + $0x8] sm:$0xf] %vm60, %v54
  %64 = vst.msk [vmem:[%s3 + $0xc] sm:$0xf] %vm60, %v55
  // Predicated region
  $region14: #{_lambda_.30} parent=0 // pred_check
    _
  $region15: #{_lambda_.30} parent=0 // pred_check_branch
    %66 = sbr.rel (0) target = $region17
  $region16: #{_lambda_.30} parent=0 // pred_region
    _
  $region17: #{_lambda_.30} parent=0 // pred_fallthru
    _
  // Predicated region
  $region18: #{_lambda_.30} parent=0 // pred_check
    _
  $region19: #{_lambda_.30} parent=0 // pred_check_branch
    %68 = sbr.rel (0) target = $region21
  $region20: #{_lambda_.30} parent=0 // pred_region
    _
  $region21: #{_lambda_.30} parent=0 // pred_fallthru
    _

// kernel: _lambda_.28
$region0: #{_lambda_.28}
  #allocation0 [shape = 'u32[]', space=smem, size = 0x4, offset = 0x4, fixed_abs, tag = 'smem constant byte address 0x4 - core index']
  #allocation1 [shape = 'u32[144,128]{1,0:T(1,128)}', space=vmem, size = 0x12000, scoped, tag = 'internal scratch']
  #allocation2 [shape = 'f32[32,32]{1,0:T(8,128)}', space=vmem, size = 0x4000, scoped, tag = 'scratch operand']
  %s0 = inlined_call_operand.vmem [shape: bf16[1,32,256], index: 0, kind: input, shape index: {}]
  %s1 = inlined_call_operand.vmem [shape: bf16[1,256,32], index: 1, kind: input, shape index: {}]
  %s2 = inlined_call_operand.vmem [shape: f32[1,1,32], index: 2, kind: input, shape index: {}]
  %s3 = inlined_call_operand.vmem [shape: bf16[1,32,32], index: 3, kind: output, shape index: {}]
  %s4 = sld [smem:[#allocation0]]
  $region30: #{_lambda_.28} parent=0
    _
  %s6 = ssub.s32 1, %s4
  %s7 = scalar_select 0, %s6, %s4
  // Predicated region
  $region2: #{_lambda_.28} parent=0 // pred_check
    _
  $region3: #{_lambda_.28} parent=0 // pred_check_branch
    %9 = sbr.rel (0) target = $region5
  $region4: #{_lambda_.28} parent=0 // pred_region
    _
  $region5: #{_lambda_.28} parent=0 // pred_fallthru
    _
  // Predicated region
  $region6: #{_lambda_.28} parent=0 // pred_check
    _
  $region7: #{_lambda_.28} parent=0 // pred_check_branch
    %11 = sbr.rel (0) target = $region9
  $region8: #{_lambda_.28} parent=0 // pred_region
    _
  $region9: #{_lambda_.28} parent=0 // pred_fallthru
    _
  // Predicated region
  $region10: #{_lambda_.28} parent=0 // pred_check
    _
  $region11: #{_lambda_.28} parent=0 // pred_check_branch
    %13 = sbr.rel (0) target = $region13
  $region12: #{_lambda_.28} parent=0 // pred_region
    _
  $region13: #{_lambda_.28} parent=0 // pred_fallthru
    _
  %p16 = scmp.eq.s32.totalorder 0, 0
  // Predicated region
  $region14: #{_lambda_.28} parent=0 // pred_check
    %p17 = pneg %p16
  $region15: #{_lambda_.28} parent=0 // pred_check_branch
    %19 = sbr.rel (%p17) target = $region17
  $region16: #{_lambda_.28} parent=0 // pred_region
    %vm20 = vcmask 261120
    %21 = vst.msk [vmem:[#allocation2] sm:$0xff] %vm20, 0.0
    %22 = vst.msk [vmem:[#allocation2 + $0x8] sm:$0xff] %vm20, 0.0
    %23 = vst.msk [vmem:[#allocation2 + $0x10] sm:$0xff] %vm20, 0.0
    %24 = vst.msk [vmem:[#allocation2 + $0x18] sm:$0xff] %vm20, 0.0
  $region17: #{_lambda_.28} parent=0 // pred_fallthru
    _
  %v25 = vld [vmem:[%s0] sm:$0xff]
  %v26 = vld [vmem:[%s0 + $0x8] sm:$0xff]
  %v27 = vld [vmem:[%s0 + $0x10] sm:$0xff]
  %v28 = vld [vmem:[%s0 + $0x18] sm:$0xff]
  %vm29 = vcmp.gt.bf16.partialorder %v25, 0
  %vm30 = vcmp.gt.bf16.partialorder %v26, 0
  %vm31 = vcmp.gt.bf16.partialorder %v27, 0
  %vm32 = vcmp.gt.bf16.partialorder %v28, 0
  %v33 = vmul.bf16 %v25, 1045249613
  %v34 = vmul.bf16 %v26, 1045249613
  %v35 = vmul.bf16 %v27, 1045249613
  %v36 = vmul.bf16 %v28, 1045249613
  %v37 = vsel %vm29, %v25, %v33
  %v38 = vsel %vm30, %v26, %v34
  %v39 = vsel %vm31, %v27, %v35
  %v40 = vsel %vm32, %v28, %v36
  %v41 = vld [vmem:[#allocation2] sm:$0xff]
  %v42 = vld [vmem:[#allocation2 + $0x8] sm:$0xff]
  %v43 = vld [vmem:[#allocation2 + $0x10] sm:$0xff]
  %v44 = vld [vmem:[#allocation2 + $0x18] sm:$0xff]
  %v45 = vld [vmem:[%s1] sm:$0xf]
  %v46 = vld [vmem:[%s1 + $0x4] sm:$0xf]
  %v47 = vld [vmem:[%s1 + $0x8] sm:$0xf]
  %v48 = vld [vmem:[%s1 + $0xc] sm:$0xf]
  %v49 = vld [vmem:[%s1 + $0x10] sm:$0xf]
  %v50 = vld [vmem:[%s1 + $0x14] sm:$0xf]
  %v51 = vld [vmem:[%s1 + $0x18] sm:$0xf]
  %v52 = vld [vmem:[%s1 + $0x1c] sm:$0xf]
  %v53 = vld [vmem:[%s1 + $0x20] sm:$0xf]
  %v54 = vld [vmem:[%s1 + $0x24] sm:$0xf]
  %v55 = vld [vmem:[%s1 + $0x28] sm:$0xf]
  %v56 = vld [vmem:[%s1 + $0x2c] sm:$0xf]
  %v57 = vld [vmem:[%s1 + $0x30] sm:$0xf]
  %v58 = vld [vmem:[%s1 + $0x34] sm:$0xf]
  %v59 = vld [vmem:[%s1 + $0x38] sm:$0xf]
  %v60 = vld [vmem:[%s1 + $0x3c] sm:$0xf]
  %v61 = vld [vmem:[%s1 + $0x40] sm:$0xf]
  %v62 = vld [vmem:[%s1 + $0x44] sm:$0xf]
  %v63 = vld [vmem:[%s1 + $0x48] sm:$0xf]
  %v64 = vld [vmem:[%s1 + $0x4c] sm:$0xf]
  %v65 = vld [vmem:[%s1 + $0x50] sm:$0xf]
  %v66 = vld [vmem:[%s1 + $0x54] sm:$0xf]
  %v67 = vld [vmem:[%s1 + $0x58] sm:$0xf]
  %v68 = vld [vmem:[%s1 + $0x5c] sm:$0xf]
  %v69 = vld [vmem:[%s1 + $0x60] sm:$0xf]
  %v70 = vld [vmem:[%s1 + $0x64] sm:$0xf]
  %v71 = vld [vmem:[%s1 + $0x68] sm:$0xf]
  %v72 = vld [vmem:[%s1 + $0x6c] sm:$0xf]
  %v73 = vld [vmem:[%s1 + $0x70] sm:$0xf]
  %v74 = vld [vmem:[%s1 + $0x74] sm:$0xf]
  %v75 = vld [vmem:[%s1 + $0x78] sm:$0xf]
  %v76 = vld [vmem:[%s1 + $0x7c] sm:$0xf]
  %v81 = vunpack.c.l.b16 %v37
  %v82 = vunpack.c.h.b16 %v37
  %v83 = vunpack.c.l.b16 %v38
  %v84 = vunpack.c.h.b16 %v38
  %v85 = vunpack.c.l.b16 %v39
  %v86 = vunpack.c.h.b16 %v39
  %v87 = vunpack.c.l.b16 %v40
  %v88 = vunpack.c.h.b16 %v40
  %v89 = vpack.c.b16 %v83, %v81
  %v90 = vpack.c.b16 %v84, %v82
  %v91 = vpack.c.b16 %v87, %v85
  %v92 = vpack.c.b16 %v88, %v86
  %v129 = vunpack.c.l.b16 %v45
  %v130 = vunpack.c.l.b16 %v46
  %v131 = vunpack.c.l.b16 %v47
  %v132 = vunpack.c.l.b16 %v48
  %v133 = vunpack.c.l.b16 %v49
  %v134 = vunpack.c.l.b16 %v50
  %v135 = vunpack.c.l.b16 %v51
  %v136 = vunpack.c.l.b16 %v52
  %v137 = vunpack.c.l.b16 %v53
  %v138 = vunpack.c.l.b16 %v54
  %v139 = vunpack.c.l.b16 %v55
  %v140 = vunpack.c.l.b16 %v56
  %v141 = vunpack.c.l.b16 %v57
  %v142 = vunpack.c.l.b16 %v58
  %v143 = vunpack.c.l.b16 %v59
  %v144 = vunpack.c.l.b16 %v60
  %v145 = vunpack.c.l.b16 %v61
  %v146 = vunpack.c.l.b16 %v62
  %v147 = vunpack.c.l.b16 %v63
  %v148 = vunpack.c.l.b16 %v64
  %v149 = vunpack.c.l.b16 %v65
  %v150 = vunpack.c.l.b16 %v66
  %v151 = vunpack.c.l.b16 %v67
  %v152 = vunpack.c.l.b16 %v68
  %v153 = vunpack.c.l.b16 %v69
  %v154 = vunpack.c.l.b16 %v70
  %v155 = vunpack.c.l.b16 %v71
  %v156 = vunpack.c.l.b16 %v72
  %v157 = vunpack.c.l.b16 %v73
  %v158 = vunpack.c.l.b16 %v74
  %v159 = vunpack.c.l.b16 %v75
  %v160 = vunpack.c.l.b16 %v76
  %v161 = vpack.c.b16 %v130, %v129
  %v162 = vpack.c.b16 %v132, %v131
  %v163 = vpack.c.b16 %v134, %v133
  %v164 = vpack.c.b16 %v136, %v135
  %v165 = vpack.c.b16 %v138, %v137
  %v166 = vpack.c.b16 %v140, %v139
  %v167 = vpack.c.b16 %v142, %v141
  %v168 = vpack.c.b16 %v144, %v143
  %v169 = vpack.c.b16 %v146, %v145
  %v170 = vpack.c.b16 %v148, %v147
  %v171 = vpack.c.b16 %v150, %v149
  %v172 = vpack.c.b16 %v152, %v151
  %v173 = vpack.c.b16 %v154, %v153
  %v174 = vpack.c.b16 %v156, %v155
  %v175 = vpack.c.b16 %v158, %v157
  %v176 = vpack.c.b16 %v160, %v159
  %193 = vmatprep.subr.bf16.mxu0 0
  %194 = vmatpush1.bf16.msra.mxu0 %v161
  %195 = vmatprep.subr.bf16.mxu0 0
  %196 = vmatpush1.bf16.msra.mxu0 %v162
  %197 = vmatprep.subr.bf16.mxu0 0
  %198 = vmatpush1.bf16.msra.mxu0 %v163
  %199 = vmatprep.subr.bf16.mxu0 0
  %200 = vmatpush1.bf16.msra.mxu0 %v164
  %201 = vmatprep.subr.bf16.mxu0 0
  %202 = vmatpush1.bf16.msra.mxu0 %v165
  %203 = vmatprep.subr.bf16.mxu0 0
  %204 = vmatpush1.bf16.msra.mxu0 %v166
  %205 = vmatprep.subr.bf16.mxu0 0
  %206 = vmatpush1.bf16.msra.mxu0 %v167
  %207 = vmatprep.subr.bf16.mxu0 0
  %208 = vmatpush1.bf16.msra.mxu0 %v168
  %209 = vmatprep.subr.bf16.mxu0 0
  %210 = vmatpush1.bf16.msra.mxu0 %v169
  %211 = vmatprep.subr.bf16.mxu0 0
  %212 = vmatpush1.bf16.msra.mxu0 %v170
  %213 = vmatprep.subr.bf16.mxu0 0
  %214 = vmatpush1.bf16.msra.mxu0 %v171
  %215 = vmatprep.subr.bf16.mxu0 0
  %216 = vmatpush1.bf16.msra.mxu0 %v172
  %217 = vmatprep.subr.bf16.mxu0 0
  %218 = vmatpush1.bf16.msra.mxu0 %v173
  %219 = vmatprep.subr.bf16.mxu0 0
  %220 = vmatpush1.bf16.msra.mxu0 %v174
  %221 = vmatprep.subr.bf16.mxu0 0
  %222 = vmatpush1.bf16.msra.mxu0 %v175
  %223 = vmatprep.subr.bf16.mxu0 0
  %224 = vmatpush1.bf16.msra.mxu0 %v176
  %225 = vmatprep.mubr.bf16.mxu0 %v90
  %226 = vmatmul.mubr.bf16.gmra.mrb[0].mxu0 %v89
  %v227 = vpop.f32.mrb[0].mxu0
  %v228 = vadd.f32 0.0, %v227
  %v229 = vpop.f32.mrb[0].mxu0
  %v230 = vpop.f32.mrb[0].mxu0
  %v231 = vadd.f32 0.0, %v230
  %v232 = vpop.f32.mrb[0].mxu0
  %233 = vmatprep.mubr.bf16.mxu0 %v92
  %234 = vmatmul.mubr.bf16.gmra.mrb[0].mxu0 %v91
  %v235 = vpop.f32.mrb[0].mxu0
  %v236 = vadd.f32 0.0, %v235
  %v237 = vpop.f32.mrb[0].mxu0
  %v238 = vpop.f32.mrb[0].mxu0
  %v239 = vadd.f32 0.0, %v238
  %v240 = vpop.f32.mrb[0].mxu0
  %241 = vdwg.mxu0
  %v242 = vadd.f32 %v41, %v228
  %v243 = vadd.f32 %v42, %v231
  %v244 = vadd.f32 %v43, %v236
  %v245 = vadd.f32 %v44, %v239
  %vm246 = vcmask 261120
  %247 = vst.msk [vmem:[#allocation2] sm:$0xff] %vm246, %v242
  %248 = vst.msk [vmem:[#allocation2 + $0x8] sm:$0xff] %vm246, %v243
  %249 = vst.msk [vmem:[#allocation2 + $0x10] sm:$0xff] %vm246, %v244
  %250 = vst.msk [vmem:[#allocation2 + $0x18] sm:$0xff] %vm246, %v245
  // Predicated region
  $region18: #{_lambda_.28} parent=0 // pred_check
    %p251 = pneg %p16
  $region19: #{_lambda_.28} parent=0 // pred_check_branch
    %253 = sbr.rel (%p251) target = $region21
  $region20: #{_lambda_.28} parent=0 // pred_region
    %v254 = vld [vmem:[#allocation2] sm:$0xff]
    %v255 = vld [vmem:[#allocation2 + $0x8] sm:$0xff]
    %v256 = vld [vmem:[#allocation2 + $0x10] sm:$0xff]
    %v257 = vld [vmem:[#allocation2 + $0x18] sm:$0xff]
    %v258 = vld [vmem:[%s2] sm:$0x1]
    %v260 = vlaneseq
    %v261 = vshrl.u32 %v260, 7
    %v262 = vsub.s32 0, %v261
    %v263 = vrot.slane %v258, %v262
    %v265 = vadd.f32 %v254, %v263
    %v266 = vadd.f32 %v255, %v263
    %v267 = vadd.f32 %v256, %v263
    %v268 = vadd.f32 %v257, %v263
    %v269 = vpack.c.bf16 %v266, %v265
    %v270 = vpack.c.bf16 %v268, %v267
    %v273 = vunpack.c.l.b16 %v269
    %v274 = vunpack.c.h.b16 %v269
    %v275 = vunpack.c.l.b16 %v270
    %v276 = vunpack.c.h.b16 %v270
    %v277 = vpack.c.b16 %v273, %v273
    %v278 = vpack.c.b16 %v274, %v274
    %v279 = vpack.c.b16 %v275, %v275
    %v280 = vpack.c.b16 %v276, %v276
    %vm285 = vcmask 257024
    %286 = vst.msk [vmem:[%s3] sm:$0xf] %vm285, %v277
    %287 = vst.msk [vmem:[%s3 + $0x4] sm:$0xf] %vm285, %v278
    %288 = vst.msk [vmem:[%s3 + $0x8] sm:$0xf] %vm285, %v279
    %289 = vst.msk [vmem:[%s3 + $0xc] sm:$0xf] %vm285, %v280
  $region21: #{_lambda_.28} parent=0 // pred_fallthru
    _
  // Predicated region
  $region22: #{_lambda_.28} parent=0 // pred_check
    _
  $region23: #{_lambda_.28} parent=0 // pred_check_branch
    %291 = sbr.rel (0) target = $region25
  $region24: #{_lambda_.28} parent=0 // pred_region
    _
  $region25: #{_lambda_.28} parent=0 // pred_fallthru
    _
  // Predicated region
  $region26: #{_lambda_.28} parent=0 // pred_check
    _
  $region27: #{_lambda_.28} parent=0 // pred_check_branch
    %293 = sbr.rel (0) target = $region29
  $region28: #{_lambda_.28} parent=0 // pred_region
    _
  $region29: #{_lambda_.28} parent=0 // pred_fallthru
    _

// kernel: _lambda_.32
$region0: #{_lambda_.32}
  #allocation0 [shape = 'u32[]', space=smem, size = 0x4, offset = 0x4, fixed_abs, tag = 'smem constant byte address 0x4 - core index']
  #allocation1 [shape = 'u32[144,128]{1,0:T(1,128)}', space=vmem, size = 0x12000, scoped, tag = 'internal scratch']
  #allocation2 [shape = 'f32[1,64]{1,0:T(1,128)}', space=vmem, size = 0x200, scoped, tag = 'scratch operand']
  #allocation3 [shape = 'f32[1,64]{1,0:T(1,128)}', space=vmem, size = 0x200, scoped, tag = 'scratch operand']
  %s0 = inlined_call_operand.vmem [shape: bf16[8,64], index: 0, kind: input, shape index: {}]
  %s1 = inlined_call_operand.vmem [shape: f32[1,64], index: 1, kind: output, shape index: {0}]
  %s2 = inlined_call_operand.vmem [shape: f32[1,64], index: 2, kind: output, shape index: {1}]
  %3 = xla_tuple %s1, %s2
  %s4 = sld [smem:[#allocation0]]
  $region30: #{_lambda_.32} parent=0
    _
  %s6 = ssub.s32 1, %s4
  %s7 = scalar_select 0, %s6, %s4
  // Predicated region
  $region2: #{_lambda_.32} parent=0 // pred_check
    _
  $region3: #{_lambda_.32} parent=0 // pred_check_branch
    %9 = sbr.rel (0) target = $region5
  $region4: #{_lambda_.32} parent=0 // pred_region
    _
  $region5: #{_lambda_.32} parent=0 // pred_fallthru
    _
  %p10 = scmp.eq.s32.totalorder 0, 0
  // Predicated region
  $region6: #{_lambda_.32} parent=0 // pred_check
    %p11 = pneg %p10
  $region7: #{_lambda_.32} parent=0 // pred_check_branch
    %13 = sbr.rel (%p11) target = $region9
  $region8: #{_lambda_.32} parent=0 // pred_region
    %vm14 = vcmask 516096
    %15 = vst.msk [vmem:[#allocation2] sm:$0x1] %vm14, 0.0
    %16 = vst.msk [vmem:[#allocation3] sm:$0x1] %vm14, 0.0
  $region9: #{_lambda_.32} parent=0 // pred_fallthru
    _
  %v17 = vld [vmem:[%s0] sm:$0xf]
  %v18 = vunpack.c.l.bf16 %v17
  %v19 = vld [vmem:[#allocation2] sm:$0x1]
  %vm20 = vcmask 523264
  %v21 = vsel %vm20, %v18, 0.0
  %v22 = vrot.slane %v21, 4
  %v23 = vadd.f32 %v21, %v22
  %v24 = vrot.slane %v23, 2
  %v25 = vadd.f32 %v23, %v24
  %v26 = vrot.slane %v25, 1
  %v27 = vadd.f32 %v25, %v26
  %v28 = vadd.f32 %v19, %v27
  %vm29 = vcmask 516096
  %30 = vst.msk [vmem:[#allocation2] sm:$0x1] %vm29, %v28
  %v31 = vld [vmem:[#allocation3] sm:$0x1]
  %v32 = vmul.f32 %v18, %v18
  %v33 = vsel %vm20, %v32, 0.0
  %v34 = vrot.slane %v33, 4
  %v35 = vadd.f32 %v33, %v34
  %v36 = vrot.slane %v35, 2
  %v37 = vadd.f32 %v35, %v36
  %v38 = vrot.slane %v37, 1
  %v39 = vadd.f32 %v37, %v38
  %v40 = vadd.f32 %v31, %v39
  %41 = vst.msk [vmem:[#allocation3] sm:$0x1] %vm29, %v40
  // Predicated region
  $region10: #{_lambda_.32} parent=0 // pred_check
    %p42 = pneg %p10
  $region11: #{_lambda_.32} parent=0 // pred_check_branch
    %44 = sbr.rel (%p42) target = $region13
  $region12: #{_lambda_.32} parent=0 // pred_region
    %v45 = vld [vmem:[#allocation2] sm:$0x1]
    %46 = vst.msk [vmem:[%s1] sm:$0x1] %vm29, %v45
    %v47 = vld [vmem:[#allocation3] sm:$0x1]
    %48 = vst.msk [vmem:[%s2] sm:$0x1] %vm29, %v47
  $region13: #{_lambda_.32} parent=0 // pred_fallthru
    _
  // Predicated region
  $region14: #{_lambda_.32} parent=0 // pred_check
    _
  $region15: #{_lambda_.32} parent=0 // pred_check_branch
    %50 = sbr.rel (0) target = $region17
  $region16: #{_lambda_.32} parent=0 // pred_region
    _
  $region17: #{_lambda_.32} parent=0 // pred_fallthru
    _
  // Predicated region
  $region18: #{_lambda_.32} parent=0 // pred_check
    _
  $region19: #{_lambda_.32} parent=0 // pred_check_branch
    %52 = sbr.rel (0) target = $region21
  $region20: #{_lambda_.32} parent=0 // pred_region
    _
  $region21: #{_lambda_.32} parent=0 // pred_fallthru
    _
  // Predicated region
  $region22: #{_lambda_.32} parent=0 // pred_check
    _
  $region23: #{_lambda_.32} parent=0 // pred_check_branch
    %54 = sbr.rel (0) target = $region25
  $region24: #{_lambda_.32} parent=0 // pred_region
    _
  $region25: #{_lambda_.32} parent=0 // pred_fallthru
    _
  // Predicated region
  $region26: #{_lambda_.32} parent=0 // pred_check
    _
  $region27: #{_lambda_.32} parent=0 // pred_check_branch
    %56 = sbr.rel (0) target = $region29
  $region28: #{_lambda_.32} parent=0 // pred_region
    _
  $region29: #{_lambda_.32} parent=0 // pred_fallthru
    _

// kernel: _lambda_.31
$region0: #{_lambda_.31}
  #allocation0 [shape = 'u32[]', space=smem, size = 0x4, offset = 0x4, fixed_abs, tag = 'smem constant byte address 0x4 - core index']
  #allocation1 [shape = 'u32[144,128]{1,0:T(1,128)}', space=vmem, size = 0x12000, scoped, tag = 'internal scratch']
  #allocation2 [shape = 'f32[8,64]{1,0:T(8,128)}', space=vmem, size = 0x1000, scoped, tag = 'scratch operand']
  %s0 = inlined_call_operand.vmem [shape: bf16[1,8,512], index: 0, kind: input, shape index: {}]
  %s1 = inlined_call_operand.vmem [shape: bf16[1,512,64], index: 1, kind: input, shape index: {}]
  %s2 = inlined_call_operand.vmem [shape: f32[1,1,64], index: 2, kind: input, shape index: {}]
  %s3 = inlined_call_operand.vmem [shape: bf16[1,8,64], index: 3, kind: output, shape index: {}]
  %s4 = sld [smem:[#allocation0]]
  $region30: #{_lambda_.31} parent=0
    _
  %s6 = ssub.s32 1, %s4
  %s7 = scalar_select 0, %s6, %s4
  // Predicated region
  $region2: #{_lambda_.31} parent=0 // pred_check
    _
  $region3: #{_lambda_.31} parent=0 // pred_check_branch
    %9 = sbr.rel (0) target = $region5
  $region4: #{_lambda_.31} parent=0 // pred_region
    _
  $region5: #{_lambda_.31} parent=0 // pred_fallthru
    _
  // Predicated region
  $region6: #{_lambda_.31} parent=0 // pred_check
    _
  $region7: #{_lambda_.31} parent=0 // pred_check_branch
    %11 = sbr.rel (0) target = $region9
  $region8: #{_lambda_.31} parent=0 // pred_region
    _
  $region9: #{_lambda_.31} parent=0 // pred_fallthru
    _
  // Predicated region
  $region10: #{_lambda_.31} parent=0 // pred_check
    _
  $region11: #{_lambda_.31} parent=0 // pred_check_branch
    %13 = sbr.rel (0) target = $region13
  $region12: #{_lambda_.31} parent=0 // pred_region
    _
  $region13: #{_lambda_.31} parent=0 // pred_fallthru
    _
  %p16 = scmp.eq.s32.totalorder 0, 0
  // Predicated region
  $region14: #{_lambda_.31} parent=0 // pred_check
    %p17 = pneg %p16
  $region15: #{_lambda_.31} parent=0 // pred_check_branch
    %19 = sbr.rel (%p17) target = $region17
  $region16: #{_lambda_.31} parent=0 // pred_region
    %vm20 = vcmask 523264
    %21 = vst.msk [vmem:[#allocation2] sm:$0xff] %vm20, 0.0
  $region17: #{_lambda_.31} parent=0 // pred_fallthru
    _
  %v22 = vld [vmem:[%s0] sm:$0xff]
  %v23 = vld [vmem:[%s0 + $0x8] sm:$0xff]
  %vm24 = vcmp.gt.bf16.partialorder %v22, 0
  %vm25 = vcmp.gt.bf16.partialorder %v23, 0
  %v26 = vmul.bf16 %v22, 1045249613
  %v27 = vmul.bf16 %v23, 1045249613
  %v28 = vsel %vm24, %v22, %v26
  %v29 = vsel %vm25, %v23, %v27
  %v30 = vld [vmem:[#allocation2] sm:$0xff]
  %v31 = vld [vmem:[%s1] sm:$0xf]
  %v32 = vld [vmem:[%s1 + $0x4] sm:$0xf]
  %v33 = vld [vmem:[%s1 + $0x8] sm:$0xf]
  %v34 = vld [vmem:[%s1 + $0xc] sm:$0xf]
  %v35 = vld [vmem:[%s1 + $0x10] sm:$0xf]
  %v36 = vld [vmem:[%s1 + $0x14] sm:$0xf]
  %v37 = vld [vmem:[%s1 + $0x18] sm:$0xf]
  %v38 = vld [vmem:[%s1 + $0x1c] sm:$0xf]
  %v39 = vld [vmem:[%s1 + $0x20] sm:$0xf]
  %v40 = vld [vmem:[%s1 + $0x24] sm:$0xf]
  %v41 = vld [vmem:[%s1 + $0x28] sm:$0xf]
  %v42 = vld [vmem:[%s1 + $0x2c] sm:$0xf]
  %v43 = vld [vmem:[%s1 + $0x30] sm:$0xf]
  %v44 = vld [vmem:[%s1 + $0x34] sm:$0xf]
  %v45 = vld [vmem:[%s1 + $0x38] sm:$0xf]
  %v46 = vld [vmem:[%s1 + $0x3c] sm:$0xf]
  %v47 = vld [vmem:[%s1 + $0x40] sm:$0xf]
  %v48 = vld [vmem:[%s1 + $0x44] sm:$0xf]
  %v49 = vld [vmem:[%s1 + $0x48] sm:$0xf]
  %v50 = vld [vmem:[%s1 + $0x4c] sm:$0xf]
  %v51 = vld [vmem:[%s1 + $0x50] sm:$0xf]
  %v52 = vld [vmem:[%s1 + $0x54] sm:$0xf]
  %v53 = vld [vmem:[%s1 + $0x58] sm:$0xf]
  %v54 = vld [vmem:[%s1 + $0x5c] sm:$0xf]
  %v55 = vld [vmem:[%s1 + $0x60] sm:$0xf]
  %v56 = vld [vmem:[%s1 + $0x64] sm:$0xf]
  %v57 = vld [vmem:[%s1 + $0x68] sm:$0xf]
  %v58 = vld [vmem:[%s1 + $0x6c] sm:$0xf]
  %v59 = vld [vmem:[%s1 + $0x70] sm:$0xf]
  %v60 = vld [vmem:[%s1 + $0x74] sm:$0xf]
  %v61 = vld [vmem:[%s1 + $0x78] sm:$0xf]
  %v62 = vld [vmem:[%s1 + $0x7c] sm:$0xf]
  %v63 = vld [vmem:[%s1 + $0x80] sm:$0xf]
  %v64 = vld [vmem:[%s1 + $0x84] sm:$0xf]
  %v65 = vld [vmem:[%s1 + $0x88] sm:$0xf]
  %v66 = vld [vmem:[%s1 + $0x8c] sm:$0xf]
  %v67 = vld [vmem:[%s1 + $0x90] sm:$0xf]
  %v68 = vld [vmem:[%s1 + $0x94] sm:$0xf]
  %v69 = vld [vmem:[%s1 + $0x98] sm:$0xf]
  %v70 = vld [vmem:[%s1 + $0x9c] sm:$0xf]
  %v71 = vld [vmem:[%s1 + $0xa0] sm:$0xf]
  %v72 = vld [vmem:[%s1 + $0xa4] sm:$0xf]
  %v73 = vld [vmem:[%s1 + $0xa8] sm:$0xf]
  %v74 = vld [vmem:[%s1 + $0xac] sm:$0xf]
  %v75 = vld [vmem:[%s1 + $0xb0] sm:$0xf]
  %v76 = vld [vmem:[%s1 + $0xb4] sm:$0xf]
  %v77 = vld [vmem:[%s1 + $0xb8] sm:$0xf]
  %v78 = vld [vmem:[%s1 + $0xbc] sm:$0xf]
  %v79 = vld [vmem:[%s1 + $0xc0] sm:$0xf]
  %v80 = vld [vmem:[%s1 + $0xc4] sm:$0xf]
  %v81 = vld [vmem:[%s1 + $0xc8] sm:$0xf]
  %v82 = vld [vmem:[%s1 + $0xcc] sm:$0xf]
  %v83 = vld [vmem:[%s1 + $0xd0] sm:$0xf]
  %v84 = vld [vmem:[%s1 + $0xd4] sm:$0xf]
  %v85 = vld [vmem:[%s1 + $0xd8] sm:$0xf]
  %v86 = vld [vmem:[%s1 + $0xdc] sm:$0xf]
  %v87 = vld [vmem:[%s1 + $0xe0] sm:$0xf]
  %v88 = vld [vmem:[%s1 + $0xe4] sm:$0xf]
  %v89 = vld [vmem:[%s1 + $0xe8] sm:$0xf]
  %v90 = vld [vmem:[%s1 + $0xec] sm:$0xf]
  %v91 = vld [vmem:[%s1 + $0xf0] sm:$0xf]
  %v92 = vld [vmem:[%s1 + $0xf4] sm:$0xf]
  %v93 = vld [vmem:[%s1 + $0xf8] sm:$0xf]
  %v94 = vld [vmem:[%s1 + $0xfc] sm:$0xf]
  %v97 = vunpack.c.l.b16 %v28
  %v98 = vunpack.c.h.b16 %v28
  %v99 = vunpack.c.l.b16 %v29
  %v100 = vunpack.c.h.b16 %v29
  %v101 = vpack.c.b16 %v97, %v97
  %v102 = vpack.c.b16 %v98, %v98
  %v103 = vpack.c.b16 %v99, %v99
  %v104 = vpack.c.b16 %v100, %v100
  %v173 = vunpack.c.l.b16 %v31
  %v174 = vunpack.c.l.b16 %v32
  %v175 = vunpack.c.l.b16 %v33
  %v176 = vunpack.c.l.b16 %v34
  %v177 = vunpack.c.l.b16 %v35
  %v178 = vunpack.c.l.b16 %v36
  %v179 = vunpack.c.l.b16 %v37
  %v180 = vunpack.c.l.b16 %v38
  %v181 = vunpack.c.l.b16 %v39
  %v182 = vunpack.c.l.b16 %v40
  %v183 = vunpack.c.l.b16 %v41
  %v184 = vunpack.c.l.b16 %v42
  %v185 = vunpack.c.l.b16 %v43
  %v186 = vunpack.c.l.b16 %v44
  %v187 = vunpack.c.l.b16 %v45
  %v188 = vunpack.c.l.b16 %v46
  %v189 = vunpack.c.l.b16 %v47
  %v190 = vunpack.c.l.b16 %v48
  %v191 = vunpack.c.l.b16 %v49
  %v192 = vunpack.c.l.b16 %v50
  %v193 = vunpack.c.l.b16 %v51
  %v194 = vunpack.c.l.b16 %v52
  %v195 = vunpack.c.l.b16 %v53
  %v196 = vunpack.c.l.b16 %v54
  %v197 = vunpack.c.l.b16 %v55
  %v198 = vunpack.c.l.b16 %v56
  %v199 = vunpack.c.l.b16 %v57
  %v200 = vunpack.c.l.b16 %v58
  %v201 = vunpack.c.l.b16 %v59
  %v202 = vunpack.c.l.b16 %v60
  %v203 = vunpack.c.l.b16 %v61
  %v204 = vunpack.c.l.b16 %v62
  %v205 = vunpack.c.l.b16 %v63
  %v206 = vunpack.c.l.b16 %v64
  %v207 = vunpack.c.l.b16 %v65
  %v208 = vunpack.c.l.b16 %v66
  %v209 = vunpack.c.l.b16 %v67
  %v210 = vunpack.c.l.b16 %v68
  %v211 = vunpack.c.l.b16 %v69
  %v212 = vunpack.c.l.b16 %v70
  %v213 = vunpack.c.l.b16 %v71
  %v214 = vunpack.c.l.b16 %v72
  %v215 = vunpack.c.l.b16 %v73
  %v216 = vunpack.c.l.b16 %v74
  %v217 = vunpack.c.l.b16 %v75
  %v218 = vunpack.c.l.b16 %v76
  %v219 = vunpack.c.l.b16 %v77
  %v220 = vunpack.c.l.b16 %v78
  %v221 = vunpack.c.l.b16 %v79
  %v222 = vunpack.c.l.b16 %v80
  %v223 = vunpack.c.l.b16 %v81
  %v224 = vunpack.c.l.b16 %v82
  %v225 = vunpack.c.l.b16 %v83
  %v226 = vunpack.c.l.b16 %v84
  %v227 = vunpack.c.l.b16 %v85
  %v228 = vunpack.c.l.b16 %v86
  %v229 = vunpack.c.l.b16 %v87
  %v230 = vunpack.c.l.b16 %v88
  %v231 = vunpack.c.l.b16 %v89
  %v232 = vunpack.c.l.b16 %v90
  %v233 = vunpack.c.l.b16 %v91
  %v234 = vunpack.c.l.b16 %v92
  %v235 = vunpack.c.l.b16 %v93
  %v236 = vunpack.c.l.b16 %v94
  %v237 = vpack.c.b16 %v174, %v173
  %v238 = vpack.c.b16 %v176, %v175
  %v239 = vpack.c.b16 %v178, %v177
  %v240 = vpack.c.b16 %v180, %v179
  %v241 = vpack.c.b16 %v182, %v181
  %v242 = vpack.c.b16 %v184, %v183
  %v243 = vpack.c.b16 %v186, %v185
  %v244 = vpack.c.b16 %v188, %v187
  %v245 = vpack.c.b16 %v190, %v189
  %v246 = vpack.c.b16 %v192, %v191
  %v247 = vpack.c.b16 %v194, %v193
  %v248 = vpack.c.b16 %v196, %v195
  %v249 = vpack.c.b16 %v198, %v197
  %v250 = vpack.c.b16 %v200, %v199
  %v251 = vpack.c.b16 %v202, %v201
  %v252 = vpack.c.b16 %v204, %v203
  %v253 = vpack.c.b16 %v206, %v205
  %v254 = vpack.c.b16 %v208, %v207
  %v255 = vpack.c.b16 %v210, %v209
  %v256 = vpack.c.b16 %v212, %v211
  %v257 = vpack.c.b16 %v214, %v213
  %v258 = vpack.c.b16 %v216, %v215
  %v259 = vpack.c.b16 %v218, %v217
  %v260 = vpack.c.b16 %v220, %v219
  %v261 = vpack.c.b16 %v222, %v221
  %v262 = vpack.c.b16 %v224, %v223
  %v263 = vpack.c.b16 %v226, %v225
  %v264 = vpack.c.b16 %v228, %v227
  %v265 = vpack.c.b16 %v230, %v229
  %v266 = vpack.c.b16 %v232, %v231
  %v267 = vpack.c.b16 %v234, %v233
  %v268 = vpack.c.b16 %v236, %v235
  %301 = vmatprep.subr.bf16.mxu0 0
  %302 = vmatpush1.bf16.msra.mxu0 %v237
  %303 = vmatprep.subr.bf16.mxu0 0
  %304 = vmatpush1.bf16.msra.mxu0 %v238
  %305 = vmatprep.subr.bf16.mxu0 0
  %306 = vmatpush1.bf16.msra.mxu0 %v239
  %307 = vmatprep.subr.bf16.mxu0 0
  %308 = vmatpush1.bf16.msra.mxu0 %v240
  %309 = vmatprep.subr.bf16.mxu0 0
  %310 = vmatpush1.bf16.msra.mxu0 %v241
  %311 = vmatprep.subr.bf16.mxu0 0
  %312 = vmatpush1.bf16.msra.mxu0 %v242
  %313 = vmatprep.subr.bf16.mxu0 0
  %314 = vmatpush1.bf16.msra.mxu0 %v243
  %315 = vmatprep.subr.bf16.mxu0 0
  %316 = vmatpush1.bf16.msra.mxu0 %v244
  %317 = vmatprep.subr.bf16.mxu0 0
  %318 = vmatpush1.bf16.msra.mxu0 %v245
  %319 = vmatprep.subr.bf16.mxu0 0
  %320 = vmatpush1.bf16.msra.mxu0 %v246
  %321 = vmatprep.subr.bf16.mxu0 0
  %322 = vmatpush1.bf16.msra.mxu0 %v247
  %323 = vmatprep.subr.bf16.mxu0 0
  %324 = vmatpush1.bf16.msra.mxu0 %v248
  %325 = vmatprep.subr.bf16.mxu0 0
  %326 = vmatpush1.bf16.msra.mxu0 %v249
  %327 = vmatprep.subr.bf16.mxu0 0
  %328 = vmatpush1.bf16.msra.mxu0 %v250
  %329 = vmatprep.subr.bf16.mxu0 0
  %330 = vmatpush1.bf16.msra.mxu0 %v251
  %331 = vmatprep.subr.bf16.mxu0 0
  %332 = vmatpush1.bf16.msra.mxu0 %v252
  %333 = vmatprep.mubr.bf16.mxu0 %v102
  %334 = vmatmul.mubr.bf16.gmra.mrb[0].mxu0 %v101
  %v335 = vpop.f32.mrb[0].mxu0
  %v336 = vadd.f32 0.0, %v335
  %v337 = vpop.f32.mrb[0].mxu0
  %v338 = vpop.f32.mrb[0].mxu0
  %v339 = vpop.f32.mrb[0].mxu0
  %340 = vdwg.mxu0
  %341 = vmatprep.subr.bf16.mxu0 0
  %342 = vmatpush1.bf16.msra.mxu0 %v253
  %343 = vmatprep.subr.bf16.mxu0 0
  %344 = vmatpush1.bf16.msra.mxu0 %v254
  %345 = vmatprep.subr.bf16.mxu0 0
  %346 = vmatpush1.bf16.msra.mxu0 %v255
  %347 = vmatprep.subr.bf16.mxu0 0
  %348 = vmatpush1.bf16.msra.mxu0 %v256
  %349 = vmatprep.subr.bf16.mxu0 0
  %350 = vmatpush1.bf16.msra.mxu0 %v257
  %351 = vmatprep.subr.bf16.mxu0 0
  %352 = vmatpush1.bf16.msra.mxu0 %v258
  %353 = vmatprep.subr.bf16.mxu0 0
  %354 = vmatpush1.bf16.msra.mxu0 %v259
  %355 = vmatprep.subr.bf16.mxu0 0
  %356 = vmatpush1.bf16.msra.mxu0 %v260
  %357 = vmatprep.subr.bf16.mxu0 0
  %358 = vmatpush1.bf16.msra.mxu0 %v261
  %359 = vmatprep.subr.bf16.mxu0 0
  %360 = vmatpush1.bf16.msra.mxu0 %v262
  %361 = vmatprep.subr.bf16.mxu0 0
  %362 = vmatpush1.bf16.msra.mxu0 %v263
  %363 = vmatprep.subr.bf16.mxu0 0
  %364 = vmatpush1.bf16.msra.mxu0 %v264
  %365 = vmatprep.subr.bf16.mxu0 0
  %366 = vmatpush1.bf16.msra.mxu0 %v265
  %367 = vmatprep.subr.bf16.mxu0 0
  %368 = vmatpush1.bf16.msra.mxu0 %v266
  %369 = vmatprep.subr.bf16.mxu0 0
  %370 = vmatpush1.bf16.msra.mxu0 %v267
  %371 = vmatprep.subr.bf16.mxu0 0
  %372 = vmatpush1.bf16.msra.mxu0 %v268
  %373 = vmatprep.mubr.bf16.mxu0 %v104
  %374 = vmatmul.mubr.bf16.gmra.mrb[0].mxu0 %v103
  %v375 = vpop.f32.mrb[0].mxu0
  %v376 = vadd.f32 %v336, %v375
  %v377 = vpop.f32.mrb[0].mxu0
  %v378 = vpop.f32.mrb[0].mxu0
  %v379 = vpop.f32.mrb[0].mxu0
  %380 = vdwg.mxu0
  %v381 = vadd.f32 %v30, %v376
  %vm382 = vcmask 523264
  %383 = vst.msk [vmem:[#allocation2] sm:$0xff] %vm382, %v381
  // Predicated region
  $region18: #{_lambda_.31} parent=0 // pred_check
    %p384 = pneg %p16
  $region19: #{_lambda_.31} parent=0 // pred_check_branch
    %386 = sbr.rel (%p384) target = $region21
  $region20: #{_lambda_.31} parent=0 // pred_region
    %v387 = vld [vmem:[#allocation2] sm:$0xff]
    %v388 = vld [vmem:[%s2] sm:$0x1]
    %v390 = vlaneseq
    %v391 = vshrl.u32 %v390, 7
    %v392 = vsub.s32 0, %v391
    %v393 = vrot.slane %v388, %v392
    %v395 = vadd.f32 %v387, %v393
    %v396 = vpack.c.bf16 %v395, %v395
    %vm397 = vcmask 519168
    %398 = vst.msk [vmem:[%s3] sm:$0xf] %vm397, %v396
  $region21: #{_lambda_.31} parent=0 // pred_fallthru
    _
  // Predicated region
  $region22: #{_lambda_.31} parent=0 // pred_check
    _
  $region23: #{_lambda_.31} parent=0 // pred_check_branch
    %400 = sbr.rel (0) target = $region25
  $region24: #{_lambda_.31} parent=0 // pred_region
    _
  $region25: #{_lambda_.31} parent=0 // pred_fallthru
    _
  // Predicated region
  $region26: #{_lambda_.31} parent=0 // pred_check
    _
  $region27: #{_lambda_.31} parent=0 // pred_check_branch
    %402 = sbr.rel (0) target = $region29
  $region28: #{_lambda_.31} parent=0 // pred_region
    _
  $region29: #{_lambda_.31} parent=0 // pred_fallthru
    _

// kernel: _lambda_.33
$region0: #{_lambda_.33}
  #allocation0 [shape = 'u32[]', space=smem, size = 0x4, offset = 0x4, fixed_abs, tag = 'smem constant byte address 0x4 - core index']
  #allocation1 [shape = 'u32[144,128]{1,0:T(1,128)}', space=vmem, size = 0x12000, scoped, tag = 'internal scratch']
  %s0 = inlined_call_operand.vmem [shape: bf16[8,64], index: 0, kind: input, shape index: {}]
  %s1 = inlined_call_operand.vmem [shape: f32[1,64], index: 1, kind: input, shape index: {}]
  %s2 = inlined_call_operand.vmem [shape: f32[1,64], index: 2, kind: input, shape index: {}]
  %s3 = inlined_call_operand.vmem [shape: bf16[8,64], index: 3, kind: output, shape index: {}]
  %s4 = sld [smem:[#allocation0]]
  $region22: #{_lambda_.33} parent=0
    _
  %s6 = ssub.s32 1, %s4
  %s7 = scalar_select 0, %s6, %s4
  // Predicated region
  $region2: #{_lambda_.33} parent=0 // pred_check
    _
  $region3: #{_lambda_.33} parent=0 // pred_check_branch
    %9 = sbr.rel (0) target = $region5
  $region4: #{_lambda_.33} parent=0 // pred_region
    _
  $region5: #{_lambda_.33} parent=0 // pred_fallthru
    _
  // Predicated region
  $region6: #{_lambda_.33} parent=0 // pred_check
    _
  $region7: #{_lambda_.33} parent=0 // pred_check_branch
    %11 = sbr.rel (0) target = $region9
  $region8: #{_lambda_.33} parent=0 // pred_region
    _
  $region9: #{_lambda_.33} parent=0 // pred_fallthru
    _
  // Predicated region
  $region10: #{_lambda_.33} parent=0 // pred_check
    _
  $region11: #{_lambda_.33} parent=0 // pred_check_branch
    %13 = sbr.rel (0) target = $region13
  $region12: #{_lambda_.33} parent=0 // pred_region
    _
  $region13: #{_lambda_.33} parent=0 // pred_fallthru
    _
  %v14 = vld [vmem:[%s0] sm:$0xf]
  %v15 = vunpack.c.l.bf16 %v14
  %v16 = vld [vmem:[%s1] sm:$0x1]
  %v18 = vlaneseq
  %v19 = vshrl.u32 %v18, 7
  %v20 = vsub.s32 0, %v19
  %v21 = vrot.slane %v16, %v20
  %v23 = vmul.f32 %v15, %v21
  %v24 = vld [vmem:[%s2] sm:$0x1]
  %v26 = vlaneseq
  %v27 = vshrl.u32 %v26, 7
  %v28 = vsub.s32 0, %v27
  %v29 = vrot.slane %v24, %v28
  %v31 = vadd.f32 %v23, %v29
  %v32 = vpack.c.bf16 %v31, %v31
  %vm33 = vcmask 519168
  %34 = vst.msk [vmem:[%s3] sm:$0xf] %vm33, %v32
  // Predicated region
  $region14: #{_lambda_.33} parent=0 // pred_check
    _
  $region15: #{_lambda_.33} parent=0 // pred_check_branch
    %36 = sbr.rel (0) target = $region17
  $region16: #{_lambda_.33} parent=0 // pred_region
    _
  $region17: #{_lambda_.33} parent=0 // pred_fallthru
    _
  // Predicated region
  $region18: #{_lambda_.33} parent=0 // pred_check
    _
  $region19: #{_lambda_.33} parent=0 // pred_check_branch
    %38 = sbr.rel (0) target = $region21
  $region20: #{_lambda_.33} parent=0 // pred_region
    _
  $region21: #{_lambda_.33} parent=0 // pred_fallthru
    _

// kernel: _lambda_.34
$region0: #{_lambda_.34}
  #allocation0 [shape = 'u32[]', space=smem, size = 0x4, offset = 0x4, fixed_abs, tag = 'smem constant byte address 0x4 - core index']
  #allocation1 [shape = 'u32[144,128]{1,0:T(1,128)}', space=vmem, size = 0x12000, scoped, tag = 'internal scratch']
  #allocation2 [shape = 'f32[2,64]{1,0:T(2,128)}', space=vmem, size = 0x400, scoped, tag = 'scratch operand']
  %s0 = inlined_call_operand.vmem [shape: bf16[1,2,1024], index: 0, kind: input, shape index: {}]
  %s1 = inlined_call_operand.vmem [shape: bf16[1,1024,64], index: 1, kind: input, shape index: {}]
  %s2 = inlined_call_operand.vmem [shape: f32[1,1,64], index: 2, kind: input, shape index: {}]
  %s3 = inlined_call_operand.vmem [shape: bf16[1,2,64], index: 3, kind: output, shape index: {}]
  %s4 = sld [smem:[#allocation0]]
  $region53: #{_lambda_.34} parent=0
    _
  %s6 = ssub.s32 1, %s4
  %s7 = scalar_select 0, %s6, %s4
  loop: start=0, step=1, limit=4
  $region2: #{_lambda_.34} parent=0 // loop_pre_header
    _
  $region3: #{_lambda_.34} parent=0 // loop_header
    %s9 = sphi 0, %s13
    %p10 = scmp.ge.s32.totalorder %s9, 4
    %s16 = sphi 0, %s42
    %s17 = sphi 0, %s38
    %s18 = sphi 0, %s34
    %s19 = sphi 0, %s30
    %s20 = sphi 0, %s16
    %s21 = sphi 0, %s17
    %s22 = sphi 0, %s18
    %s23 = sphi 0, %s19
    %s24 = sphi 0, %s20
    %s25 = sphi 0, %s21
    %s26 = sphi 0, %s22
    %s27 = sphi 0, %s23
    %s49 = sphi 0, %s51
    %s52 = sphi 0, %s49
    %s53 = sphi 0, %s52
    %s69 = sphi 0, %s53
    %s79 = sphi 0, %s81
    %s82 = sphi 0, %s79
    %s83 = sphi 0, %s82
    %s99 = sphi 0, %s83
    %s105 = sphi 0, %s107
    %s108 = sphi 0, %s105
    %s109 = sphi 0, %s108
    %s125 = sphi 0, %s109
    %s135 = sphi 0, %s137
    %s138 = sphi 0, %s135
    %s139 = sphi 0, %s138
    %s155 = sphi 0, %s139
  $region4: #{_lambda_.34} parent=0 // loop_header_branch
    %12 = sbr.rel (%p10) target = $region8
  $region5: #{_lambda_.34} parent=0 // loop_body
    %s14 = ssub.s32 %s9, 1
    %s15 = ssub.s32 %s9, 2
    %s28 = sadd.s32 1, %s19
    %p29 = scmp.ge.s32.totalorder %s28, 2
    %s30 = scalar_select %p29, 0, %s28
    %s31 = sadd.s32 1, %s18
    %s32 = scalar_select %p29, %s31, %s18
    %p33 = scmp.ge.s32.totalorder %s32, 1
    %s34 = scalar_select %p33, 0, %s32
    %s35 = sadd.s32 1, %s17
    %s36 = scalar_select %p33, %s35, %s17
    %p37 = scmp.ge.s32.totalorder %s36, 1
    %s38 = scalar_select %p37, 0, %s36
    %s39 = sadd.s32 1, %s16
    %s40 = scalar_select %p37, %s39, %s16
    %p41 = scmp.ge.s32.totalorder %s40, 1
    %s42 = scalar_select %p41, 0, %s40
    %s43 = ssub.s32 %s16, %s42
    %s44 = ssub.s32 %s17, %s38
    %s45 = sor.u32 %s43, %s44
    %s46 = ssub.s32 %s19, %s30
    %s47 = sor.u32 %s45, %s46
    %p48 = scmp.eq.s32.totalorder %s47, 0
    %s50 = sadd.s32 %s49, 1
    %s51 = scalar_select %p48, %s49, %s50
    %p54 = pneg %p48
    %p55 = scmp.eq.s32.totalorder %s9, 1
    %p56 = por %p54, %p55
    %p57 = scmp.ne.s32.totalorder %s49, %s52
    %p58 = scmp.eq.s32.totalorder %s9, 0
    %p59 = por %p57, %p58
    %p60 = scmp.ne.s32.totalorder %s49, %s52
    %p61 = scmp.eq.s32.totalorder %s14, 1
    %p62 = por %p60, %p61
    %p63 = scmp.ne.s32.totalorder %s52, %s53
    %p64 = scmp.eq.s32.totalorder %s14, 0
    %p65 = por %p63, %p64
    %p66 = scmp.ne.s32.totalorder %s52, %s53
    %p67 = scmp.eq.s32.totalorder %s15, 1
    %p68 = por %p66, %p67
    %p70 = scmp.ne.s32.totalorder %s53, %s69
    %p71 = scmp.eq.s32.totalorder %s15, 0
    %p72 = por %p70, %p71
    %s73 = ssub.s32 %s16, %s42
    %s74 = ssub.s32 %s19, %s30
    %s75 = sor.u32 %s73, %s74
    %s76 = ssub.s32 %s18, %s34
    %s77 = sor.u32 %s75, %s76
    %p78 = scmp.eq.s32.totalorder %s77, 0
    %s80 = sadd.s32 %s79, 1
    %s81 = scalar_select %p78, %s79, %s80
    %p84 = pneg %p78
    %p85 = scmp.eq.s32.totalorder %s9, 1
    %p86 = por %p84, %p85
    %p87 = scmp.ne.s32.totalorder %s79, %s82
    %p88 = scmp.eq.s32.totalorder %s9, 0
    %p89 = por %p87, %p88
    %p90 = scmp.ne.s32.totalorder %s79, %s82
    %p91 = scmp.eq.s32.totalorder %s14, 1
    %p92 = por %p90, %p91
    %p93 = scmp.ne.s32.totalorder %s82, %s83
    %p94 = scmp.eq.s32.totalorder %s14, 0
    %p95 = por %p93, %p94
    %p96 = scmp.ne.s32.totalorder %s82, %s83
    %p97 = scmp.eq.s32.totalorder %s15, 1
    %p98 = por %p96, %p97
    %p100 = scmp.ne.s32.totalorder %s83, %s99
    %p101 = scmp.eq.s32.totalorder %s15, 0
    %p102 = por %p100, %p101
    %s103 = ssub.s32 %s18, %s34
    %p104 = scmp.eq.s32.totalorder %s103, 0
    %s106 = sadd.s32 %s105, 1
    %s107 = scalar_select %p104, %s105, %s106
    %p110 = pneg %p104
    %p111 = scmp.eq.s32.totalorder %s9, 1
    %p112 = por %p110, %p111
    %p113 = scmp.ne.s32.totalorder %s105, %s108
    %p114 = scmp.eq.s32.totalorder %s9, 0
    %p115 = por %p113, %p114
    %p116 = scmp.ne.s32.totalorder %s105, %s108
    %p117 = scmp.eq.s32.totalorder %s14, 1
    %p118 = por %p116, %p117
    %p119 = scmp.ne.s32.totalorder %s108, %s109
    %p120 = scmp.eq.s32.totalorder %s14, 0
    %p121 = por %p119, %p120
    %p122 = scmp.ne.s32.totalorder %s108, %s109
    %p123 = scmp.eq.s32.totalorder %s15, 1
    %p124 = por %p122, %p123
    %p126 = scmp.ne.s32.totalorder %s109, %s125
    %p127 = scmp.eq.s32.totalorder %s15, 0
    %p128 = por %p126, %p127
    %s129 = ssub.s32 %s16, %s42
    %s130 = ssub.s32 %s17, %s38
    %s131 = sor.u32 %s129, %s130
    %s132 = ssub.s32 %s18, %s34
    %s133 = sor.u32 %s131, %s132
    %p134 = scmp.eq.s32.totalorder %s133, 0
    %s136 = sadd.s32 %s135, 1
    %s137 = scalar_select %p134, %s135, %s136
    %p140 = pneg %p134
    %p141 = scmp.eq.s32.totalorder %s9, 1
    %p142 = por %p140, %p141
    %p143 = scmp.ne.s32.totalorder %s135, %s138
    %p144 = scmp.eq.s32.totalorder %s9, 0
    %p145 = por %p143, %p144
    %p146 = scmp.ne.s32.totalorder %s135, %s138
    %p147 = scmp.eq.s32.totalorder %s14, 1
    %p148 = por %p146, %p147
    %p149 = scmp.ne.s32.totalorder %s138, %s139
    %p150 = scmp.eq.s32.totalorder %s14, 0
    %p151 = por %p149, %p150
    %p152 = scmp.ne.s32.totalorder %s138, %s139
    %p153 = scmp.eq.s32.totalorder %s15, 1
    %p154 = por %p152, %p153
    %p156 = scmp.ne.s32.totalorder %s139, %s155
    %p157 = scmp.eq.s32.totalorder %s15, 0
    %p158 = por %p156, %p157
    %p159 = scmp.le.s32.totalorder 1, %s9
    %p160 = scmp.lt.s32.totalorder %s9, 3
    %p161 = pnand %p159, %p160
    %p162 = pneg %p161
    // Predicated region
    $region9: #{_lambda_.34} parent=5 // pred_check
      _
    $region10: #{_lambda_.34} parent=5 // pred_check_branch
      %164 = sbr.rel (%p161) target = $region12
    $region11: #{_lambda_.34} parent=5 // pred_region
      %s165 = ssub.s32 %s9, 1
      // Predicated region
      $region13: #{_lambda_.34} parent=11 // pred_check
        %p166 = pneg %p121
      $region14: #{_lambda_.34} parent=11 // pred_check_branch
        %168 = sbr.rel (%p166) target = $region16
      $region15: #{_lambda_.34} parent=11 // pred_region
        %p169 = scmp.lt.s32.totalorder %s22, 0
        %s170 = scalar_select %p169, %s22, 0
        %s171 = scalar_lea.vmem %s2, %s170
      $region16: #{_lambda_.34} parent=11 // pred_fallthru
        _
    $region12: #{_lambda_.34} parent=5 // pred_fallthru
      _
    %p172 = scmp.lt.s32.totalorder %s9, 2
    // Predicated region
    $region17: #{_lambda_.34} parent=5 // pred_check
      %p173 = pneg %p172
    $region18: #{_lambda_.34} parent=5 // pred_check_branch
      %175 = sbr.rel (%p173) target = $region20
    $region19: #{_lambda_.34} parent=5 // pred_region
      // Predicated region
      $region21: #{_lambda_.34} parent=19 // pred_check
        %p176 = pneg %p59
      $region22: #{_lambda_.34} parent=19 // pred_check_branch
        %178 = sbr.rel (%p176) target = $region24
      $region23: #{_lambda_.34} parent=19 // pred_region
        %s179 = smul.u32 4, %s19
        %p180 = scmp.lt.s32.totalorder %s16, 0
        %s181 = scalar_select %p180, %s16, 0
        %p182 = scmp.lt.s32.totalorder %s17, 0
        %s183 = scalar_select %p182, %s17, 0
        %p184 = scmp.lt.s32.totalorder %s179, 7
        %s185 = scalar_select %p184, %s179, 7
        %s186 = smul.addr %s183, 8
        %s187 = sadd.s32 %s185, %s186
        %s188 = smul.addr %s181, 8
        %s189 = sadd.s32 %s187, %s188
        %s190 = scalar_lea.vmem %s0, %s189
        %s191 = smul.u32 4, %s19
      $region24: #{_lambda_.34} parent=19 // pred_fallthru
        _
      // Predicated region
      $region25: #{_lambda_.34} parent=19 // pred_check
        %p192 = pneg %p89
      $region26: #{_lambda_.34} parent=19 // pred_check_branch
        %194 = sbr.rel (%p192) target = $region28
      $region27: #{_lambda_.34} parent=19 // pred_region
        %s195 = smul.u32 64, %s19
        %p196 = scmp.lt.s32.totalorder %s16, 0
        %s197 = scalar_select %p196, %s16, 0
        %p198 = scmp.lt.s32.totalorder %s195, 127
        %s199 = scalar_select %p198, %s195, 127
        %p200 = scmp.lt.s32.totalorder %s18, 0
        %s201 = scalar_select %p200, %s18, 0
        %s202 = sadd.s32 %s201, %s199
        %s203 = smul.addr %s197, 128
        %s204 = sadd.s32 %s202, %s203
        %s205 = smul.addr %s204, 4
        %s206 = scalar_lea.vmem %s1, %s205
        %s207 = smul.u32 64, %s19
      $region28: #{_lambda_.34} parent=19 // pred_fallthru
        _
    $region20: #{_lambda_.34} parent=5 // pred_fallthru
      _
    %p208 = scmp.le.s32.totalorder 1, %s9
    %p209 = scmp.lt.s32.totalorder %s9, 3
    %p210 = pnand %p208, %p209
    %p211 = pneg %p210
    // Predicated region
    $region29: #{_lambda_.34} parent=5 // pred_check
      _
    $region30: #{_lambda_.34} parent=5 // pred_check_branch
      %213 = sbr.rel (%p210) target = $region32
    $region31: #{_lambda_.34} parent=5 // pred_region
      %s214 = ssub.s32 %s9, 1
      %s215 = smul.u32 4, %s23
      %p216 = scmp.lt.s32.totalorder %s20, 0
      %s217 = scalar_select %p216, %s20, 0
      %p218 = scmp.lt.s32.totalorder %s21, 0
      %s219 = scalar_select %p218, %s21, 0
      %p220 = scmp.lt.s32.totalorder %s215, 7
      %s221 = scalar_select %p220, %s215, 7
      %s222 = smul.addr %s219, 8
      %s223 = sadd.s32 %s221, %s222
      %s224 = smul.addr %s217, 8
      %s225 = sadd.s32 %s223, %s224
      %s226 = scalar_lea.vmem %s0, %s225
      %p227 = pneg %p65
      %p228 = pneg %p62
      %s229 = smul.u32 64, %s23
      %p230 = scmp.lt.s32.totalorder %s20, 0
      %s231 = scalar_select %p230, %s20, 0
      %p232 = scmp.lt.s32.totalorder %s229, 127
      %s233 = scalar_select %p232, %s229, 127
      %p234 = scmp.lt.s32.totalorder %s22, 0
      %s235 = scalar_select %p234, %s22, 0
      %s236 = sadd.s32 %s235, %s233
      %s237 = smul.addr %s231, 128
      %s238 = sadd.s32 %s236, %s237
      %s239 = smul.addr %s238, 4
      %s240 = scalar_lea.vmem %s1, %s239
      %p241 = pneg %p95
      %p242 = pneg %p92
      %p243 = scmp.lt.s32.totalorder %s22, 0
      %s244 = scalar_select %p243, %s22, 0
      %s245 = scalar_lea.vmem %s2, %s244
      %p246 = pneg %p121
      %p247 = pneg %p118
      %p248 = pneg %p151
      %p249 = pneg %p148
      %p250 = scmp.lt.s32.totalorder %s20, 0
      %s251 = scalar_select %p250, %s20, 0
      %p252 = scmp.lt.s32.totalorder %s21, 0
      %s253 = scalar_select %p252, %s21, 0
      %p254 = scmp.lt.s32.totalorder %s22, 0
      %s255 = scalar_select %p254, %s22, 0
      %s256 = sadd.s32 %s255, %s253
      %s257 = sadd.s32 %s256, %s251
      %s258 = scalar_lea.vmem %s3, %s257
      %s259 = smul.u32 4, %s23
      %p260 = scmp.lt.s32.totalorder %s20, 0
      %s261 = scalar_select %p260, %s20, 0
      %p262 = scmp.lt.s32.totalorder %s21, 0
      %s263 = scalar_select %p262, %s21, 0
      %p264 = scmp.lt.s32.totalorder %s259, 7
      %s265 = scalar_select %p264, %s259, 7
      %s266 = smul.addr %s263, 8
      %s267 = sadd.s32 %s265, %s266
      %s268 = smul.addr %s261, 8
      %s269 = sadd.s32 %s267, %s268
      %s270 = scalar_lea.vmem %s0, %s269
      %s271 = smul.u32 4, %s23
      %s272 = smul.u32 64, %s23
      %p273 = scmp.lt.s32.totalorder %s20, 0
      %s274 = scalar_select %p273, %s20, 0
      %p275 = scmp.lt.s32.totalorder %s272, 127
      %s276 = scalar_select %p275, %s272, 127
      %p277 = scmp.lt.s32.totalorder %s22, 0
      %s278 = scalar_select %p277, %s22, 0
      %s279 = sadd.s32 %s278, %s276
      %s280 = smul.addr %s274, 128
      %s281 = sadd.s32 %s279, %s280
      %s282 = smul.addr %s281, 4
      %s283 = scalar_lea.vmem %s1, %s282
      %s284 = smul.u32 64, %s23
      %p285 = scmp.lt.s32.totalorder %s22, 0
      %s286 = scalar_select %p285, %s22, 0
      %s287 = scalar_lea.vmem %s2, %s286
      %p288 = scmp.lt.s32.totalorder %s20, 0
      %s289 = scalar_select %p288, %s20, 0
      %p290 = scmp.lt.s32.totalorder %s21, 0
      %s291 = scalar_select %p290, %s21, 0
      %p292 = scmp.lt.s32.totalorder %s22, 0
      %s293 = scalar_select %p292, %s22, 0
      %s294 = sadd.s32 %s293, %s291
      %s295 = sadd.s32 %s294, %s289
      %s296 = scalar_lea.vmem %s3, %s295
      %p299 = scmp.eq.s32.totalorder %s23, 0
      // Predicated region
      $region33: #{_lambda_.34} parent=31 // pred_check
        %p300 = pneg %p299
      $region34: #{_lambda_.34} parent=31 // pred_check_branch
        %302 = sbr.rel (%p300) target = $region36
      $region35: #{_lambda_.34} parent=31 // pred_region
        %vm303 = vcmask 517120
        %304 = vst.msk [vmem:[#allocation2] sm:$0x3] %vm303, 0.0
      $region36: #{_lambda_.34} parent=31 // pred_fallthru
        _
      %v305 = vld [vmem:[%s270] sm:$0xf]
      %vm306 = vcmp.gt.bf16.partialorder %v305, 0
      %v307 = vmul.bf16 %v305, 1045249613
      %v308 = vsel %vm306, %v305, %v307
      %v309 = vld [vmem:[#allocation2] sm:$0x3]
      %v310 = vld [vmem:[%s283] sm:$0xf]
      %v311 = vld [vmem:[%s283 + $0x4] sm:$0xf]
      %v312 = vld [vmem:[%s283 + $0x8] sm:$0xf]
      %v313 = vld [vmem:[%s283 + $0xc] sm:$0xf]
      %v314 = vld [vmem:[%s283 + $0x10] sm:$0xf]
      %v315 = vld [vmem:[%s283 + $0x14] sm:$0xf]
      %v316 = vld [vmem:[%s283 + $0x18] sm:$0xf]
      %v317 = vld [vmem:[%s283 + $0x1c] sm:$0xf]
      %v318 = vld [vmem:[%s283 + $0x20] sm:$0xf]
      %v319 = vld [vmem:[%s283 + $0x24] sm:$0xf]
      %v320 = vld [vmem:[%s283 + $0x28] sm:$0xf]
      %v321 = vld [vmem:[%s283 + $0x2c] sm:$0xf]
      %v322 = vld [vmem:[%s283 + $0x30] sm:$0xf]
      %v323 = vld [vmem:[%s283 + $0x34] sm:$0xf]
      %v324 = vld [vmem:[%s283 + $0x38] sm:$0xf]
      %v325 = vld [vmem:[%s283 + $0x3c] sm:$0xf]
      %v326 = vld [vmem:[%s283 + $0x40] sm:$0xf]
      %v327 = vld [vmem:[%s283 + $0x44] sm:$0xf]
      %v328 = vld [vmem:[%s283 + $0x48] sm:$0xf]
      %v329 = vld [vmem:[%s283 + $0x4c] sm:$0xf]
      %v330 = vld [vmem:[%s283 + $0x50] sm:$0xf]
      %v331 = vld [vmem:[%s283 + $0x54] sm:$0xf]
      %v332 = vld [vmem:[%s283 + $0x58] sm:$0xf]
      %v333 = vld [vmem:[%s283 + $0x5c] sm:$0xf]
      %v334 = vld [vmem:[%s283 + $0x60] sm:$0xf]
      %v335 = vld [vmem:[%s283 + $0x64] sm:$0xf]
      %v336 = vld [vmem:[%s283 + $0x68] sm:$0xf]
      %v337 = vld [vmem:[%s283 + $0x6c] sm:$0xf]
      %v338 = vld [vmem:[%s283 + $0x70] sm:$0xf]
      %v339 = vld [vmem:[%s283 + $0x74] sm:$0xf]
      %v340 = vld [vmem:[%s283 + $0x78] sm:$0xf]
      %v341 = vld [vmem:[%s283 + $0x7c] sm:$0xf]
      %v342 = vld [vmem:[%s283 + $0x80] sm:$0xf]
      %v343 = vld [vmem:[%s283 + $0x84] sm:$0xf]
      %v344 = vld [vmem:[%s283 + $0x88] sm:$0xf]
      %v345 = vld [vmem:[%s283 + $0x8c] sm:$0xf]
      %v346 = vld [vmem:[%s283 + $0x90] sm:$0xf]
      %v347 = vld [vmem:[%s283 + $0x94] sm:$0xf]
      %v348 = vld [vmem:[%s283 + $0x98] sm:$0xf]
      %v349 = vld [vmem:[%s283 + $0x9c] sm:$0xf]
      %v350 = vld [vmem:[%s283 + $0xa0] sm:$0xf]
      %v351 = vld [vmem:[%s283 + $0xa4] sm:$0xf]
      %v352 = vld [vmem:[%s283 + $0xa8] sm:$0xf]
      %v353 = vld [vmem:[%s283 + $0xac] sm:$0xf]
      %v354 = vld [vmem:[%s283 + $0xb0] sm:$0xf]
      %v355 = vld [vmem:[%s283 + $0xb4] sm:$0xf]
      %v356 = vld [vmem:[%s283 + $0xb8] sm:$0xf]
      %v357 = vld [vmem:[%s283 + $0xbc] sm:$0xf]
      %v358 = vld [vmem:[%s283 + $0xc0] sm:$0xf]
      %v359 = vld [vmem:[%s283 + $0xc4] sm:$0xf]
      %v360 = vld [vmem:[%s283 + $0xc8] sm:$0xf]
      %v361 = vld [vmem:[%s283 + $0xcc] sm:$0xf]
      %v362 = vld [vmem:[%s283 + $0xd0] sm:$0xf]
      %v363 = vld [vmem:[%s283 + $0xd4] sm:$0xf]
      %v364 = vld [vmem:[%s283 + $0xd8] sm:$0xf]
      %v365 = vld [vmem:[%s283 + $0xdc] sm:$0xf]
      %v366 = vld [vmem:[%s283 + $0xe0] sm:$0xf]
      %v367 = vld [vmem:[%s283 + $0xe4] sm:$0xf]
      %v368 = vld [vmem:[%s283 + $0xe8] sm:$0xf]
      %v369 = vld [vmem:[%s283 + $0xec] sm:$0xf]
      %v370 = vld [vmem:[%s283 + $0xf0] sm:$0xf]
      %v371 = vld [vmem:[%s283 + $0xf4] sm:$0xf]
      %v372 = vld [vmem:[%s283 + $0xf8] sm:$0xf]
      %v373 = vld [vmem:[%s283 + $0xfc] sm:$0xf]
      %v376 = vunpack.c.l.s4 1966171168
      %v377 = vunpack.c.0.s8 %v376
      %v378 = vlaneseq
      %v379 = vshrl.u32 %v378, 7
      %v380 = vsub.s32 %v377, %v379
      %v381 = vrot.slane %v308, %v380
      %v382 = vcombine.high %v381, %v381
      %v384 = vunpack.c.l.s4 1966171168
      %v385 = vunpack.c.0.s8 %v384
      %v386 = vlaneseq
      %v387 = vshrl.u32 %v386, 7
      %v388 = vsub.s32 %v385, %v387
      %v389 = vrot.slane %v381, %v388
      %v391 = vunpack.c.l.s4 1966171168
      %v392 = vunpack.c.0.s8 %v391
      %v393 = vlaneseq
      %v394 = vshrl.u32 %v393, 7
      %v395 = vsub.s32 %v392, %v394
      %v396 = vrot.slane %v382, %v395
      %v397 = vcombine.high %v389, %v389
      %v398 = vcombine.high %v396, %v396
      %v467 = vunpack.c.l.b16 %v310
      %v468 = vunpack.c.l.b16 %v311
      %v469 = vunpack.c.l.b16 %v312
      %v470 = vunpack.c.l.b16 %v313
      %v471 = vunpack.c.l.b16 %v314
      %v472 = vunpack.c.l.b16 %v315
      %v473 = vunpack.c.l.b16 %v316
      %v474 = vunpack.c.l.b16 %v317
      %v475 = vunpack.c.l.b16 %v318
      %v476 = vunpack.c.l.b16 %v319
      %v477 = vunpack.c.l.b16 %v320
      %v478 = vunpack.c.l.b16 %v321
      %v479 = vunpack.c.l.b16 %v322
      %v480 = vunpack.c.l.b16 %v323
      %v481 = vunpack.c.l.b16 %v324
      %v482 = vunpack.c.l.b16 %v325
      %v483 = vunpack.c.l.b16 %v326
      %v484 = vunpack.c.l.b16 %v327
      %v485 = vunpack.c.l.b16 %v328
      %v486 = vunpack.c.l.b16 %v329
      %v487 = vunpack.c.l.b16 %v330
      %v488 = vunpack.c.l.b16 %v331
      %v489 = vunpack.c.l.b16 %v332
      %v490 = vunpack.c.l.b16 %v333
      %v491 = vunpack.c.l.b16 %v334
      %v492 = vunpack.c.l.b16 %v335
      %v493 = vunpack.c.l.b16 %v336
      %v494 = vunpack.c.l.b16 %v337
      %v495 = vunpack.c.l.b16 %v338
      %v496 = vunpack.c.l.b16 %v339
      %v497 = vunpack.c.l.b16 %v340
      %v498 = vunpack.c.l.b16 %v341
      %v499 = vunpack.c.l.b16 %v342
      %v500 = vunpack.c.l.b16 %v343
      %v501 = vunpack.c.l.b16 %v344
      %v502 = vunpack.c.l.b16 %v345
      %v503 = vunpack.c.l.b16 %v346
      %v504 = vunpack.c.l.b16 %v347
      %v505 = vunpack.c.l.b16 %v348
      %v506 = vunpack.c.l.b16 %v349
      %v507 = vunpack.c.l.b16 %v350
      %v508 = vunpack.c.l.b16 %v351
      %v509 = vunpack.c.l.b16 %v352
      %v510 = vunpack.c.l.b16 %v353
      %v511 = vunpack.c.l.b16 %v354
      %v512 = vunpack.c.l.b16 %v355
      %v513 = vunpack.c.l.b16 %v356
      %v514 = vunpack.c.l.b16 %v357
      %v515 = vunpack.c.l.b16 %v358
      %v516 = vunpack.c.l.b16 %v359
      %v517 = vunpack.c.l.b16 %v360
      %v518 = vunpack.c.l.b16 %v361
      %v519 = vunpack.c.l.b16 %v362
      %v520 = vunpack.c.l.b16 %v363
      %v521 = vunpack.c.l.b16 %v364
      %v522 = vunpack.c.l.b16 %v365
      %v523 = vunpack.c.l.b16 %v366
      %v524 = vunpack.c.l.b16 %v367
      %v525 = vunpack.c.l.b16 %v368
      %v526 = vunpack.c.l.b16 %v369
      %v527 = vunpack.c.l.b16 %v370
      %v528 = vunpack.c.l.b16 %v371
      %v529 = vunpack.c.l.b16 %v372
      %v530 = vunpack.c.l.b16 %v373
      %v531 = vpack.c.b16 %v468, %v467
      %v532 = vpack.c.b16 %v470, %v469
      %v533 = vpack.c.b16 %v472, %v471
      %v534 = vpack.c.b16 %v474, %v473
      %v535 = vpack.c.b16 %v476, %v475
      %v536 = vpack.c.b16 %v478, %v477
      %v537 = vpack.c.b16 %v480, %v479
      %v538 = vpack.c.b16 %v482, %v481
      %v539 = vpack.c.b16 %v484, %v483
      %v540 = vpack.c.b16 %v486, %v485
      %v541 = vpack.c.b16 %v488, %v487
      %v542 = vpack.c.b16 %v490, %v489
      %v543 = vpack.c.b16 %v492, %v491
      %v544 = vpack.c.b16 %v494, %v493
      %v545 = vpack.c.b16 %v496, %v495
      %v546 = vpack.c.b16 %v498, %v497
      %v547 = vpack.c.b16 %v500, %v499
      %v548 = vpack.c.b16 %v502, %v501
      %v549 = vpack.c.b16 %v504, %v503
      %v550 = vpack.c.b16 %v506, %v505
      %v551 = vpack.c.b16 %v508, %v507
      %v552 = vpack.c.b16 %v510, %v509
      %v553 = vpack.c.b16 %v512, %v511
      %v554 = vpack.c.b16 %v514, %v513
      %v555 = vpack.c.b16 %v516, %v515
      %v556 = vpack.c.b16 %v518, %v517
      %v557 = vpack.c.b16 %v520, %v519
      %v558 = vpack.c.b16 %v522, %v521
      %v559 = vpack.c.b16 %v524, %v523
      %v560 = vpack.c.b16 %v526, %v525
      %v561 = vpack.c.b16 %v528, %v527
      %v562 = vpack.c.b16 %v530, %v529
      %595 = vmatprep.subr.bf16.mxu0 0
      %596 = vmatpush1.bf16.msra.mxu0 %v531
      %597 = vmatprep.subr.bf16.mxu0 0
      %598 = vmatpush1.bf16.msra.mxu0 %v532
      %599 = vmatprep.subr.bf16.mxu0 0
      %600 = vmatpush1.bf16.msra.mxu0 %v533
      %601 = vmatprep.subr.bf16.mxu0 0
      %602 = vmatpush1.bf16.msra.mxu0 %v534
      %603 = vmatprep.subr.bf16.mxu0 0
      %604 = vmatpush1.bf16.msra.mxu0 %v535
      %605 = vmatprep.subr.bf16.mxu0 0
      %606 = vmatpush1.bf16.msra.mxu0 %v536
      %607 = vmatprep.subr.bf16.mxu0 0
      %608 = vmatpush1.bf16.msra.mxu0 %v537
      %609 = vmatprep.subr.bf16.mxu0 0
      %610 = vmatpush1.bf16.msra.mxu0 %v538
      %611 = vmatprep.subr.bf16.mxu0 0
      %612 = vmatpush1.bf16.msra.mxu0 %v539
      %613 = vmatprep.subr.bf16.mxu0 0
      %614 = vmatpush1.bf16.msra.mxu0 %v540
      %615 = vmatprep.subr.bf16.mxu0 0
      %616 = vmatpush1.bf16.msra.mxu0 %v541
      %617 = vmatprep.subr.bf16.mxu0 0
      %618 = vmatpush1.bf16.msra.mxu0 %v542
      %619 = vmatprep.subr.bf16.mxu0 0
      %620 = vmatpush1.bf16.msra.mxu0 %v543
      %621 = vmatprep.subr.bf16.mxu0 0
      %622 = vmatpush1.bf16.msra.mxu0 %v544
      %623 = vmatprep.subr.bf16.mxu0 0
      %624 = vmatpush1.bf16.msra.mxu0 %v545
      %625 = vmatprep.subr.bf16.mxu0 0
      %626 = vmatpush1.bf16.msra.mxu0 %v546
      %627 = vmatprep.mubr.bf16.mxu0 %v396
      %628 = vmatmul.mubr.bf16.gmra.mrb[0].mxu0 %v389
      %v629 = vpop.f32.mrb[0].mxu0
      %v630 = vadd.f32 0.0, %v629
      %v631 = vpop.f32.mrb[0].mxu0
      %v632 = vpop.f32.mrb[0].mxu0
      %v633 = vpop.f32.mrb[0].mxu0
      %634 = vdwg.mxu0
      %635 = vmatprep.subr.bf16.mxu0 0
      %636 = vmatpush1.bf16.msra.mxu0 %v547
      %637 = vmatprep.subr.bf16.mxu0 0
      %638 = vmatpush1.bf16.msra.mxu0 %v548
      %639 = vmatprep.subr.bf16.mxu0 0
      %640 = vmatpush1.bf16.msra.mxu0 %v549
      %641 = vmatprep.subr.bf16.mxu0 0
      %642 = vmatpush1.bf16.msra.mxu0 %v550
      %643 = vmatprep.subr.bf16.mxu0 0
      %644 = vmatpush1.bf16.msra.mxu0 %v551
      %645 = vmatprep.subr.bf16.mxu0 0
      %646 = vmatpush1.bf16.msra.mxu0 %v552
      %647 = vmatprep.subr.bf16.mxu0 0
      %648 = vmatpush1.bf16.msra.mxu0 %v553
      %649 = vmatprep.subr.bf16.mxu0 0
      %650 = vmatpush1.bf16.msra.mxu0 %v554
      %651 = vmatprep.subr.bf16.mxu0 0
      %652 = vmatpush1.bf16.msra.mxu0 %v555
      %653 = vmatprep.subr.bf16.mxu0 0
      %654 = vmatpush1.bf16.msra.mxu0 %v556
      %655 = vmatprep.subr.bf16.mxu0 0
      %656 = vmatpush1.bf16.msra.mxu0 %v557
      %657 = vmatprep.subr.bf16.mxu0 0
      %658 = vmatpush1.bf16.msra.mxu0 %v558
      %659 = vmatprep.subr.bf16.mxu0 0
      %660 = vmatpush1.bf16.msra.mxu0 %v559
      %661 = vmatprep.subr.bf16.mxu0 0
      %662 = vmatpush1.bf16.msra.mxu0 %v560
      %663 = vmatprep.subr.bf16.mxu0 0
      %664 = vmatpush1.bf16.msra.mxu0 %v561
      %665 = vmatprep.subr.bf16.mxu0 0
      %666 = vmatpush1.bf16.msra.mxu0 %v562
      %667 = vmatprep.mubr.bf16.mxu0 %v398
      %668 = vmatmul.mubr.bf16.gmra.mrb[0].mxu0 %v397
      %v669 = vpop.f32.mrb[0].mxu0
      %v670 = vadd.f32 %v630, %v669
      %v671 = vpop.f32.mrb[0].mxu0
      %v672 = vpop.f32.mrb[0].mxu0
      %v673 = vpop.f32.mrb[0].mxu0
      %674 = vdwg.mxu0
      %v675 = vadd.f32 %v309, %v670
      %vm676 = vcmask 517120
      %677 = vst.msk [vmem:[#allocation2] sm:$0x3] %vm676, %v675
      %p678 = scmp.eq.s32.totalorder %s23, 1
      // Predicated region
      $region37: #{_lambda_.34} parent=31 // pred_check
        %p679 = pneg %p678
      $region38: #{_lambda_.34} parent=31 // pred_check_branch
        %681 = sbr.rel (%p679) target = $region40
      $region39: #{_lambda_.34} parent=31 // pred_region
        %v682 = vld [vmem:[#allocation2] sm:$0x3]
        %v683 = vld [vmem:[%s287] sm:$0x1]
        %v685 = vlaneseq
        %v686 = vshrl.u32 %v685, 7
        %v687 = vsub.s32 0, %v686
        %v688 = vrot.slane %v683, %v687
        %v690 = vadd.f32 %v682, %v688
        %v691 = vpack.c.bf16 %v690, %v690
        %vm692 = vcmask 516096
        %693 = vst.msk [vmem:[%s296] sm:$0x1] %vm692, %v691
      $region40: #{_lambda_.34} parent=31 // pred_fallthru
        _
      %p694 = scmp.lt.s32.totalorder %s20, 0
      %s695 = scalar_select %p694, %s20, 0
      %p696 = scmp.lt.s32.totalorder %s21, 0
      %s697 = scalar_select %p696, %s21, 0
      %p698 = scmp.lt.s32.totalorder %s22, 0
      %s699 = scalar_select %p698, %s22, 0
      %s700 = sadd.s32 %s699, %s697
      %s701 = sadd.s32 %s700, %s695
      %s702 = scalar_lea.vmem %s3, %s701
      // Predicated region
      $region41: #{_lambda_.34} parent=31 // pred_check
        %p703 = pneg %p148
      $region42: #{_lambda_.34} parent=31 // pred_check_branch
        %705 = sbr.rel (%p703) target = $region44
      $region43: #{_lambda_.34} parent=31 // pred_region
        _
      $region44: #{_lambda_.34} parent=31 // pred_fallthru
        _
      // Predicated region
      $region45: #{_lambda_.34} parent=31 // pred_check
        %p706 = pneg %p148
      $region46: #{_lambda_.34} parent=31 // pred_check_branch
        %708 = sbr.rel (%p706) target = $region48
      $region47: #{_lambda_.34} parent=31 // pred_region
        %p709 = scmp.lt.s32.totalorder %s20, 0
        %s710 = scalar_select %p709, %s20, 0
        %p711 = scmp.lt.s32.totalorder %s21, 0
        %s712 = scalar_select %p711, %s21, 0
        %p713 = scmp.lt.s32.totalorder %s22, 0
        %s714 = scalar_select %p713, %s22, 0
        %s715 = sadd.s32 %s714, %s712
        %s716 = sadd.s32 %s715, %s710
        %s717 = scalar_lea.vmem %s3, %s716
      $region48: #{_lambda_.34} parent=31 // pred_fallthru
        _
    $region32: #{_lambda_.34} parent=5 // pred_fallthru
      _
    %p718 = scmp.le.s32.totalorder 2, %s9
    // Predicated region
    $region49: #{_lambda_.34} parent=5 // pred_check
      %p719 = pneg %p718
    $region50: #{_lambda_.34} parent=5 // pred_check_branch
      %721 = sbr.rel (%p719) target = $region52
    $region51: #{_lambda_.34} parent=5 // pred_region
      %s722 = ssub.s32 %s9, 2
    $region52: #{_lambda_.34} parent=5 // pred_fallthru
      _
  $region6: #{_lambda_.34} parent=0 // loop_footer
    %s13 = sadd.s32 1, %s9
  $region7: #{_lambda_.34} parent=0 // loop_footer_branch
    %8 = sbr.rel target = $region3
  $region8: #{_lambda_.34} parent=0 // loop_exit
    _

// kernel: _lambda_.35
$region0: #{_lambda_.35}
  #allocation0 [shape = 'u32[]', space=smem, size = 0x4, offset = 0x4, fixed_abs, tag = 'smem constant byte address 0x4 - core index']
  #allocation1 [shape = 'u32[144,128]{1,0:T(1,128)}', space=vmem, size = 0x12000, scoped, tag = 'internal scratch']
  #allocation2 [shape = 'f32[2,64]{1,0:T(2,128)}', space=vmem, size = 0x400, scoped, tag = 'scratch operand']
  %s0 = inlined_call_operand.vmem [shape: bf16[4,2,256], index: 0, kind: input, shape index: {}]
  %s1 = inlined_call_operand.vmem [shape: bf16[4,256,64], index: 1, kind: input, shape index: {}]
  %s2 = inlined_call_operand.vmem [shape: f32[1,1,64], index: 2, kind: input, shape index: {}]
  %s3 = inlined_call_operand.vmem [shape: bf16[4,2,64], index: 3, kind: output, shape index: {}]
  %s4 = sld [smem:[#allocation0]]
  $region53: #{_lambda_.35} parent=0
    _
  %s6 = ssub.s32 1, %s4
  %s7 = scalar_select 0, %s6, %s4
  loop: start=0, step=1, limit=6
  $region2: #{_lambda_.35} parent=0 // loop_pre_header
    _
  $region3: #{_lambda_.35} parent=0 // loop_header
    %s9 = sphi 0, %s13
    %p10 = scmp.ge.s32.totalorder %s9, 6
    %s16 = sphi 0, %s42
    %s17 = sphi 0, %s38
    %s18 = sphi 0, %s34
    %s19 = sphi 0, %s30
    %s20 = sphi 0, %s16
    %s21 = sphi 0, %s17
    %s22 = sphi 0, %s18
    %s23 = sphi 0, %s19
    %s24 = sphi 0, %s20
    %s25 = sphi 0, %s21
    %s26 = sphi 0, %s22
    %s27 = sphi 0, %s23
    %s49 = sphi 0, %s51
    %s52 = sphi 0, %s49
    %s53 = sphi 0, %s52
    %s69 = sphi 0, %s53
    %s79 = sphi 0, %s81
    %s82 = sphi 0, %s79
    %s83 = sphi 0, %s82
    %s99 = sphi 0, %s83
    %s105 = sphi 0, %s107
    %s108 = sphi 0, %s105
    %s109 = sphi 0, %s108
    %s125 = sphi 0, %s109
    %s135 = sphi 0, %s137
    %s138 = sphi 0, %s135
    %s139 = sphi 0, %s138
    %s155 = sphi 0, %s139
  $region4: #{_lambda_.35} parent=0 // loop_header_branch
    %12 = sbr.rel (%p10) target = $region8
  $region5: #{_lambda_.35} parent=0 // loop_body
    %s14 = ssub.s32 %s9, 1
    %s15 = ssub.s32 %s9, 2
    %s28 = sadd.s32 1, %s19
    %p29 = scmp.ge.s32.totalorder %s28, 1
    %s30 = scalar_select %p29, 0, %s28
    %s31 = sadd.s32 1, %s18
    %s32 = scalar_select %p29, %s31, %s18
    %p33 = scmp.ge.s32.totalorder %s32, 1
    %s34 = scalar_select %p33, 0, %s32
    %s35 = sadd.s32 1, %s17
    %s36 = scalar_select %p33, %s35, %s17
    %p37 = scmp.ge.s32.totalorder %s36, 1
    %s38 = scalar_select %p37, 0, %s36
    %s39 = sadd.s32 1, %s16
    %s40 = scalar_select %p37, %s39, %s16
    %p41 = scmp.ge.s32.totalorder %s40, 4
    %s42 = scalar_select %p41, 0, %s40
    %s43 = ssub.s32 %s16, %s42
    %s44 = ssub.s32 %s17, %s38
    %s45 = sor.u32 %s43, %s44
    %s46 = ssub.s32 %s19, %s30
    %s47 = sor.u32 %s45, %s46
    %p48 = scmp.eq.s32.totalorder %s47, 0
    %s50 = sadd.s32 %s49, 1
    %s51 = scalar_select %p48, %s49, %s50
    %p54 = pneg %p48
    %p55 = scmp.eq.s32.totalorder %s9, 3
    %p56 = por %p54, %p55
    %p57 = scmp.ne.s32.totalorder %s49, %s52
    %p58 = scmp.eq.s32.totalorder %s9, 0
    %p59 = por %p57, %p58
    %p60 = scmp.ne.s32.totalorder %s49, %s52
    %p61 = scmp.eq.s32.totalorder %s14, 3
    %p62 = por %p60, %p61
    %p63 = scmp.ne.s32.totalorder %s52, %s53
    %p64 = scmp.eq.s32.totalorder %s14, 0
    %p65 = por %p63, %p64
    %p66 = scmp.ne.s32.totalorder %s52, %s53
    %p67 = scmp.eq.s32.totalorder %s15, 3
    %p68 = por %p66, %p67
    %p70 = scmp.ne.s32.totalorder %s53, %s69
    %p71 = scmp.eq.s32.totalorder %s15, 0
    %p72 = por %p70, %p71
    %s73 = ssub.s32 %s16, %s42
    %s74 = ssub.s32 %s19, %s30
    %s75 = sor.u32 %s73, %s74
    %s76 = ssub.s32 %s18, %s34
    %s77 = sor.u32 %s75, %s76
    %p78 = scmp.eq.s32.totalorder %s77, 0
    %s80 = sadd.s32 %s79, 1
    %s81 = scalar_select %p78, %s79, %s80
    %p84 = pneg %p78
    %p85 = scmp.eq.s32.totalorder %s9, 3
    %p86 = por %p84, %p85
    %p87 = scmp.ne.s32.totalorder %s79, %s82
    %p88 = scmp.eq.s32.totalorder %s9, 0
    %p89 = por %p87, %p88
    %p90 = scmp.ne.s32.totalorder %s79, %s82
    %p91 = scmp.eq.s32.totalorder %s14, 3
    %p92 = por %p90, %p91
    %p93 = scmp.ne.s32.totalorder %s82, %s83
    %p94 = scmp.eq.s32.totalorder %s14, 0
    %p95 = por %p93, %p94
    %p96 = scmp.ne.s32.totalorder %s82, %s83
    %p97 = scmp.eq.s32.totalorder %s15, 3
    %p98 = por %p96, %p97
    %p100 = scmp.ne.s32.totalorder %s83, %s99
    %p101 = scmp.eq.s32.totalorder %s15, 0
    %p102 = por %p100, %p101
    %s103 = ssub.s32 %s18, %s34
    %p104 = scmp.eq.s32.totalorder %s103, 0
    %s106 = sadd.s32 %s105, 1
    %s107 = scalar_select %p104, %s105, %s106
    %p110 = pneg %p104
    %p111 = scmp.eq.s32.totalorder %s9, 3
    %p112 = por %p110, %p111
    %p113 = scmp.ne.s32.totalorder %s105, %s108
    %p114 = scmp.eq.s32.totalorder %s9, 0
    %p115 = por %p113, %p114
    %p116 = scmp.ne.s32.totalorder %s105, %s108
    %p117 = scmp.eq.s32.totalorder %s14, 3
    %p118 = por %p116, %p117
    %p119 = scmp.ne.s32.totalorder %s108, %s109
    %p120 = scmp.eq.s32.totalorder %s14, 0
    %p121 = por %p119, %p120
    %p122 = scmp.ne.s32.totalorder %s108, %s109
    %p123 = scmp.eq.s32.totalorder %s15, 3
    %p124 = por %p122, %p123
    %p126 = scmp.ne.s32.totalorder %s109, %s125
    %p127 = scmp.eq.s32.totalorder %s15, 0
    %p128 = por %p126, %p127
    %s129 = ssub.s32 %s16, %s42
    %s130 = ssub.s32 %s17, %s38
    %s131 = sor.u32 %s129, %s130
    %s132 = ssub.s32 %s18, %s34
    %s133 = sor.u32 %s131, %s132
    %p134 = scmp.eq.s32.totalorder %s133, 0
    %s136 = sadd.s32 %s135, 1
    %s137 = scalar_select %p134, %s135, %s136
    %p140 = pneg %p134
    %p141 = scmp.eq.s32.totalorder %s9, 3
    %p142 = por %p140, %p141
    %p143 = scmp.ne.s32.totalorder %s135, %s138
    %p144 = scmp.eq.s32.totalorder %s9, 0
    %p145 = por %p143, %p144
    %p146 = scmp.ne.s32.totalorder %s135, %s138
    %p147 = scmp.eq.s32.totalorder %s14, 3
    %p148 = por %p146, %p147
    %p149 = scmp.ne.s32.totalorder %s138, %s139
    %p150 = scmp.eq.s32.totalorder %s14, 0
    %p151 = por %p149, %p150
    %p152 = scmp.ne.s32.totalorder %s138, %s139
    %p153 = scmp.eq.s32.totalorder %s15, 3
    %p154 = por %p152, %p153
    %p156 = scmp.ne.s32.totalorder %s139, %s155
    %p157 = scmp.eq.s32.totalorder %s15, 0
    %p158 = por %p156, %p157
    %p159 = scmp.le.s32.totalorder 1, %s9
    %p160 = scmp.lt.s32.totalorder %s9, 5
    %p161 = pnand %p159, %p160
    %p162 = pneg %p161
    // Predicated region
    $region9: #{_lambda_.35} parent=5 // pred_check
      _
    $region10: #{_lambda_.35} parent=5 // pred_check_branch
      %164 = sbr.rel (%p161) target = $region12
    $region11: #{_lambda_.35} parent=5 // pred_region
      %s165 = ssub.s32 %s9, 1
      // Predicated region
      $region13: #{_lambda_.35} parent=11 // pred_check
        %p166 = pneg %p121
      $region14: #{_lambda_.35} parent=11 // pred_check_branch
        %168 = sbr.rel (%p166) target = $region16
      $region15: #{_lambda_.35} parent=11 // pred_region
        %p169 = scmp.lt.s32.totalorder %s22, 0
        %s170 = scalar_select %p169, %s22, 0
        %s171 = scalar_lea.vmem %s2, %s170
      $region16: #{_lambda_.35} parent=11 // pred_fallthru
        _
    $region12: #{_lambda_.35} parent=5 // pred_fallthru
      _
    %p172 = scmp.lt.s32.totalorder %s9, 4
    // Predicated region
    $region17: #{_lambda_.35} parent=5 // pred_check
      %p173 = pneg %p172
    $region18: #{_lambda_.35} parent=5 // pred_check_branch
      %175 = sbr.rel (%p173) target = $region20
    $region19: #{_lambda_.35} parent=5 // pred_region
      // Predicated region
      $region21: #{_lambda_.35} parent=19 // pred_check
        %p176 = pneg %p59
      $region22: #{_lambda_.35} parent=19 // pred_check_branch
        %178 = sbr.rel (%p176) target = $region24
      $region23: #{_lambda_.35} parent=19 // pred_region
        %s179 = smul.u32 2, %s19
        %p180 = scmp.lt.s32.totalorder %s16, 3
        %s181 = scalar_select %p180, %s16, 3
        %p182 = scmp.lt.s32.totalorder %s17, 0
        %s183 = scalar_select %p182, %s17, 0
        %p184 = scmp.lt.s32.totalorder %s179, 1
        %s185 = scalar_select %p184, %s179, 1
        %s186 = smul.addr %s183, 2
        %s187 = sadd.s32 %s185, %s186
        %s188 = smul.addr %s181, 2
        %s189 = sadd.s32 %s187, %s188
        %s190 = scalar_lea.vmem %s0, %s189
        %s191 = smul.u32 2, %s19
      $region24: #{_lambda_.35} parent=19 // pred_fallthru
        _
      // Predicated region
      $region25: #{_lambda_.35} parent=19 // pred_check
        %p192 = pneg %p89
      $region26: #{_lambda_.35} parent=19 // pred_check_branch
        %194 = sbr.rel (%p192) target = $region28
      $region27: #{_lambda_.35} parent=19 // pred_region
        %s195 = smul.u32 32, %s19
        %p196 = scmp.lt.s32.totalorder %s16, 3
        %s197 = scalar_select %p196, %s16, 3
        %p198 = scmp.lt.s32.totalorder %s195, 31
        %s199 = scalar_select %p198, %s195, 31
        %p200 = scmp.lt.s32.totalorder %s18, 0
        %s201 = scalar_select %p200, %s18, 0
        %s202 = sadd.s32 %s201, %s199
        %s203 = smul.addr %s197, 32
        %s204 = sadd.s32 %s202, %s203
        %s205 = smul.addr %s204, 4
        %s206 = scalar_lea.vmem %s1, %s205
        %s207 = smul.u32 32, %s19
      $region28: #{_lambda_.35} parent=19 // pred_fallthru
        _
    $region20: #{_lambda_.35} parent=5 // pred_fallthru
      _
    %p208 = scmp.le.s32.totalorder 1, %s9
    %p209 = scmp.lt.s32.totalorder %s9, 5
    %p210 = pnand %p208, %p209
    %p211 = pneg %p210
    // Predicated region
    $region29: #{_lambda_.35} parent=5 // pred_check
      _
    $region30: #{_lambda_.35} parent=5 // pred_check_branch
      %213 = sbr.rel (%p210) target = $region32
    $region31: #{_lambda_.35} parent=5 // pred_region
      %s214 = ssub.s32 %s9, 1
      %s215 = smul.u32 2, %s23
      %p216 = scmp.lt.s32.totalorder %s20, 3
      %s217 = scalar_select %p216, %s20, 3
      %p218 = scmp.lt.s32.totalorder %s21, 0
      %s219 = scalar_select %p218, %s21, 0
      %p220 = scmp.lt.s32.totalorder %s215, 1
      %s221 = scalar_select %p220, %s215, 1
      %s222 = smul.addr %s219, 2
      %s223 = sadd.s32 %s221, %s222
      %s224 = smul.addr %s217, 2
      %s225 = sadd.s32 %s223, %s224
      %s226 = scalar_lea.vmem %s0, %s225
      %p227 = pneg %p65
      %p228 = pneg %p62
      %s229 = smul.u32 32, %s23
      %p230 = scmp.lt.s32.totalorder %s20, 3
      %s231 = scalar_select %p230, %s20, 3
      %p232 = scmp.lt.s32.totalorder %s229, 31
      %s233 = scalar_select %p232, %s229, 31
      %p234 = scmp.lt.s32.totalorder %s22, 0
      %s235 = scalar_select %p234, %s22, 0
      %s236 = sadd.s32 %s235, %s233
      %s237 = smul.addr %s231, 32
      %s238 = sadd.s32 %s236, %s237
      %s239 = smul.addr %s238, 4
      %s240 = scalar_lea.vmem %s1, %s239
      %p241 = pneg %p95
      %p242 = pneg %p92
      %p243 = scmp.lt.s32.totalorder %s22, 0
      %s244 = scalar_select %p243, %s22, 0
      %s245 = scalar_lea.vmem %s2, %s244
      %p246 = pneg %p121
      %p247 = pneg %p118
      %p248 = pneg %p151
      %p249 = pneg %p148
      %p250 = scmp.lt.s32.totalorder %s20, 3
      %s251 = scalar_select %p250, %s20, 3
      %p252 = scmp.lt.s32.totalorder %s21, 0
      %s253 = scalar_select %p252, %s21, 0
      %p254 = scmp.lt.s32.totalorder %s22, 0
      %s255 = scalar_select %p254, %s22, 0
      %s256 = sadd.s32 %s255, %s253
      %s257 = sadd.s32 %s256, %s251
      %s258 = scalar_lea.vmem %s3, %s257
      %s259 = smul.u32 2, %s23
      %p260 = scmp.lt.s32.totalorder %s20, 3
      %s261 = scalar_select %p260, %s20, 3
      %p262 = scmp.lt.s32.totalorder %s21, 0
      %s263 = scalar_select %p262, %s21, 0
      %p264 = scmp.lt.s32.totalorder %s259, 1
      %s265 = scalar_select %p264, %s259, 1
      %s266 = smul.addr %s263, 2
      %s267 = sadd.s32 %s265, %s266
      %s268 = smul.addr %s261, 2
      %s269 = sadd.s32 %s267, %s268
      %s270 = scalar_lea.vmem %s0, %s269
      %s271 = smul.u32 2, %s23
      %s272 = smul.u32 32, %s23
      %p273 = scmp.lt.s32.totalorder %s20, 3
      %s274 = scalar_select %p273, %s20, 3
      %p275 = scmp.lt.s32.totalorder %s272, 31
      %s276 = scalar_select %p275, %s272, 31
      %p277 = scmp.lt.s32.totalorder %s22, 0
      %s278 = scalar_select %p277, %s22, 0
      %s279 = sadd.s32 %s278, %s276
      %s280 = smul.addr %s274, 32
      %s281 = sadd.s32 %s279, %s280
      %s282 = smul.addr %s281, 4
      %s283 = scalar_lea.vmem %s1, %s282
      %s284 = smul.u32 32, %s23
      %p285 = scmp.lt.s32.totalorder %s22, 0
      %s286 = scalar_select %p285, %s22, 0
      %s287 = scalar_lea.vmem %s2, %s286
      %p288 = scmp.lt.s32.totalorder %s20, 3
      %s289 = scalar_select %p288, %s20, 3
      %p290 = scmp.lt.s32.totalorder %s21, 0
      %s291 = scalar_select %p290, %s21, 0
      %p292 = scmp.lt.s32.totalorder %s22, 0
      %s293 = scalar_select %p292, %s22, 0
      %s294 = sadd.s32 %s293, %s291
      %s295 = sadd.s32 %s294, %s289
      %s296 = scalar_lea.vmem %s3, %s295
      %p298 = scmp.eq.s32.totalorder %s23, 0
      // Predicated region
      $region33: #{_lambda_.35} parent=31 // pred_check
        %p299 = pneg %p298
      $region34: #{_lambda_.35} parent=31 // pred_check_branch
        %301 = sbr.rel (%p299) target = $region36
      $region35: #{_lambda_.35} parent=31 // pred_region
        %vm302 = vcmask 517120
        %303 = vst.msk [vmem:[#allocation2] sm:$0x3] %vm302, 0.0
      $region36: #{_lambda_.35} parent=31 // pred_fallthru
        _
      %v304 = vld [vmem:[%s270] sm:$0x3]
      %v305 = vmax.bf16 %v304, 0
      %v306 = vld [vmem:[#allocation2] sm:$0x3]
      %v307 = vld [vmem:[%s283] sm:$0xf]
      %v308 = vld [vmem:[%s283 + $0x4] sm:$0xf]
      %v309 = vld [vmem:[%s283 + $0x8] sm:$0xf]
      %v310 = vld [vmem:[%s283 + $0xc] sm:$0xf]
      %v311 = vld [vmem:[%s283 + $0x10] sm:$0xf]
      %v312 = vld [vmem:[%s283 + $0x14] sm:$0xf]
      %v313 = vld [vmem:[%s283 + $0x18] sm:$0xf]
      %v314 = vld [vmem:[%s283 + $0x1c] sm:$0xf]
      %v315 = vld [vmem:[%s283 + $0x20] sm:$0xf]
      %v316 = vld [vmem:[%s283 + $0x24] sm:$0xf]
      %v317 = vld [vmem:[%s283 + $0x28] sm:$0xf]
      %v318 = vld [vmem:[%s283 + $0x2c] sm:$0xf]
      %v319 = vld [vmem:[%s283 + $0x30] sm:$0xf]
      %v320 = vld [vmem:[%s283 + $0x34] sm:$0xf]
      %v321 = vld [vmem:[%s283 + $0x38] sm:$0xf]
      %v322 = vld [vmem:[%s283 + $0x3c] sm:$0xf]
      %v323 = vld [vmem:[%s283 + $0x40] sm:$0xf]
      %v324 = vld [vmem:[%s283 + $0x44] sm:$0xf]
      %v325 = vld [vmem:[%s283 + $0x48] sm:$0xf]
      %v326 = vld [vmem:[%s283 + $0x4c] sm:$0xf]
      %v327 = vld [vmem:[%s283 + $0x50] sm:$0xf]
      %v328 = vld [vmem:[%s283 + $0x54] sm:$0xf]
      %v329 = vld [vmem:[%s283 + $0x58] sm:$0xf]
      %v330 = vld [vmem:[%s283 + $0x5c] sm:$0xf]
      %v331 = vld [vmem:[%s283 + $0x60] sm:$0xf]
      %v332 = vld [vmem:[%s283 + $0x64] sm:$0xf]
      %v333 = vld [vmem:[%s283 + $0x68] sm:$0xf]
      %v334 = vld [vmem:[%s283 + $0x6c] sm:$0xf]
      %v335 = vld [vmem:[%s283 + $0x70] sm:$0xf]
      %v336 = vld [vmem:[%s283 + $0x74] sm:$0xf]
      %v337 = vld [vmem:[%s283 + $0x78] sm:$0xf]
      %v338 = vld [vmem:[%s283 + $0x7c] sm:$0xf]
      %v341 = vunpack.c.l.s4 1966171168
      %v342 = vunpack.c.0.s8 %v341
      %v343 = vlaneseq
      %v344 = vshrl.u32 %v343, 7
      %v345 = vsub.s32 %v342, %v344
      %v346 = vrot.slane %v305, %v345
      %v347 = vcombine.high %v346, %v346
      %v349 = vunpack.c.l.s4 1966171168
      %v350 = vunpack.c.0.s8 %v349
      %v351 = vlaneseq
      %v352 = vshrl.u32 %v351, 7
      %v353 = vsub.s32 %v350, %v352
      %v354 = vrot.slane %v346, %v353
      %v356 = vunpack.c.l.s4 1966171168
      %v357 = vunpack.c.0.s8 %v356
      %v358 = vlaneseq
      %v359 = vshrl.u32 %v358, 7
      %v360 = vsub.s32 %v357, %v359
      %v361 = vrot.slane %v347, %v360
      %v396 = vunpack.c.l.b16 %v307
      %v397 = vunpack.c.l.b16 %v308
      %v398 = vunpack.c.l.b16 %v309
      %v399 = vunpack.c.l.b16 %v310
      %v400 = vunpack.c.l.b16 %v311
      %v401 = vunpack.c.l.b16 %v312
      %v402 = vunpack.c.l.b16 %v313
      %v403 = vunpack.c.l.b16 %v314
      %v404 = vunpack.c.l.b16 %v315
      %v405 = vunpack.c.l.b16 %v316
      %v406 = vunpack.c.l.b16 %v317
      %v407 = vunpack.c.l.b16 %v318
      %v408 = vunpack.c.l.b16 %v319
      %v409 = vunpack.c.l.b16 %v320
      %v410 = vunpack.c.l.b16 %v321
      %v411 = vunpack.c.l.b16 %v322
      %v412 = vunpack.c.l.b16 %v323
      %v413 = vunpack.c.l.b16 %v324
      %v414 = vunpack.c.l.b16 %v325
      %v415 = vunpack.c.l.b16 %v326
      %v416 = vunpack.c.l.b16 %v327
      %v417 = vunpack.c.l.b16 %v328
      %v418 = vunpack.c.l.b16 %v329
      %v419 = vunpack.c.l.b16 %v330
      %v420 = vunpack.c.l.b16 %v331
      %v421 = vunpack.c.l.b16 %v332
      %v422 = vunpack.c.l.b16 %v333
      %v423 = vunpack.c.l.b16 %v334
      %v424 = vunpack.c.l.b16 %v335
      %v425 = vunpack.c.l.b16 %v336
      %v426 = vunpack.c.l.b16 %v337
      %v427 = vunpack.c.l.b16 %v338
      %v428 = vpack.c.b16 %v397, %v396
      %v429 = vpack.c.b16 %v399, %v398
      %v430 = vpack.c.b16 %v401, %v400
      %v431 = vpack.c.b16 %v403, %v402
      %v432 = vpack.c.b16 %v405, %v404
      %v433 = vpack.c.b16 %v407, %v406
      %v434 = vpack.c.b16 %v409, %v408
      %v435 = vpack.c.b16 %v411, %v410
      %v436 = vpack.c.b16 %v413, %v412
      %v437 = vpack.c.b16 %v415, %v414
      %v438 = vpack.c.b16 %v417, %v416
      %v439 = vpack.c.b16 %v419, %v418
      %v440 = vpack.c.b16 %v421, %v420
      %v441 = vpack.c.b16 %v423, %v422
      %v442 = vpack.c.b16 %v425, %v424
      %v443 = vpack.c.b16 %v427, %v426
      %460 = vmatprep.subr.bf16.mxu0 0
      %461 = vmatpush1.bf16.msra.mxu0 %v428
      %462 = vmatprep.subr.bf16.mxu0 0
      %463 = vmatpush1.bf16.msra.mxu0 %v429
      %464 = vmatprep.subr.bf16.mxu0 0
      %465 = vmatpush1.bf16.msra.mxu0 %v430
      %466 = vmatprep.subr.bf16.mxu0 0
      %467 = vmatpush1.bf16.msra.mxu0 %v431
      %468 = vmatprep.subr.bf16.mxu0 0
      %469 = vmatpush1.bf16.msra.mxu0 %v432
      %470 = vmatprep.subr.bf16.mxu0 0
      %471 = vmatpush1.bf16.msra.mxu0 %v433
      %472 = vmatprep.subr.bf16.mxu0 0
      %473 = vmatpush1.bf16.msra.mxu0 %v434
      %474 = vmatprep.subr.bf16.mxu0 0
      %475 = vmatpush1.bf16.msra.mxu0 %v435
      %476 = vmatprep.subr.bf16.mxu0 0
      %477 = vmatpush1.bf16.msra.mxu0 %v436
      %478 = vmatprep.subr.bf16.mxu0 0
      %479 = vmatpush1.bf16.msra.mxu0 %v437
      %480 = vmatprep.subr.bf16.mxu0 0
      %481 = vmatpush1.bf16.msra.mxu0 %v438
      %482 = vmatprep.subr.bf16.mxu0 0
      %483 = vmatpush1.bf16.msra.mxu0 %v439
      %484 = vmatprep.subr.bf16.mxu0 0
      %485 = vmatpush1.bf16.msra.mxu0 %v440
      %486 = vmatprep.subr.bf16.mxu0 0
      %487 = vmatpush1.bf16.msra.mxu0 %v441
      %488 = vmatprep.subr.bf16.mxu0 0
      %489 = vmatpush1.bf16.msra.mxu0 %v442
      %490 = vmatprep.subr.bf16.mxu0 0
      %491 = vmatpush1.bf16.msra.mxu0 %v443
      %492 = vmatprep.mubr.bf16.mxu0 %v361
      %493 = vmatmul.mubr.bf16.gmra.mrb[0].mxu0 %v354
      %v494 = vpop.f32.mrb[0].mxu0
      %v495 = vadd.f32 0.0, %v494
      %v496 = vpop.f32.mrb[0].mxu0
      %v497 = vpop.f32.mrb[0].mxu0
      %v498 = vpop.f32.mrb[0].mxu0
      %499 = vdwg.mxu0
      %v500 = vadd.f32 %v306, %v495
      %vm501 = vcmask 517120
      %502 = vst.msk [vmem:[#allocation2] sm:$0x3] %vm501, %v500
      // Predicated region
      $region37: #{_lambda_.35} parent=31 // pred_check
        %p503 = pneg %p298
      $region38: #{_lambda_.35} parent=31 // pred_check_branch
        %505 = sbr.rel (%p503) target = $region40
      $region39: #{_lambda_.35} parent=31 // pred_region
        %v506 = vld [vmem:[#allocation2] sm:$0x3]
        %v507 = vld [vmem:[%s287] sm:$0x1]
        %v509 = vlaneseq
        %v510 = vshrl.u32 %v509, 7
        %v511 = vsub.s32 0, %v510
        %v512 = vrot.slane %v507, %v511
        %v514 = vadd.f32 %v506, %v512
        %v515 = vpack.c.bf16 %v514, %v514
        %vm516 = vcmask 516096
        %517 = vst.msk [vmem:[%s296] sm:$0x1] %vm516, %v515
      $region40: #{_lambda_.35} parent=31 // pred_fallthru
        _
      %p518 = scmp.lt.s32.totalorder %s20, 3
      %s519 = scalar_select %p518, %s20, 3
      %p520 = scmp.lt.s32.totalorder %s21, 0
      %s521 = scalar_select %p520, %s21, 0
      %p522 = scmp.lt.s32.totalorder %s22, 0
      %s523 = scalar_select %p522, %s22, 0
      %s524 = sadd.s32 %s523, %s521
      %s525 = sadd.s32 %s524, %s519
      %s526 = scalar_lea.vmem %s3, %s525
      // Predicated region
      $region41: #{_lambda_.35} parent=31 // pred_check
        %p527 = pneg %p148
      $region42: #{_lambda_.35} parent=31 // pred_check_branch
        %529 = sbr.rel (%p527) target = $region44
      $region43: #{_lambda_.35} parent=31 // pred_region
        _
      $region44: #{_lambda_.35} parent=31 // pred_fallthru
        _
    $region32: #{_lambda_.35} parent=5 // pred_fallthru
      _
    %p530 = scmp.le.s32.totalorder 2, %s9
    // Predicated region
    $region45: #{_lambda_.35} parent=5 // pred_check
      %p531 = pneg %p530
    $region46: #{_lambda_.35} parent=5 // pred_check_branch
      %533 = sbr.rel (%p531) target = $region48
    $region47: #{_lambda_.35} parent=5 // pred_region
      %s534 = ssub.s32 %s9, 2
      // Predicated region
      $region49: #{_lambda_.35} parent=47 // pred_check
        %p535 = pneg %p154
      $region50: #{_lambda_.35} parent=47 // pred_check_branch
        %537 = sbr.rel (%p535) target = $region52
      $region51: #{_lambda_.35} parent=47 // pred_region
        %p538 = scmp.lt.s32.totalorder %s24, 3
        %s539 = scalar_select %p538, %s24, 3
        %p540 = scmp.lt.s32.totalorder %s25, 0
        %s541 = scalar_select %p540, %s25, 0
        %p542 = scmp.lt.s32.totalorder %s26, 0
        %s543 = scalar_select %p542, %s26, 0
        %s544 = sadd.s32 %s543, %s541
        %s545 = sadd.s32 %s544, %s539
        %s546 = scalar_lea.vmem %s3, %s545
      $region52: #{_lambda_.35} parent=47 // pred_fallthru
        _
    $region48: #{_lambda_.35} parent=5 // pred_fallthru
      _
  $region6: #{_lambda_.35} parent=0 // loop_footer
    %s13 = sadd.s32 1, %s9
  $region7: #{_lambda_.35} parent=0 // loop_footer_branch
    %8 = sbr.rel target = $region3
  $region8: #{_lambda_.35} parent=0 // loop_exit
    _

// kernel: _lambda_.38
$region0: #{_lambda_.38}
  #allocation0 [shape = 'u32[]', space=smem, size = 0x4, offset = 0x4, fixed_abs, tag = 'smem constant byte address 0x4 - core index']
  #allocation1 [shape = 'u32[144,128]{1,0:T(1,128)}', space=vmem, size = 0x12000, scoped, tag = 'internal scratch']
  #allocation2 [shape = 'f32[8,32]{1,0:T(8,128)}', space=vmem, size = 0x1000, scoped, tag = 'scratch operand']
  %s0 = inlined_call_operand.vmem [shape: bf16[4,8,512], index: 0, kind: input, shape index: {}]
  %s1 = inlined_call_operand.vmem [shape: bf16[4,512,32], index: 1, kind: input, shape index: {}]
  %s2 = inlined_call_operand.vmem [shape: f32[1,1,32], index: 2, kind: input, shape index: {}]
  %s3 = inlined_call_operand.vmem [shape: bf16[4,8,32], index: 3, kind: output, shape index: {}]
  %s4 = sld [smem:[#allocation0]]
  $region53: #{_lambda_.38} parent=0
    _
  %s6 = ssub.s32 1, %s4
  %s7 = scalar_select 0, %s6, %s4
  loop: start=0, step=1, limit=6
  $region2: #{_lambda_.38} parent=0 // loop_pre_header
    _
  $region3: #{_lambda_.38} parent=0 // loop_header
    %s9 = sphi 0, %s13
    %p10 = scmp.ge.s32.totalorder %s9, 6
    %s16 = sphi 0, %s42
    %s17 = sphi 0, %s38
    %s18 = sphi 0, %s34
    %s19 = sphi 0, %s30
    %s20 = sphi 0, %s16
    %s21 = sphi 0, %s17
    %s22 = sphi 0, %s18
    %s23 = sphi 0, %s19
    %s24 = sphi 0, %s20
    %s25 = sphi 0, %s21
    %s26 = sphi 0, %s22
    %s27 = sphi 0, %s23
    %s49 = sphi 0, %s51
    %s52 = sphi 0, %s49
    %s53 = sphi 0, %s52
    %s69 = sphi 0, %s53
    %s79 = sphi 0, %s81
    %s82 = sphi 0, %s79
    %s83 = sphi 0, %s82
    %s99 = sphi 0, %s83
    %s105 = sphi 0, %s107
    %s108 = sphi 0, %s105
    %s109 = sphi 0, %s108
    %s125 = sphi 0, %s109
    %s135 = sphi 0, %s137
    %s138 = sphi 0, %s135
    %s139 = sphi 0, %s138
    %s155 = sphi 0, %s139
  $region4: #{_lambda_.38} parent=0 // loop_header_branch
    %12 = sbr.rel (%p10) target = $region8
  $region5: #{_lambda_.38} parent=0 // loop_body
    %s14 = ssub.s32 %s9, 1
    %s15 = ssub.s32 %s9, 2
    %s28 = sadd.s32 1, %s19
    %p29 = scmp.ge.s32.totalorder %s28, 1
    %s30 = scalar_select %p29, 0, %s28
    %s31 = sadd.s32 1, %s18
    %s32 = scalar_select %p29, %s31, %s18
    %p33 = scmp.ge.s32.totalorder %s32, 1
    %s34 = scalar_select %p33, 0, %s32
    %s35 = sadd.s32 1, %s17
    %s36 = scalar_select %p33, %s35, %s17
    %p37 = scmp.ge.s32.totalorder %s36, 1
    %s38 = scalar_select %p37, 0, %s36
    %s39 = sadd.s32 1, %s16
    %s40 = scalar_select %p37, %s39, %s16
    %p41 = scmp.ge.s32.totalorder %s40, 4
    %s42 = scalar_select %p41, 0, %s40
    %s43 = ssub.s32 %s16, %s42
    %s44 = ssub.s32 %s17, %s38
    %s45 = sor.u32 %s43, %s44
    %s46 = ssub.s32 %s19, %s30
    %s47 = sor.u32 %s45, %s46
    %p48 = scmp.eq.s32.totalorder %s47, 0
    %s50 = sadd.s32 %s49, 1
    %s51 = scalar_select %p48, %s49, %s50
    %p54 = pneg %p48
    %p55 = scmp.eq.s32.totalorder %s9, 3
    %p56 = por %p54, %p55
    %p57 = scmp.ne.s32.totalorder %s49, %s52
    %p58 = scmp.eq.s32.totalorder %s9, 0
    %p59 = por %p57, %p58
    %p60 = scmp.ne.s32.totalorder %s49, %s52
    %p61 = scmp.eq.s32.totalorder %s14, 3
    %p62 = por %p60, %p61
    %p63 = scmp.ne.s32.totalorder %s52, %s53
    %p64 = scmp.eq.s32.totalorder %s14, 0
    %p65 = por %p63, %p64
    %p66 = scmp.ne.s32.totalorder %s52, %s53
    %p67 = scmp.eq.s32.totalorder %s15, 3
    %p68 = por %p66, %p67
    %p70 = scmp.ne.s32.totalorder %s53, %s69
    %p71 = scmp.eq.s32.totalorder %s15, 0
    %p72 = por %p70, %p71
    %s73 = ssub.s32 %s16, %s42
    %s74 = ssub.s32 %s19, %s30
    %s75 = sor.u32 %s73, %s74
    %s76 = ssub.s32 %s18, %s34
    %s77 = sor.u32 %s75, %s76
    %p78 = scmp.eq.s32.totalorder %s77, 0
    %s80 = sadd.s32 %s79, 1
    %s81 = scalar_select %p78, %s79, %s80
    %p84 = pneg %p78
    %p85 = scmp.eq.s32.totalorder %s9, 3
    %p86 = por %p84, %p85
    %p87 = scmp.ne.s32.totalorder %s79, %s82
    %p88 = scmp.eq.s32.totalorder %s9, 0
    %p89 = por %p87, %p88
    %p90 = scmp.ne.s32.totalorder %s79, %s82
    %p91 = scmp.eq.s32.totalorder %s14, 3
    %p92 = por %p90, %p91
    %p93 = scmp.ne.s32.totalorder %s82, %s83
    %p94 = scmp.eq.s32.totalorder %s14, 0
    %p95 = por %p93, %p94
    %p96 = scmp.ne.s32.totalorder %s82, %s83
    %p97 = scmp.eq.s32.totalorder %s15, 3
    %p98 = por %p96, %p97
    %p100 = scmp.ne.s32.totalorder %s83, %s99
    %p101 = scmp.eq.s32.totalorder %s15, 0
    %p102 = por %p100, %p101
    %s103 = ssub.s32 %s18, %s34
    %p104 = scmp.eq.s32.totalorder %s103, 0
    %s106 = sadd.s32 %s105, 1
    %s107 = scalar_select %p104, %s105, %s106
    %p110 = pneg %p104
    %p111 = scmp.eq.s32.totalorder %s9, 3
    %p112 = por %p110, %p111
    %p113 = scmp.ne.s32.totalorder %s105, %s108
    %p114 = scmp.eq.s32.totalorder %s9, 0
    %p115 = por %p113, %p114
    %p116 = scmp.ne.s32.totalorder %s105, %s108
    %p117 = scmp.eq.s32.totalorder %s14, 3
    %p118 = por %p116, %p117
    %p119 = scmp.ne.s32.totalorder %s108, %s109
    %p120 = scmp.eq.s32.totalorder %s14, 0
    %p121 = por %p119, %p120
    %p122 = scmp.ne.s32.totalorder %s108, %s109
    %p123 = scmp.eq.s32.totalorder %s15, 3
    %p124 = por %p122, %p123
    %p126 = scmp.ne.s32.totalorder %s109, %s125
    %p127 = scmp.eq.s32.totalorder %s15, 0
    %p128 = por %p126, %p127
    %s129 = ssub.s32 %s16, %s42
    %s130 = ssub.s32 %s17, %s38
    %s131 = sor.u32 %s129, %s130
    %s132 = ssub.s32 %s18, %s34
    %s133 = sor.u32 %s131, %s132
    %p134 = scmp.eq.s32.totalorder %s133, 0
    %s136 = sadd.s32 %s135, 1
    %s137 = scalar_select %p134, %s135, %s136
    %p140 = pneg %p134
    %p141 = scmp.eq.s32.totalorder %s9, 3
    %p142 = por %p140, %p141
    %p143 = scmp.ne.s32.totalorder %s135, %s138
    %p144 = scmp.eq.s32.totalorder %s9, 0
    %p145 = por %p143, %p144
    %p146 = scmp.ne.s32.totalorder %s135, %s138
    %p147 = scmp.eq.s32.totalorder %s14, 3
    %p148 = por %p146, %p147
    %p149 = scmp.ne.s32.totalorder %s138, %s139
    %p150 = scmp.eq.s32.totalorder %s14, 0
    %p151 = por %p149, %p150
    %p152 = scmp.ne.s32.totalorder %s138, %s139
    %p153 = scmp.eq.s32.totalorder %s15, 3
    %p154 = por %p152, %p153
    %p156 = scmp.ne.s32.totalorder %s139, %s155
    %p157 = scmp.eq.s32.totalorder %s15, 0
    %p158 = por %p156, %p157
    %p159 = scmp.le.s32.totalorder 1, %s9
    %p160 = scmp.lt.s32.totalorder %s9, 5
    %p161 = pnand %p159, %p160
    %p162 = pneg %p161
    // Predicated region
    $region9: #{_lambda_.38} parent=5 // pred_check
      _
    $region10: #{_lambda_.38} parent=5 // pred_check_branch
      %164 = sbr.rel (%p161) target = $region12
    $region11: #{_lambda_.38} parent=5 // pred_region
      %s165 = ssub.s32 %s9, 1
      // Predicated region
      $region13: #{_lambda_.38} parent=11 // pred_check
        %p166 = pneg %p121
      $region14: #{_lambda_.38} parent=11 // pred_check_branch
        %168 = sbr.rel (%p166) target = $region16
      $region15: #{_lambda_.38} parent=11 // pred_region
        %p169 = scmp.lt.s32.totalorder %s22, 0
        %s170 = scalar_select %p169, %s22, 0
        %s171 = scalar_lea.vmem %s2, %s170
      $region16: #{_lambda_.38} parent=11 // pred_fallthru
        _
    $region12: #{_lambda_.38} parent=5 // pred_fallthru
      _
    %p172 = scmp.lt.s32.totalorder %s9, 4
    // Predicated region
    $region17: #{_lambda_.38} parent=5 // pred_check
      %p173 = pneg %p172
    $region18: #{_lambda_.38} parent=5 // pred_check_branch
      %175 = sbr.rel (%p173) target = $region20
    $region19: #{_lambda_.38} parent=5 // pred_region
      // Predicated region
      $region21: #{_lambda_.38} parent=19 // pred_check
        %p176 = pneg %p59
      $region22: #{_lambda_.38} parent=19 // pred_check_branch
        %178 = sbr.rel (%p176) target = $region24
      $region23: #{_lambda_.38} parent=19 // pred_region
        %s179 = smul.u32 4, %s19
        %p180 = scmp.lt.s32.totalorder %s16, 3
        %s181 = scalar_select %p180, %s16, 3
        %p182 = scmp.lt.s32.totalorder %s17, 0
        %s183 = scalar_select %p182, %s17, 0
        %p184 = scmp.lt.s32.totalorder %s179, 3
        %s185 = scalar_select %p184, %s179, 3
        %s186 = smul.addr %s183, 4
        %s187 = sadd.s32 %s185, %s186
        %s188 = smul.addr %s181, 4
        %s189 = sadd.s32 %s187, %s188
        %s190 = smul.addr %s189, 4
        %s191 = scalar_lea.vmem %s0, %s190
        %s192 = smul.u32 4, %s19
      $region24: #{_lambda_.38} parent=19 // pred_fallthru
        _
      // Predicated region
      $region25: #{_lambda_.38} parent=19 // pred_check
        %p193 = pneg %p89
      $region26: #{_lambda_.38} parent=19 // pred_check_branch
        %195 = sbr.rel (%p193) target = $region28
      $region27: #{_lambda_.38} parent=19 // pred_region
        %s196 = smul.u32 64, %s19
        %p197 = scmp.lt.s32.totalorder %s16, 3
        %s198 = scalar_select %p197, %s16, 3
        %p199 = scmp.lt.s32.totalorder %s196, 63
        %s200 = scalar_select %p199, %s196, 63
        %p201 = scmp.lt.s32.totalorder %s18, 0
        %s202 = scalar_select %p201, %s18, 0
        %s203 = sadd.s32 %s202, %s200
        %s204 = smul.addr %s198, 64
        %s205 = sadd.s32 %s203, %s204
        %s206 = smul.addr %s205, 4
        %s207 = scalar_lea.vmem %s1, %s206
        %s208 = smul.u32 64, %s19
      $region28: #{_lambda_.38} parent=19 // pred_fallthru
        _
    $region20: #{_lambda_.38} parent=5 // pred_fallthru
      _
    %p209 = scmp.le.s32.totalorder 1, %s9
    %p210 = scmp.lt.s32.totalorder %s9, 5
    %p211 = pnand %p209, %p210
    %p212 = pneg %p211
    // Predicated region
    $region29: #{_lambda_.38} parent=5 // pred_check
      _
    $region30: #{_lambda_.38} parent=5 // pred_check_branch
      %214 = sbr.rel (%p211) target = $region32
    $region31: #{_lambda_.38} parent=5 // pred_region
      %s215 = ssub.s32 %s9, 1
      %s216 = smul.u32 4, %s23
      %p217 = scmp.lt.s32.totalorder %s20, 3
      %s218 = scalar_select %p217, %s20, 3
      %p219 = scmp.lt.s32.totalorder %s21, 0
      %s220 = scalar_select %p219, %s21, 0
      %p221 = scmp.lt.s32.totalorder %s216, 3
      %s222 = scalar_select %p221, %s216, 3
      %s223 = smul.addr %s220, 4
      %s224 = sadd.s32 %s222, %s223
      %s225 = smul.addr %s218, 4
      %s226 = sadd.s32 %s224, %s225
      %s227 = smul.addr %s226, 4
      %s228 = scalar_lea.vmem %s0, %s227
      %p229 = pneg %p65
      %p230 = pneg %p62
      %s231 = smul.u32 64, %s23
      %p232 = scmp.lt.s32.totalorder %s20, 3
      %s233 = scalar_select %p232, %s20, 3
      %p234 = scmp.lt.s32.totalorder %s231, 63
      %s235 = scalar_select %p234, %s231, 63
      %p236 = scmp.lt.s32.totalorder %s22, 0
      %s237 = scalar_select %p236, %s22, 0
      %s238 = sadd.s32 %s237, %s235
      %s239 = smul.addr %s233, 64
      %s240 = sadd.s32 %s238, %s239
      %s241 = smul.addr %s240, 4
      %s242 = scalar_lea.vmem %s1, %s241
      %p243 = pneg %p95
      %p244 = pneg %p92
      %p245 = scmp.lt.s32.totalorder %s22, 0
      %s246 = scalar_select %p245, %s22, 0
      %s247 = scalar_lea.vmem %s2, %s246
      %p248 = pneg %p121
      %p249 = pneg %p118
      %p250 = pneg %p151
      %p251 = pneg %p148
      %p252 = scmp.lt.s32.totalorder %s20, 3
      %s253 = scalar_select %p252, %s20, 3
      %p254 = scmp.lt.s32.totalorder %s21, 0
      %s255 = scalar_select %p254, %s21, 0
      %p256 = scmp.lt.s32.totalorder %s22, 0
      %s257 = scalar_select %p256, %s22, 0
      %s258 = sadd.s32 %s257, %s255
      %s259 = sadd.s32 %s258, %s253
      %s260 = smul.addr %s259, 4
      %s261 = scalar_lea.vmem %s3, %s260
      %s262 = smul.u32 4, %s23
      %p263 = scmp.lt.s32.totalorder %s20, 3
      %s264 = scalar_select %p263, %s20, 3
      %p265 = scmp.lt.s32.totalorder %s21, 0
      %s266 = scalar_select %p265, %s21, 0
      %p267 = scmp.lt.s32.totalorder %s262, 3
      %s268 = scalar_select %p267, %s262, 3
      %s269 = smul.addr %s266, 4
      %s270 = sadd.s32 %s268, %s269
      %s271 = smul.addr %s264, 4
      %s272 = sadd.s32 %s270, %s271
      %s273 = smul.addr %s272, 4
      %s274 = scalar_lea.vmem %s0, %s273
      %s275 = smul.u32 4, %s23
      %s276 = smul.u32 64, %s23
      %p277 = scmp.lt.s32.totalorder %s20, 3
      %s278 = scalar_select %p277, %s20, 3
      %p279 = scmp.lt.s32.totalorder %s276, 63
      %s280 = scalar_select %p279, %s276, 63
      %p281 = scmp.lt.s32.totalorder %s22, 0
      %s282 = scalar_select %p281, %s22, 0
      %s283 = sadd.s32 %s282, %s280
      %s284 = smul.addr %s278, 64
      %s285 = sadd.s32 %s283, %s284
      %s286 = smul.addr %s285, 4
      %s287 = scalar_lea.vmem %s1, %s286
      %s288 = smul.u32 64, %s23
      %p289 = scmp.lt.s32.totalorder %s22, 0
      %s290 = scalar_select %p289, %s22, 0
      %s291 = scalar_lea.vmem %s2, %s290
      %p292 = scmp.lt.s32.totalorder %s20, 3
      %s293 = scalar_select %p292, %s20, 3
      %p294 = scmp.lt.s32.totalorder %s21, 0
      %s295 = scalar_select %p294, %s21, 0
      %p296 = scmp.lt.s32.totalorder %s22, 0
      %s297 = scalar_select %p296, %s22, 0
      %s298 = sadd.s32 %s297, %s295
      %s299 = sadd.s32 %s298, %s293
      %s300 = smul.addr %s299, 4
      %s301 = scalar_lea.vmem %s3, %s300
      %p303 = scmp.eq.s32.totalorder %s23, 0
      // Predicated region
      $region33: #{_lambda_.38} parent=31 // pred_check
        %p304 = pneg %p303
      $region34: #{_lambda_.38} parent=31 // pred_check_branch
        %306 = sbr.rel (%p304) target = $region36
      $region35: #{_lambda_.38} parent=31 // pred_region
        %vm307 = vcmask 261120
        %308 = vst.msk [vmem:[#allocation2] sm:$0xff] %vm307, 0.0
      $region36: #{_lambda_.38} parent=31 // pred_fallthru
        _
      %v309 = vld [vmem:[%s274] sm:$0xff]
      %v310 = vld [vmem:[%s274 + $0x8] sm:$0xff]
      %v311 = vmax.bf16 %v309, 0
      %v312 = vmax.bf16 %v310, 0
      %v313 = vld [vmem:[#allocation2] sm:$0xff]
      %v314 = vld [vmem:[%s287] sm:$0xf]
      %v315 = vld [vmem:[%s287 + $0x4] sm:$0xf]
      %v316 = vld [vmem:[%s287 + $0x8] sm:$0xf]
      %v317 = vld [vmem:[%s287 + $0xc] sm:$0xf]
      %v318 = vld [vmem:[%s287 + $0x10] sm:$0xf]
      %v319 = vld [vmem:[%s287 + $0x14] sm:$0xf]
      %v320 = vld [vmem:[%s287 + $0x18] sm:$0xf]
      %v321 = vld [vmem:[%s287 + $0x1c] sm:$0xf]
      %v322 = vld [vmem:[%s287 + $0x20] sm:$0xf]
      %v323 = vld [vmem:[%s287 + $0x24] sm:$0xf]
      %v324 = vld [vmem:[%s287 + $0x28] sm:$0xf]
      %v325 = vld [vmem:[%s287 + $0x2c] sm:$0xf]
      %v326 = vld [vmem:[%s287 + $0x30] sm:$0xf]
      %v327 = vld [vmem:[%s287 + $0x34] sm:$0xf]
      %v328 = vld [vmem:[%s287 + $0x38] sm:$0xf]
      %v329 = vld [vmem:[%s287 + $0x3c] sm:$0xf]
      %v330 = vld [vmem:[%s287 + $0x40] sm:$0xf]
      %v331 = vld [vmem:[%s287 + $0x44] sm:$0xf]
      %v332 = vld [vmem:[%s287 + $0x48] sm:$0xf]
      %v333 = vld [vmem:[%s287 + $0x4c] sm:$0xf]
      %v334 = vld [vmem:[%s287 + $0x50] sm:$0xf]
      %v335 = vld [vmem:[%s287 + $0x54] sm:$0xf]
      %v336 = vld [vmem:[%s287 + $0x58] sm:$0xf]
      %v337 = vld [vmem:[%s287 + $0x5c] sm:$0xf]
      %v338 = vld [vmem:[%s287 + $0x60] sm:$0xf]
      %v339 = vld [vmem:[%s287 + $0x64] sm:$0xf]
      %v340 = vld [vmem:[%s287 + $0x68] sm:$0xf]
      %v341 = vld [vmem:[%s287 + $0x6c] sm:$0xf]
      %v342 = vld [vmem:[%s287 + $0x70] sm:$0xf]
      %v343 = vld [vmem:[%s287 + $0x74] sm:$0xf]
      %v344 = vld [vmem:[%s287 + $0x78] sm:$0xf]
      %v345 = vld [vmem:[%s287 + $0x7c] sm:$0xf]
      %v346 = vld [vmem:[%s287 + $0x80] sm:$0xf]
      %v347 = vld [vmem:[%s287 + $0x84] sm:$0xf]
      %v348 = vld [vmem:[%s287 + $0x88] sm:$0xf]
      %v349 = vld [vmem:[%s287 + $0x8c] sm:$0xf]
      %v350 = vld [vmem:[%s287 + $0x90] sm:$0xf]
      %v351 = vld [vmem:[%s287 + $0x94] sm:$0xf]
      %v352 = vld [vmem:[%s287 + $0x98] sm:$0xf]
      %v353 = vld [vmem:[%s287 + $0x9c] sm:$0xf]
      %v354 = vld [vmem:[%s287 + $0xa0] sm:$0xf]
      %v355 = vld [vmem:[%s287 + $0xa4] sm:$0xf]
      %v356 = vld [vmem:[%s287 + $0xa8] sm:$0xf]
      %v357 = vld [vmem:[%s287 + $0xac] sm:$0xf]
      %v358 = vld [vmem:[%s287 + $0xb0] sm:$0xf]
      %v359 = vld [vmem:[%s287 + $0xb4] sm:$0xf]
      %v360 = vld [vmem:[%s287 + $0xb8] sm:$0xf]
      %v361 = vld [vmem:[%s287 + $0xbc] sm:$0xf]
      %v362 = vld [vmem:[%s287 + $0xc0] sm:$0xf]
      %v363 = vld [vmem:[%s287 + $0xc4] sm:$0xf]
      %v364 = vld [vmem:[%s287 + $0xc8] sm:$0xf]
      %v365 = vld [vmem:[%s287 + $0xcc] sm:$0xf]
      %v366 = vld [vmem:[%s287 + $0xd0] sm:$0xf]
      %v367 = vld [vmem:[%s287 + $0xd4] sm:$0xf]
      %v368 = vld [vmem:[%s287 + $0xd8] sm:$0xf]
      %v369 = vld [vmem:[%s287 + $0xdc] sm:$0xf]
      %v370 = vld [vmem:[%s287 + $0xe0] sm:$0xf]
      %v371 = vld [vmem:[%s287 + $0xe4] sm:$0xf]
      %v372 = vld [vmem:[%s287 + $0xe8] sm:$0xf]
      %v373 = vld [vmem:[%s287 + $0xec] sm:$0xf]
      %v374 = vld [vmem:[%s287 + $0xf0] sm:$0xf]
      %v375 = vld [vmem:[%s287 + $0xf4] sm:$0xf]
      %v376 = vld [vmem:[%s287 + $0xf8] sm:$0xf]
      %v377 = vld [vmem:[%s287 + $0xfc] sm:$0xf]
      %v380 = vunpack.c.l.b16 %v311
      %v381 = vunpack.c.h.b16 %v311
      %v382 = vunpack.c.l.b16 %v312
      %v383 = vunpack.c.h.b16 %v312
      %v384 = vpack.c.b16 %v380, %v380
      %v385 = vpack.c.b16 %v381, %v381
      %v386 = vpack.c.b16 %v382, %v382
      %v387 = vpack.c.b16 %v383, %v383
      %v456 = vunpack.c.l.b16 %v314
      %v457 = vunpack.c.l.b16 %v315
      %v458 = vunpack.c.l.b16 %v316
      %v459 = vunpack.c.l.b16 %v317
      %v460 = vunpack.c.l.b16 %v318
      %v461 = vunpack.c.l.b16 %v319
      %v462 = vunpack.c.l.b16 %v320
      %v463 = vunpack.c.l.b16 %v321
      %v464 = vunpack.c.l.b16 %v322
      %v465 = vunpack.c.l.b16 %v323
      %v466 = vunpack.c.l.b16 %v324
      %v467 = vunpack.c.l.b16 %v325
      %v468 = vunpack.c.l.b16 %v326
      %v469 = vunpack.c.l.b16 %v327
      %v470 = vunpack.c.l.b16 %v328
      %v471 = vunpack.c.l.b16 %v329
      %v472 = vunpack.c.l.b16 %v330
      %v473 = vunpack.c.l.b16 %v331
      %v474 = vunpack.c.l.b16 %v332
      %v475 = vunpack.c.l.b16 %v333
      %v476 = vunpack.c.l.b16 %v334
      %v477 = vunpack.c.l.b16 %v335
      %v478 = vunpack.c.l.b16 %v336
      %v479 = vunpack.c.l.b16 %v337
      %v480 = vunpack.c.l.b16 %v338
      %v481 = vunpack.c.l.b16 %v339
      %v482 = vunpack.c.l.b16 %v340
      %v483 = vunpack.c.l.b16 %v341
      %v484 = vunpack.c.l.b16 %v342
      %v485 = vunpack.c.l.b16 %v343
      %v486 = vunpack.c.l.b16 %v344
      %v487 = vunpack.c.l.b16 %v345
      %v488 = vunpack.c.l.b16 %v346
      %v489 = vunpack.c.l.b16 %v347
      %v490 = vunpack.c.l.b16 %v348
      %v491 = vunpack.c.l.b16 %v349
      %v492 = vunpack.c.l.b16 %v350
      %v493 = vunpack.c.l.b16 %v351
      %v494 = vunpack.c.l.b16 %v352
      %v495 = vunpack.c.l.b16 %v353
      %v496 = vunpack.c.l.b16 %v354
      %v497 = vunpack.c.l.b16 %v355
      %v498 = vunpack.c.l.b16 %v356
      %v499 = vunpack.c.l.b16 %v357
      %v500 = vunpack.c.l.b16 %v358
      %v501 = vunpack.c.l.b16 %v359
      %v502 = vunpack.c.l.b16 %v360
      %v503 = vunpack.c.l.b16 %v361
      %v504 = vunpack.c.l.b16 %v362
      %v505 = vunpack.c.l.b16 %v363
      %v506 = vunpack.c.l.b16 %v364
      %v507 = vunpack.c.l.b16 %v365
      %v508 = vunpack.c.l.b16 %v366
      %v509 = vunpack.c.l.b16 %v367
      %v510 = vunpack.c.l.b16 %v368
      %v511 = vunpack.c.l.b16 %v369
      %v512 = vunpack.c.l.b16 %v370
      %v513 = vunpack.c.l.b16 %v371
      %v514 = vunpack.c.l.b16 %v372
      %v515 = vunpack.c.l.b16 %v373
      %v516 = vunpack.c.l.b16 %v374
      %v517 = vunpack.c.l.b16 %v375
      %v518 = vunpack.c.l.b16 %v376
      %v519 = vunpack.c.l.b16 %v377
      %v520 = vpack.c.b16 %v457, %v456
      %v521 = vpack.c.b16 %v459, %v458
      %v522 = vpack.c.b16 %v461, %v460
      %v523 = vpack.c.b16 %v463, %v462
      %v524 = vpack.c.b16 %v465, %v464
      %v525 = vpack.c.b16 %v467, %v466
      %v526 = vpack.c.b16 %v469, %v468
      %v527 = vpack.c.b16 %v471, %v470
      %v528 = vpack.c.b16 %v473, %v472
      %v529 = vpack.c.b16 %v475, %v474
      %v530 = vpack.c.b16 %v477, %v476
      %v531 = vpack.c.b16 %v479, %v478
      %v532 = vpack.c.b16 %v481, %v480
      %v533 = vpack.c.b16 %v483, %v482
      %v534 = vpack.c.b16 %v485, %v484
      %v535 = vpack.c.b16 %v487, %v486
      %v536 = vpack.c.b16 %v489, %v488
      %v537 = vpack.c.b16 %v491, %v490
      %v538 = vpack.c.b16 %v493, %v492
      %v539 = vpack.c.b16 %v495, %v494
      %v540 = vpack.c.b16 %v497, %v496
      %v541 = vpack.c.b16 %v499, %v498
      %v542 = vpack.c.b16 %v501, %v500
      %v543 = vpack.c.b16 %v503, %v502
      %v544 = vpack.c.b16 %v505, %v504
      %v545 = vpack.c.b16 %v507, %v506
      %v546 = vpack.c.b16 %v509, %v508
      %v547 = vpack.c.b16 %v511, %v510
      %v548 = vpack.c.b16 %v513, %v512
      %v549 = vpack.c.b16 %v515, %v514
      %v550 = vpack.c.b16 %v517, %v516
      %v551 = vpack.c.b16 %v519, %v518
      %584 = vmatprep.subr.bf16.mxu0 0
      %585 = vmatpush1.bf16.msra.mxu0 %v520
      %586 = vmatprep.subr.bf16.mxu0 0
      %587 = vmatpush1.bf16.msra.mxu0 %v521
      %588 = vmatprep.subr.bf16.mxu0 0
      %589 = vmatpush1.bf16.msra.mxu0 %v522
      %590 = vmatprep.subr.bf16.mxu0 0
      %591 = vmatpush1.bf16.msra.mxu0 %v523
      %592 = vmatprep.subr.bf16.mxu0 0
      %593 = vmatpush1.bf16.msra.mxu0 %v524
      %594 = vmatprep.subr.bf16.mxu0 0
      %595 = vmatpush1.bf16.msra.mxu0 %v525
      %596 = vmatprep.subr.bf16.mxu0 0
      %597 = vmatpush1.bf16.msra.mxu0 %v526
      %598 = vmatprep.subr.bf16.mxu0 0
      %599 = vmatpush1.bf16.msra.mxu0 %v527
      %600 = vmatprep.subr.bf16.mxu0 0
      %601 = vmatpush1.bf16.msra.mxu0 %v528
      %602 = vmatprep.subr.bf16.mxu0 0
      %603 = vmatpush1.bf16.msra.mxu0 %v529
      %604 = vmatprep.subr.bf16.mxu0 0
      %605 = vmatpush1.bf16.msra.mxu0 %v530
      %606 = vmatprep.subr.bf16.mxu0 0
      %607 = vmatpush1.bf16.msra.mxu0 %v531
      %608 = vmatprep.subr.bf16.mxu0 0
      %609 = vmatpush1.bf16.msra.mxu0 %v532
      %610 = vmatprep.subr.bf16.mxu0 0
      %611 = vmatpush1.bf16.msra.mxu0 %v533
      %612 = vmatprep.subr.bf16.mxu0 0
      %613 = vmatpush1.bf16.msra.mxu0 %v534
      %614 = vmatprep.subr.bf16.mxu0 0
      %615 = vmatpush1.bf16.msra.mxu0 %v535
      %616 = vmatprep.mubr.bf16.mxu0 %v385
      %617 = vmatmul.mubr.bf16.gmra.mrb[0].mxu0 %v384
      %v618 = vpop.f32.mrb[0].mxu0
      %v619 = vadd.f32 0.0, %v618
      %v620 = vpop.f32.mrb[0].mxu0
      %v621 = vpop.f32.mrb[0].mxu0
      %v622 = vpop.f32.mrb[0].mxu0
      %623 = vdwg.mxu0
      %624 = vmatprep.subr.bf16.mxu0 0
      %625 = vmatpush1.bf16.msra.mxu0 %v536
      %626 = vmatprep.subr.bf16.mxu0 0
      %627 = vmatpush1.bf16.msra.mxu0 %v537
      %628 = vmatprep.subr.bf16.mxu0 0
      %629 = vmatpush1.bf16.msra.mxu0 %v538
      %630 = vmatprep.subr.bf16.mxu0 0
      %631 = vmatpush1.bf16.msra.mxu0 %v539
      %632 = vmatprep.subr.bf16.mxu0 0
      %633 = vmatpush1.bf16.msra.mxu0 %v540
      %634 = vmatprep.subr.bf16.mxu0 0
      %635 = vmatpush1.bf16.msra.mxu0 %v541
      %636 = vmatprep.subr.bf16.mxu0 0
      %637 = vmatpush1.bf16.msra.mxu0 %v542
      %638 = vmatprep.subr.bf16.mxu0 0
      %639 = vmatpush1.bf16.msra.mxu0 %v543
      %640 = vmatprep.subr.bf16.mxu0 0
      %641 = vmatpush1.bf16.msra.mxu0 %v544
      %642 = vmatprep.subr.bf16.mxu0 0
      %643 = vmatpush1.bf16.msra.mxu0 %v545
      %644 = vmatprep.subr.bf16.mxu0 0
      %645 = vmatpush1.bf16.msra.mxu0 %v546
      %646 = vmatprep.subr.bf16.mxu0 0
      %647 = vmatpush1.bf16.msra.mxu0 %v547
      %648 = vmatprep.subr.bf16.mxu0 0
      %649 = vmatpush1.bf16.msra.mxu0 %v548
      %650 = vmatprep.subr.bf16.mxu0 0
      %651 = vmatpush1.bf16.msra.mxu0 %v549
      %652 = vmatprep.subr.bf16.mxu0 0
      %653 = vmatpush1.bf16.msra.mxu0 %v550
      %654 = vmatprep.subr.bf16.mxu0 0
      %655 = vmatpush1.bf16.msra.mxu0 %v551
      %656 = vmatprep.mubr.bf16.mxu0 %v387
      %657 = vmatmul.mubr.bf16.gmra.mrb[0].mxu0 %v386
      %v658 = vpop.f32.mrb[0].mxu0
      %v659 = vadd.f32 %v619, %v658
      %v660 = vpop.f32.mrb[0].mxu0
      %v661 = vpop.f32.mrb[0].mxu0
      %v662 = vpop.f32.mrb[0].mxu0
      %663 = vdwg.mxu0
      %v664 = vadd.f32 %v313, %v659
      %vm665 = vcmask 261120
      %666 = vst.msk [vmem:[#allocation2] sm:$0xff] %vm665, %v664
      // Predicated region
      $region37: #{_lambda_.38} parent=31 // pred_check
        %p667 = pneg %p303
      $region38: #{_lambda_.38} parent=31 // pred_check_branch
        %669 = sbr.rel (%p667) target = $region40
      $region39: #{_lambda_.38} parent=31 // pred_region
        %v670 = vld [vmem:[#allocation2] sm:$0xff]
        %v671 = vld [vmem:[%s291] sm:$0x1]
        %v673 = vlaneseq
        %v674 = vshrl.u32 %v673, 7
        %v675 = vsub.s32 0, %v674
        %v676 = vrot.slane %v671, %v675
        %v678 = vadd.f32 %v670, %v676
        %v679 = vpack.c.bf16 %v678, %v678
        %vm680 = vcmask 257024
        %681 = vst.msk [vmem:[%s301] sm:$0xf] %vm680, %v679
      $region40: #{_lambda_.38} parent=31 // pred_fallthru
        _
      %p682 = scmp.lt.s32.totalorder %s20, 3
      %s683 = scalar_select %p682, %s20, 3
      %p684 = scmp.lt.s32.totalorder %s21, 0
      %s685 = scalar_select %p684, %s21, 0
      %p686 = scmp.lt.s32.totalorder %s22, 0
      %s687 = scalar_select %p686, %s22, 0
      %s688 = sadd.s32 %s687, %s685
      %s689 = sadd.s32 %s688, %s683
      %s690 = smul.addr %s689, 4
      %s691 = scalar_lea.vmem %s3, %s690
      // Predicated region
      $region41: #{_lambda_.38} parent=31 // pred_check
        %p692 = pneg %p148
      $region42: #{_lambda_.38} parent=31 // pred_check_branch
        %694 = sbr.rel (%p692) target = $region44
      $region43: #{_lambda_.38} parent=31 // pred_region
        _
      $region44: #{_lambda_.38} parent=31 // pred_fallthru
        _
    $region32: #{_lambda_.38} parent=5 // pred_fallthru
      _
    %p695 = scmp.le.s32.totalorder 2, %s9
    // Predicated region
    $region45: #{_lambda_.38} parent=5 // pred_check
      %p696 = pneg %p695
    $region46: #{_lambda_.38} parent=5 // pred_check_branch
      %698 = sbr.rel (%p696) target = $region48
    $region47: #{_lambda_.38} parent=5 // pred_region
      %s699 = ssub.s32 %s9, 2
      // Predicated region
      $region49: #{_lambda_.38} parent=47 // pred_check
        %p700 = pneg %p154
      $region50: #{_lambda_.38} parent=47 // pred_check_branch
        %702 = sbr.rel (%p700) target = $region52
      $region51: #{_lambda_.38} parent=47 // pred_region
        %p703 = scmp.lt.s32.totalorder %s24, 3
        %s704 = scalar_select %p703, %s24, 3
        %p705 = scmp.lt.s32.totalorder %s25, 0
        %s706 = scalar_select %p705, %s25, 0
        %p707 = scmp.lt.s32.totalorder %s26, 0
        %s708 = scalar_select %p707, %s26, 0
        %s709 = sadd.s32 %s708, %s706
        %s710 = sadd.s32 %s709, %s704
        %s711 = smul.addr %s710, 4
        %s712 = scalar_lea.vmem %s3, %s711
      $region52: #{_lambda_.38} parent=47 // pred_fallthru
        _
    $region48: #{_lambda_.38} parent=5 // pred_fallthru
      _
  $region6: #{_lambda_.38} parent=0 // loop_footer
    %s13 = sadd.s32 1, %s9
  $region7: #{_lambda_.38} parent=0 // loop_footer_branch
    %8 = sbr.rel target = $region3
  $region8: #{_lambda_.38} parent=0 // loop_exit
    _

// kernel: _lambda_.41
$region0: #{_lambda_.41}
  #allocation0 [shape = 'u32[]', space=smem, size = 0x4, offset = 0x4, fixed_abs, tag = 'smem constant byte address 0x4 - core index']
  #allocation1 [shape = 'u32[144,128]{1,0:T(1,128)}', space=vmem, size = 0x12000, scoped, tag = 'internal scratch']
  #allocation2 [shape = 'f32[32,16]{1,0:T(8,128)}', space=vmem, size = 0x4000, scoped, tag = 'scratch operand']
  %s0 = inlined_call_operand.vmem [shape: bf16[4,32,256], index: 0, kind: input, shape index: {}]
  %s1 = inlined_call_operand.vmem [shape: bf16[4,256,16], index: 1, kind: input, shape index: {}]
  %s2 = inlined_call_operand.vmem [shape: f32[1,1,16], index: 2, kind: input, shape index: {}]
  %s3 = inlined_call_operand.vmem [shape: bf16[4,32,16], index: 3, kind: output, shape index: {}]
  %s4 = sld [smem:[#allocation0]]
  $region53: #{_lambda_.41} parent=0
    _
  %s6 = ssub.s32 1, %s4
  %s7 = scalar_select 0, %s6, %s4
  loop: start=0, step=1, limit=6
  $region2: #{_lambda_.41} parent=0 // loop_pre_header
    _
  $region3: #{_lambda_.41} parent=0 // loop_header
    %s9 = sphi 0, %s13
    %p10 = scmp.ge.s32.totalorder %s9, 6
    %s16 = sphi 0, %s42
    %s17 = sphi 0, %s38
    %s18 = sphi 0, %s34
    %s19 = sphi 0, %s30
    %s20 = sphi 0, %s16
    %s21 = sphi 0, %s17
    %s22 = sphi 0, %s18
    %s23 = sphi 0, %s19
    %s24 = sphi 0, %s20
    %s25 = sphi 0, %s21
    %s26 = sphi 0, %s22
    %s27 = sphi 0, %s23
    %s49 = sphi 0, %s51
    %s52 = sphi 0, %s49
    %s53 = sphi 0, %s52
    %s69 = sphi 0, %s53
    %s79 = sphi 0, %s81
    %s82 = sphi 0, %s79
    %s83 = sphi 0, %s82
    %s99 = sphi 0, %s83
    %s105 = sphi 0, %s107
    %s108 = sphi 0, %s105
    %s109 = sphi 0, %s108
    %s125 = sphi 0, %s109
    %s135 = sphi 0, %s137
    %s138 = sphi 0, %s135
    %s139 = sphi 0, %s138
    %s155 = sphi 0, %s139
  $region4: #{_lambda_.41} parent=0 // loop_header_branch
    %12 = sbr.rel (%p10) target = $region8
  $region5: #{_lambda_.41} parent=0 // loop_body
    %s14 = ssub.s32 %s9, 1
    %s15 = ssub.s32 %s9, 2
    %s28 = sadd.s32 1, %s19
    %p29 = scmp.ge.s32.totalorder %s28, 1
    %s30 = scalar_select %p29, 0, %s28
    %s31 = sadd.s32 1, %s18
    %s32 = scalar_select %p29, %s31, %s18
    %p33 = scmp.ge.s32.totalorder %s32, 1
    %s34 = scalar_select %p33, 0, %s32
    %s35 = sadd.s32 1, %s17
    %s36 = scalar_select %p33, %s35, %s17
    %p37 = scmp.ge.s32.totalorder %s36, 1
    %s38 = scalar_select %p37, 0, %s36
    %s39 = sadd.s32 1, %s16
    %s40 = scalar_select %p37, %s39, %s16
    %p41 = scmp.ge.s32.totalorder %s40, 4
    %s42 = scalar_select %p41, 0, %s40
    %s43 = ssub.s32 %s16, %s42
    %s44 = ssub.s32 %s17, %s38
    %s45 = sor.u32 %s43, %s44
    %s46 = ssub.s32 %s19, %s30
    %s47 = sor.u32 %s45, %s46
    %p48 = scmp.eq.s32.totalorder %s47, 0
    %s50 = sadd.s32 %s49, 1
    %s51 = scalar_select %p48, %s49, %s50
    %p54 = pneg %p48
    %p55 = scmp.eq.s32.totalorder %s9, 3
    %p56 = por %p54, %p55
    %p57 = scmp.ne.s32.totalorder %s49, %s52
    %p58 = scmp.eq.s32.totalorder %s9, 0
    %p59 = por %p57, %p58
    %p60 = scmp.ne.s32.totalorder %s49, %s52
    %p61 = scmp.eq.s32.totalorder %s14, 3
    %p62 = por %p60, %p61
    %p63 = scmp.ne.s32.totalorder %s52, %s53
    %p64 = scmp.eq.s32.totalorder %s14, 0
    %p65 = por %p63, %p64
    %p66 = scmp.ne.s32.totalorder %s52, %s53
    %p67 = scmp.eq.s32.totalorder %s15, 3
    %p68 = por %p66, %p67
    %p70 = scmp.ne.s32.totalorder %s53, %s69
    %p71 = scmp.eq.s32.totalorder %s15, 0
    %p72 = por %p70, %p71
    %s73 = ssub.s32 %s16, %s42
    %s74 = ssub.s32 %s19, %s30
    %s75 = sor.u32 %s73, %s74
    %s76 = ssub.s32 %s18, %s34
    %s77 = sor.u32 %s75, %s76
    %p78 = scmp.eq.s32.totalorder %s77, 0
    %s80 = sadd.s32 %s79, 1
    %s81 = scalar_select %p78, %s79, %s80
    %p84 = pneg %p78
    %p85 = scmp.eq.s32.totalorder %s9, 3
    %p86 = por %p84, %p85
    %p87 = scmp.ne.s32.totalorder %s79, %s82
    %p88 = scmp.eq.s32.totalorder %s9, 0
    %p89 = por %p87, %p88
    %p90 = scmp.ne.s32.totalorder %s79, %s82
    %p91 = scmp.eq.s32.totalorder %s14, 3
    %p92 = por %p90, %p91
    %p93 = scmp.ne.s32.totalorder %s82, %s83
    %p94 = scmp.eq.s32.totalorder %s14, 0
    %p95 = por %p93, %p94
    %p96 = scmp.ne.s32.totalorder %s82, %s83
    %p97 = scmp.eq.s32.totalorder %s15, 3
    %p98 = por %p96, %p97
    %p100 = scmp.ne.s32.totalorder %s83, %s99
    %p101 = scmp.eq.s32.totalorder %s15, 0
    %p102 = por %p100, %p101
    %s103 = ssub.s32 %s18, %s34
    %p104 = scmp.eq.s32.totalorder %s103, 0
    %s106 = sadd.s32 %s105, 1
    %s107 = scalar_select %p104, %s105, %s106
    %p110 = pneg %p104
    %p111 = scmp.eq.s32.totalorder %s9, 3
    %p112 = por %p110, %p111
    %p113 = scmp.ne.s32.totalorder %s105, %s108
    %p114 = scmp.eq.s32.totalorder %s9, 0
    %p115 = por %p113, %p114
    %p116 = scmp.ne.s32.totalorder %s105, %s108
    %p117 = scmp.eq.s32.totalorder %s14, 3
    %p118 = por %p116, %p117
    %p119 = scmp.ne.s32.totalorder %s108, %s109
    %p120 = scmp.eq.s32.totalorder %s14, 0
    %p121 = por %p119, %p120
    %p122 = scmp.ne.s32.totalorder %s108, %s109
    %p123 = scmp.eq.s32.totalorder %s15, 3
    %p124 = por %p122, %p123
    %p126 = scmp.ne.s32.totalorder %s109, %s125
    %p127 = scmp.eq.s32.totalorder %s15, 0
    %p128 = por %p126, %p127
    %s129 = ssub.s32 %s16, %s42
    %s130 = ssub.s32 %s17, %s38
    %s131 = sor.u32 %s129, %s130
    %s132 = ssub.s32 %s18, %s34
    %s133 = sor.u32 %s131, %s132
    %p134 = scmp.eq.s32.totalorder %s133, 0
    %s136 = sadd.s32 %s135, 1
    %s137 = scalar_select %p134, %s135, %s136
    %p140 = pneg %p134
    %p141 = scmp.eq.s32.totalorder %s9, 3
    %p142 = por %p140, %p141
    %p143 = scmp.ne.s32.totalorder %s135, %s138
    %p144 = scmp.eq.s32.totalorder %s9, 0
    %p145 = por %p143, %p144
    %p146 = scmp.ne.s32.totalorder %s135, %s138
    %p147 = scmp.eq.s32.totalorder %s14, 3
    %p148 = por %p146, %p147
    %p149 = scmp.ne.s32.totalorder %s138, %s139
    %p150 = scmp.eq.s32.totalorder %s14, 0
    %p151 = por %p149, %p150
    %p152 = scmp.ne.s32.totalorder %s138, %s139
    %p153 = scmp.eq.s32.totalorder %s15, 3
    %p154 = por %p152, %p153
    %p156 = scmp.ne.s32.totalorder %s139, %s155
    %p157 = scmp.eq.s32.totalorder %s15, 0
    %p158 = por %p156, %p157
    %p159 = scmp.le.s32.totalorder 1, %s9
    %p160 = scmp.lt.s32.totalorder %s9, 5
    %p161 = pnand %p159, %p160
    %p162 = pneg %p161
    // Predicated region
    $region9: #{_lambda_.41} parent=5 // pred_check
      _
    $region10: #{_lambda_.41} parent=5 // pred_check_branch
      %164 = sbr.rel (%p161) target = $region12
    $region11: #{_lambda_.41} parent=5 // pred_region
      %s165 = ssub.s32 %s9, 1
      // Predicated region
      $region13: #{_lambda_.41} parent=11 // pred_check
        %p166 = pneg %p121
      $region14: #{_lambda_.41} parent=11 // pred_check_branch
        %168 = sbr.rel (%p166) target = $region16
      $region15: #{_lambda_.41} parent=11 // pred_region
        %p169 = scmp.lt.s32.totalorder %s22, 0
        %s170 = scalar_select %p169, %s22, 0
        %s171 = scalar_lea.vmem %s2, %s170
      $region16: #{_lambda_.41} parent=11 // pred_fallthru
        _
    $region12: #{_lambda_.41} parent=5 // pred_fallthru
      _
    %p172 = scmp.lt.s32.totalorder %s9, 4
    // Predicated region
    $region17: #{_lambda_.41} parent=5 // pred_check
      %p173 = pneg %p172
    $region18: #{_lambda_.41} parent=5 // pred_check_branch
      %175 = sbr.rel (%p173) target = $region20
    $region19: #{_lambda_.41} parent=5 // pred_region
      // Predicated region
      $region21: #{_lambda_.41} parent=19 // pred_check
        %p176 = pneg %p59
      $region22: #{_lambda_.41} parent=19 // pred_check_branch
        %178 = sbr.rel (%p176) target = $region24
      $region23: #{_lambda_.41} parent=19 // pred_region
        %s179 = smul.u32 4, %s17
        %s180 = smul.u32 2, %s19
        %p181 = scmp.lt.s32.totalorder %s16, 3
        %s182 = scalar_select %p181, %s16, 3
        %p183 = scmp.lt.s32.totalorder %s179, 3
        %s184 = scalar_select %p183, %s179, 3
        %p185 = scmp.lt.s32.totalorder %s180, 1
        %s186 = scalar_select %p185, %s180, 1
        %s187 = smul.addr %s184, 2
        %s188 = sadd.s32 %s186, %s187
        %s189 = smul.addr %s182, 8
        %s190 = sadd.s32 %s188, %s189
        %s191 = smul.addr %s190, 4
        %s192 = scalar_lea.vmem %s0, %s191
        %s193 = smul.u32 4, %s17
        %s194 = smul.u32 2, %s19
      $region24: #{_lambda_.41} parent=19 // pred_fallthru
        _
      // Predicated region
      $region25: #{_lambda_.41} parent=19 // pred_check
        %p195 = pneg %p89
      $region26: #{_lambda_.41} parent=19 // pred_check_branch
        %197 = sbr.rel (%p195) target = $region28
      $region27: #{_lambda_.41} parent=19 // pred_region
        %s198 = smul.u32 32, %s19
        %p199 = scmp.lt.s32.totalorder %s16, 3
        %s200 = scalar_select %p199, %s16, 3
        %p201 = scmp.lt.s32.totalorder %s198, 31
        %s202 = scalar_select %p201, %s198, 31
        %p203 = scmp.lt.s32.totalorder %s18, 0
        %s204 = scalar_select %p203, %s18, 0
        %s205 = sadd.s32 %s204, %s202
        %s206 = smul.addr %s200, 32
        %s207 = sadd.s32 %s205, %s206
        %s208 = smul.addr %s207, 4
        %s209 = scalar_lea.vmem %s1, %s208
        %s210 = smul.u32 32, %s19
      $region28: #{_lambda_.41} parent=19 // pred_fallthru
        _
    $region20: #{_lambda_.41} parent=5 // pred_fallthru
      _
    %p211 = scmp.le.s32.totalorder 1, %s9
    %p212 = scmp.lt.s32.totalorder %s9, 5
    %p213 = pnand %p211, %p212
    %p214 = pneg %p213
    // Predicated region
    $region29: #{_lambda_.41} parent=5 // pred_check
      _
    $region30: #{_lambda_.41} parent=5 // pred_check_branch
      %216 = sbr.rel (%p213) target = $region32
    $region31: #{_lambda_.41} parent=5 // pred_region
      %s217 = ssub.s32 %s9, 1
      %s218 = smul.u32 4, %s21
      %s219 = smul.u32 2, %s23
      %p220 = scmp.lt.s32.totalorder %s20, 3
      %s221 = scalar_select %p220, %s20, 3
      %p222 = scmp.lt.s32.totalorder %s218, 3
      %s223 = scalar_select %p222, %s218, 3
      %p224 = scmp.lt.s32.totalorder %s219, 1
      %s225 = scalar_select %p224, %s219, 1
      %s226 = smul.addr %s223, 2
      %s227 = sadd.s32 %s225, %s226
      %s228 = smul.addr %s221, 8
      %s229 = sadd.s32 %s227, %s228
      %s230 = smul.addr %s229, 4
      %s231 = scalar_lea.vmem %s0, %s230
      %p232 = pneg %p65
      %p233 = pneg %p62
      %s234 = smul.u32 32, %s23
      %p235 = scmp.lt.s32.totalorder %s20, 3
      %s236 = scalar_select %p235, %s20, 3
      %p237 = scmp.lt.s32.totalorder %s234, 31
      %s238 = scalar_select %p237, %s234, 31
      %p239 = scmp.lt.s32.totalorder %s22, 0
      %s240 = scalar_select %p239, %s22, 0
      %s241 = sadd.s32 %s240, %s238
      %s242 = smul.addr %s236, 32
      %s243 = sadd.s32 %s241, %s242
      %s244 = smul.addr %s243, 4
      %s245 = scalar_lea.vmem %s1, %s244
      %p246 = pneg %p95
      %p247 = pneg %p92
      %p248 = scmp.lt.s32.totalorder %s22, 0
      %s249 = scalar_select %p248, %s22, 0
      %s250 = scalar_lea.vmem %s2, %s249
      %p251 = pneg %p121
      %p252 = pneg %p118
      %p253 = pneg %p151
      %p254 = pneg %p148
      %s255 = smul.u32 4, %s21
      %p256 = scmp.lt.s32.totalorder %s20, 3
      %s257 = scalar_select %p256, %s20, 3
      %p258 = scmp.lt.s32.totalorder %s255, 3
      %s259 = scalar_select %p258, %s255, 3
      %p260 = scmp.lt.s32.totalorder %s22, 0
      %s261 = scalar_select %p260, %s22, 0
      %s262 = sadd.s32 %s261, %s259
      %s263 = smul.addr %s257, 4
      %s264 = sadd.s32 %s262, %s263
      %s265 = smul.addr %s264, 4
      %s266 = scalar_lea.vmem %s3, %s265
      %s267 = smul.u32 4, %s21
      %s268 = smul.u32 2, %s23
      %p269 = scmp.lt.s32.totalorder %s20, 3
      %s270 = scalar_select %p269, %s20, 3
      %p271 = scmp.lt.s32.totalorder %s267, 3
      %s272 = scalar_select %p271, %s267, 3
      %p273 = scmp.lt.s32.totalorder %s268, 1
      %s274 = scalar_select %p273, %s268, 1
      %s275 = smul.addr %s272, 2
      %s276 = sadd.s32 %s274, %s275
      %s277 = smul.addr %s270, 8
      %s278 = sadd.s32 %s276, %s277
      %s279 = smul.addr %s278, 4
      %s280 = scalar_lea.vmem %s0, %s279
      %s281 = smul.u32 4, %s21
      %s282 = smul.u32 2, %s23
      %s283 = smul.u32 32, %s23
      %p284 = scmp.lt.s32.totalorder %s20, 3
      %s285 = scalar_select %p284, %s20, 3
      %p286 = scmp.lt.s32.totalorder %s283, 31
      %s287 = scalar_select %p286, %s283, 31
      %p288 = scmp.lt.s32.totalorder %s22, 0
      %s289 = scalar_select %p288, %s22, 0
      %s290 = sadd.s32 %s289, %s287
      %s291 = smul.addr %s285, 32
      %s292 = sadd.s32 %s290, %s291
      %s293 = smul.addr %s292, 4
      %s294 = scalar_lea.vmem %s1, %s293
      %s295 = smul.u32 32, %s23
      %p296 = scmp.lt.s32.totalorder %s22, 0
      %s297 = scalar_select %p296, %s22, 0
      %s298 = scalar_lea.vmem %s2, %s297
      %s299 = smul.u32 4, %s21
      %p300 = scmp.lt.s32.totalorder %s20, 3
      %s301 = scalar_select %p300, %s20, 3
      %p302 = scmp.lt.s32.totalorder %s299, 3
      %s303 = scalar_select %p302, %s299, 3
      %p304 = scmp.lt.s32.totalorder %s22, 0
      %s305 = scalar_select %p304, %s22, 0
      %s306 = sadd.s32 %s305, %s303
      %s307 = smul.addr %s301, 4
      %s308 = sadd.s32 %s306, %s307
      %s309 = smul.addr %s308, 4
      %s310 = scalar_lea.vmem %s3, %s309
      %s311 = smul.u32 4, %s21
      %p313 = scmp.eq.s32.totalorder %s23, 0
      // Predicated region
      $region33: #{_lambda_.41} parent=31 // pred_check
        %p314 = pneg %p313
      $region34: #{_lambda_.41} parent=31 // pred_check_branch
        %316 = sbr.rel (%p314) target = $region36
      $region35: #{_lambda_.41} parent=31 // pred_region
        %vm317 = vcmask 130048
        %318 = vst.msk [vmem:[#allocation2] sm:$0xff] %vm317, 0.0
        %319 = vst.msk [vmem:[#allocation2 + $0x8] sm:$0xff] %vm317, 0.0
        %320 = vst.msk [vmem:[#allocation2 + $0x10] sm:$0xff] %vm317, 0.0
        %321 = vst.msk [vmem:[#allocation2 + $0x18] sm:$0xff] %vm317, 0.0
      $region36: #{_lambda_.41} parent=31 // pred_fallthru
        _
      %v322 = vld [vmem:[%s280] sm:$0xff]
      %v323 = vld [vmem:[%s280 + $0x8] sm:$0xff]
      %v324 = vld [vmem:[%s280 + $0x10] sm:$0xff]
      %v325 = vld [vmem:[%s280 + $0x18] sm:$0xff]
      %v326 = vmax.bf16 %v322, 0
      %v327 = vmax.bf16 %v323, 0
      %v328 = vmax.bf16 %v324, 0
      %v329 = vmax.bf16 %v325, 0
      %v330 = vld [vmem:[#allocation2] sm:$0xff]
      %v331 = vld [vmem:[#allocation2 + $0x8] sm:$0xff]
      %v332 = vld [vmem:[#allocation2 + $0x10] sm:$0xff]
      %v333 = vld [vmem:[#allocation2 + $0x18] sm:$0xff]
      %v334 = vld [vmem:[%s294] sm:$0xf]
      %v335 = vld [vmem:[%s294 + $0x4] sm:$0xf]
      %v336 = vld [vmem:[%s294 + $0x8] sm:$0xf]
      %v337 = vld [vmem:[%s294 + $0xc] sm:$0xf]
      %v338 = vld [vmem:[%s294 + $0x10] sm:$0xf]
      %v339 = vld [vmem:[%s294 + $0x14] sm:$0xf]
      %v340 = vld [vmem:[%s294 + $0x18] sm:$0xf]
      %v341 = vld [vmem:[%s294 + $0x1c] sm:$0xf]
      %v342 = vld [vmem:[%s294 + $0x20] sm:$0xf]
      %v343 = vld [vmem:[%s294 + $0x24] sm:$0xf]
      %v344 = vld [vmem:[%s294 + $0x28] sm:$0xf]
      %v345 = vld [vmem:[%s294 + $0x2c] sm:$0xf]
      %v346 = vld [vmem:[%s294 + $0x30] sm:$0xf]
      %v347 = vld [vmem:[%s294 + $0x34] sm:$0xf]
      %v348 = vld [vmem:[%s294 + $0x38] sm:$0xf]
      %v349 = vld [vmem:[%s294 + $0x3c] sm:$0xf]
      %v350 = vld [vmem:[%s294 + $0x40] sm:$0xf]
      %v351 = vld [vmem:[%s294 + $0x44] sm:$0xf]
      %v352 = vld [vmem:[%s294 + $0x48] sm:$0xf]
      %v353 = vld [vmem:[%s294 + $0x4c] sm:$0xf]
      %v354 = vld [vmem:[%s294 + $0x50] sm:$0xf]
      %v355 = vld [vmem:[%s294 + $0x54] sm:$0xf]
      %v356 = vld [vmem:[%s294 + $0x58] sm:$0xf]
      %v357 = vld [vmem:[%s294 + $0x5c] sm:$0xf]
      %v358 = vld [vmem:[%s294 + $0x60] sm:$0xf]
      %v359 = vld [vmem:[%s294 + $0x64] sm:$0xf]
      %v360 = vld [vmem:[%s294 + $0x68] sm:$0xf]
      %v361 = vld [vmem:[%s294 + $0x6c] sm:$0xf]
      %v362 = vld [vmem:[%s294 + $0x70] sm:$0xf]
      %v363 = vld [vmem:[%s294 + $0x74] sm:$0xf]
      %v364 = vld [vmem:[%s294 + $0x78] sm:$0xf]
      %v365 = vld [vmem:[%s294 + $0x7c] sm:$0xf]
      %v370 = vunpack.c.l.b16 %v326
      %v371 = vunpack.c.h.b16 %v326
      %v372 = vunpack.c.l.b16 %v327
      %v373 = vunpack.c.h.b16 %v327
      %v374 = vunpack.c.l.b16 %v328
      %v375 = vunpack.c.h.b16 %v328
      %v376 = vunpack.c.l.b16 %v329
      %v377 = vunpack.c.h.b16 %v329
      %v378 = vpack.c.b16 %v372, %v370
      %v379 = vpack.c.b16 %v373, %v371
      %v380 = vpack.c.b16 %v376, %v374
      %v381 = vpack.c.b16 %v377, %v375
      %v418 = vunpack.c.l.b16 %v334
      %v419 = vunpack.c.l.b16 %v335
      %v420 = vunpack.c.l.b16 %v336
      %v421 = vunpack.c.l.b16 %v337
      %v422 = vunpack.c.l.b16 %v338
      %v423 = vunpack.c.l.b16 %v339
      %v424 = vunpack.c.l.b16 %v340
      %v425 = vunpack.c.l.b16 %v341
      %v426 = vunpack.c.l.b16 %v342
      %v427 = vunpack.c.l.b16 %v343
      %v428 = vunpack.c.l.b16 %v344
      %v429 = vunpack.c.l.b16 %v345
      %v430 = vunpack.c.l.b16 %v346
      %v431 = vunpack.c.l.b16 %v347
      %v432 = vunpack.c.l.b16 %v348
      %v433 = vunpack.c.l.b16 %v349
      %v434 = vunpack.c.l.b16 %v350
      %v435 = vunpack.c.l.b16 %v351
      %v436 = vunpack.c.l.b16 %v352
      %v437 = vunpack.c.l.b16 %v353
      %v438 = vunpack.c.l.b16 %v354
      %v439 = vunpack.c.l.b16 %v355
      %v440 = vunpack.c.l.b16 %v356
      %v441 = vunpack.c.l.b16 %v357
      %v442 = vunpack.c.l.b16 %v358
      %v443 = vunpack.c.l.b16 %v359
      %v444 = vunpack.c.l.b16 %v360
      %v445 = vunpack.c.l.b16 %v361
      %v446 = vunpack.c.l.b16 %v362
      %v447 = vunpack.c.l.b16 %v363
      %v448 = vunpack.c.l.b16 %v364
      %v449 = vunpack.c.l.b16 %v365
      %v450 = vpack.c.b16 %v419, %v418
      %v451 = vpack.c.b16 %v421, %v420
      %v452 = vpack.c.b16 %v423, %v422
      %v453 = vpack.c.b16 %v425, %v424
      %v454 = vpack.c.b16 %v427, %v426
      %v455 = vpack.c.b16 %v429, %v428
      %v456 = vpack.c.b16 %v431, %v430
      %v457 = vpack.c.b16 %v433, %v432
      %v458 = vpack.c.b16 %v435, %v434
      %v459 = vpack.c.b16 %v437, %v436
      %v460 = vpack.c.b16 %v439, %v438
      %v461 = vpack.c.b16 %v441, %v440
      %v462 = vpack.c.b16 %v443, %v442
      %v463 = vpack.c.b16 %v445, %v444
      %v464 = vpack.c.b16 %v447, %v446
      %v465 = vpack.c.b16 %v449, %v448
      %482 = vmatprep.subr.bf16.mxu0 0
      %483 = vmatpush1.bf16.msra.mxu0 %v450
      %484 = vmatprep.subr.bf16.mxu0 0
      %485 = vmatpush1.bf16.msra.mxu0 %v451
      %486 = vmatprep.subr.bf16.mxu0 0
      %487 = vmatpush1.bf16.msra.mxu0 %v452
      %488 = vmatprep.subr.bf16.mxu0 0
      %489 = vmatpush1.bf16.msra.mxu0 %v453
      %490 = vmatprep.subr.bf16.mxu0 0
      %491 = vmatpush1.bf16.msra.mxu0 %v454
      %492 = vmatprep.subr.bf16.mxu0 0
      %493 = vmatpush1.bf16.msra.mxu0 %v455
      %494 = vmatprep.subr.bf16.mxu0 0
      %495 = vmatpush1.bf16.msra.mxu0 %v456
      %496 = vmatprep.subr.bf16.mxu0 0
      %497 = vmatpush1.bf16.msra.mxu0 %v457
      %498 = vmatprep.subr.bf16.mxu0 0
      %499 = vmatpush1.bf16.msra.mxu0 %v458
      %500 = vmatprep.subr.bf16.mxu0 0
      %501 = vmatpush1.bf16.msra.mxu0 %v459
      %502 = vmatprep.subr.bf16.mxu0 0
      %503 = vmatpush1.bf16.msra.mxu0 %v460
      %504 = vmatprep.subr.bf16.mxu0 0
      %505 = vmatpush1.bf16.msra.mxu0 %v461
      %506 = vmatprep.subr.bf16.mxu0 0
      %507 = vmatpush1.bf16.msra.mxu0 %v462
      %508 = vmatprep.subr.bf16.mxu0 0
      %509 = vmatpush1.bf16.msra.mxu0 %v463
      %510 = vmatprep.subr.bf16.mxu0 0
      %511 = vmatpush1.bf16.msra.mxu0 %v464
      %512 = vmatprep.subr.bf16.mxu0 0
      %513 = vmatpush1.bf16.msra.mxu0 %v465
      %514 = vmatprep.mubr.bf16.mxu0 %v379
      %515 = vmatmul.mubr.bf16.gmra.mrb[0].mxu0 %v378
      %v516 = vpop.f32.mrb[0].mxu0
      %v517 = vadd.f32 0.0, %v516
      %v518 = vpop.f32.mrb[0].mxu0
      %v519 = vpop.f32.mrb[0].mxu0
      %v520 = vadd.f32 0.0, %v519
      %v521 = vpop.f32.mrb[0].mxu0
      %522 = vmatprep.mubr.bf16.mxu0 %v381
      %523 = vmatmul.mubr.bf16.gmra.mrb[0].mxu0 %v380
      %v524 = vpop.f32.mrb[0].mxu0
      %v525 = vadd.f32 0.0, %v524
      %v526 = vpop.f32.mrb[0].mxu0
      %v527 = vpop.f32.mrb[0].mxu0
      %v528 = vadd.f32 0.0, %v527
      %v529 = vpop.f32.mrb[0].mxu0
      %530 = vdwg.mxu0
      %v531 = vadd.f32 %v330, %v517
      %v532 = vadd.f32 %v331, %v520
      %v533 = vadd.f32 %v332, %v525
      %v534 = vadd.f32 %v333, %v528
      %vm535 = vcmask 130048
      %536 = vst.msk [vmem:[#allocation2] sm:$0xff] %vm535, %v531
      %537 = vst.msk [vmem:[#allocation2 + $0x8] sm:$0xff] %vm535, %v532
      %538 = vst.msk [vmem:[#allocation2 + $0x10] sm:$0xff] %vm535, %v533
      %539 = vst.msk [vmem:[#allocation2 + $0x18] sm:$0xff] %vm535, %v534
      // Predicated region
      $region37: #{_lambda_.41} parent=31 // pred_check
        %p540 = pneg %p313
      $region38: #{_lambda_.41} parent=31 // pred_check_branch
        %542 = sbr.rel (%p540) target = $region40
      $region39: #{_lambda_.41} parent=31 // pred_region
        %v543 = vld [vmem:[#allocation2] sm:$0xff]
        %v544 = vld [vmem:[#allocation2 + $0x8] sm:$0xff]
        %v545 = vld [vmem:[#allocation2 + $0x10] sm:$0xff]
        %v546 = vld [vmem:[#allocation2 + $0x18] sm:$0xff]
        %v547 = vld [vmem:[%s298] sm:$0x1]
        %v549 = vlaneseq
        %v550 = vshrl.u32 %v549, 7
        %v551 = vsub.s32 0, %v550
        %v552 = vrot.slane %v547, %v551
        %v554 = vadd.f32 %v543, %v552
        %v555 = vadd.f32 %v544, %v552
        %v556 = vadd.f32 %v545, %v552
        %v557 = vadd.f32 %v546, %v552
        %v558 = vpack.c.bf16 %v555, %v554
        %v559 = vpack.c.bf16 %v557, %v556
        %v562 = vunpack.c.l.b16 %v558
        %v563 = vunpack.c.h.b16 %v558
        %v564 = vunpack.c.l.b16 %v559
        %v565 = vunpack.c.h.b16 %v559
        %v566 = vpack.c.b16 %v562, %v562
        %v567 = vpack.c.b16 %v563, %v563
        %v568 = vpack.c.b16 %v564, %v564
        %v569 = vpack.c.b16 %v565, %v565
        %vm574 = vcmask 125952
        %575 = vst.msk [vmem:[%s310] sm:$0xf] %vm574, %v566
        %576 = vst.msk [vmem:[%s310 + $0x4] sm:$0xf] %vm574, %v567
        %577 = vst.msk [vmem:[%s310 + $0x8] sm:$0xf] %vm574, %v568
        %578 = vst.msk [vmem:[%s310 + $0xc] sm:$0xf] %vm574, %v569
      $region40: #{_lambda_.41} parent=31 // pred_fallthru
        _
      %s579 = smul.u32 4, %s21
      %p580 = scmp.lt.s32.totalorder %s20, 3
      %s581 = scalar_select %p580, %s20, 3
      %p582 = scmp.lt.s32.totalorder %s579, 3
      %s583 = scalar_select %p582, %s579, 3
      %p584 = scmp.lt.s32.totalorder %s22, 0
      %s585 = scalar_select %p584, %s22, 0
      %s586 = sadd.s32 %s585, %s583
      %s587 = smul.addr %s581, 4
      %s588 = sadd.s32 %s586, %s587
      %s589 = smul.addr %s588, 4
      %s590 = scalar_lea.vmem %s3, %s589
      // Predicated region
      $region41: #{_lambda_.41} parent=31 // pred_check
        %p591 = pneg %p148
      $region42: #{_lambda_.41} parent=31 // pred_check_branch
        %593 = sbr.rel (%p591) target = $region44
      $region43: #{_lambda_.41} parent=31 // pred_region
        %s594 = smul.u32 4, %s21
      $region44: #{_lambda_.41} parent=31 // pred_fallthru
        _
    $region32: #{_lambda_.41} parent=5 // pred_fallthru
      _
    %p595 = scmp.le.s32.totalorder 2, %s9
    // Predicated region
    $region45: #{_lambda_.41} parent=5 // pred_check
      %p596 = pneg %p595
    $region46: #{_lambda_.41} parent=5 // pred_check_branch
      %598 = sbr.rel (%p596) target = $region48
    $region47: #{_lambda_.41} parent=5 // pred_region
      %s599 = ssub.s32 %s9, 2
      // Predicated region
      $region49: #{_lambda_.41} parent=47 // pred_check
        %p600 = pneg %p154
      $region50: #{_lambda_.41} parent=47 // pred_check_branch
        %602 = sbr.rel (%p600) target = $region52
      $region51: #{_lambda_.41} parent=47 // pred_region
        %s603 = smul.u32 4, %s25
        %p604 = scmp.lt.s32.totalorder %s24, 3
        %s605 = scalar_select %p604, %s24, 3
        %p606 = scmp.lt.s32.totalorder %s603, 3
        %s607 = scalar_select %p606, %s603, 3
        %p608 = scmp.lt.s32.totalorder %s26, 0
        %s609 = scalar_select %p608, %s26, 0
        %s610 = sadd.s32 %s609, %s607
        %s611 = smul.addr %s605, 4
        %s612 = sadd.s32 %s610, %s611
        %s613 = smul.addr %s612, 4
        %s614 = scalar_lea.vmem %s3, %s613
      $region52: #{_lambda_.41} parent=47 // pred_fallthru
        _
    $region48: #{_lambda_.41} parent=5 // pred_fallthru
      _
  $region6: #{_lambda_.41} parent=0 // loop_footer
    %s13 = sadd.s32 1, %s9
  $region7: #{_lambda_.41} parent=0 // loop_footer_branch
    %8 = sbr.rel target = $region3
  $region8: #{_lambda_.41} parent=0 // loop_exit
    _

// kernel: _lambda_.44
$region0: #{_lambda_.44}
  #allocation0 [shape = 'u32[]', space=smem, size = 0x4, offset = 0x4, fixed_abs, tag = 'smem constant byte address 0x4 - core index']
  #allocation1 [shape = 'u32[144,128]{1,0:T(1,128)}', space=vmem, size = 0x12000, scoped, tag = 'internal scratch']
  #allocation2 [shape = 'f32[128,8]{1,0:T(8,128)}', space=vmem, size = 0x10000, scoped, tag = 'scratch operand']
  %s0 = inlined_call_operand.vmem [shape: bf16[4,128,128], index: 0, kind: input, shape index: {}]
  %s1 = inlined_call_operand.vmem [shape: bf16[4,128,8], index: 1, kind: input, shape index: {}]
  %s2 = inlined_call_operand.vmem [shape: f32[1,1,8], index: 2, kind: input, shape index: {}]
  %s3 = inlined_call_operand.vmem [shape: bf16[4,128,8], index: 3, kind: output, shape index: {}]
  %s4 = sld [smem:[#allocation0]]
  $region53: #{_lambda_.44} parent=0
    _
  %s6 = ssub.s32 1, %s4
  %s7 = scalar_select 0, %s6, %s4
  loop: start=0, step=1, limit=6
  $region2: #{_lambda_.44} parent=0 // loop_pre_header
    _
  $region3: #{_lambda_.44} parent=0 // loop_header
    %s9 = sphi 0, %s13
    %p10 = scmp.ge.s32.totalorder %s9, 6
    %s16 = sphi 0, %s42
    %s17 = sphi 0, %s38
    %s18 = sphi 0, %s34
    %s19 = sphi 0, %s30
    %s20 = sphi 0, %s16
    %s21 = sphi 0, %s17
    %s22 = sphi 0, %s18
    %s23 = sphi 0, %s19
    %s24 = sphi 0, %s20
    %s25 = sphi 0, %s21
    %s26 = sphi 0, %s22
    %s27 = sphi 0, %s23
    %s49 = sphi 0, %s51
    %s52 = sphi 0, %s49
    %s53 = sphi 0, %s52
    %s69 = sphi 0, %s53
    %s79 = sphi 0, %s81
    %s82 = sphi 0, %s79
    %s83 = sphi 0, %s82
    %s99 = sphi 0, %s83
    %s105 = sphi 0, %s107
    %s108 = sphi 0, %s105
    %s109 = sphi 0, %s108
    %s125 = sphi 0, %s109
    %s135 = sphi 0, %s137
    %s138 = sphi 0, %s135
    %s139 = sphi 0, %s138
    %s155 = sphi 0, %s139
  $region4: #{_lambda_.44} parent=0 // loop_header_branch
    %12 = sbr.rel (%p10) target = $region8
  $region5: #{_lambda_.44} parent=0 // loop_body
    %s14 = ssub.s32 %s9, 1
    %s15 = ssub.s32 %s9, 2
    %s28 = sadd.s32 1, %s19
    %p29 = scmp.ge.s32.totalorder %s28, 1
    %s30 = scalar_select %p29, 0, %s28
    %s31 = sadd.s32 1, %s18
    %s32 = scalar_select %p29, %s31, %s18
    %p33 = scmp.ge.s32.totalorder %s32, 1
    %s34 = scalar_select %p33, 0, %s32
    %s35 = sadd.s32 1, %s17
    %s36 = scalar_select %p33, %s35, %s17
    %p37 = scmp.ge.s32.totalorder %s36, 1
    %s38 = scalar_select %p37, 0, %s36
    %s39 = sadd.s32 1, %s16
    %s40 = scalar_select %p37, %s39, %s16
    %p41 = scmp.ge.s32.totalorder %s40, 4
    %s42 = scalar_select %p41, 0, %s40
    %s43 = ssub.s32 %s16, %s42
    %s44 = ssub.s32 %s17, %s38
    %s45 = sor.u32 %s43, %s44
    %s46 = ssub.s32 %s19, %s30
    %s47 = sor.u32 %s45, %s46
    %p48 = scmp.eq.s32.totalorder %s47, 0
    %s50 = sadd.s32 %s49, 1
    %s51 = scalar_select %p48, %s49, %s50
    %p54 = pneg %p48
    %p55 = scmp.eq.s32.totalorder %s9, 3
    %p56 = por %p54, %p55
    %p57 = scmp.ne.s32.totalorder %s49, %s52
    %p58 = scmp.eq.s32.totalorder %s9, 0
    %p59 = por %p57, %p58
    %p60 = scmp.ne.s32.totalorder %s49, %s52
    %p61 = scmp.eq.s32.totalorder %s14, 3
    %p62 = por %p60, %p61
    %p63 = scmp.ne.s32.totalorder %s52, %s53
    %p64 = scmp.eq.s32.totalorder %s14, 0
    %p65 = por %p63, %p64
    %p66 = scmp.ne.s32.totalorder %s52, %s53
    %p67 = scmp.eq.s32.totalorder %s15, 3
    %p68 = por %p66, %p67
    %p70 = scmp.ne.s32.totalorder %s53, %s69
    %p71 = scmp.eq.s32.totalorder %s15, 0
    %p72 = por %p70, %p71
    %s73 = ssub.s32 %s16, %s42
    %s74 = ssub.s32 %s19, %s30
    %s75 = sor.u32 %s73, %s74
    %s76 = ssub.s32 %s18, %s34
    %s77 = sor.u32 %s75, %s76
    %p78 = scmp.eq.s32.totalorder %s77, 0
    %s80 = sadd.s32 %s79, 1
    %s81 = scalar_select %p78, %s79, %s80
    %p84 = pneg %p78
    %p85 = scmp.eq.s32.totalorder %s9, 3
    %p86 = por %p84, %p85
    %p87 = scmp.ne.s32.totalorder %s79, %s82
    %p88 = scmp.eq.s32.totalorder %s9, 0
    %p89 = por %p87, %p88
    %p90 = scmp.ne.s32.totalorder %s79, %s82
    %p91 = scmp.eq.s32.totalorder %s14, 3
    %p92 = por %p90, %p91
    %p93 = scmp.ne.s32.totalorder %s82, %s83
    %p94 = scmp.eq.s32.totalorder %s14, 0
    %p95 = por %p93, %p94
    %p96 = scmp.ne.s32.totalorder %s82, %s83
    %p97 = scmp.eq.s32.totalorder %s15, 3
    %p98 = por %p96, %p97
    %p100 = scmp.ne.s32.totalorder %s83, %s99
    %p101 = scmp.eq.s32.totalorder %s15, 0
    %p102 = por %p100, %p101
    %s103 = ssub.s32 %s18, %s34
    %p104 = scmp.eq.s32.totalorder %s103, 0
    %s106 = sadd.s32 %s105, 1
    %s107 = scalar_select %p104, %s105, %s106
    %p110 = pneg %p104
    %p111 = scmp.eq.s32.totalorder %s9, 3
    %p112 = por %p110, %p111
    %p113 = scmp.ne.s32.totalorder %s105, %s108
    %p114 = scmp.eq.s32.totalorder %s9, 0
    %p115 = por %p113, %p114
    %p116 = scmp.ne.s32.totalorder %s105, %s108
    %p117 = scmp.eq.s32.totalorder %s14, 3
    %p118 = por %p116, %p117
    %p119 = scmp.ne.s32.totalorder %s108, %s109
    %p120 = scmp.eq.s32.totalorder %s14, 0
    %p121 = por %p119, %p120
    %p122 = scmp.ne.s32.totalorder %s108, %s109
    %p123 = scmp.eq.s32.totalorder %s15, 3
    %p124 = por %p122, %p123
    %p126 = scmp.ne.s32.totalorder %s109, %s125
    %p127 = scmp.eq.s32.totalorder %s15, 0
    %p128 = por %p126, %p127
    %s129 = ssub.s32 %s16, %s42
    %s130 = ssub.s32 %s17, %s38
    %s131 = sor.u32 %s129, %s130
    %s132 = ssub.s32 %s18, %s34
    %s133 = sor.u32 %s131, %s132
    %p134 = scmp.eq.s32.totalorder %s133, 0
    %s136 = sadd.s32 %s135, 1
    %s137 = scalar_select %p134, %s135, %s136
    %p140 = pneg %p134
    %p141 = scmp.eq.s32.totalorder %s9, 3
    %p142 = por %p140, %p141
    %p143 = scmp.ne.s32.totalorder %s135, %s138
    %p144 = scmp.eq.s32.totalorder %s9, 0
    %p145 = por %p143, %p144
    %p146 = scmp.ne.s32.totalorder %s135, %s138
    %p147 = scmp.eq.s32.totalorder %s14, 3
    %p148 = por %p146, %p147
    %p149 = scmp.ne.s32.totalorder %s138, %s139
    %p150 = scmp.eq.s32.totalorder %s14, 0
    %p151 = por %p149, %p150
    %p152 = scmp.ne.s32.totalorder %s138, %s139
    %p153 = scmp.eq.s32.totalorder %s15, 3
    %p154 = por %p152, %p153
    %p156 = scmp.ne.s32.totalorder %s139, %s155
    %p157 = scmp.eq.s32.totalorder %s15, 0
    %p158 = por %p156, %p157
    %p159 = scmp.le.s32.totalorder 1, %s9
    %p160 = scmp.lt.s32.totalorder %s9, 5
    %p161 = pnand %p159, %p160
    %p162 = pneg %p161
    // Predicated region
    $region9: #{_lambda_.44} parent=5 // pred_check
      _
    $region10: #{_lambda_.44} parent=5 // pred_check_branch
      %164 = sbr.rel (%p161) target = $region12
    $region11: #{_lambda_.44} parent=5 // pred_region
      %s165 = ssub.s32 %s9, 1
      // Predicated region
      $region13: #{_lambda_.44} parent=11 // pred_check
        %p166 = pneg %p121
      $region14: #{_lambda_.44} parent=11 // pred_check_branch
        %168 = sbr.rel (%p166) target = $region16
      $region15: #{_lambda_.44} parent=11 // pred_region
        %p169 = scmp.lt.s32.totalorder %s22, 0
        %s170 = scalar_select %p169, %s22, 0
        %s171 = scalar_lea.vmem %s2, %s170
      $region16: #{_lambda_.44} parent=11 // pred_fallthru
        _
    $region12: #{_lambda_.44} parent=5 // pred_fallthru
      _
    %p172 = scmp.lt.s32.totalorder %s9, 4
    // Predicated region
    $region17: #{_lambda_.44} parent=5 // pred_check
      %p173 = pneg %p172
    $region18: #{_lambda_.44} parent=5 // pred_check_branch
      %175 = sbr.rel (%p173) target = $region20
    $region19: #{_lambda_.44} parent=5 // pred_region
      // Predicated region
      $region21: #{_lambda_.44} parent=19 // pred_check
        %p176 = pneg %p59
      $region22: #{_lambda_.44} parent=19 // pred_check_branch
        %178 = sbr.rel (%p176) target = $region24
      $region23: #{_lambda_.44} parent=19 // pred_region
        %s179 = smul.u32 16, %s17
        %p180 = scmp.lt.s32.totalorder %s16, 3
        %s181 = scalar_select %p180, %s16, 3
        %p182 = scmp.lt.s32.totalorder %s179, 15
        %s183 = scalar_select %p182, %s179, 15
        %p184 = scmp.lt.s32.totalorder %s19, 0
        %s185 = scalar_select %p184, %s19, 0
        %s186 = sadd.s32 %s185, %s183
        %s187 = smul.addr %s181, 16
        %s188 = sadd.s32 %s186, %s187
        %s189 = smul.addr %s188, 4
        %s190 = scalar_lea.vmem %s0, %s189
        %s191 = smul.u32 16, %s17
      $region24: #{_lambda_.44} parent=19 // pred_fallthru
        _
      // Predicated region
      $region25: #{_lambda_.44} parent=19 // pred_check
        %p192 = pneg %p89
      $region26: #{_lambda_.44} parent=19 // pred_check_branch
        %194 = sbr.rel (%p192) target = $region28
      $region27: #{_lambda_.44} parent=19 // pred_region
        %s195 = smul.u32 16, %s19
        %p196 = scmp.lt.s32.totalorder %s16, 3
        %s197 = scalar_select %p196, %s16, 3
        %p198 = scmp.lt.s32.totalorder %s195, 15
        %s199 = scalar_select %p198, %s195, 15
        %p200 = scmp.lt.s32.totalorder %s18, 0
        %s201 = scalar_select %p200, %s18, 0
        %s202 = sadd.s32 %s201, %s199
        %s203 = smul.addr %s197, 16
        %s204 = sadd.s32 %s202, %s203
        %s205 = smul.addr %s204, 4
        %s206 = scalar_lea.vmem %s1, %s205
        %s207 = smul.u32 16, %s19
      $region28: #{_lambda_.44} parent=19 // pred_fallthru
        _
    $region20: #{_lambda_.44} parent=5 // pred_fallthru
      _
    %p208 = scmp.le.s32.totalorder 1, %s9
    %p209 = scmp.lt.s32.totalorder %s9, 5
    %p210 = pnand %p208, %p209
    %p211 = pneg %p210
    // Predicated region
    $region29: #{_lambda_.44} parent=5 // pred_check
      _
    $region30: #{_lambda_.44} parent=5 // pred_check_branch
      %213 = sbr.rel (%p210) target = $region32
    $region31: #{_lambda_.44} parent=5 // pred_region
      %s214 = ssub.s32 %s9, 1
      %s215 = smul.u32 16, %s21
      %p216 = scmp.lt.s32.totalorder %s20, 3
      %s217 = scalar_select %p216, %s20, 3
      %p218 = scmp.lt.s32.totalorder %s215, 15
      %s219 = scalar_select %p218, %s215, 15
      %p220 = scmp.lt.s32.totalorder %s23, 0
      %s221 = scalar_select %p220, %s23, 0
      %s222 = sadd.s32 %s221, %s219
      %s223 = smul.addr %s217, 16
      %s224 = sadd.s32 %s222, %s223
      %s225 = smul.addr %s224, 4
      %s226 = scalar_lea.vmem %s0, %s225
      %p227 = pneg %p65
      %p228 = pneg %p62
      %s229 = smul.u32 16, %s23
      %p230 = scmp.lt.s32.totalorder %s20, 3
      %s231 = scalar_select %p230, %s20, 3
      %p232 = scmp.lt.s32.totalorder %s229, 15
      %s233 = scalar_select %p232, %s229, 15
      %p234 = scmp.lt.s32.totalorder %s22, 0
      %s235 = scalar_select %p234, %s22, 0
      %s236 = sadd.s32 %s235, %s233
      %s237 = smul.addr %s231, 16
      %s238 = sadd.s32 %s236, %s237
      %s239 = smul.addr %s238, 4
      %s240 = scalar_lea.vmem %s1, %s239
      %p241 = pneg %p95
      %p242 = pneg %p92
      %p243 = scmp.lt.s32.totalorder %s22, 0
      %s244 = scalar_select %p243, %s22, 0
      %s245 = scalar_lea.vmem %s2, %s244
      %p246 = pneg %p121
      %p247 = pneg %p118
      %p248 = pneg %p151
      %p249 = pneg %p148
      %s250 = smul.u32 16, %s21
      %p251 = scmp.lt.s32.totalorder %s20, 3
      %s252 = scalar_select %p251, %s20, 3
      %p253 = scmp.lt.s32.totalorder %s250, 15
      %s254 = scalar_select %p253, %s250, 15
      %p255 = scmp.lt.s32.totalorder %s22, 0
      %s256 = scalar_select %p255, %s22, 0
      %s257 = sadd.s32 %s256, %s254
      %s258 = smul.addr %s252, 16
      %s259 = sadd.s32 %s257, %s258
      %s260 = smul.addr %s259, 4
      %s261 = scalar_lea.vmem %s3, %s260
      %s262 = smul.u32 16, %s21
      %p263 = scmp.lt.s32.totalorder %s20, 3
      %s264 = scalar_select %p263, %s20, 3
      %p265 = scmp.lt.s32.totalorder %s262, 15
      %s266 = scalar_select %p265, %s262, 15
      %p267 = scmp.lt.s32.totalorder %s23, 0
      %s268 = scalar_select %p267, %s23, 0
      %s269 = sadd.s32 %s268, %s266
      %s270 = smul.addr %s264, 16
      %s271 = sadd.s32 %s269, %s270
      %s272 = smul.addr %s271, 4
      %s273 = scalar_lea.vmem %s0, %s272
      %s274 = smul.u32 16, %s21
      %s275 = smul.u32 16, %s23
      %p276 = scmp.lt.s32.totalorder %s20, 3
      %s277 = scalar_select %p276, %s20, 3
      %p278 = scmp.lt.s32.totalorder %s275, 15
      %s279 = scalar_select %p278, %s275, 15
      %p280 = scmp.lt.s32.totalorder %s22, 0
      %s281 = scalar_select %p280, %s22, 0
      %s282 = sadd.s32 %s281, %s279
      %s283 = smul.addr %s277, 16
      %s284 = sadd.s32 %s282, %s283
      %s285 = smul.addr %s284, 4
      %s286 = scalar_lea.vmem %s1, %s285
      %s287 = smul.u32 16, %s23
      %p288 = scmp.lt.s32.totalorder %s22, 0
      %s289 = scalar_select %p288, %s22, 0
      %s290 = scalar_lea.vmem %s2, %s289
      %s291 = smul.u32 16, %s21
      %p292 = scmp.lt.s32.totalorder %s20, 3
      %s293 = scalar_select %p292, %s20, 3
      %p294 = scmp.lt.s32.totalorder %s291, 15
      %s295 = scalar_select %p294, %s291, 15
      %p296 = scmp.lt.s32.totalorder %s22, 0
      %s297 = scalar_select %p296, %s22, 0
      %s298 = sadd.s32 %s297, %s295
      %s299 = smul.addr %s293, 16
      %s300 = sadd.s32 %s298, %s299
      %s301 = smul.addr %s300, 4
      %s302 = scalar_lea.vmem %s3, %s301
      %s303 = smul.u32 16, %s21
      %p305 = scmp.eq.s32.totalorder %s23, 0
      // Predicated region
      $region33: #{_lambda_.44} parent=31 // pred_check
        %p306 = pneg %p305
      $region34: #{_lambda_.44} parent=31 // pred_check_branch
        %308 = sbr.rel (%p306) target = $region36
      $region35: #{_lambda_.44} parent=31 // pred_region
        %vm309 = vcmask 64512
        %310 = vst.msk [vmem:[#allocation2] sm:$0xff] %vm309, 0.0
        %311 = vst.msk [vmem:[#allocation2 + $0x8] sm:$0xff] %vm309, 0.0
        %312 = vst.msk [vmem:[#allocation2 + $0x10] sm:$0xff] %vm309, 0.0
        %313 = vst.msk [vmem:[#allocation2 + $0x18] sm:$0xff] %vm309, 0.0
        %314 = vst.msk [vmem:[#allocation2 + $0x20] sm:$0xff] %vm309, 0.0
        %315 = vst.msk [vmem:[#allocation2 + $0x28] sm:$0xff] %vm309, 0.0
        %316 = vst.msk [vmem:[#allocation2 + $0x30] sm:$0xff] %vm309, 0.0
        %317 = vst.msk [vmem:[#allocation2 + $0x38] sm:$0xff] %vm309, 0.0
        %318 = vst.msk [vmem:[#allocation2 + $0x40] sm:$0xff] %vm309, 0.0
        %319 = vst.msk [vmem:[#allocation2 + $0x48] sm:$0xff] %vm309, 0.0
        %320 = vst.msk [vmem:[#allocation2 + $0x50] sm:$0xff] %vm309, 0.0
        %321 = vst.msk [vmem:[#allocation2 + $0x58] sm:$0xff] %vm309, 0.0
        %322 = vst.msk [vmem:[#allocation2 + $0x60] sm:$0xff] %vm309, 0.0
        %323 = vst.msk [vmem:[#allocation2 + $0x68] sm:$0xff] %vm309, 0.0
        %324 = vst.msk [vmem:[#allocation2 + $0x70] sm:$0xff] %vm309, 0.0
        %325 = vst.msk [vmem:[#allocation2 + $0x78] sm:$0xff] %vm309, 0.0
      $region36: #{_lambda_.44} parent=31 // pred_fallthru
        _
      %v326 = vld [vmem:[%s273] sm:$0xf]
      %v327 = vld [vmem:[%s273 + $0x4] sm:$0xf]
      %v328 = vld [vmem:[%s273 + $0x8] sm:$0xf]
      %v329 = vld [vmem:[%s273 + $0xc] sm:$0xf]
      %v330 = vld [vmem:[%s273 + $0x10] sm:$0xf]
      %v331 = vld [vmem:[%s273 + $0x14] sm:$0xf]
      %v332 = vld [vmem:[%s273 + $0x18] sm:$0xf]
      %v333 = vld [vmem:[%s273 + $0x1c] sm:$0xf]
      %v334 = vld [vmem:[%s273 + $0x20] sm:$0xf]
      %v335 = vld [vmem:[%s273 + $0x24] sm:$0xf]
      %v336 = vld [vmem:[%s273 + $0x28] sm:$0xf]
      %v337 = vld [vmem:[%s273 + $0x2c] sm:$0xf]
      %v338 = vld [vmem:[%s273 + $0x30] sm:$0xf]
      %v339 = vld [vmem:[%s273 + $0x34] sm:$0xf]
      %v340 = vld [vmem:[%s273 + $0x38] sm:$0xf]
      %v341 = vld [vmem:[%s273 + $0x3c] sm:$0xf]
      %v342 = vmax.bf16 %v326, 0
      %v343 = vmax.bf16 %v327, 0
      %v344 = vmax.bf16 %v328, 0
      %v345 = vmax.bf16 %v329, 0
      %v346 = vmax.bf16 %v330, 0
      %v347 = vmax.bf16 %v331, 0
      %v348 = vmax.bf16 %v332, 0
      %v349 = vmax.bf16 %v333, 0
      %v350 = vmax.bf16 %v334, 0
      %v351 = vmax.bf16 %v335, 0
      %v352 = vmax.bf16 %v336, 0
      %v353 = vmax.bf16 %v337, 0
      %v354 = vmax.bf16 %v338, 0
      %v355 = vmax.bf16 %v339, 0
      %v356 = vmax.bf16 %v340, 0
      %v357 = vmax.bf16 %v341, 0
      %v358 = vld [vmem:[#allocation2] sm:$0xff]
      %v359 = vld [vmem:[#allocation2 + $0x8] sm:$0xff]
      %v360 = vld [vmem:[#allocation2 + $0x10] sm:$0xff]
      %v361 = vld [vmem:[#allocation2 + $0x18] sm:$0xff]
      %v362 = vld [vmem:[#allocation2 + $0x20] sm:$0xff]
      %v363 = vld [vmem:[#allocation2 + $0x28] sm:$0xff]
      %v364 = vld [vmem:[#allocation2 + $0x30] sm:$0xff]
      %v365 = vld [vmem:[#allocation2 + $0x38] sm:$0xff]
      %v366 = vld [vmem:[#allocation2 + $0x40] sm:$0xff]
      %v367 = vld [vmem:[#allocation2 + $0x48] sm:$0xff]
      %v368 = vld [vmem:[#allocation2 + $0x50] sm:$0xff]
      %v369 = vld [vmem:[#allocation2 + $0x58] sm:$0xff]
      %v370 = vld [vmem:[#allocation2 + $0x60] sm:$0xff]
      %v371 = vld [vmem:[#allocation2 + $0x68] sm:$0xff]
      %v372 = vld [vmem:[#allocation2 + $0x70] sm:$0xff]
      %v373 = vld [vmem:[#allocation2 + $0x78] sm:$0xff]
      %v374 = vld [vmem:[%s286] sm:$0xf]
      %v375 = vld [vmem:[%s286 + $0x4] sm:$0xf]
      %v376 = vld [vmem:[%s286 + $0x8] sm:$0xf]
      %v377 = vld [vmem:[%s286 + $0xc] sm:$0xf]
      %v378 = vld [vmem:[%s286 + $0x10] sm:$0xf]
      %v379 = vld [vmem:[%s286 + $0x14] sm:$0xf]
      %v380 = vld [vmem:[%s286 + $0x18] sm:$0xf]
      %v381 = vld [vmem:[%s286 + $0x1c] sm:$0xf]
      %v382 = vld [vmem:[%s286 + $0x20] sm:$0xf]
      %v383 = vld [vmem:[%s286 + $0x24] sm:$0xf]
      %v384 = vld [vmem:[%s286 + $0x28] sm:$0xf]
      %v385 = vld [vmem:[%s286 + $0x2c] sm:$0xf]
      %v386 = vld [vmem:[%s286 + $0x30] sm:$0xf]
      %v387 = vld [vmem:[%s286 + $0x34] sm:$0xf]
      %v388 = vld [vmem:[%s286 + $0x38] sm:$0xf]
      %v389 = vld [vmem:[%s286 + $0x3c] sm:$0xf]
      %v406 = vunpack.c.l.b16 %v342
      %v407 = vunpack.c.l.b16 %v343
      %v408 = vunpack.c.l.b16 %v344
      %v409 = vunpack.c.l.b16 %v345
      %v410 = vunpack.c.l.b16 %v346
      %v411 = vunpack.c.l.b16 %v347
      %v412 = vunpack.c.l.b16 %v348
      %v413 = vunpack.c.l.b16 %v349
      %v414 = vunpack.c.l.b16 %v350
      %v415 = vunpack.c.l.b16 %v351
      %v416 = vunpack.c.l.b16 %v352
      %v417 = vunpack.c.l.b16 %v353
      %v418 = vunpack.c.l.b16 %v354
      %v419 = vunpack.c.l.b16 %v355
      %v420 = vunpack.c.l.b16 %v356
      %v421 = vunpack.c.l.b16 %v357
      %v422 = vpack.c.b16 %v407, %v406
      %v423 = vpack.c.b16 %v409, %v408
      %v424 = vpack.c.b16 %v411, %v410
      %v425 = vpack.c.b16 %v413, %v412
      %v426 = vpack.c.b16 %v415, %v414
      %v427 = vpack.c.b16 %v417, %v416
      %v428 = vpack.c.b16 %v419, %v418
      %v429 = vpack.c.b16 %v421, %v420
      %v454 = vunpack.c.l.b16 %v374
      %v455 = vunpack.c.l.b16 %v375
      %v456 = vunpack.c.l.b16 %v376
      %v457 = vunpack.c.l.b16 %v377
      %v458 = vunpack.c.l.b16 %v378
      %v459 = vunpack.c.l.b16 %v379
      %v460 = vunpack.c.l.b16 %v380
      %v461 = vunpack.c.l.b16 %v381
      %v462 = vunpack.c.l.b16 %v382
      %v463 = vunpack.c.l.b16 %v383
      %v464 = vunpack.c.l.b16 %v384
      %v465 = vunpack.c.l.b16 %v385
      %v466 = vunpack.c.l.b16 %v386
      %v467 = vunpack.c.l.b16 %v387
      %v468 = vunpack.c.l.b16 %v388
      %v469 = vunpack.c.l.b16 %v389
      %v470 = vpack.c.b16 %v455, %v454
      %v471 = vpack.c.b16 %v457, %v456
      %v472 = vpack.c.b16 %v459, %v458
      %v473 = vpack.c.b16 %v461, %v460
      %v474 = vpack.c.b16 %v463, %v462
      %v475 = vpack.c.b16 %v465, %v464
      %v476 = vpack.c.b16 %v467, %v466
      %v477 = vpack.c.b16 %v469, %v468
      %486 = vmatprep.subr.bf16.mxu0 0
      %487 = vmatpush1.bf16.msra.mxu0 %v470
      %488 = vmatprep.subr.bf16.mxu0 0
      %489 = vmatpush1.bf16.msra.mxu0 %v471
      %490 = vmatprep.subr.bf16.mxu0 0
      %491 = vmatpush1.bf16.msra.mxu0 %v472
      %492 = vmatprep.subr.bf16.mxu0 0
      %493 = vmatpush1.bf16.msra.mxu0 %v473
      %494 = vmatprep.subr.bf16.mxu0 0
      %495 = vmatpush1.bf16.msra.mxu0 %v474
      %496 = vmatprep.subr.bf16.mxu0 0
      %497 = vmatpush1.bf16.msra.mxu0 %v475
      %498 = vmatprep.subr.bf16.mxu0 0
      %499 = vmatpush1.bf16.msra.mxu0 %v476
      %500 = vmatprep.subr.bf16.mxu0 0
      %501 = vmatpush1.bf16.msra.mxu0 %v477
      %502 = vmatprep.subr.bf16.mxu0 0
      %503 = vmatpush1.bf16.msra.mxu0 0
      %504 = vmatprep.subr.bf16.mxu0 0
      %505 = vmatpush1.bf16.msra.mxu0 0
      %506 = vmatprep.subr.bf16.mxu0 0
      %507 = vmatpush1.bf16.msra.mxu0 0
      %508 = vmatprep.subr.bf16.mxu0 0
      %509 = vmatpush1.bf16.msra.mxu0 0
      %510 = vmatprep.subr.bf16.mxu0 0
      %511 = vmatpush1.bf16.msra.mxu0 0
      %512 = vmatprep.subr.bf16.mxu0 0
      %513 = vmatpush1.bf16.msra.mxu0 0
      %514 = vmatprep.subr.bf16.mxu0 0
      %515 = vmatpush1.bf16.msra.mxu0 0
      %516 = vmatprep.subr.bf16.mxu0 0
      %517 = vmatpush1.bf16.msra.mxu0 0
      %518 = vmatprep.mubr.bf16.mxu0 0
      %519 = vmatmul.mubr.bf16.gmra.mrb[0].mxu0 %v422
      %v520 = vpop.f32.mrb[0].mxu0
      %v521 = vadd.f32 0.0, %v520
      %v522 = vpop.f32.mrb[0].mxu0
      %v523 = vpop.f32.mrb[0].mxu0
      %v524 = vadd.f32 0.0, %v523
      %v525 = vpop.f32.mrb[0].mxu0
      %526 = vmatprep.mubr.bf16.mxu0 0
      %527 = vmatmul.mubr.bf16.gmra.mrb[0].mxu0 %v423
      %v528 = vpop.f32.mrb[0].mxu0
      %v529 = vadd.f32 0.0, %v528
      %v530 = vpop.f32.mrb[0].mxu0
      %v531 = vpop.f32.mrb[0].mxu0
      %v532 = vadd.f32 0.0, %v531
      %v533 = vpop.f32.mrb[0].mxu0
      %534 = vmatprep.mubr.bf16.mxu0 0
      %535 = vmatmul.mubr.bf16.gmra.mrb[0].mxu0 %v424
      %v536 = vpop.f32.mrb[0].mxu0
      %v537 = vadd.f32 0.0, %v536
      %v538 = vpop.f32.mrb[0].mxu0
      %v539 = vpop.f32.mrb[0].mxu0
      %v540 = vadd.f32 0.0, %v539
      %v541 = vpop.f32.mrb[0].mxu0
      %542 = vmatprep.mubr.bf16.mxu0 0
      %543 = vmatmul.mubr.bf16.gmra.mrb[0].mxu0 %v425
      %v544 = vpop.f32.mrb[0].mxu0
      %v545 = vadd.f32 0.0, %v544
      %v546 = vpop.f32.mrb[0].mxu0
      %v547 = vpop.f32.mrb[0].mxu0
      %v548 = vadd.f32 0.0, %v547
      %v549 = vpop.f32.mrb[0].mxu0
      %550 = vmatprep.mubr.bf16.mxu0 0
      %551 = vmatmul.mubr.bf16.gmra.mrb[0].mxu0 %v426
      %v552 = vpop.f32.mrb[0].mxu0
      %v553 = vadd.f32 0.0, %v552
      %v554 = vpop.f32.mrb[0].mxu0
      %v555 = vpop.f32.mrb[0].mxu0
      %v556 = vadd.f32 0.0, %v555
      %v557 = vpop.f32.mrb[0].mxu0
      %558 = vmatprep.mubr.bf16.mxu0 0
      %559 = vmatmul.mubr.bf16.gmra.mrb[0].mxu0 %v427
      %v560 = vpop.f32.mrb[0].mxu0
      %v561 = vadd.f32 0.0, %v560
      %v562 = vpop.f32.mrb[0].mxu0
      %v563 = vpop.f32.mrb[0].mxu0
      %v564 = vadd.f32 0.0, %v563
      %v565 = vpop.f32.mrb[0].mxu0
      %566 = vmatprep.mubr.bf16.mxu0 0
      %567 = vmatmul.mubr.bf16.gmra.mrb[0].mxu0 %v428
      %v568 = vpop.f32.mrb[0].mxu0
      %v569 = vadd.f32 0.0, %v568
      %v570 = vpop.f32.mrb[0].mxu0
      %v571 = vpop.f32.mrb[0].mxu0
      %v572 = vadd.f32 0.0, %v571
      %v573 = vpop.f32.mrb[0].mxu0
      %574 = vmatprep.mubr.bf16.mxu0 0
      %575 = vmatmul.mubr.bf16.gmra.mrb[0].mxu0 %v429
      %v576 = vpop.f32.mrb[0].mxu0
      %v577 = vadd.f32 0.0, %v576
      %v578 = vpop.f32.mrb[0].mxu0
      %v579 = vpop.f32.mrb[0].mxu0
      %v580 = vadd.f32 0.0, %v579
      %v581 = vpop.f32.mrb[0].mxu0
      %582 = vdwg.mxu0
      %v583 = vadd.f32 %v358, %v521
      %v584 = vadd.f32 %v359, %v524
      %v585 = vadd.f32 %v360, %v529
      %v586 = vadd.f32 %v361, %v532
      %v587 = vadd.f32 %v362, %v537
      %v588 = vadd.f32 %v363, %v540
      %v589 = vadd.f32 %v364, %v545
      %v590 = vadd.f32 %v365, %v548
      %v591 = vadd.f32 %v366, %v553
      %v592 = vadd.f32 %v367, %v556
      %v593 = vadd.f32 %v368, %v561
      %v594 = vadd.f32 %v369, %v564
      %v595 = vadd.f32 %v370, %v569
      %v596 = vadd.f32 %v371, %v572
      %v597 = vadd.f32 %v372, %v577
      %v598 = vadd.f32 %v373, %v580
      %vm599 = vcmask 64512
      %600 = vst.msk [vmem:[#allocation2] sm:$0xff] %vm599, %v583
      %601 = vst.msk [vmem:[#allocation2 + $0x8] sm:$0xff] %vm599, %v584
      %602 = vst.msk [vmem:[#allocation2 + $0x10] sm:$0xff] %vm599, %v585
      %603 = vst.msk [vmem:[#allocation2 + $0x18] sm:$0xff] %vm599, %v586
      %604 = vst.msk [vmem:[#allocation2 + $0x20] sm:$0xff] %vm599, %v587
      %605 = vst.msk [vmem:[#allocation2 + $0x28] sm:$0xff] %vm599, %v588
      %606 = vst.msk [vmem:[#allocation2 + $0x30] sm:$0xff] %vm599, %v589
      %607 = vst.msk [vmem:[#allocation2 + $0x38] sm:$0xff] %vm599, %v590
      %608 = vst.msk [vmem:[#allocation2 + $0x40] sm:$0xff] %vm599, %v591
      %609 = vst.msk [vmem:[#allocation2 + $0x48] sm:$0xff] %vm599, %v592
      %610 = vst.msk [vmem:[#allocation2 + $0x50] sm:$0xff] %vm599, %v593
      %611 = vst.msk [vmem:[#allocation2 + $0x58] sm:$0xff] %vm599, %v594
      %612 = vst.msk [vmem:[#allocation2 + $0x60] sm:$0xff] %vm599, %v595
      %613 = vst.msk [vmem:[#allocation2 + $0x68] sm:$0xff] %vm599, %v596
      %614 = vst.msk [vmem:[#allocation2 + $0x70] sm:$0xff] %vm599, %v597
      %615 = vst.msk [vmem:[#allocation2 + $0x78] sm:$0xff] %vm599, %v598
      // Predicated region
      $region37: #{_lambda_.44} parent=31 // pred_check
        %p616 = pneg %p305
      $region38: #{_lambda_.44} parent=31 // pred_check_branch
        %618 = sbr.rel (%p616) target = $region40
      $region39: #{_lambda_.44} parent=31 // pred_region
        %v619 = vld [vmem:[#allocation2] sm:$0xff]
        %v620 = vld [vmem:[#allocation2 + $0x8] sm:$0xff]
        %v621 = vld [vmem:[#allocation2 + $0x10] sm:$0xff]
        %v622 = vld [vmem:[#allocation2 + $0x18] sm:$0xff]
        %v623 = vld [vmem:[#allocation2 + $0x20] sm:$0xff]
        %v624 = vld [vmem:[#allocation2 + $0x28] sm:$0xff]
        %v625 = vld [vmem:[#allocation2 + $0x30] sm:$0xff]
        %v626 = vld [vmem:[#allocation2 + $0x38] sm:$0xff]
        %v627 = vld [vmem:[#allocation2 + $0x40] sm:$0xff]
        %v628 = vld [vmem:[#allocation2 + $0x48] sm:$0xff]
        %v629 = vld [vmem:[#allocation2 + $0x50] sm:$0xff]
        %v630 = vld [vmem:[#allocation2 + $0x58] sm:$0xff]
        %v631 = vld [vmem:[#allocation2 + $0x60] sm:$0xff]
        %v632 = vld [vmem:[#allocation2 + $0x68] sm:$0xff]
        %v633 = vld [vmem:[#allocation2 + $0x70] sm:$0xff]
        %v634 = vld [vmem:[#allocation2 + $0x78] sm:$0xff]
        %v635 = vld [vmem:[%s290] sm:$0x1]
        %v637 = vlaneseq
        %v638 = vshrl.u32 %v637, 7
        %v639 = vsub.s32 0, %v638
        %v640 = vrot.slane %v635, %v639
        %v642 = vadd.f32 %v619, %v640
        %v643 = vadd.f32 %v620, %v640
        %v644 = vadd.f32 %v621, %v640
        %v645 = vadd.f32 %v622, %v640
        %v646 = vadd.f32 %v623, %v640
        %v647 = vadd.f32 %v624, %v640
        %v648 = vadd.f32 %v625, %v640
        %v649 = vadd.f32 %v626, %v640
        %v650 = vadd.f32 %v627, %v640
        %v651 = vadd.f32 %v628, %v640
        %v652 = vadd.f32 %v629, %v640
        %v653 = vadd.f32 %v630, %v640
        %v654 = vadd.f32 %v631, %v640
        %v655 = vadd.f32 %v632, %v640
        %v656 = vadd.f32 %v633, %v640
        %v657 = vadd.f32 %v634, %v640
        %v658 = vpack.c.bf16 %v643, %v642
        %v659 = vpack.c.bf16 %v645, %v644
        %v660 = vpack.c.bf16 %v647, %v646
        %v661 = vpack.c.bf16 %v649, %v648
        %v662 = vpack.c.bf16 %v651, %v650
        %v663 = vpack.c.bf16 %v653, %v652
        %v664 = vpack.c.bf16 %v655, %v654
        %v665 = vpack.c.bf16 %v657, %v656
        %v674 = vunpack.c.l.b16 %v658
        %v675 = vunpack.c.h.b16 %v658
        %v676 = vunpack.c.l.b16 %v659
        %v677 = vunpack.c.h.b16 %v659
        %v678 = vunpack.c.l.b16 %v660
        %v679 = vunpack.c.h.b16 %v660
        %v680 = vunpack.c.l.b16 %v661
        %v681 = vunpack.c.h.b16 %v661
        %v682 = vunpack.c.l.b16 %v662
        %v683 = vunpack.c.h.b16 %v662
        %v684 = vunpack.c.l.b16 %v663
        %v685 = vunpack.c.h.b16 %v663
        %v686 = vunpack.c.l.b16 %v664
        %v687 = vunpack.c.h.b16 %v664
        %v688 = vunpack.c.l.b16 %v665
        %v689 = vunpack.c.h.b16 %v665
        %v690 = vpack.c.b16 %v674, %v674
        %v691 = vpack.c.b16 %v675, %v675
        %v692 = vpack.c.b16 %v676, %v676
        %v693 = vpack.c.b16 %v677, %v677
        %v694 = vpack.c.b16 %v678, %v678
        %v695 = vpack.c.b16 %v679, %v679
        %v696 = vpack.c.b16 %v680, %v680
        %v697 = vpack.c.b16 %v681, %v681
        %v698 = vpack.c.b16 %v682, %v682
        %v699 = vpack.c.b16 %v683, %v683
        %v700 = vpack.c.b16 %v684, %v684
        %v701 = vpack.c.b16 %v685, %v685
        %v702 = vpack.c.b16 %v686, %v686
        %v703 = vpack.c.b16 %v687, %v687
        %v704 = vpack.c.b16 %v688, %v688
        %v705 = vpack.c.b16 %v689, %v689
        %vm722 = vcmask 60416
        %723 = vst.msk [vmem:[%s302] sm:$0xf] %vm722, %v690
        %724 = vst.msk [vmem:[%s302 + $0x4] sm:$0xf] %vm722, %v691
        %725 = vst.msk [vmem:[%s302 + $0x8] sm:$0xf] %vm722, %v692
        %726 = vst.msk [vmem:[%s302 + $0xc] sm:$0xf] %vm722, %v693
        %727 = vst.msk [vmem:[%s302 + $0x10] sm:$0xf] %vm722, %v694
        %728 = vst.msk [vmem:[%s302 + $0x14] sm:$0xf] %vm722, %v695
        %729 = vst.msk [vmem:[%s302 + $0x18] sm:$0xf] %vm722, %v696
        %730 = vst.msk [vmem:[%s302 + $0x1c] sm:$0xf] %vm722, %v697
        %731 = vst.msk [vmem:[%s302 + $0x20] sm:$0xf] %vm722, %v698
        %732 = vst.msk [vmem:[%s302 + $0x24] sm:$0xf] %vm722, %v699
        %733 = vst.msk [vmem:[%s302 + $0x28] sm:$0xf] %vm722, %v700
        %734 = vst.msk [vmem:[%s302 + $0x2c] sm:$0xf] %vm722, %v701
        %735 = vst.msk [vmem:[%s302 + $0x30] sm:$0xf] %vm722, %v702
        %736 = vst.msk [vmem:[%s302 + $0x34] sm:$0xf] %vm722, %v703
        %737 = vst.msk [vmem:[%s302 + $0x38] sm:$0xf] %vm722, %v704
        %738 = vst.msk [vmem:[%s302 + $0x3c] sm:$0xf] %vm722, %v705
      $region40: #{_lambda_.44} parent=31 // pred_fallthru
        _
      %s739 = smul.u32 16, %s21
      %p740 = scmp.lt.s32.totalorder %s20, 3
      %s741 = scalar_select %p740, %s20, 3
      %p742 = scmp.lt.s32.totalorder %s739, 15
      %s743 = scalar_select %p742, %s739, 15
      %p744 = scmp.lt.s32.totalorder %s22, 0
      %s745 = scalar_select %p744, %s22, 0
      %s746 = sadd.s32 %s745, %s743
      %s747 = smul.addr %s741, 16
      %s748 = sadd.s32 %s746, %s747
      %s749 = smul.addr %s748, 4
      %s750 = scalar_lea.vmem %s3, %s749
      // Predicated region
      $region41: #{_lambda_.44} parent=31 // pred_check
        %p751 = pneg %p148
      $region42: #{_lambda_.44} parent=31 // pred_check_branch
        %753 = sbr.rel (%p751) target = $region44
      $region43: #{_lambda_.44} parent=31 // pred_region
        %s754 = smul.u32 16, %s21
      $region44: #{_lambda_.44} parent=31 // pred_fallthru
        _
    $region32: #{_lambda_.44} parent=5 // pred_fallthru
      _
    %p755 = scmp.le.s32.totalorder 2, %s9
    // Predicated region
    $region45: #{_lambda_.44} parent=5 // pred_check
      %p756 = pneg %p755
    $region46: #{_lambda_.44} parent=5 // pred_check_branch
      %758 = sbr.rel (%p756) target = $region48
    $region47: #{_lambda_.44} parent=5 // pred_region
      %s759 = ssub.s32 %s9, 2
      // Predicated region
      $region49: #{_lambda_.44} parent=47 // pred_check
        %p760 = pneg %p154
      $region50: #{_lambda_.44} parent=47 // pred_check_branch
        %762 = sbr.rel (%p760) target = $region52
      $region51: #{_lambda_.44} parent=47 // pred_region
        %s763 = smul.u32 16, %s25
        %p764 = scmp.lt.s32.totalorder %s24, 3
        %s765 = scalar_select %p764, %s24, 3
        %p766 = scmp.lt.s32.totalorder %s763, 15
        %s767 = scalar_select %p766, %s763, 15
        %p768 = scmp.lt.s32.totalorder %s26, 0
        %s769 = scalar_select %p768, %s26, 0
        %s770 = sadd.s32 %s769, %s767
        %s771 = smul.addr %s765, 16
        %s772 = sadd.s32 %s770, %s771
        %s773 = smul.addr %s772, 4
        %s774 = scalar_lea.vmem %s3, %s773
      $region52: #{_lambda_.44} parent=47 // pred_fallthru
        _
    $region48: #{_lambda_.44} parent=5 // pred_fallthru
      _
  $region6: #{_lambda_.44} parent=0 // loop_footer
    %s13 = sadd.s32 1, %s9
  $region7: #{_lambda_.44} parent=0 // loop_footer_branch
    %8 = sbr.rel target = $region3
  $region8: #{_lambda_.44} parent=0 // loop_exit
    _

// kernel: _lambda_.45
$region0: #{_lambda_.45}
  #allocation0 [shape = 'u32[]', space=smem, size = 0x4, offset = 0x4, fixed_abs, tag = 'smem constant byte address 0x4 - core index']
  #allocation1 [shape = 'u32[144,128]{1,0:T(1,128)}', space=vmem, size = 0x12000, scoped, tag = 'internal scratch']
  #allocation2 [shape = 'f32[1,8]{1,0:T(1,128)}', space=vmem, size = 0x200, scoped, tag = 'scratch operand']
  #allocation3 [shape = 'f32[1,8]{1,0:T(1,128)}', space=vmem, size = 0x200, scoped, tag = 'scratch operand']
  %s0 = inlined_call_operand.vmem [shape: bf16[512,8], index: 0, kind: input, shape index: {}]
  %s1 = inlined_call_operand.vmem [shape: f32[1,8], index: 1, kind: output, shape index: {0}]
  %s2 = inlined_call_operand.vmem [shape: f32[1,8], index: 2, kind: output, shape index: {1}]
  %3 = xla_tuple %s1, %s2
  %s4 = sld [smem:[#allocation0]]
  $region30: #{_lambda_.45} parent=0
    _
  %s6 = ssub.s32 1, %s4
  %s7 = scalar_select 0, %s6, %s4
  // Predicated region
  $region2: #{_lambda_.45} parent=0 // pred_check
    _
  $region3: #{_lambda_.45} parent=0 // pred_check_branch
    %9 = sbr.rel (0) target = $region5
  $region4: #{_lambda_.45} parent=0 // pred_region
    _
  $region5: #{_lambda_.45} parent=0 // pred_fallthru
    _
  %p10 = scmp.eq.s32.totalorder 0, 0
  // Predicated region
  $region6: #{_lambda_.45} parent=0 // pred_check
    %p11 = pneg %p10
  $region7: #{_lambda_.45} parent=0 // pred_check_branch
    %13 = sbr.rel (%p11) target = $region9
  $region8: #{_lambda_.45} parent=0 // pred_region
    %vm14 = vcmask 57344
    %15 = vst.msk [vmem:[#allocation2] sm:$0x1] %vm14, 0.0
    %16 = vst.msk [vmem:[#allocation3] sm:$0x1] %vm14, 0.0
  $region9: #{_lambda_.45} parent=0 // pred_fallthru
    _
  %v17 = vld [vmem:[%s0] sm:$0xf]
  %v18 = vld [vmem:[%s0 + $0x4] sm:$0xf]
  %v19 = vld [vmem:[%s0 + $0x8] sm:$0xf]
  %v20 = vld [vmem:[%s0 + $0xc] sm:$0xf]
  %v21 = vld [vmem:[%s0 + $0x10] sm:$0xf]
  %v22 = vld [vmem:[%s0 + $0x14] sm:$0xf]
  %v23 = vld [vmem:[%s0 + $0x18] sm:$0xf]
  %v24 = vld [vmem:[%s0 + $0x1c] sm:$0xf]
  %v25 = vld [vmem:[%s0 + $0x20] sm:$0xf]
  %v26 = vld [vmem:[%s0 + $0x24] sm:$0xf]
  %v27 = vld [vmem:[%s0 + $0x28] sm:$0xf]
  %v28 = vld [vmem:[%s0 + $0x2c] sm:$0xf]
  %v29 = vld [vmem:[%s0 + $0x30] sm:$0xf]
  %v30 = vld [vmem:[%s0 + $0x34] sm:$0xf]
  %v31 = vld [vmem:[%s0 + $0x38] sm:$0xf]
  %v32 = vld [vmem:[%s0 + $0x3c] sm:$0xf]
  %v33 = vld [vmem:[%s0 + $0x40] sm:$0xf]
  %v34 = vld [vmem:[%s0 + $0x44] sm:$0xf]
  %v35 = vld [vmem:[%s0 + $0x48] sm:$0xf]
  %v36 = vld [vmem:[%s0 + $0x4c] sm:$0xf]
  %v37 = vld [vmem:[%s0 + $0x50] sm:$0xf]
  %v38 = vld [vmem:[%s0 + $0x54] sm:$0xf]
  %v39 = vld [vmem:[%s0 + $0x58] sm:$0xf]
  %v40 = vld [vmem:[%s0 + $0x5c] sm:$0xf]
  %v41 = vld [vmem:[%s0 + $0x60] sm:$0xf]
  %v42 = vld [vmem:[%s0 + $0x64] sm:$0xf]
  %v43 = vld [vmem:[%s0 + $0x68] sm:$0xf]
  %v44 = vld [vmem:[%s0 + $0x6c] sm:$0xf]
  %v45 = vld [vmem:[%s0 + $0x70] sm:$0xf]
  %v46 = vld [vmem:[%s0 + $0x74] sm:$0xf]
  %v47 = vld [vmem:[%s0 + $0x78] sm:$0xf]
  %v48 = vld [vmem:[%s0 + $0x7c] sm:$0xf]
  %v49 = vld [vmem:[%s0 + $0x80] sm:$0xf]
  %v50 = vld [vmem:[%s0 + $0x84] sm:$0xf]
  %v51 = vld [vmem:[%s0 + $0x88] sm:$0xf]
  %v52 = vld [vmem:[%s0 + $0x8c] sm:$0xf]
  %v53 = vld [vmem:[%s0 + $0x90] sm:$0xf]
  %v54 = vld [vmem:[%s0 + $0x94] sm:$0xf]
  %v55 = vld [vmem:[%s0 + $0x98] sm:$0xf]
  %v56 = vld [vmem:[%s0 + $0x9c] sm:$0xf]
  %v57 = vld [vmem:[%s0 + $0xa0] sm:$0xf]
  %v58 = vld [vmem:[%s0 + $0xa4] sm:$0xf]
  %v59 = vld [vmem:[%s0 + $0xa8] sm:$0xf]
  %v60 = vld [vmem:[%s0 + $0xac] sm:$0xf]
  %v61 = vld [vmem:[%s0 + $0xb0] sm:$0xf]
  %v62 = vld [vmem:[%s0 + $0xb4] sm:$0xf]
  %v63 = vld [vmem:[%s0 + $0xb8] sm:$0xf]
  %v64 = vld [vmem:[%s0 + $0xbc] sm:$0xf]
  %v65 = vld [vmem:[%s0 + $0xc0] sm:$0xf]
  %v66 = vld [vmem:[%s0 + $0xc4] sm:$0xf]
  %v67 = vld [vmem:[%s0 + $0xc8] sm:$0xf]
  %v68 = vld [vmem:[%s0 + $0xcc] sm:$0xf]
  %v69 = vld [vmem:[%s0 + $0xd0] sm:$0xf]
  %v70 = vld [vmem:[%s0 + $0xd4] sm:$0xf]
  %v71 = vld [vmem:[%s0 + $0xd8] sm:$0xf]
  %v72 = vld [vmem:[%s0 + $0xdc] sm:$0xf]
  %v73 = vld [vmem:[%s0 + $0xe0] sm:$0xf]
  %v74 = vld [vmem:[%s0 + $0xe4] sm:$0xf]
  %v75 = vld [vmem:[%s0 + $0xe8] sm:$0xf]
  %v76 = vld [vmem:[%s0 + $0xec] sm:$0xf]
  %v77 = vld [vmem:[%s0 + $0xf0] sm:$0xf]
  %v78 = vld [vmem:[%s0 + $0xf4] sm:$0xf]
  %v79 = vld [vmem:[%s0 + $0xf8] sm:$0xf]
  %v80 = vld [vmem:[%s0 + $0xfc] sm:$0xf]
  %v81 = vunpack.c.l.bf16 %v17
  %v82 = vunpack.c.l.bf16 %v18
  %v83 = vunpack.c.l.bf16 %v19
  %v84 = vunpack.c.l.bf16 %v20
  %v85 = vunpack.c.l.bf16 %v21
  %v86 = vunpack.c.l.bf16 %v22
  %v87 = vunpack.c.l.bf16 %v23
  %v88 = vunpack.c.l.bf16 %v24
  %v89 = vunpack.c.l.bf16 %v25
  %v90 = vunpack.c.l.bf16 %v26
  %v91 = vunpack.c.l.bf16 %v27
  %v92 = vunpack.c.l.bf16 %v28
  %v93 = vunpack.c.l.bf16 %v29
  %v94 = vunpack.c.l.bf16 %v30
  %v95 = vunpack.c.l.bf16 %v31
  %v96 = vunpack.c.l.bf16 %v32
  %v97 = vunpack.c.l.bf16 %v33
  %v98 = vunpack.c.l.bf16 %v34
  %v99 = vunpack.c.l.bf16 %v35
  %v100 = vunpack.c.l.bf16 %v36
  %v101 = vunpack.c.l.bf16 %v37
  %v102 = vunpack.c.l.bf16 %v38
  %v103 = vunpack.c.l.bf16 %v39
  %v104 = vunpack.c.l.bf16 %v40
  %v105 = vunpack.c.l.bf16 %v41
  %v106 = vunpack.c.l.bf16 %v42
  %v107 = vunpack.c.l.bf16 %v43
  %v108 = vunpack.c.l.bf16 %v44
  %v109 = vunpack.c.l.bf16 %v45
  %v110 = vunpack.c.l.bf16 %v46
  %v111 = vunpack.c.l.bf16 %v47
  %v112 = vunpack.c.l.bf16 %v48
  %v113 = vunpack.c.l.bf16 %v49
  %v114 = vunpack.c.l.bf16 %v50
  %v115 = vunpack.c.l.bf16 %v51
  %v116 = vunpack.c.l.bf16 %v52
  %v117 = vunpack.c.l.bf16 %v53
  %v118 = vunpack.c.l.bf16 %v54
  %v119 = vunpack.c.l.bf16 %v55
  %v120 = vunpack.c.l.bf16 %v56
  %v121 = vunpack.c.l.bf16 %v57
  %v122 = vunpack.c.l.bf16 %v58
  %v123 = vunpack.c.l.bf16 %v59
  %v124 = vunpack.c.l.bf16 %v60
  %v125 = vunpack.c.l.bf16 %v61
  %v126 = vunpack.c.l.bf16 %v62
  %v127 = vunpack.c.l.bf16 %v63
  %v128 = vunpack.c.l.bf16 %v64
  %v129 = vunpack.c.l.bf16 %v65
  %v130 = vunpack.c.l.bf16 %v66
  %v131 = vunpack.c.l.bf16 %v67
  %v132 = vunpack.c.l.bf16 %v68
  %v133 = vunpack.c.l.bf16 %v69
  %v134 = vunpack.c.l.bf16 %v70
  %v135 = vunpack.c.l.bf16 %v71
  %v136 = vunpack.c.l.bf16 %v72
  %v137 = vunpack.c.l.bf16 %v73
  %v138 = vunpack.c.l.bf16 %v74
  %v139 = vunpack.c.l.bf16 %v75
  %v140 = vunpack.c.l.bf16 %v76
  %v141 = vunpack.c.l.bf16 %v77
  %v142 = vunpack.c.l.bf16 %v78
  %v143 = vunpack.c.l.bf16 %v79
  %v144 = vunpack.c.l.bf16 %v80
  %v145 = vld [vmem:[#allocation2] sm:$0x1]
  %vm146 = vcmask 64512
  %v147 = vsel %vm146, %v81, 0.0
  %v148 = vsel %vm146, %v82, 0.0
  %v149 = vadd.f32 %v147, %v148
  %v150 = vsel %vm146, %v83, 0.0
  %v151 = vadd.f32 %v149, %v150
  %v152 = vsel %vm146, %v84, 0.0
  %v153 = vadd.f32 %v151, %v152
  %v154 = vsel %vm146, %v85, 0.0
  %v155 = vadd.f32 %v153, %v154
  %v156 = vsel %vm146, %v86, 0.0
  %v157 = vadd.f32 %v155, %v156
  %v158 = vsel %vm146, %v87, 0.0
  %v159 = vadd.f32 %v157, %v158
  %v160 = vsel %vm146, %v88, 0.0
  %v161 = vadd.f32 %v159, %v160
  %v162 = vsel %vm146, %v89, 0.0
  %v163 = vadd.f32 %v161, %v162
  %v164 = vsel %vm146, %v90, 0.0
  %v165 = vadd.f32 %v163, %v164
  %v166 = vsel %vm146, %v91, 0.0
  %v167 = vadd.f32 %v165, %v166
  %v168 = vsel %vm146, %v92, 0.0
  %v169 = vadd.f32 %v167, %v168
  %v170 = vsel %vm146, %v93, 0.0
  %v171 = vadd.f32 %v169, %v170
  %v172 = vsel %vm146, %v94, 0.0
  %v173 = vadd.f32 %v171, %v172
  %v174 = vsel %vm146, %v95, 0.0
  %v175 = vadd.f32 %v173, %v174
  %v176 = vsel %vm146, %v96, 0.0
  %v177 = vadd.f32 %v175, %v176
  %v178 = vsel %vm146, %v97, 0.0
  %v179 = vadd.f32 %v177, %v178
  %v180 = vsel %vm146, %v98, 0.0
  %v181 = vadd.f32 %v179, %v180
  %v182 = vsel %vm146, %v99, 0.0
  %v183 = vadd.f32 %v181, %v182
  %v184 = vsel %vm146, %v100, 0.0
  %v185 = vadd.f32 %v183, %v184
  %v186 = vsel %vm146, %v101, 0.0
  %v187 = vadd.f32 %v185, %v186
  %v188 = vsel %vm146, %v102, 0.0
  %v189 = vadd.f32 %v187, %v188
  %v190 = vsel %vm146, %v103, 0.0
  %v191 = vadd.f32 %v189, %v190
  %v192 = vsel %vm146, %v104, 0.0
  %v193 = vadd.f32 %v191, %v192
  %v194 = vsel %vm146, %v105, 0.0
  %v195 = vadd.f32 %v193, %v194
  %v196 = vsel %vm146, %v106, 0.0
  %v197 = vadd.f32 %v195, %v196
  %v198 = vsel %vm146, %v107, 0.0
  %v199 = vadd.f32 %v197, %v198
  %v200 = vsel %vm146, %v108, 0.0
  %v201 = vadd.f32 %v199, %v200
  %v202 = vsel %vm146, %v109, 0.0
  %v203 = vadd.f32 %v201, %v202
  %v204 = vsel %vm146, %v110, 0.0
  %v205 = vadd.f32 %v203, %v204
  %v206 = vsel %vm146, %v111, 0.0
  %v207 = vadd.f32 %v205, %v206
  %v208 = vsel %vm146, %v112, 0.0
  %v209 = vadd.f32 %v207, %v208
  %v210 = vsel %vm146, %v113, 0.0
  %v211 = vadd.f32 %v209, %v210
  %v212 = vsel %vm146, %v114, 0.0
  %v213 = vadd.f32 %v211, %v212
  %v214 = vsel %vm146, %v115, 0.0
  %v215 = vadd.f32 %v213, %v214
  %v216 = vsel %vm146, %v116, 0.0
  %v217 = vadd.f32 %v215, %v216
  %v218 = vsel %vm146, %v117, 0.0
  %v219 = vadd.f32 %v217, %v218
  %v220 = vsel %vm146, %v118, 0.0
  %v221 = vadd.f32 %v219, %v220
  %v222 = vsel %vm146, %v119, 0.0
  %v223 = vadd.f32 %v221, %v222
  %v224 = vsel %vm146, %v120, 0.0
  %v225 = vadd.f32 %v223, %v224
  %v226 = vsel %vm146, %v121, 0.0
  %v227 = vadd.f32 %v225, %v226
  %v228 = vsel %vm146, %v122, 0.0
  %v229 = vadd.f32 %v227, %v228
  %v230 = vsel %vm146, %v123, 0.0
  %v231 = vadd.f32 %v229, %v230
  %v232 = vsel %vm146, %v124, 0.0
  %v233 = vadd.f32 %v231, %v232
  %v234 = vsel %vm146, %v125, 0.0
  %v235 = vadd.f32 %v233, %v234
  %v236 = vsel %vm146, %v126, 0.0
  %v237 = vadd.f32 %v235, %v236
  %v238 = vsel %vm146, %v127, 0.0
  %v239 = vadd.f32 %v237, %v238
  %v240 = vsel %vm146, %v128, 0.0
  %v241 = vadd.f32 %v239, %v240
  %v242 = vsel %vm146, %v129, 0.0
  %v243 = vadd.f32 %v241, %v242
  %v244 = vsel %vm146, %v130, 0.0
  %v245 = vadd.f32 %v243, %v244
  %v246 = vsel %vm146, %v131, 0.0
  %v247 = vadd.f32 %v245, %v246
  %v248 = vsel %vm146, %v132, 0.0
  %v249 = vadd.f32 %v247, %v248
  %v250 = vsel %vm146, %v133, 0.0
  %v251 = vadd.f32 %v249, %v250
  %v252 = vsel %vm146, %v134, 0.0
  %v253 = vadd.f32 %v251, %v252
  %v254 = vsel %vm146, %v135, 0.0
  %v255 = vadd.f32 %v253, %v254
  %v256 = vsel %vm146, %v136, 0.0
  %v257 = vadd.f32 %v255, %v256
  %v258 = vsel %vm146, %v137, 0.0
  %v259 = vadd.f32 %v257, %v258
  %v260 = vsel %vm146, %v138, 0.0
  %v261 = vadd.f32 %v259, %v260
  %v262 = vsel %vm146, %v139, 0.0
  %v263 = vadd.f32 %v261, %v262
  %v264 = vsel %vm146, %v140, 0.0
  %v265 = vadd.f32 %v263, %v264
  %v266 = vsel %vm146, %v141, 0.0
  %v267 = vadd.f32 %v265, %v266
  %v268 = vsel %vm146, %v142, 0.0
  %v269 = vadd.f32 %v267, %v268
  %v270 = vsel %vm146, %v143, 0.0
  %v271 = vadd.f32 %v269, %v270
  %v272 = vsel %vm146, %v144, 0.0
  %v273 = vadd.f32 %v271, %v272
  %v274 = vrot.slane %v273, 4
  %v275 = vadd.f32 %v273, %v274
  %v276 = vrot.slane %v275, 2
  %v277 = vadd.f32 %v275, %v276
  %v278 = vrot.slane %v277, 1
  %v279 = vadd.f32 %v277, %v278
  %v280 = vadd.f32 %v145, %v279
  %vm281 = vcmask 57344
  %282 = vst.msk [vmem:[#allocation2] sm:$0x1] %vm281, %v280
  %v283 = vld [vmem:[#allocation3] sm:$0x1]
  %v284 = vmul.f32 %v81, %v81
  %v285 = vmul.f32 %v82, %v82
  %v286 = vmul.f32 %v83, %v83
  %v287 = vmul.f32 %v84, %v84
  %v288 = vmul.f32 %v85, %v85
  %v289 = vmul.f32 %v86, %v86
  %v290 = vmul.f32 %v87, %v87
  %v291 = vmul.f32 %v88, %v88
  %v292 = vmul.f32 %v89, %v89
  %v293 = vmul.f32 %v90, %v90
  %v294 = vmul.f32 %v91, %v91
  %v295 = vmul.f32 %v92, %v92
  %v296 = vmul.f32 %v93, %v93
  %v297 = vmul.f32 %v94, %v94
  %v298 = vmul.f32 %v95, %v95
  %v299 = vmul.f32 %v96, %v96
  %v300 = vmul.f32 %v97, %v97
  %v301 = vmul.f32 %v98, %v98
  %v302 = vmul.f32 %v99, %v99
  %v303 = vmul.f32 %v100, %v100
  %v304 = vmul.f32 %v101, %v101
  %v305 = vmul.f32 %v102, %v102
  %v306 = vmul.f32 %v103, %v103
  %v307 = vmul.f32 %v104, %v104
  %v308 = vmul.f32 %v105, %v105
  %v309 = vmul.f32 %v106, %v106
  %v310 = vmul.f32 %v107, %v107
  %v311 = vmul.f32 %v108, %v108
  %v312 = vmul.f32 %v109, %v109
  %v313 = vmul.f32 %v110, %v110
  %v314 = vmul.f32 %v111, %v111
  %v315 = vmul.f32 %v112, %v112
  %v316 = vmul.f32 %v113, %v113
  %v317 = vmul.f32 %v114, %v114
  %v318 = vmul.f32 %v115, %v115
  %v319 = vmul.f32 %v116, %v116
  %v320 = vmul.f32 %v117, %v117
  %v321 = vmul.f32 %v118, %v118
  %v322 = vmul.f32 %v119, %v119
  %v323 = vmul.f32 %v120, %v120
  %v324 = vmul.f32 %v121, %v121
  %v325 = vmul.f32 %v122, %v122
  %v326 = vmul.f32 %v123, %v123
  %v327 = vmul.f32 %v124, %v124
  %v328 = vmul.f32 %v125, %v125
  %v329 = vmul.f32 %v126, %v126
  %v330 = vmul.f32 %v127, %v127
  %v331 = vmul.f32 %v128, %v128
  %v332 = vmul.f32 %v129, %v129
  %v333 = vmul.f32 %v130, %v130
  %v334 = vmul.f32 %v131, %v131
  %v335 = vmul.f32 %v132, %v132
  %v336 = vmul.f32 %v133, %v133
  %v337 = vmul.f32 %v134, %v134
  %v338 = vmul.f32 %v135, %v135
  %v339 = vmul.f32 %v136, %v136
  %v340 = vmul.f32 %v137, %v137
  %v341 = vmul.f32 %v138, %v138
  %v342 = vmul.f32 %v139, %v139
  %v343 = vmul.f32 %v140, %v140
  %v344 = vmul.f32 %v141, %v141
  %v345 = vmul.f32 %v142, %v142
  %v346 = vmul.f32 %v143, %v143
  %v347 = vmul.f32 %v144, %v144
  %v348 = vsel %vm146, %v284, 0.0
  %v349 = vsel %vm146, %v285, 0.0
  %v350 = vadd.f32 %v348, %v349
  %v351 = vsel %vm146, %v286, 0.0
  %v352 = vadd.f32 %v350, %v351
  %v353 = vsel %vm146, %v287, 0.0
  %v354 = vadd.f32 %v352, %v353
  %v355 = vsel %vm146, %v288, 0.0
  %v356 = vadd.f32 %v354, %v355
  %v357 = vsel %vm146, %v289, 0.0
  %v358 = vadd.f32 %v356, %v357
  %v359 = vsel %vm146, %v290, 0.0
  %v360 = vadd.f32 %v358, %v359
  %v361 = vsel %vm146, %v291, 0.0
  %v362 = vadd.f32 %v360, %v361
  %v363 = vsel %vm146, %v292, 0.0
  %v364 = vadd.f32 %v362, %v363
  %v365 = vsel %vm146, %v293, 0.0
  %v366 = vadd.f32 %v364, %v365
  %v367 = vsel %vm146, %v294, 0.0
  %v368 = vadd.f32 %v366, %v367
  %v369 = vsel %vm146, %v295, 0.0
  %v370 = vadd.f32 %v368, %v369
  %v371 = vsel %vm146, %v296, 0.0
  %v372 = vadd.f32 %v370, %v371
  %v373 = vsel %vm146, %v297, 0.0
  %v374 = vadd.f32 %v372, %v373
  %v375 = vsel %vm146, %v298, 0.0
  %v376 = vadd.f32 %v374, %v375
  %v377 = vsel %vm146, %v299, 0.0
  %v378 = vadd.f32 %v376, %v377
  %v379 = vsel %vm146, %v300, 0.0
  %v380 = vadd.f32 %v378, %v379
  %v381 = vsel %vm146, %v301, 0.0
  %v382 = vadd.f32 %v380, %v381
  %v383 = vsel %vm146, %v302, 0.0
  %v384 = vadd.f32 %v382, %v383
  %v385 = vsel %vm146, %v303, 0.0
  %v386 = vadd.f32 %v384, %v385
  %v387 = vsel %vm146, %v304, 0.0
  %v388 = vadd.f32 %v386, %v387
  %v389 = vsel %vm146, %v305, 0.0
  %v390 = vadd.f32 %v388, %v389
  %v391 = vsel %vm146, %v306, 0.0
  %v392 = vadd.f32 %v390, %v391
  %v393 = vsel %vm146, %v307, 0.0
  %v394 = vadd.f32 %v392, %v393
  %v395 = vsel %vm146, %v308, 0.0
  %v396 = vadd.f32 %v394, %v395
  %v397 = vsel %vm146, %v309, 0.0
  %v398 = vadd.f32 %v396, %v397
  %v399 = vsel %vm146, %v310, 0.0
  %v400 = vadd.f32 %v398, %v399
  %v401 = vsel %vm146, %v311, 0.0
  %v402 = vadd.f32 %v400, %v401
  %v403 = vsel %vm146, %v312, 0.0
  %v404 = vadd.f32 %v402, %v403
  %v405 = vsel %vm146, %v313, 0.0
  %v406 = vadd.f32 %v404, %v405
  %v407 = vsel %vm146, %v314, 0.0
  %v408 = vadd.f32 %v406, %v407
  %v409 = vsel %vm146, %v315, 0.0
  %v410 = vadd.f32 %v408, %v409
  %v411 = vsel %vm146, %v316, 0.0
  %v412 = vadd.f32 %v410, %v411
  %v413 = vsel %vm146, %v317, 0.0
  %v414 = vadd.f32 %v412, %v413
  %v415 = vsel %vm146, %v318, 0.0
  %v416 = vadd.f32 %v414, %v415
  %v417 = vsel %vm146, %v319, 0.0
  %v418 = vadd.f32 %v416, %v417
  %v419 = vsel %vm146, %v320, 0.0
  %v420 = vadd.f32 %v418, %v419
  %v421 = vsel %vm146, %v321, 0.0
  %v422 = vadd.f32 %v420, %v421
  %v423 = vsel %vm146, %v322, 0.0
  %v424 = vadd.f32 %v422, %v423
  %v425 = vsel %vm146, %v323, 0.0
  %v426 = vadd.f32 %v424, %v425
  %v427 = vsel %vm146, %v324, 0.0
  %v428 = vadd.f32 %v426, %v427
  %v429 = vsel %vm146, %v325, 0.0
  %v430 = vadd.f32 %v428, %v429
  %v431 = vsel %vm146, %v326, 0.0
  %v432 = vadd.f32 %v430, %v431
  %v433 = vsel %vm146, %v327, 0.0
  %v434 = vadd.f32 %v432, %v433
  %v435 = vsel %vm146, %v328, 0.0
  %v436 = vadd.f32 %v434, %v435
  %v437 = vsel %vm146, %v329, 0.0
  %v438 = vadd.f32 %v436, %v437
  %v439 = vsel %vm146, %v330, 0.0
  %v440 = vadd.f32 %v438, %v439
  %v441 = vsel %vm146, %v331, 0.0
  %v442 = vadd.f32 %v440, %v441
  %v443 = vsel %vm146, %v332, 0.0
  %v444 = vadd.f32 %v442, %v443
  %v445 = vsel %vm146, %v333, 0.0
  %v446 = vadd.f32 %v444, %v445
  %v447 = vsel %vm146, %v334, 0.0
  %v448 = vadd.f32 %v446, %v447
  %v449 = vsel %vm146, %v335, 0.0
  %v450 = vadd.f32 %v448, %v449
  %v451 = vsel %vm146, %v336, 0.0
  %v452 = vadd.f32 %v450, %v451
  %v453 = vsel %vm146, %v337, 0.0
  %v454 = vadd.f32 %v452, %v453
  %v455 = vsel %vm146, %v338, 0.0
  %v456 = vadd.f32 %v454, %v455
  %v457 = vsel %vm146, %v339, 0.0
  %v458 = vadd.f32 %v456, %v457
  %v459 = vsel %vm146, %v340, 0.0
  %v460 = vadd.f32 %v458, %v459
  %v461 = vsel %vm146, %v341, 0.0
  %v462 = vadd.f32 %v460, %v461
  %v463 = vsel %vm146, %v342, 0.0
  %v464 = vadd.f32 %v462, %v463
  %v465 = vsel %vm146, %v343, 0.0
  %v466 = vadd.f32 %v464, %v465
  %v467 = vsel %vm146, %v344, 0.0
  %v468 = vadd.f32 %v466, %v467
  %v469 = vsel %vm146, %v345, 0.0
  %v470 = vadd.f32 %v468, %v469
  %v471 = vsel %vm146, %v346, 0.0
  %v472 = vadd.f32 %v470, %v471
  %v473 = vsel %vm146, %v347, 0.0
  %v474 = vadd.f32 %v472, %v473
  %v475 = vrot.slane %v474, 4
  %v476 = vadd.f32 %v474, %v475
  %v477 = vrot.slane %v476, 2
  %v478 = vadd.f32 %v476, %v477
  %v479 = vrot.slane %v478, 1
  %v480 = vadd.f32 %v478, %v479
  %v481 = vadd.f32 %v283, %v480
  %482 = vst.msk [vmem:[#allocation3] sm:$0x1] %vm281, %v481
  // Predicated region
  $region10: #{_lambda_.45} parent=0 // pred_check
    %p483 = pneg %p10
  $region11: #{_lambda_.45} parent=0 // pred_check_branch
    %485 = sbr.rel (%p483) target = $region13
  $region12: #{_lambda_.45} parent=0 // pred_region
    %v486 = vld [vmem:[#allocation2] sm:$0x1]
    %487 = vst.msk [vmem:[%s1] sm:$0x1] %vm281, %v486
    %v488 = vld [vmem:[#allocation3] sm:$0x1]
    %489 = vst.msk [vmem:[%s2] sm:$0x1] %vm281, %v488
  $region13: #{_lambda_.45} parent=0 // pred_fallthru
    _
  // Predicated region
  $region14: #{_lambda_.45} parent=0 // pred_check
    _
  $region15: #{_lambda_.45} parent=0 // pred_check_branch
    %491 = sbr.rel (0) target = $region17
  $region16: #{_lambda_.45} parent=0 // pred_region
    _
  $region17: #{_lambda_.45} parent=0 // pred_fallthru
    _
  // Predicated region
  $region18: #{_lambda_.45} parent=0 // pred_check
    _
  $region19: #{_lambda_.45} parent=0 // pred_check_branch
    %493 = sbr.rel (0) target = $region21
  $region20: #{_lambda_.45} parent=0 // pred_region
    _
  $region21: #{_lambda_.45} parent=0 // pred_fallthru
    _
  // Predicated region
  $region22: #{_lambda_.45} parent=0 // pred_check
    _
  $region23: #{_lambda_.45} parent=0 // pred_check_branch
    %495 = sbr.rel (0) target = $region25
  $region24: #{_lambda_.45} parent=0 // pred_region
    _
  $region25: #{_lambda_.45} parent=0 // pred_fallthru
    _
  // Predicated region
  $region26: #{_lambda_.45} parent=0 // pred_check
    _
  $region27: #{_lambda_.45} parent=0 // pred_check_branch
    %497 = sbr.rel (0) target = $region29
  $region28: #{_lambda_.45} parent=0 // pred_region
    _
  $region29: #{_lambda_.45} parent=0 // pred_fallthru
    _

// kernel: _lambda_.46
$region0: #{_lambda_.46}
  #allocation0 [shape = 'u32[]', space=smem, size = 0x4, offset = 0x4, fixed_abs, tag = 'smem constant byte address 0x4 - core index']
  #allocation1 [shape = 'u32[144,128]{1,0:T(1,128)}', space=vmem, size = 0x12000, scoped, tag = 'internal scratch']
  %s0 = inlined_call_operand.vmem [shape: bf16[512,8], index: 0, kind: input, shape index: {}]
  %s1 = inlined_call_operand.vmem [shape: f32[1,8], index: 1, kind: input, shape index: {}]
  %s2 = inlined_call_operand.vmem [shape: f32[1,8], index: 2, kind: input, shape index: {}]
  %s3 = inlined_call_operand.vmem [shape: bf16[512,8], index: 3, kind: output, shape index: {}]
  %s4 = sld [smem:[#allocation0]]
  $region22: #{_lambda_.46} parent=0
    _
  %s6 = ssub.s32 1, %s4
  %s7 = scalar_select 0, %s6, %s4
  // Predicated region
  $region2: #{_lambda_.46} parent=0 // pred_check
    _
  $region3: #{_lambda_.46} parent=0 // pred_check_branch
    %9 = sbr.rel (0) target = $region5
  $region4: #{_lambda_.46} parent=0 // pred_region
    _
  $region5: #{_lambda_.46} parent=0 // pred_fallthru
    _
  // Predicated region
  $region6: #{_lambda_.46} parent=0 // pred_check
    _
  $region7: #{_lambda_.46} parent=0 // pred_check_branch
    %11 = sbr.rel (0) target = $region9
  $region8: #{_lambda_.46} parent=0 // pred_region
    _
  $region9: #{_lambda_.46} parent=0 // pred_fallthru
    _
  // Predicated region
  $region10: #{_lambda_.46} parent=0 // pred_check
    _
  $region11: #{_lambda_.46} parent=0 // pred_check_branch
    %13 = sbr.rel (0) target = $region13
  $region12: #{_lambda_.46} parent=0 // pred_region
    _
  $region13: #{_lambda_.46} parent=0 // pred_fallthru
    _
  %v14 = vld [vmem:[%s0] sm:$0xf]
  %v15 = vld [vmem:[%s0 + $0x4] sm:$0xf]
  %v16 = vld [vmem:[%s0 + $0x8] sm:$0xf]
  %v17 = vld [vmem:[%s0 + $0xc] sm:$0xf]
  %v18 = vld [vmem:[%s0 + $0x10] sm:$0xf]
  %v19 = vld [vmem:[%s0 + $0x14] sm:$0xf]
  %v20 = vld [vmem:[%s0 + $0x18] sm:$0xf]
  %v21 = vld [vmem:[%s0 + $0x1c] sm:$0xf]
  %v22 = vld [vmem:[%s0 + $0x20] sm:$0xf]
  %v23 = vld [vmem:[%s0 + $0x24] sm:$0xf]
  %v24 = vld [vmem:[%s0 + $0x28] sm:$0xf]
  %v25 = vld [vmem:[%s0 + $0x2c] sm:$0xf]
  %v26 = vld [vmem:[%s0 + $0x30] sm:$0xf]
  %v27 = vld [vmem:[%s0 + $0x34] sm:$0xf]
  %v28 = vld [vmem:[%s0 + $0x38] sm:$0xf]
  %v29 = vld [vmem:[%s0 + $0x3c] sm:$0xf]
  %v30 = vld [vmem:[%s0 + $0x40] sm:$0xf]
  %v31 = vld [vmem:[%s0 + $0x44] sm:$0xf]
  %v32 = vld [vmem:[%s0 + $0x48] sm:$0xf]
  %v33 = vld [vmem:[%s0 + $0x4c] sm:$0xf]
  %v34 = vld [vmem:[%s0 + $0x50] sm:$0xf]
  %v35 = vld [vmem:[%s0 + $0x54] sm:$0xf]
  %v36 = vld [vmem:[%s0 + $0x58] sm:$0xf]
  %v37 = vld [vmem:[%s0 + $0x5c] sm:$0xf]
  %v38 = vld [vmem:[%s0 + $0x60] sm:$0xf]
  %v39 = vld [vmem:[%s0 + $0x64] sm:$0xf]
  %v40 = vld [vmem:[%s0 + $0x68] sm:$0xf]
  %v41 = vld [vmem:[%s0 + $0x6c] sm:$0xf]
  %v42 = vld [vmem:[%s0 + $0x70] sm:$0xf]
  %v43 = vld [vmem:[%s0 + $0x74] sm:$0xf]
  %v44 = vld [vmem:[%s0 + $0x78] sm:$0xf]
  %v45 = vld [vmem:[%s0 + $0x7c] sm:$0xf]
  %v46 = vld [vmem:[%s0 + $0x80] sm:$0xf]
  %v47 = vld [vmem:[%s0 + $0x84] sm:$0xf]
  %v48 = vld [vmem:[%s0 + $0x88] sm:$0xf]
  %v49 = vld [vmem:[%s0 + $0x8c] sm:$0xf]
  %v50 = vld [vmem:[%s0 + $0x90] sm:$0xf]
  %v51 = vld [vmem:[%s0 + $0x94] sm:$0xf]
  %v52 = vld [vmem:[%s0 + $0x98] sm:$0xf]
  %v53 = vld [vmem:[%s0 + $0x9c] sm:$0xf]
  %v54 = vld [vmem:[%s0 + $0xa0] sm:$0xf]
  %v55 = vld [vmem:[%s0 + $0xa4] sm:$0xf]
  %v56 = vld [vmem:[%s0 + $0xa8] sm:$0xf]
  %v57 = vld [vmem:[%s0 + $0xac] sm:$0xf]
  %v58 = vld [vmem:[%s0 + $0xb0] sm:$0xf]
  %v59 = vld [vmem:[%s0 + $0xb4] sm:$0xf]
  %v60 = vld [vmem:[%s0 + $0xb8] sm:$0xf]
  %v61 = vld [vmem:[%s0 + $0xbc] sm:$0xf]
  %v62 = vld [vmem:[%s0 + $0xc0] sm:$0xf]
  %v63 = vld [vmem:[%s0 + $0xc4] sm:$0xf]
  %v64 = vld [vmem:[%s0 + $0xc8] sm:$0xf]
  %v65 = vld [vmem:[%s0 + $0xcc] sm:$0xf]
  %v66 = vld [vmem:[%s0 + $0xd0] sm:$0xf]
  %v67 = vld [vmem:[%s0 + $0xd4] sm:$0xf]
  %v68 = vld [vmem:[%s0 + $0xd8] sm:$0xf]
  %v69 = vld [vmem:[%s0 + $0xdc] sm:$0xf]
  %v70 = vld [vmem:[%s0 + $0xe0] sm:$0xf]
  %v71 = vld [vmem:[%s0 + $0xe4] sm:$0xf]
  %v72 = vld [vmem:[%s0 + $0xe8] sm:$0xf]
  %v73 = vld [vmem:[%s0 + $0xec] sm:$0xf]
  %v74 = vld [vmem:[%s0 + $0xf0] sm:$0xf]
  %v75 = vld [vmem:[%s0 + $0xf4] sm:$0xf]
  %v76 = vld [vmem:[%s0 + $0xf8] sm:$0xf]
  %v77 = vld [vmem:[%s0 + $0xfc] sm:$0xf]
  %v78 = vunpack.c.l.bf16 %v14
  %v79 = vunpack.c.l.bf16 %v15
  %v80 = vunpack.c.l.bf16 %v16
  %v81 = vunpack.c.l.bf16 %v17
  %v82 = vunpack.c.l.bf16 %v18
  %v83 = vunpack.c.l.bf16 %v19
  %v84 = vunpack.c.l.bf16 %v20
  %v85 = vunpack.c.l.bf16 %v21
  %v86 = vunpack.c.l.bf16 %v22
  %v87 = vunpack.c.l.bf16 %v23
  %v88 = vunpack.c.l.bf16 %v24
  %v89 = vunpack.c.l.bf16 %v25
  %v90 = vunpack.c.l.bf16 %v26
  %v91 = vunpack.c.l.bf16 %v27
  %v92 = vunpack.c.l.bf16 %v28
  %v93 = vunpack.c.l.bf16 %v29
  %v94 = vunpack.c.l.bf16 %v30
  %v95 = vunpack.c.l.bf16 %v31
  %v96 = vunpack.c.l.bf16 %v32
  %v97 = vunpack.c.l.bf16 %v33
  %v98 = vunpack.c.l.bf16 %v34
  %v99 = vunpack.c.l.bf16 %v35
  %v100 = vunpack.c.l.bf16 %v36
  %v101 = vunpack.c.l.bf16 %v37
  %v102 = vunpack.c.l.bf16 %v38
  %v103 = vunpack.c.l.bf16 %v39
  %v104 = vunpack.c.l.bf16 %v40
  %v105 = vunpack.c.l.bf16 %v41
  %v106 = vunpack.c.l.bf16 %v42
  %v107 = vunpack.c.l.bf16 %v43
  %v108 = vunpack.c.l.bf16 %v44
  %v109 = vunpack.c.l.bf16 %v45
  %v110 = vunpack.c.l.bf16 %v46
  %v111 = vunpack.c.l.bf16 %v47
  %v112 = vunpack.c.l.bf16 %v48
  %v113 = vunpack.c.l.bf16 %v49
  %v114 = vunpack.c.l.bf16 %v50
  %v115 = vunpack.c.l.bf16 %v51
  %v116 = vunpack.c.l.bf16 %v52
  %v117 = vunpack.c.l.bf16 %v53
  %v118 = vunpack.c.l.bf16 %v54
  %v119 = vunpack.c.l.bf16 %v55
  %v120 = vunpack.c.l.bf16 %v56
  %v121 = vunpack.c.l.bf16 %v57
  %v122 = vunpack.c.l.bf16 %v58
  %v123 = vunpack.c.l.bf16 %v59
  %v124 = vunpack.c.l.bf16 %v60
  %v125 = vunpack.c.l.bf16 %v61
  %v126 = vunpack.c.l.bf16 %v62
  %v127 = vunpack.c.l.bf16 %v63
  %v128 = vunpack.c.l.bf16 %v64
  %v129 = vunpack.c.l.bf16 %v65
  %v130 = vunpack.c.l.bf16 %v66
  %v131 = vunpack.c.l.bf16 %v67
  %v132 = vunpack.c.l.bf16 %v68
  %v133 = vunpack.c.l.bf16 %v69
  %v134 = vunpack.c.l.bf16 %v70
  %v135 = vunpack.c.l.bf16 %v71
  %v136 = vunpack.c.l.bf16 %v72
  %v137 = vunpack.c.l.bf16 %v73
  %v138 = vunpack.c.l.bf16 %v74
  %v139 = vunpack.c.l.bf16 %v75
  %v140 = vunpack.c.l.bf16 %v76
  %v141 = vunpack.c.l.bf16 %v77
  %v142 = vld [vmem:[%s1] sm:$0x1]
  %v144 = vlaneseq
  %v145 = vshrl.u32 %v144, 7
  %v146 = vsub.s32 0, %v145
  %v147 = vrot.slane %v142, %v146
  %v149 = vmul.f32 %v78, %v147
  %v150 = vmul.f32 %v79, %v147
  %v151 = vmul.f32 %v80, %v147
  %v152 = vmul.f32 %v81, %v147
  %v153 = vmul.f32 %v82, %v147
  %v154 = vmul.f32 %v83, %v147
  %v155 = vmul.f32 %v84, %v147
  %v156 = vmul.f32 %v85, %v147
  %v157 = vmul.f32 %v86, %v147
  %v158 = vmul.f32 %v87, %v147
  %v159 = vmul.f32 %v88, %v147
  %v160 = vmul.f32 %v89, %v147
  %v161 = vmul.f32 %v90, %v147
  %v162 = vmul.f32 %v91, %v147
  %v163 = vmul.f32 %v92, %v147
  %v164 = vmul.f32 %v93, %v147
  %v165 = vmul.f32 %v94, %v147
  %v166 = vmul.f32 %v95, %v147
  %v167 = vmul.f32 %v96, %v147
  %v168 = vmul.f32 %v97, %v147
  %v169 = vmul.f32 %v98, %v147
  %v170 = vmul.f32 %v99, %v147
  %v171 = vmul.f32 %v100, %v147
  %v172 = vmul.f32 %v101, %v147
  %v173 = vmul.f32 %v102, %v147
  %v174 = vmul.f32 %v103, %v147
  %v175 = vmul.f32 %v104, %v147
  %v176 = vmul.f32 %v105, %v147
  %v177 = vmul.f32 %v106, %v147
  %v178 = vmul.f32 %v107, %v147
  %v179 = vmul.f32 %v108, %v147
  %v180 = vmul.f32 %v109, %v147
  %v181 = vmul.f32 %v110, %v147
  %v182 = vmul.f32 %v111, %v147
  %v183 = vmul.f32 %v112, %v147
  %v184 = vmul.f32 %v113, %v147
  %v185 = vmul.f32 %v114, %v147
  %v186 = vmul.f32 %v115, %v147
  %v187 = vmul.f32 %v116, %v147
  %v188 = vmul.f32 %v117, %v147
  %v189 = vmul.f32 %v118, %v147
  %v190 = vmul.f32 %v119, %v147
  %v191 = vmul.f32 %v120, %v147
  %v192 = vmul.f32 %v121, %v147
  %v193 = vmul.f32 %v122, %v147
  %v194 = vmul.f32 %v123, %v147
  %v195 = vmul.f32 %v124, %v147
  %v196 = vmul.f32 %v125, %v147
  %v197 = vmul.f32 %v126, %v147
  %v198 = vmul.f32 %v127, %v147
  %v199 = vmul.f32 %v128, %v147
  %v200 = vmul.f32 %v129, %v147
  %v201 = vmul.f32 %v130, %v147
  %v202 = vmul.f32 %v131, %v147
  %v203 = vmul.f32 %v132, %v147
  %v204 = vmul.f32 %v133, %v147
  %v205 = vmul.f32 %v134, %v147
  %v206 = vmul.f32 %v135, %v147
  %v207 = vmul.f32 %v136, %v147
  %v208 = vmul.f32 %v137, %v147
  %v209 = vmul.f32 %v138, %v147
  %v210 = vmul.f32 %v139, %v147
  %v211 = vmul.f32 %v140, %v147
  %v212 = vmul.f32 %v141, %v147
  %v213 = vld [vmem:[%s2] sm:$0x1]
  %v215 = vlaneseq
  %v216 = vshrl.u32 %v215, 7
  %v217 = vsub.s32 0, %v216
  %v218 = vrot.slane %v213, %v217
  %v220 = vadd.f32 %v149, %v218
  %v221 = vadd.f32 %v150, %v218
  %v222 = vadd.f32 %v151, %v218
  %v223 = vadd.f32 %v152, %v218
  %v224 = vadd.f32 %v153, %v218
  %v225 = vadd.f32 %v154, %v218
  %v226 = vadd.f32 %v155, %v218
  %v227 = vadd.f32 %v156, %v218
  %v228 = vadd.f32 %v157, %v218
  %v229 = vadd.f32 %v158, %v218
  %v230 = vadd.f32 %v159, %v218
  %v231 = vadd.f32 %v160, %v218
  %v232 = vadd.f32 %v161, %v218
  %v233 = vadd.f32 %v162, %v218
  %v234 = vadd.f32 %v163, %v218
  %v235 = vadd.f32 %v164, %v218
  %v236 = vadd.f32 %v165, %v218
  %v237 = vadd.f32 %v166, %v218
  %v238 = vadd.f32 %v167, %v218
  %v239 = vadd.f32 %v168, %v218
  %v240 = vadd.f32 %v169, %v218
  %v241 = vadd.f32 %v170, %v218
  %v242 = vadd.f32 %v171, %v218
  %v243 = vadd.f32 %v172, %v218
  %v244 = vadd.f32 %v173, %v218
  %v245 = vadd.f32 %v174, %v218
  %v246 = vadd.f32 %v175, %v218
  %v247 = vadd.f32 %v176, %v218
  %v248 = vadd.f32 %v177, %v218
  %v249 = vadd.f32 %v178, %v218
  %v250 = vadd.f32 %v179, %v218
  %v251 = vadd.f32 %v180, %v218
  %v252 = vadd.f32 %v181, %v218
  %v253 = vadd.f32 %v182, %v218
  %v254 = vadd.f32 %v183, %v218
  %v255 = vadd.f32 %v184, %v218
  %v256 = vadd.f32 %v185, %v218
  %v257 = vadd.f32 %v186, %v218
  %v258 = vadd.f32 %v187, %v218
  %v259 = vadd.f32 %v188, %v218
  %v260 = vadd.f32 %v189, %v218
  %v261 = vadd.f32 %v190, %v218
  %v262 = vadd.f32 %v191, %v218
  %v263 = vadd.f32 %v192, %v218
  %v264 = vadd.f32 %v193, %v218
  %v265 = vadd.f32 %v194, %v218
  %v266 = vadd.f32 %v195, %v218
  %v267 = vadd.f32 %v196, %v218
  %v268 = vadd.f32 %v197, %v218
  %v269 = vadd.f32 %v198, %v218
  %v270 = vadd.f32 %v199, %v218
  %v271 = vadd.f32 %v200, %v218
  %v272 = vadd.f32 %v201, %v218
  %v273 = vadd.f32 %v202, %v218
  %v274 = vadd.f32 %v203, %v218
  %v275 = vadd.f32 %v204, %v218
  %v276 = vadd.f32 %v205, %v218
  %v277 = vadd.f32 %v206, %v218
  %v278 = vadd.f32 %v207, %v218
  %v279 = vadd.f32 %v208, %v218
  %v280 = vadd.f32 %v209, %v218
  %v281 = vadd.f32 %v210, %v218
  %v282 = vadd.f32 %v211, %v218
  %v283 = vadd.f32 %v212, %v218
  %v284 = vpack.c.bf16 %v221, %v220
  %v285 = vpack.c.bf16 %v223, %v222
  %v286 = vpack.c.bf16 %v225, %v224
  %v287 = vpack.c.bf16 %v227, %v226
  %v288 = vpack.c.bf16 %v229, %v228
  %v289 = vpack.c.bf16 %v231, %v230
  %v290 = vpack.c.bf16 %v233, %v232
  %v291 = vpack.c.bf16 %v235, %v234
  %v292 = vpack.c.bf16 %v237, %v236
  %v293 = vpack.c.bf16 %v239, %v238
  %v294 = vpack.c.bf16 %v241, %v240
  %v295 = vpack.c.bf16 %v243, %v242
  %v296 = vpack.c.bf16 %v245, %v244
  %v297 = vpack.c.bf16 %v247, %v246
  %v298 = vpack.c.bf16 %v249, %v248
  %v299 = vpack.c.bf16 %v251, %v250
  %v300 = vpack.c.bf16 %v253, %v252
  %v301 = vpack.c.bf16 %v255, %v254
  %v302 = vpack.c.bf16 %v257, %v256
  %v303 = vpack.c.bf16 %v259, %v258
  %v304 = vpack.c.bf16 %v261, %v260
  %v305 = vpack.c.bf16 %v263, %v262
  %v306 = vpack.c.bf16 %v265, %v264
  %v307 = vpack.c.bf16 %v267, %v266
  %v308 = vpack.c.bf16 %v269, %v268
  %v309 = vpack.c.bf16 %v271, %v270
  %v310 = vpack.c.bf16 %v273, %v272
  %v311 = vpack.c.bf16 %v275, %v274
  %v312 = vpack.c.bf16 %v277, %v276
  %v313 = vpack.c.bf16 %v279, %v278
  %v314 = vpack.c.bf16 %v281, %v280
  %v315 = vpack.c.bf16 %v283, %v282
  %v348 = vunpack.c.l.b16 %v284
  %v349 = vunpack.c.h.b16 %v284
  %v350 = vunpack.c.l.b16 %v285
  %v351 = vunpack.c.h.b16 %v285
  %v352 = vunpack.c.l.b16 %v286
  %v353 = vunpack.c.h.b16 %v286
  %v354 = vunpack.c.l.b16 %v287
  %v355 = vunpack.c.h.b16 %v287
  %v356 = vunpack.c.l.b16 %v288
  %v357 = vunpack.c.h.b16 %v288
  %v358 = vunpack.c.l.b16 %v289
  %v359 = vunpack.c.h.b16 %v289
  %v360 = vunpack.c.l.b16 %v290
  %v361 = vunpack.c.h.b16 %v290
  %v362 = vunpack.c.l.b16 %v291
  %v363 = vunpack.c.h.b16 %v291
  %v364 = vunpack.c.l.b16 %v292
  %v365 = vunpack.c.h.b16 %v292
  %v366 = vunpack.c.l.b16 %v293
  %v367 = vunpack.c.h.b16 %v293
  %v368 = vunpack.c.l.b16 %v294
  %v369 = vunpack.c.h.b16 %v294
  %v370 = vunpack.c.l.b16 %v295
  %v371 = vunpack.c.h.b16 %v295
  %v372 = vunpack.c.l.b16 %v296
  %v373 = vunpack.c.h.b16 %v296
  %v374 = vunpack.c.l.b16 %v297
  %v375 = vunpack.c.h.b16 %v297
  %v376 = vunpack.c.l.b16 %v298
  %v377 = vunpack.c.h.b16 %v298
  %v378 = vunpack.c.l.b16 %v299
  %v379 = vunpack.c.h.b16 %v299
  %v380 = vunpack.c.l.b16 %v300
  %v381 = vunpack.c.h.b16 %v300
  %v382 = vunpack.c.l.b16 %v301
  %v383 = vunpack.c.h.b16 %v301
  %v384 = vunpack.c.l.b16 %v302
  %v385 = vunpack.c.h.b16 %v302
  %v386 = vunpack.c.l.b16 %v303
  %v387 = vunpack.c.h.b16 %v303
  %v388 = vunpack.c.l.b16 %v304
  %v389 = vunpack.c.h.b16 %v304
  %v390 = vunpack.c.l.b16 %v305
  %v391 = vunpack.c.h.b16 %v305
  %v392 = vunpack.c.l.b16 %v306
  %v393 = vunpack.c.h.b16 %v306
  %v394 = vunpack.c.l.b16 %v307
  %v395 = vunpack.c.h.b16 %v307
  %v396 = vunpack.c.l.b16 %v308
  %v397 = vunpack.c.h.b16 %v308
  %v398 = vunpack.c.l.b16 %v309
  %v399 = vunpack.c.h.b16 %v309
  %v400 = vunpack.c.l.b16 %v310
  %v401 = vunpack.c.h.b16 %v310
  %v402 = vunpack.c.l.b16 %v311
  %v403 = vunpack.c.h.b16 %v311
  %v404 = vunpack.c.l.b16 %v312
  %v405 = vunpack.c.h.b16 %v312
  %v406 = vunpack.c.l.b16 %v313
  %v407 = vunpack.c.h.b16 %v313
  %v408 = vunpack.c.l.b16 %v314
  %v409 = vunpack.c.h.b16 %v314
  %v410 = vunpack.c.l.b16 %v315
  %v411 = vunpack.c.h.b16 %v315
  %v412 = vpack.c.b16 %v348, %v348
  %v413 = vpack.c.b16 %v349, %v349
  %v414 = vpack.c.b16 %v350, %v350
  %v415 = vpack.c.b16 %v351, %v351
  %v416 = vpack.c.b16 %v352, %v352
  %v417 = vpack.c.b16 %v353, %v353
  %v418 = vpack.c.b16 %v354, %v354
  %v419 = vpack.c.b16 %v355, %v355
  %v420 = vpack.c.b16 %v356, %v356
  %v421 = vpack.c.b16 %v357, %v357
  %v422 = vpack.c.b16 %v358, %v358
  %v423 = vpack.c.b16 %v359, %v359
  %v424 = vpack.c.b16 %v360, %v360
  %v425 = vpack.c.b16 %v361, %v361
  %v426 = vpack.c.b16 %v362, %v362
  %v427 = vpack.c.b16 %v363, %v363
  %v428 = vpack.c.b16 %v364, %v364
  %v429 = vpack.c.b16 %v365, %v365
  %v430 = vpack.c.b16 %v366, %v366
  %v431 = vpack.c.b16 %v367, %v367
  %v432 = vpack.c.b16 %v368, %v368
  %v433 = vpack.c.b16 %v369, %v369
  %v434 = vpack.c.b16 %v370, %v370
  %v435 = vpack.c.b16 %v371, %v371
  %v436 = vpack.c.b16 %v372, %v372
  %v437 = vpack.c.b16 %v373, %v373
  %v438 = vpack.c.b16 %v374, %v374
  %v439 = vpack.c.b16 %v375, %v375
  %v440 = vpack.c.b16 %v376, %v376
  %v441 = vpack.c.b16 %v377, %v377
  %v442 = vpack.c.b16 %v378, %v378
  %v443 = vpack.c.b16 %v379, %v379
  %v444 = vpack.c.b16 %v380, %v380
  %v445 = vpack.c.b16 %v381, %v381
  %v446 = vpack.c.b16 %v382, %v382
  %v447 = vpack.c.b16 %v383, %v383
  %v448 = vpack.c.b16 %v384, %v384
  %v449 = vpack.c.b16 %v385, %v385
  %v450 = vpack.c.b16 %v386, %v386
  %v451 = vpack.c.b16 %v387, %v387
  %v452 = vpack.c.b16 %v388, %v388
  %v453 = vpack.c.b16 %v389, %v389
  %v454 = vpack.c.b16 %v390, %v390
  %v455 = vpack.c.b16 %v391, %v391
  %v456 = vpack.c.b16 %v392, %v392
  %v457 = vpack.c.b16 %v393, %v393
  %v458 = vpack.c.b16 %v394, %v394
  %v459 = vpack.c.b16 %v395, %v395
  %v460 = vpack.c.b16 %v396, %v396
  %v461 = vpack.c.b16 %v397, %v397
  %v462 = vpack.c.b16 %v398, %v398
  %v463 = vpack.c.b16 %v399, %v399
  %v464 = vpack.c.b16 %v400, %v400
  %v465 = vpack.c.b16 %v401, %v401
  %v466 = vpack.c.b16 %v402, %v402
  %v467 = vpack.c.b16 %v403, %v403
  %v468 = vpack.c.b16 %v404, %v404
  %v469 = vpack.c.b16 %v405, %v405
  %v470 = vpack.c.b16 %v406, %v406
  %v471 = vpack.c.b16 %v407, %v407
  %v472 = vpack.c.b16 %v408, %v408
  %v473 = vpack.c.b16 %v409, %v409
  %v474 = vpack.c.b16 %v410, %v410
  %v475 = vpack.c.b16 %v411, %v411
  %vm540 = vcmask 60416
  %541 = vst.msk [vmem:[%s3] sm:$0xf] %vm540, %v412
  %542 = vst.msk [vmem:[%s3 + $0x4] sm:$0xf] %vm540, %v413
  %543 = vst.msk [vmem:[%s3 + $0x8] sm:$0xf] %vm540, %v414
  %544 = vst.msk [vmem:[%s3 + $0xc] sm:$0xf] %vm540, %v415
  %545 = vst.msk [vmem:[%s3 + $0x10] sm:$0xf] %vm540, %v416
  %546 = vst.msk [vmem:[%s3 + $0x14] sm:$0xf] %vm540, %v417
  %547 = vst.msk [vmem:[%s3 + $0x18] sm:$0xf] %vm540, %v418
  %548 = vst.msk [vmem:[%s3 + $0x1c] sm:$0xf] %vm540, %v419
  %549 = vst.msk [vmem:[%s3 + $0x20] sm:$0xf] %vm540, %v420
  %550 = vst.msk [vmem:[%s3 + $0x24] sm:$0xf] %vm540, %v421
  %551 = vst.msk [vmem:[%s3 + $0x28] sm:$0xf] %vm540, %v422
  %552 = vst.msk [vmem:[%s3 + $0x2c] sm:$0xf] %vm540, %v423
  %553 = vst.msk [vmem:[%s3 + $0x30] sm:$0xf] %vm540, %v424
  %554 = vst.msk [vmem:[%s3 + $0x34] sm:$0xf] %vm540, %v425
  %555 = vst.msk [vmem:[%s3 + $0x38] sm:$0xf] %vm540, %v426
  %556 = vst.msk [vmem:[%s3 + $0x3c] sm:$0xf] %vm540, %v427
  %557 = vst.msk [vmem:[%s3 + $0x40] sm:$0xf] %vm540, %v428
  %558 = vst.msk [vmem:[%s3 + $0x44] sm:$0xf] %vm540, %v429
  %559 = vst.msk [vmem:[%s3 + $0x48] sm:$0xf] %vm540, %v430
  %560 = vst.msk [vmem:[%s3 + $0x4c] sm:$0xf] %vm540, %v431
  %561 = vst.msk [vmem:[%s3 + $0x50] sm:$0xf] %vm540, %v432
  %562 = vst.msk [vmem:[%s3 + $0x54] sm:$0xf] %vm540, %v433
  %563 = vst.msk [vmem:[%s3 + $0x58] sm:$0xf] %vm540, %v434
  %564 = vst.msk [vmem:[%s3 + $0x5c] sm:$0xf] %vm540, %v435
  %565 = vst.msk [vmem:[%s3 + $0x60] sm:$0xf] %vm540, %v436
  %566 = vst.msk [vmem:[%s3 + $0x64] sm:$0xf] %vm540, %v437
  %567 = vst.msk [vmem:[%s3 + $0x68] sm:$0xf] %vm540, %v438
  %568 = vst.msk [vmem:[%s3 + $0x6c] sm:$0xf] %vm540, %v439
  %569 = vst.msk [vmem:[%s3 + $0x70] sm:$0xf] %vm540, %v440
  %570 = vst.msk [vmem:[%s3 + $0x74] sm:$0xf] %vm540, %v441
  %571 = vst.msk [vmem:[%s3 + $0x78] sm:$0xf] %vm540, %v442
  %572 = vst.msk [vmem:[%s3 + $0x7c] sm:$0xf] %vm540, %v443
  %573 = vst.msk [vmem:[%s3 + $0x80] sm:$0xf] %vm540, %v444
  %574 = vst.msk [vmem:[%s3 + $0x84] sm:$0xf] %vm540, %v445
  %575 = vst.msk [vmem:[%s3 + $0x88] sm:$0xf] %vm540, %v446
  %576 = vst.msk [vmem:[%s3 + $0x8c] sm:$0xf] %vm540, %v447
  %577 = vst.msk [vmem:[%s3 + $0x90] sm:$0xf] %vm540, %v448
  %578 = vst.msk [vmem:[%s3 + $0x94] sm:$0xf] %vm540, %v449
  %579 = vst.msk [vmem:[%s3 + $0x98] sm:$0xf] %vm540, %v450
  %580 = vst.msk [vmem:[%s3 + $0x9c] sm:$0xf] %vm540, %v451
  %581 = vst.msk [vmem:[%s3 + $0xa0] sm:$0xf] %vm540, %v452
  %582 = vst.msk [vmem:[%s3 + $0xa4] sm:$0xf] %vm540, %v453
  %583 = vst.msk [vmem:[%s3 + $0xa8] sm:$0xf] %vm540, %v454
  %584 = vst.msk [vmem:[%s3 + $0xac] sm:$0xf] %vm540, %v455
  %585 = vst.msk [vmem:[%s3 + $0xb0] sm:$0xf] %vm540, %v456
  %586 = vst.msk [vmem:[%s3 + $0xb4] sm:$0xf] %vm540, %v457
  %587 = vst.msk [vmem:[%s3 + $0xb8] sm:$0xf] %vm540, %v458
  %588 = vst.msk [vmem:[%s3 + $0xbc] sm:$0xf] %vm540, %v459
  %589 = vst.msk [vmem:[%s3 + $0xc0] sm:$0xf] %vm540, %v460
  %590 = vst.msk [vmem:[%s3 + $0xc4] sm:$0xf] %vm540, %v461
  %591 = vst.msk [vmem:[%s3 + $0xc8] sm:$0xf] %vm540, %v462
  %592 = vst.msk [vmem:[%s3 + $0xcc] sm:$0xf] %vm540, %v463
  %593 = vst.msk [vmem:[%s3 + $0xd0] sm:$0xf] %vm540, %v464
  %594 = vst.msk [vmem:[%s3 + $0xd4] sm:$0xf] %vm540, %v465
  %595 = vst.msk [vmem:[%s3 + $0xd8] sm:$0xf] %vm540, %v466
  %596 = vst.msk [vmem:[%s3 + $0xdc] sm:$0xf] %vm540, %v467
  %597 = vst.msk [vmem:[%s3 + $0xe0] sm:$0xf] %vm540, %v468
  %598 = vst.msk [vmem:[%s3 + $0xe4] sm:$0xf] %vm540, %v469
  %599 = vst.msk [vmem:[%s3 + $0xe8] sm:$0xf] %vm540, %v470
  %600 = vst.msk [vmem:[%s3 + $0xec] sm:$0xf] %vm540, %v471
  %601 = vst.msk [vmem:[%s3 + $0xf0] sm:$0xf] %vm540, %v472
  %602 = vst.msk [vmem:[%s3 + $0xf4] sm:$0xf] %vm540, %v473
  %603 = vst.msk [vmem:[%s3 + $0xf8] sm:$0xf] %vm540, %v474
  %604 = vst.msk [vmem:[%s3 + $0xfc] sm:$0xf] %vm540, %v475
  // Predicated region
  $region14: #{_lambda_.46} parent=0 // pred_check
    _
  $region15: #{_lambda_.46} parent=0 // pred_check_branch
    %606 = sbr.rel (0) target = $region17
  $region16: #{_lambda_.46} parent=0 // pred_region
    _
  $region17: #{_lambda_.46} parent=0 // pred_fallthru
    _
  // Predicated region
  $region18: #{_lambda_.46} parent=0 // pred_check
    _
  $region19: #{_lambda_.46} parent=0 // pred_check_branch
    %608 = sbr.rel (0) target = $region21
  $region20: #{_lambda_.46} parent=0 // pred_region
    _
  $region21: #{_lambda_.46} parent=0 // pred_fallthru
    _

// kernel: _lambda_.47
$region0: #{_lambda_.47}
  #allocation0 [shape = 'u32[]', space=smem, size = 0x4, offset = 0x4, fixed_abs, tag = 'smem constant byte address 0x4 - core index']
  #allocation1 [shape = 'u32[144,128]{1,0:T(1,128)}', space=vmem, size = 0x12000, scoped, tag = 'internal scratch']
  #allocation2 [shape = 'f32[512,3]{1,0:T(8,128)}', space=vmem, size = 0x40000, scoped, tag = 'scratch operand']
  %s0 = inlined_call_operand.vmem [shape: bf16[4,512,64], index: 0, kind: input, shape index: {}]
  %s1 = inlined_call_operand.vmem [shape: bf16[4,64,3], index: 1, kind: input, shape index: {}]
  %s2 = inlined_call_operand.vmem [shape: f32[1,1,3], index: 2, kind: input, shape index: {}]
  %s3 = inlined_call_operand.vmem [shape: f32[4,512,3], index: 3, kind: output, shape index: {}]
  %s4 = sld [smem:[#allocation0]]
  $region53: #{_lambda_.47} parent=0
    _
  %s6 = ssub.s32 1, %s4
  %s7 = scalar_select 0, %s6, %s4
  loop: start=0, step=1, limit=6
  $region2: #{_lambda_.47} parent=0 // loop_pre_header
    _
  $region3: #{_lambda_.47} parent=0 // loop_header
    %s9 = sphi 0, %s13
    %p10 = scmp.ge.s32.totalorder %s9, 6
    %s16 = sphi 0, %s42
    %s17 = sphi 0, %s38
    %s18 = sphi 0, %s34
    %s19 = sphi 0, %s30
    %s20 = sphi 0, %s16
    %s21 = sphi 0, %s17
    %s22 = sphi 0, %s18
    %s23 = sphi 0, %s19
    %s24 = sphi 0, %s20
    %s25 = sphi 0, %s21
    %s26 = sphi 0, %s22
    %s27 = sphi 0, %s23
    %s49 = sphi 0, %s51
    %s52 = sphi 0, %s49
    %s53 = sphi 0, %s52
    %s69 = sphi 0, %s53
    %s79 = sphi 0, %s81
    %s82 = sphi 0, %s79
    %s83 = sphi 0, %s82
    %s99 = sphi 0, %s83
    %s105 = sphi 0, %s107
    %s108 = sphi 0, %s105
    %s109 = sphi 0, %s108
    %s125 = sphi 0, %s109
    %s135 = sphi 0, %s137
    %s138 = sphi 0, %s135
    %s139 = sphi 0, %s138
    %s155 = sphi 0, %s139
  $region4: #{_lambda_.47} parent=0 // loop_header_branch
    %12 = sbr.rel (%p10) target = $region8
  $region5: #{_lambda_.47} parent=0 // loop_body
    %s14 = ssub.s32 %s9, 1
    %s15 = ssub.s32 %s9, 2
    %s28 = sadd.s32 1, %s19
    %p29 = scmp.ge.s32.totalorder %s28, 1
    %s30 = scalar_select %p29, 0, %s28
    %s31 = sadd.s32 1, %s18
    %s32 = scalar_select %p29, %s31, %s18
    %p33 = scmp.ge.s32.totalorder %s32, 1
    %s34 = scalar_select %p33, 0, %s32
    %s35 = sadd.s32 1, %s17
    %s36 = scalar_select %p33, %s35, %s17
    %p37 = scmp.ge.s32.totalorder %s36, 1
    %s38 = scalar_select %p37, 0, %s36
    %s39 = sadd.s32 1, %s16
    %s40 = scalar_select %p37, %s39, %s16
    %p41 = scmp.ge.s32.totalorder %s40, 4
    %s42 = scalar_select %p41, 0, %s40
    %s43 = ssub.s32 %s16, %s42
    %s44 = ssub.s32 %s17, %s38
    %s45 = sor.u32 %s43, %s44
    %s46 = ssub.s32 %s19, %s30
    %s47 = sor.u32 %s45, %s46
    %p48 = scmp.eq.s32.totalorder %s47, 0
    %s50 = sadd.s32 %s49, 1
    %s51 = scalar_select %p48, %s49, %s50
    %p54 = pneg %p48
    %p55 = scmp.eq.s32.totalorder %s9, 3
    %p56 = por %p54, %p55
    %p57 = scmp.ne.s32.totalorder %s49, %s52
    %p58 = scmp.eq.s32.totalorder %s9, 0
    %p59 = por %p57, %p58
    %p60 = scmp.ne.s32.totalorder %s49, %s52
    %p61 = scmp.eq.s32.totalorder %s14, 3
    %p62 = por %p60, %p61
    %p63 = scmp.ne.s32.totalorder %s52, %s53
    %p64 = scmp.eq.s32.totalorder %s14, 0
    %p65 = por %p63, %p64
    %p66 = scmp.ne.s32.totalorder %s52, %s53
    %p67 = scmp.eq.s32.totalorder %s15, 3
    %p68 = por %p66, %p67
    %p70 = scmp.ne.s32.totalorder %s53, %s69
    %p71 = scmp.eq.s32.totalorder %s15, 0
    %p72 = por %p70, %p71
    %s73 = ssub.s32 %s16, %s42
    %s74 = ssub.s32 %s19, %s30
    %s75 = sor.u32 %s73, %s74
    %s76 = ssub.s32 %s18, %s34
    %s77 = sor.u32 %s75, %s76
    %p78 = scmp.eq.s32.totalorder %s77, 0
    %s80 = sadd.s32 %s79, 1
    %s81 = scalar_select %p78, %s79, %s80
    %p84 = pneg %p78
    %p85 = scmp.eq.s32.totalorder %s9, 3
    %p86 = por %p84, %p85
    %p87 = scmp.ne.s32.totalorder %s79, %s82
    %p88 = scmp.eq.s32.totalorder %s9, 0
    %p89 = por %p87, %p88
    %p90 = scmp.ne.s32.totalorder %s79, %s82
    %p91 = scmp.eq.s32.totalorder %s14, 3
    %p92 = por %p90, %p91
    %p93 = scmp.ne.s32.totalorder %s82, %s83
    %p94 = scmp.eq.s32.totalorder %s14, 0
    %p95 = por %p93, %p94
    %p96 = scmp.ne.s32.totalorder %s82, %s83
    %p97 = scmp.eq.s32.totalorder %s15, 3
    %p98 = por %p96, %p97
    %p100 = scmp.ne.s32.totalorder %s83, %s99
    %p101 = scmp.eq.s32.totalorder %s15, 0
    %p102 = por %p100, %p101
    %s103 = ssub.s32 %s18, %s34
    %p104 = scmp.eq.s32.totalorder %s103, 0
    %s106 = sadd.s32 %s105, 1
    %s107 = scalar_select %p104, %s105, %s106
    %p110 = pneg %p104
    %p111 = scmp.eq.s32.totalorder %s9, 3
    %p112 = por %p110, %p111
    %p113 = scmp.ne.s32.totalorder %s105, %s108
    %p114 = scmp.eq.s32.totalorder %s9, 0
    %p115 = por %p113, %p114
    %p116 = scmp.ne.s32.totalorder %s105, %s108
    %p117 = scmp.eq.s32.totalorder %s14, 3
    %p118 = por %p116, %p117
    %p119 = scmp.ne.s32.totalorder %s108, %s109
    %p120 = scmp.eq.s32.totalorder %s14, 0
    %p121 = por %p119, %p120
    %p122 = scmp.ne.s32.totalorder %s108, %s109
    %p123 = scmp.eq.s32.totalorder %s15, 3
    %p124 = por %p122, %p123
    %p126 = scmp.ne.s32.totalorder %s109, %s125
    %p127 = scmp.eq.s32.totalorder %s15, 0
    %p128 = por %p126, %p127
    %s129 = ssub.s32 %s16, %s42
    %s130 = ssub.s32 %s17, %s38
    %s131 = sor.u32 %s129, %s130
    %s132 = ssub.s32 %s18, %s34
    %s133 = sor.u32 %s131, %s132
    %p134 = scmp.eq.s32.totalorder %s133, 0
    %s136 = sadd.s32 %s135, 1
    %s137 = scalar_select %p134, %s135, %s136
    %p140 = pneg %p134
    %p141 = scmp.eq.s32.totalorder %s9, 3
    %p142 = por %p140, %p141
    %p143 = scmp.ne.s32.totalorder %s135, %s138
    %p144 = scmp.eq.s32.totalorder %s9, 0
    %p145 = por %p143, %p144
    %p146 = scmp.ne.s32.totalorder %s135, %s138
    %p147 = scmp.eq.s32.totalorder %s14, 3
    %p148 = por %p146, %p147
    %p149 = scmp.ne.s32.totalorder %s138, %s139
    %p150 = scmp.eq.s32.totalorder %s14, 0
    %p151 = por %p149, %p150
    %p152 = scmp.ne.s32.totalorder %s138, %s139
    %p153 = scmp.eq.s32.totalorder %s15, 3
    %p154 = por %p152, %p153
    %p156 = scmp.ne.s32.totalorder %s139, %s155
    %p157 = scmp.eq.s32.totalorder %s15, 0
    %p158 = por %p156, %p157
    %p159 = scmp.le.s32.totalorder 1, %s9
    %p160 = scmp.lt.s32.totalorder %s9, 5
    %p161 = pnand %p159, %p160
    %p162 = pneg %p161
    // Predicated region
    $region9: #{_lambda_.47} parent=5 // pred_check
      _
    $region10: #{_lambda_.47} parent=5 // pred_check_branch
      %164 = sbr.rel (%p161) target = $region12
    $region11: #{_lambda_.47} parent=5 // pred_region
      %s165 = ssub.s32 %s9, 1
      // Predicated region
      $region13: #{_lambda_.47} parent=11 // pred_check
        %p166 = pneg %p121
      $region14: #{_lambda_.47} parent=11 // pred_check_branch
        %168 = sbr.rel (%p166) target = $region16
      $region15: #{_lambda_.47} parent=11 // pred_region
        %p169 = scmp.lt.s32.totalorder %s22, 0
        %s170 = scalar_select %p169, %s22, 0
        %s171 = scalar_lea.vmem %s2, %s170
      $region16: #{_lambda_.47} parent=11 // pred_fallthru
        _
    $region12: #{_lambda_.47} parent=5 // pred_fallthru
      _
    %p172 = scmp.lt.s32.totalorder %s9, 4
    // Predicated region
    $region17: #{_lambda_.47} parent=5 // pred_check
      %p173 = pneg %p172
    $region18: #{_lambda_.47} parent=5 // pred_check_branch
      %175 = sbr.rel (%p173) target = $region20
    $region19: #{_lambda_.47} parent=5 // pred_region
      // Predicated region
      $region21: #{_lambda_.47} parent=19 // pred_check
        %p176 = pneg %p59
      $region22: #{_lambda_.47} parent=19 // pred_check_branch
        %178 = sbr.rel (%p176) target = $region24
      $region23: #{_lambda_.47} parent=19 // pred_region
        %s179 = smul.u32 64, %s17
        %p180 = scmp.lt.s32.totalorder %s16, 3
        %s181 = scalar_select %p180, %s16, 3
        %p182 = scmp.lt.s32.totalorder %s179, 63
        %s183 = scalar_select %p182, %s179, 63
        %p184 = scmp.lt.s32.totalorder %s19, 0
        %s185 = scalar_select %p184, %s19, 0
        %s186 = sadd.s32 %s185, %s183
        %s187 = smul.addr %s181, 64
        %s188 = sadd.s32 %s186, %s187
        %s189 = smul.addr %s188, 4
        %s190 = scalar_lea.vmem %s0, %s189
        %s191 = smul.u32 64, %s17
      $region24: #{_lambda_.47} parent=19 // pred_fallthru
        _
      // Predicated region
      $region25: #{_lambda_.47} parent=19 // pred_check
        %p192 = pneg %p89
      $region26: #{_lambda_.47} parent=19 // pred_check_branch
        %194 = sbr.rel (%p192) target = $region28
      $region27: #{_lambda_.47} parent=19 // pred_region
        %s195 = smul.u32 8, %s19
        %p196 = scmp.lt.s32.totalorder %s16, 3
        %s197 = scalar_select %p196, %s16, 3
        %p198 = scmp.lt.s32.totalorder %s195, 7
        %s199 = scalar_select %p198, %s195, 7
        %p200 = scmp.lt.s32.totalorder %s18, 0
        %s201 = scalar_select %p200, %s18, 0
        %s202 = sadd.s32 %s201, %s199
        %s203 = smul.addr %s197, 8
        %s204 = sadd.s32 %s202, %s203
        %s205 = smul.addr %s204, 4
        %s206 = scalar_lea.vmem %s1, %s205
        %s207 = smul.u32 8, %s19
      $region28: #{_lambda_.47} parent=19 // pred_fallthru
        _
    $region20: #{_lambda_.47} parent=5 // pred_fallthru
      _
    %p208 = scmp.le.s32.totalorder 1, %s9
    %p209 = scmp.lt.s32.totalorder %s9, 5
    %p210 = pnand %p208, %p209
    %p211 = pneg %p210
    // Predicated region
    $region29: #{_lambda_.47} parent=5 // pred_check
      _
    $region30: #{_lambda_.47} parent=5 // pred_check_branch
      %213 = sbr.rel (%p210) target = $region32
    $region31: #{_lambda_.47} parent=5 // pred_region
      %s214 = ssub.s32 %s9, 1
      %s215 = smul.u32 64, %s21
      %p216 = scmp.lt.s32.totalorder %s20, 3
      %s217 = scalar_select %p216, %s20, 3
      %p218 = scmp.lt.s32.totalorder %s215, 63
      %s219 = scalar_select %p218, %s215, 63
      %p220 = scmp.lt.s32.totalorder %s23, 0
      %s221 = scalar_select %p220, %s23, 0
      %s222 = sadd.s32 %s221, %s219
      %s223 = smul.addr %s217, 64
      %s224 = sadd.s32 %s222, %s223
      %s225 = smul.addr %s224, 4
      %s226 = scalar_lea.vmem %s0, %s225
      %p227 = pneg %p65
      %p228 = pneg %p62
      %s229 = smul.u32 8, %s23
      %p230 = scmp.lt.s32.totalorder %s20, 3
      %s231 = scalar_select %p230, %s20, 3
      %p232 = scmp.lt.s32.totalorder %s229, 7
      %s233 = scalar_select %p232, %s229, 7
      %p234 = scmp.lt.s32.totalorder %s22, 0
      %s235 = scalar_select %p234, %s22, 0
      %s236 = sadd.s32 %s235, %s233
      %s237 = smul.addr %s231, 8
      %s238 = sadd.s32 %s236, %s237
      %s239 = smul.addr %s238, 4
      %s240 = scalar_lea.vmem %s1, %s239
      %p241 = pneg %p95
      %p242 = pneg %p92
      %p243 = scmp.lt.s32.totalorder %s22, 0
      %s244 = scalar_select %p243, %s22, 0
      %s245 = scalar_lea.vmem %s2, %s244
      %p246 = pneg %p121
      %p247 = pneg %p118
      %p248 = pneg %p151
      %p249 = pneg %p148
      %s250 = smul.u32 64, %s21
      %p251 = scmp.lt.s32.totalorder %s20, 3
      %s252 = scalar_select %p251, %s20, 3
      %p253 = scmp.lt.s32.totalorder %s250, 63
      %s254 = scalar_select %p253, %s250, 63
      %p255 = scmp.lt.s32.totalorder %s22, 0
      %s256 = scalar_select %p255, %s22, 0
      %s257 = sadd.s32 %s256, %s254
      %s258 = smul.addr %s252, 64
      %s259 = sadd.s32 %s257, %s258
      %s260 = smul.addr %s259, 8
      %s261 = scalar_lea.vmem %s3, %s260
      %s262 = smul.u32 64, %s21
      %p263 = scmp.lt.s32.totalorder %s20, 3
      %s264 = scalar_select %p263, %s20, 3
      %p265 = scmp.lt.s32.totalorder %s262, 63
      %s266 = scalar_select %p265, %s262, 63
      %p267 = scmp.lt.s32.totalorder %s23, 0
      %s268 = scalar_select %p267, %s23, 0
      %s269 = sadd.s32 %s268, %s266
      %s270 = smul.addr %s264, 64
      %s271 = sadd.s32 %s269, %s270
      %s272 = smul.addr %s271, 4
      %s273 = scalar_lea.vmem %s0, %s272
      %s274 = smul.u32 64, %s21
      %s275 = smul.u32 8, %s23
      %p276 = scmp.lt.s32.totalorder %s20, 3
      %s277 = scalar_select %p276, %s20, 3
      %p278 = scmp.lt.s32.totalorder %s275, 7
      %s279 = scalar_select %p278, %s275, 7
      %p280 = scmp.lt.s32.totalorder %s22, 0
      %s281 = scalar_select %p280, %s22, 0
      %s282 = sadd.s32 %s281, %s279
      %s283 = smul.addr %s277, 8
      %s284 = sadd.s32 %s282, %s283
      %s285 = smul.addr %s284, 4
      %s286 = scalar_lea.vmem %s1, %s285
      %s287 = smul.u32 8, %s23
      %p288 = scmp.lt.s32.totalorder %s22, 0
      %s289 = scalar_select %p288, %s22, 0
      %s290 = scalar_lea.vmem %s2, %s289
      %s291 = smul.u32 64, %s21
      %p292 = scmp.lt.s32.totalorder %s20, 3
      %s293 = scalar_select %p292, %s20, 3
      %p294 = scmp.lt.s32.totalorder %s291, 63
      %s295 = scalar_select %p294, %s291, 63
      %p296 = scmp.lt.s32.totalorder %s22, 0
      %s297 = scalar_select %p296, %s22, 0
      %s298 = sadd.s32 %s297, %s295
      %s299 = smul.addr %s293, 64
      %s300 = sadd.s32 %s298, %s299
      %s301 = smul.addr %s300, 8
      %s302 = scalar_lea.vmem %s3, %s301
      %s303 = smul.u32 64, %s21
      %p305 = scmp.eq.s32.totalorder %s23, 0
      // Predicated region
      $region33: #{_lambda_.47} parent=31 // pred_check
        %p306 = pneg %p305
      $region34: #{_lambda_.47} parent=31 // pred_check_branch
        %308 = sbr.rel (%p306) target = $region36
      $region35: #{_lambda_.47} parent=31 // pred_region
        %vm309 = vcmask 23552
        %310 = vst.msk [vmem:[#allocation2] sm:$0xff] %vm309, 0.0
        %311 = vst.msk [vmem:[#allocation2 + $0x8] sm:$0xff] %vm309, 0.0
        %312 = vst.msk [vmem:[#allocation2 + $0x10] sm:$0xff] %vm309, 0.0
        %313 = vst.msk [vmem:[#allocation2 + $0x18] sm:$0xff] %vm309, 0.0
        %314 = vst.msk [vmem:[#allocation2 + $0x20] sm:$0xff] %vm309, 0.0
        %315 = vst.msk [vmem:[#allocation2 + $0x28] sm:$0xff] %vm309, 0.0
        %316 = vst.msk [vmem:[#allocation2 + $0x30] sm:$0xff] %vm309, 0.0
        %317 = vst.msk [vmem:[#allocation2 + $0x38] sm:$0xff] %vm309, 0.0
        %318 = vst.msk [vmem:[#allocation2 + $0x40] sm:$0xff] %vm309, 0.0
        %319 = vst.msk [vmem:[#allocation2 + $0x48] sm:$0xff] %vm309, 0.0
        %320 = vst.msk [vmem:[#allocation2 + $0x50] sm:$0xff] %vm309, 0.0
        %321 = vst.msk [vmem:[#allocation2 + $0x58] sm:$0xff] %vm309, 0.0
        %322 = vst.msk [vmem:[#allocation2 + $0x60] sm:$0xff] %vm309, 0.0
        %323 = vst.msk [vmem:[#allocation2 + $0x68] sm:$0xff] %vm309, 0.0
        %324 = vst.msk [vmem:[#allocation2 + $0x70] sm:$0xff] %vm309, 0.0
        %325 = vst.msk [vmem:[#allocation2 + $0x78] sm:$0xff] %vm309, 0.0
        %326 = vst.msk [vmem:[#allocation2 + $0x80] sm:$0xff] %vm309, 0.0
        %327 = vst.msk [vmem:[#allocation2 + $0x88] sm:$0xff] %vm309, 0.0
        %328 = vst.msk [vmem:[#allocation2 + $0x90] sm:$0xff] %vm309, 0.0
        %329 = vst.msk [vmem:[#allocation2 + $0x98] sm:$0xff] %vm309, 0.0
        %330 = vst.msk [vmem:[#allocation2 + $0xa0] sm:$0xff] %vm309, 0.0
        %331 = vst.msk [vmem:[#allocation2 + $0xa8] sm:$0xff] %vm309, 0.0
        %332 = vst.msk [vmem:[#allocation2 + $0xb0] sm:$0xff] %vm309, 0.0
        %333 = vst.msk [vmem:[#allocation2 + $0xb8] sm:$0xff] %vm309, 0.0
        %334 = vst.msk [vmem:[#allocation2 + $0xc0] sm:$0xff] %vm309, 0.0
        %335 = vst.msk [vmem:[#allocation2 + $0xc8] sm:$0xff] %vm309, 0.0
        %336 = vst.msk [vmem:[#allocation2 + $0xd0] sm:$0xff] %vm309, 0.0
        %337 = vst.msk [vmem:[#allocation2 + $0xd8] sm:$0xff] %vm309, 0.0
        %338 = vst.msk [vmem:[#allocation2 + $0xe0] sm:$0xff] %vm309, 0.0
        %339 = vst.msk [vmem:[#allocation2 + $0xe8] sm:$0xff] %vm309, 0.0
        %340 = vst.msk [vmem:[#allocation2 + $0xf0] sm:$0xff] %vm309, 0.0
        %341 = vst.msk [vmem:[#allocation2 + $0xf8] sm:$0xff] %vm309, 0.0
        %342 = vst.msk [vmem:[#allocation2 + $0x100] sm:$0xff] %vm309, 0.0
        %343 = vst.msk [vmem:[#allocation2 + $0x108] sm:$0xff] %vm309, 0.0
        %344 = vst.msk [vmem:[#allocation2 + $0x110] sm:$0xff] %vm309, 0.0
        %345 = vst.msk [vmem:[#allocation2 + $0x118] sm:$0xff] %vm309, 0.0
        %346 = vst.msk [vmem:[#allocation2 + $0x120] sm:$0xff] %vm309, 0.0
        %347 = vst.msk [vmem:[#allocation2 + $0x128] sm:$0xff] %vm309, 0.0
        %348 = vst.msk [vmem:[#allocation2 + $0x130] sm:$0xff] %vm309, 0.0
        %349 = vst.msk [vmem:[#allocation2 + $0x138] sm:$0xff] %vm309, 0.0
        %350 = vst.msk [vmem:[#allocation2 + $0x140] sm:$0xff] %vm309, 0.0
        %351 = vst.msk [vmem:[#allocation2 + $0x148] sm:$0xff] %vm309, 0.0
        %352 = vst.msk [vmem:[#allocation2 + $0x150] sm:$0xff] %vm309, 0.0
        %353 = vst.msk [vmem:[#allocation2 + $0x158] sm:$0xff] %vm309, 0.0
        %354 = vst.msk [vmem:[#allocation2 + $0x160] sm:$0xff] %vm309, 0.0
        %355 = vst.msk [vmem:[#allocation2 + $0x168] sm:$0xff] %vm309, 0.0
        %356 = vst.msk [vmem:[#allocation2 + $0x170] sm:$0xff] %vm309, 0.0
        %357 = vst.msk [vmem:[#allocation2 + $0x178] sm:$0xff] %vm309, 0.0
        %358 = vst.msk [vmem:[#allocation2 + $0x180] sm:$0xff] %vm309, 0.0
        %359 = vst.msk [vmem:[#allocation2 + $0x188] sm:$0xff] %vm309, 0.0
        %360 = vst.msk [vmem:[#allocation2 + $0x190] sm:$0xff] %vm309, 0.0
        %361 = vst.msk [vmem:[#allocation2 + $0x198] sm:$0xff] %vm309, 0.0
        %362 = vst.msk [vmem:[#allocation2 + $0x1a0] sm:$0xff] %vm309, 0.0
        %363 = vst.msk [vmem:[#allocation2 + $0x1a8] sm:$0xff] %vm309, 0.0
        %364 = vst.msk [vmem:[#allocation2 + $0x1b0] sm:$0xff] %vm309, 0.0
        %365 = vst.msk [vmem:[#allocation2 + $0x1b8] sm:$0xff] %vm309, 0.0
        %366 = vst.msk [vmem:[#allocation2 + $0x1c0] sm:$0xff] %vm309, 0.0
        %367 = vst.msk [vmem:[#allocation2 + $0x1c8] sm:$0xff] %vm309, 0.0
        %368 = vst.msk [vmem:[#allocation2 + $0x1d0] sm:$0xff] %vm309, 0.0
        %369 = vst.msk [vmem:[#allocation2 + $0x1d8] sm:$0xff] %vm309, 0.0
        %370 = vst.msk [vmem:[#allocation2 + $0x1e0] sm:$0xff] %vm309, 0.0
        %371 = vst.msk [vmem:[#allocation2 + $0x1e8] sm:$0xff] %vm309, 0.0
        %372 = vst.msk [vmem:[#allocation2 + $0x1f0] sm:$0xff] %vm309, 0.0
        %373 = vst.msk [vmem:[#allocation2 + $0x1f8] sm:$0xff] %vm309, 0.0
      $region36: #{_lambda_.47} parent=31 // pred_fallthru
        _
      %v374 = vld [vmem:[%s273] sm:$0xf]
      %v375 = vld [vmem:[%s273 + $0x4] sm:$0xf]
      %v376 = vld [vmem:[%s273 + $0x8] sm:$0xf]
      %v377 = vld [vmem:[%s273 + $0xc] sm:$0xf]
      %v378 = vld [vmem:[%s273 + $0x10] sm:$0xf]
      %v379 = vld [vmem:[%s273 + $0x14] sm:$0xf]
      %v380 = vld [vmem:[%s273 + $0x18] sm:$0xf]
      %v381 = vld [vmem:[%s273 + $0x1c] sm:$0xf]
      %v382 = vld [vmem:[%s273 + $0x20] sm:$0xf]
      %v383 = vld [vmem:[%s273 + $0x24] sm:$0xf]
      %v384 = vld [vmem:[%s273 + $0x28] sm:$0xf]
      %v385 = vld [vmem:[%s273 + $0x2c] sm:$0xf]
      %v386 = vld [vmem:[%s273 + $0x30] sm:$0xf]
      %v387 = vld [vmem:[%s273 + $0x34] sm:$0xf]
      %v388 = vld [vmem:[%s273 + $0x38] sm:$0xf]
      %v389 = vld [vmem:[%s273 + $0x3c] sm:$0xf]
      %v390 = vld [vmem:[%s273 + $0x40] sm:$0xf]
      %v391 = vld [vmem:[%s273 + $0x44] sm:$0xf]
      %v392 = vld [vmem:[%s273 + $0x48] sm:$0xf]
      %v393 = vld [vmem:[%s273 + $0x4c] sm:$0xf]
      %v394 = vld [vmem:[%s273 + $0x50] sm:$0xf]
      %v395 = vld [vmem:[%s273 + $0x54] sm:$0xf]
      %v396 = vld [vmem:[%s273 + $0x58] sm:$0xf]
      %v397 = vld [vmem:[%s273 + $0x5c] sm:$0xf]
      %v398 = vld [vmem:[%s273 + $0x60] sm:$0xf]
      %v399 = vld [vmem:[%s273 + $0x64] sm:$0xf]
      %v400 = vld [vmem:[%s273 + $0x68] sm:$0xf]
      %v401 = vld [vmem:[%s273 + $0x6c] sm:$0xf]
      %v402 = vld [vmem:[%s273 + $0x70] sm:$0xf]
      %v403 = vld [vmem:[%s273 + $0x74] sm:$0xf]
      %v404 = vld [vmem:[%s273 + $0x78] sm:$0xf]
      %v405 = vld [vmem:[%s273 + $0x7c] sm:$0xf]
      %v406 = vld [vmem:[%s273 + $0x80] sm:$0xf]
      %v407 = vld [vmem:[%s273 + $0x84] sm:$0xf]
      %v408 = vld [vmem:[%s273 + $0x88] sm:$0xf]
      %v409 = vld [vmem:[%s273 + $0x8c] sm:$0xf]
      %v410 = vld [vmem:[%s273 + $0x90] sm:$0xf]
      %v411 = vld [vmem:[%s273 + $0x94] sm:$0xf]
      %v412 = vld [vmem:[%s273 + $0x98] sm:$0xf]
      %v413 = vld [vmem:[%s273 + $0x9c] sm:$0xf]
      %v414 = vld [vmem:[%s273 + $0xa0] sm:$0xf]
      %v415 = vld [vmem:[%s273 + $0xa4] sm:$0xf]
      %v416 = vld [vmem:[%s273 + $0xa8] sm:$0xf]
      %v417 = vld [vmem:[%s273 + $0xac] sm:$0xf]
      %v418 = vld [vmem:[%s273 + $0xb0] sm:$0xf]
      %v419 = vld [vmem:[%s273 + $0xb4] sm:$0xf]
      %v420 = vld [vmem:[%s273 + $0xb8] sm:$0xf]
      %v421 = vld [vmem:[%s273 + $0xbc] sm:$0xf]
      %v422 = vld [vmem:[%s273 + $0xc0] sm:$0xf]
      %v423 = vld [vmem:[%s273 + $0xc4] sm:$0xf]
      %v424 = vld [vmem:[%s273 + $0xc8] sm:$0xf]
      %v425 = vld [vmem:[%s273 + $0xcc] sm:$0xf]
      %v426 = vld [vmem:[%s273 + $0xd0] sm:$0xf]
      %v427 = vld [vmem:[%s273 + $0xd4] sm:$0xf]
      %v428 = vld [vmem:[%s273 + $0xd8] sm:$0xf]
      %v429 = vld [vmem:[%s273 + $0xdc] sm:$0xf]
      %v430 = vld [vmem:[%s273 + $0xe0] sm:$0xf]
      %v431 = vld [vmem:[%s273 + $0xe4] sm:$0xf]
      %v432 = vld [vmem:[%s273 + $0xe8] sm:$0xf]
      %v433 = vld [vmem:[%s273 + $0xec] sm:$0xf]
      %v434 = vld [vmem:[%s273 + $0xf0] sm:$0xf]
      %v435 = vld [vmem:[%s273 + $0xf4] sm:$0xf]
      %v436 = vld [vmem:[%s273 + $0xf8] sm:$0xf]
      %v437 = vld [vmem:[%s273 + $0xfc] sm:$0xf]
      %v438 = vmax.bf16 %v374, 0
      %v439 = vmax.bf16 %v375, 0
      %v440 = vmax.bf16 %v376, 0
      %v441 = vmax.bf16 %v377, 0
      %v442 = vmax.bf16 %v378, 0
      %v443 = vmax.bf16 %v379, 0
      %v444 = vmax.bf16 %v380, 0
      %v445 = vmax.bf16 %v381, 0
      %v446 = vmax.bf16 %v382, 0
      %v447 = vmax.bf16 %v383, 0
      %v448 = vmax.bf16 %v384, 0
      %v449 = vmax.bf16 %v385, 0
      %v450 = vmax.bf16 %v386, 0
      %v451 = vmax.bf16 %v387, 0
      %v452 = vmax.bf16 %v388, 0
      %v453 = vmax.bf16 %v389, 0
      %v454 = vmax.bf16 %v390, 0
      %v455 = vmax.bf16 %v391, 0
      %v456 = vmax.bf16 %v392, 0
      %v457 = vmax.bf16 %v393, 0
      %v458 = vmax.bf16 %v394, 0
      %v459 = vmax.bf16 %v395, 0
      %v460 = vmax.bf16 %v396, 0
      %v461 = vmax.bf16 %v397, 0
      %v462 = vmax.bf16 %v398, 0
      %v463 = vmax.bf16 %v399, 0
      %v464 = vmax.bf16 %v400, 0
      %v465 = vmax.bf16 %v401, 0
      %v466 = vmax.bf16 %v402, 0
      %v467 = vmax.bf16 %v403, 0
      %v468 = vmax.bf16 %v404, 0
      %v469 = vmax.bf16 %v405, 0
      %v470 = vmax.bf16 %v406, 0
      %v471 = vmax.bf16 %v407, 0
      %v472 = vmax.bf16 %v408, 0
      %v473 = vmax.bf16 %v409, 0
      %v474 = vmax.bf16 %v410, 0
      %v475 = vmax.bf16 %v411, 0
      %v476 = vmax.bf16 %v412, 0
      %v477 = vmax.bf16 %v413, 0
      %v478 = vmax.bf16 %v414, 0
      %v479 = vmax.bf16 %v415, 0
      %v480 = vmax.bf16 %v416, 0
      %v481 = vmax.bf16 %v417, 0
      %v482 = vmax.bf16 %v418, 0
      %v483 = vmax.bf16 %v419, 0
      %v484 = vmax.bf16 %v420, 0
      %v485 = vmax.bf16 %v421, 0
      %v486 = vmax.bf16 %v422, 0
      %v487 = vmax.bf16 %v423, 0
      %v488 = vmax.bf16 %v424, 0
      %v489 = vmax.bf16 %v425, 0
      %v490 = vmax.bf16 %v426, 0
      %v491 = vmax.bf16 %v427, 0
      %v492 = vmax.bf16 %v428, 0
      %v493 = vmax.bf16 %v429, 0
      %v494 = vmax.bf16 %v430, 0
      %v495 = vmax.bf16 %v431, 0
      %v496 = vmax.bf16 %v432, 0
      %v497 = vmax.bf16 %v433, 0
      %v498 = vmax.bf16 %v434, 0
      %v499 = vmax.bf16 %v435, 0
      %v500 = vmax.bf16 %v436, 0
      %v501 = vmax.bf16 %v437, 0
      %v502 = vld [vmem:[#allocation2] sm:$0xff]
      %v503 = vld [vmem:[#allocation2 + $0x8] sm:$0xff]
      %v504 = vld [vmem:[#allocation2 + $0x10] sm:$0xff]
      %v505 = vld [vmem:[#allocation2 + $0x18] sm:$0xff]
      %v506 = vld [vmem:[#allocation2 + $0x20] sm:$0xff]
      %v507 = vld [vmem:[#allocation2 + $0x28] sm:$0xff]
      %v508 = vld [vmem:[#allocation2 + $0x30] sm:$0xff]
      %v509 = vld [vmem:[#allocation2 + $0x38] sm:$0xff]
      %v510 = vld [vmem:[#allocation2 + $0x40] sm:$0xff]
      %v511 = vld [vmem:[#allocation2 + $0x48] sm:$0xff]
      %v512 = vld [vmem:[#allocation2 + $0x50] sm:$0xff]
      %v513 = vld [vmem:[#allocation2 + $0x58] sm:$0xff]
      %v514 = vld [vmem:[#allocation2 + $0x60] sm:$0xff]
      %v515 = vld [vmem:[#allocation2 + $0x68] sm:$0xff]
      %v516 = vld [vmem:[#allocation2 + $0x70] sm:$0xff]
      %v517 = vld [vmem:[#allocation2 + $0x78] sm:$0xff]
      %v518 = vld [vmem:[#allocation2 + $0x80] sm:$0xff]
      %v519 = vld [vmem:[#allocation2 + $0x88] sm:$0xff]
      %v520 = vld [vmem:[#allocation2 + $0x90] sm:$0xff]
      %v521 = vld [vmem:[#allocation2 + $0x98] sm:$0xff]
      %v522 = vld [vmem:[#allocation2 + $0xa0] sm:$0xff]
      %v523 = vld [vmem:[#allocation2 + $0xa8] sm:$0xff]
      %v524 = vld [vmem:[#allocation2 + $0xb0] sm:$0xff]
      %v525 = vld [vmem:[#allocation2 + $0xb8] sm:$0xff]
      %v526 = vld [vmem:[#allocation2 + $0xc0] sm:$0xff]
      %v527 = vld [vmem:[#allocation2 + $0xc8] sm:$0xff]
      %v528 = vld [vmem:[#allocation2 + $0xd0] sm:$0xff]
      %v529 = vld [vmem:[#allocation2 + $0xd8] sm:$0xff]
      %v530 = vld [vmem:[#allocation2 + $0xe0] sm:$0xff]
      %v531 = vld [vmem:[#allocation2 + $0xe8] sm:$0xff]
      %v532 = vld [vmem:[#allocation2 + $0xf0] sm:$0xff]
      %v533 = vld [vmem:[#allocation2 + $0xf8] sm:$0xff]
      %v534 = vld [vmem:[#allocation2 + $0x100] sm:$0xff]
      %v535 = vld [vmem:[#allocation2 + $0x108] sm:$0xff]
      %v536 = vld [vmem:[#allocation2 + $0x110] sm:$0xff]
      %v537 = vld [vmem:[#allocation2 + $0x118] sm:$0xff]
      %v538 = vld [vmem:[#allocation2 + $0x120] sm:$0xff]
      %v539 = vld [vmem:[#allocation2 + $0x128] sm:$0xff]
      %v540 = vld [vmem:[#allocation2 + $0x130] sm:$0xff]
      %v541 = vld [vmem:[#allocation2 + $0x138] sm:$0xff]
      %v542 = vld [vmem:[#allocation2 + $0x140] sm:$0xff]
      %v543 = vld [vmem:[#allocation2 + $0x148] sm:$0xff]
      %v544 = vld [vmem:[#allocation2 + $0x150] sm:$0xff]
      %v545 = vld [vmem:[#allocation2 + $0x158] sm:$0xff]
      %v546 = vld [vmem:[#allocation2 + $0x160] sm:$0xff]
      %v547 = vld [vmem:[#allocation2 + $0x168] sm:$0xff]
      %v548 = vld [vmem:[#allocation2 + $0x170] sm:$0xff]
      %v549 = vld [vmem:[#allocation2 + $0x178] sm:$0xff]
      %v550 = vld [vmem:[#allocation2 + $0x180] sm:$0xff]
      %v551 = vld [vmem:[#allocation2 + $0x188] sm:$0xff]
      %v552 = vld [vmem:[#allocation2 + $0x190] sm:$0xff]
      %v553 = vld [vmem:[#allocation2 + $0x198] sm:$0xff]
      %v554 = vld [vmem:[#allocation2 + $0x1a0] sm:$0xff]
      %v555 = vld [vmem:[#allocation2 + $0x1a8] sm:$0xff]
      %v556 = vld [vmem:[#allocation2 + $0x1b0] sm:$0xff]
      %v557 = vld [vmem:[#allocation2 + $0x1b8] sm:$0xff]
      %v558 = vld [vmem:[#allocation2 + $0x1c0] sm:$0xff]
      %v559 = vld [vmem:[#allocation2 + $0x1c8] sm:$0xff]
      %v560 = vld [vmem:[#allocation2 + $0x1d0] sm:$0xff]
      %v561 = vld [vmem:[#allocation2 + $0x1d8] sm:$0xff]
      %v562 = vld [vmem:[#allocation2 + $0x1e0] sm:$0xff]
      %v563 = vld [vmem:[#allocation2 + $0x1e8] sm:$0xff]
      %v564 = vld [vmem:[#allocation2 + $0x1f0] sm:$0xff]
      %v565 = vld [vmem:[#allocation2 + $0x1f8] sm:$0xff]
      %v566 = vld [vmem:[%s286] sm:$0xf]
      %v567 = vld [vmem:[%s286 + $0x4] sm:$0xf]
      %v568 = vld [vmem:[%s286 + $0x8] sm:$0xf]
      %v569 = vld [vmem:[%s286 + $0xc] sm:$0xf]
      %v570 = vld [vmem:[%s286 + $0x10] sm:$0xf]
      %v571 = vld [vmem:[%s286 + $0x14] sm:$0xf]
      %v572 = vld [vmem:[%s286 + $0x18] sm:$0xf]
      %v573 = vld [vmem:[%s286 + $0x1c] sm:$0xf]
      %v638 = vunpack.c.l.b16 %v438
      %v639 = vunpack.c.l.b16 %v439
      %v640 = vunpack.c.l.b16 %v440
      %v641 = vunpack.c.l.b16 %v441
      %v642 = vunpack.c.l.b16 %v442
      %v643 = vunpack.c.l.b16 %v443
      %v644 = vunpack.c.l.b16 %v444
      %v645 = vunpack.c.l.b16 %v445
      %v646 = vunpack.c.l.b16 %v446
      %v647 = vunpack.c.l.b16 %v447
      %v648 = vunpack.c.l.b16 %v448
      %v649 = vunpack.c.l.b16 %v449
      %v650 = vunpack.c.l.b16 %v450
      %v651 = vunpack.c.l.b16 %v451
      %v652 = vunpack.c.l.b16 %v452
      %v653 = vunpack.c.l.b16 %v453
      %v654 = vunpack.c.l.b16 %v454
      %v655 = vunpack.c.l.b16 %v455
      %v656 = vunpack.c.l.b16 %v456
      %v657 = vunpack.c.l.b16 %v457
      %v658 = vunpack.c.l.b16 %v458
      %v659 = vunpack.c.l.b16 %v459
      %v660 = vunpack.c.l.b16 %v460
      %v661 = vunpack.c.l.b16 %v461
      %v662 = vunpack.c.l.b16 %v462
      %v663 = vunpack.c.l.b16 %v463
      %v664 = vunpack.c.l.b16 %v464
      %v665 = vunpack.c.l.b16 %v465
      %v666 = vunpack.c.l.b16 %v466
      %v667 = vunpack.c.l.b16 %v467
      %v668 = vunpack.c.l.b16 %v468
      %v669 = vunpack.c.l.b16 %v469
      %v670 = vunpack.c.l.b16 %v470
      %v671 = vunpack.c.l.b16 %v471
      %v672 = vunpack.c.l.b16 %v472
      %v673 = vunpack.c.l.b16 %v473
      %v674 = vunpack.c.l.b16 %v474
      %v675 = vunpack.c.l.b16 %v475
      %v676 = vunpack.c.l.b16 %v476
      %v677 = vunpack.c.l.b16 %v477
      %v678 = vunpack.c.l.b16 %v478
      %v679 = vunpack.c.l.b16 %v479
      %v680 = vunpack.c.l.b16 %v480
      %v681 = vunpack.c.l.b16 %v481
      %v682 = vunpack.c.l.b16 %v482
      %v683 = vunpack.c.l.b16 %v483
      %v684 = vunpack.c.l.b16 %v484
      %v685 = vunpack.c.l.b16 %v485
      %v686 = vunpack.c.l.b16 %v486
      %v687 = vunpack.c.l.b16 %v487
      %v688 = vunpack.c.l.b16 %v488
      %v689 = vunpack.c.l.b16 %v489
      %v690 = vunpack.c.l.b16 %v490
      %v691 = vunpack.c.l.b16 %v491
      %v692 = vunpack.c.l.b16 %v492
      %v693 = vunpack.c.l.b16 %v493
      %v694 = vunpack.c.l.b16 %v494
      %v695 = vunpack.c.l.b16 %v495
      %v696 = vunpack.c.l.b16 %v496
      %v697 = vunpack.c.l.b16 %v497
      %v698 = vunpack.c.l.b16 %v498
      %v699 = vunpack.c.l.b16 %v499
      %v700 = vunpack.c.l.b16 %v500
      %v701 = vunpack.c.l.b16 %v501
      %v702 = vpack.c.b16 %v639, %v638
      %v703 = vpack.c.b16 %v641, %v640
      %v704 = vpack.c.b16 %v643, %v642
      %v705 = vpack.c.b16 %v645, %v644
      %v706 = vpack.c.b16 %v647, %v646
      %v707 = vpack.c.b16 %v649, %v648
      %v708 = vpack.c.b16 %v651, %v650
      %v709 = vpack.c.b16 %v653, %v652
      %v710 = vpack.c.b16 %v655, %v654
      %v711 = vpack.c.b16 %v657, %v656
      %v712 = vpack.c.b16 %v659, %v658
      %v713 = vpack.c.b16 %v661, %v660
      %v714 = vpack.c.b16 %v663, %v662
      %v715 = vpack.c.b16 %v665, %v664
      %v716 = vpack.c.b16 %v667, %v666
      %v717 = vpack.c.b16 %v669, %v668
      %v718 = vpack.c.b16 %v671, %v670
      %v719 = vpack.c.b16 %v673, %v672
      %v720 = vpack.c.b16 %v675, %v674
      %v721 = vpack.c.b16 %v677, %v676
      %v722 = vpack.c.b16 %v679, %v678
      %v723 = vpack.c.b16 %v681, %v680
      %v724 = vpack.c.b16 %v683, %v682
      %v725 = vpack.c.b16 %v685, %v684
      %v726 = vpack.c.b16 %v687, %v686
      %v727 = vpack.c.b16 %v689, %v688
      %v728 = vpack.c.b16 %v691, %v690
      %v729 = vpack.c.b16 %v693, %v692
      %v730 = vpack.c.b16 %v695, %v694
      %v731 = vpack.c.b16 %v697, %v696
      %v732 = vpack.c.b16 %v699, %v698
      %v733 = vpack.c.b16 %v701, %v700
      %v742 = vunpack.c.l.b16 %v566
      %v743 = vunpack.c.l.b16 %v567
      %v744 = vunpack.c.l.b16 %v568
      %v745 = vunpack.c.l.b16 %v569
      %v746 = vunpack.c.l.b16 %v570
      %v747 = vunpack.c.l.b16 %v571
      %v748 = vunpack.c.l.b16 %v572
      %v749 = vunpack.c.l.b16 %v573
      %v750 = vpack.c.b16 %v743, %v742
      %v751 = vpack.c.b16 %v745, %v744
      %v752 = vpack.c.b16 %v747, %v746
      %v753 = vpack.c.b16 %v749, %v748
      %vm758 = vcmask 523264
      %v760 = vsel %vm758, %v702, 0
      %v763 = vsel %vm758, %v703, 0
      %v766 = vsel %vm758, %v704, 0
      %v769 = vsel %vm758, %v705, 0
      %v772 = vsel %vm758, %v706, 0
      %v775 = vsel %vm758, %v707, 0
      %v778 = vsel %vm758, %v708, 0
      %v781 = vsel %vm758, %v709, 0
      %v784 = vsel %vm758, %v710, 0
      %v787 = vsel %vm758, %v711, 0
      %v790 = vsel %vm758, %v712, 0
      %v793 = vsel %vm758, %v713, 0
      %v796 = vsel %vm758, %v714, 0
      %v799 = vsel %vm758, %v715, 0
      %v802 = vsel %vm758, %v716, 0
      %v805 = vsel %vm758, %v717, 0
      %v808 = vsel %vm758, %v718, 0
      %v811 = vsel %vm758, %v719, 0
      %v814 = vsel %vm758, %v720, 0
      %v817 = vsel %vm758, %v721, 0
      %v820 = vsel %vm758, %v722, 0
      %v823 = vsel %vm758, %v723, 0
      %v826 = vsel %vm758, %v724, 0
      %v829 = vsel %vm758, %v725, 0
      %v832 = vsel %vm758, %v726, 0
      %v835 = vsel %vm758, %v727, 0
      %v838 = vsel %vm758, %v728, 0
      %v841 = vsel %vm758, %v729, 0
      %v844 = vsel %vm758, %v730, 0
      %v847 = vsel %vm758, %v731, 0
      %v850 = vsel %vm758, %v732, 0
      %v853 = vsel %vm758, %v733, 0
      %855 = vmatprep.subr.bf16.mxu0 0
      %856 = vmatpush1.bf16.msra.mxu0 %v750
      %857 = vmatprep.subr.bf16.mxu0 0
      %858 = vmatpush1.bf16.msra.mxu0 %v751
      %859 = vmatprep.subr.bf16.mxu0 0
      %860 = vmatpush1.bf16.msra.mxu0 %v752
      %861 = vmatprep.subr.bf16.mxu0 0
      %862 = vmatpush1.bf16.msra.mxu0 %v753
      %863 = vmatprep.subr.bf16.mxu0 0
      %864 = vmatpush1.bf16.msra.mxu0 0
      %865 = vmatprep.subr.bf16.mxu0 0
      %866 = vmatpush1.bf16.msra.mxu0 0
      %867 = vmatprep.subr.bf16.mxu0 0
      %868 = vmatpush1.bf16.msra.mxu0 0
      %869 = vmatprep.subr.bf16.mxu0 0
      %870 = vmatpush1.bf16.msra.mxu0 0
      %871 = vmatprep.subr.bf16.mxu0 0
      %872 = vmatpush1.bf16.msra.mxu0 0
      %873 = vmatprep.subr.bf16.mxu0 0
      %874 = vmatpush1.bf16.msra.mxu0 0
      %875 = vmatprep.subr.bf16.mxu0 0
      %876 = vmatpush1.bf16.msra.mxu0 0
      %877 = vmatprep.subr.bf16.mxu0 0
      %878 = vmatpush1.bf16.msra.mxu0 0
      %879 = vmatprep.subr.bf16.mxu0 0
      %880 = vmatpush1.bf16.msra.mxu0 0
      %881 = vmatprep.subr.bf16.mxu0 0
      %882 = vmatpush1.bf16.msra.mxu0 0
      %883 = vmatprep.subr.bf16.mxu0 0
      %884 = vmatpush1.bf16.msra.mxu0 0
      %885 = vmatprep.subr.bf16.mxu0 0
      %886 = vmatpush1.bf16.msra.mxu0 0
      %887 = vmatprep.mubr.bf16.mxu0 0
      %888 = vmatmul.mubr.bf16.gmra.mrb[0].mxu0 %v760
      %v889 = vpop.f32.mrb[0].mxu0
      %v890 = vadd.f32 0.0, %v889
      %v891 = vpop.f32.mrb[0].mxu0
      %v892 = vpop.f32.mrb[0].mxu0
      %v893 = vadd.f32 0.0, %v892
      %v894 = vpop.f32.mrb[0].mxu0
      %895 = vmatprep.mubr.bf16.mxu0 0
      %896 = vmatmul.mubr.bf16.gmra.mrb[0].mxu0 %v763
      %v897 = vpop.f32.mrb[0].mxu0
      %v898 = vadd.f32 0.0, %v897
      %v899 = vpop.f32.mrb[0].mxu0
      %v900 = vpop.f32.mrb[0].mxu0
      %v901 = vadd.f32 0.0, %v900
      %v902 = vpop.f32.mrb[0].mxu0
      %903 = vmatprep.mubr.bf16.mxu0 0
      %904 = vmatmul.mubr.bf16.gmra.mrb[0].mxu0 %v766
      %v905 = vpop.f32.mrb[0].mxu0
      %v906 = vadd.f32 0.0, %v905
      %v907 = vpop.f32.mrb[0].mxu0
      %v908 = vpop.f32.mrb[0].mxu0
      %v909 = vadd.f32 0.0, %v908
      %v910 = vpop.f32.mrb[0].mxu0
      %911 = vmatprep.mubr.bf16.mxu0 0
      %912 = vmatmul.mubr.bf16.gmra.mrb[0].mxu0 %v769
      %v913 = vpop.f32.mrb[0].mxu0
      %v914 = vadd.f32 0.0, %v913
      %v915 = vpop.f32.mrb[0].mxu0
      %v916 = vpop.f32.mrb[0].mxu0
      %v917 = vadd.f32 0.0, %v916
      %v918 = vpop.f32.mrb[0].mxu0
      %919 = vmatprep.mubr.bf16.mxu0 0
      %920 = vmatmul.mubr.bf16.gmra.mrb[0].mxu0 %v772
      %v921 = vpop.f32.mrb[0].mxu0
      %v922 = vadd.f32 0.0, %v921
      %v923 = vpop.f32.mrb[0].mxu0
      %v924 = vpop.f32.mrb[0].mxu0
      %v925 = vadd.f32 0.0, %v924
      %v926 = vpop.f32.mrb[0].mxu0
      %927 = vmatprep.mubr.bf16.mxu0 0
      %928 = vmatmul.mubr.bf16.gmra.mrb[0].mxu0 %v775
      %v929 = vpop.f32.mrb[0].mxu0
      %v930 = vadd.f32 0.0, %v929
      %v931 = vpop.f32.mrb[0].mxu0
      %v932 = vpop.f32.mrb[0].mxu0
      %v933 = vadd.f32 0.0, %v932
      %v934 = vpop.f32.mrb[0].mxu0
      %935 = vmatprep.mubr.bf16.mxu0 0
      %936 = vmatmul.mubr.bf16.gmra.mrb[0].mxu0 %v778
      %v937 = vpop.f32.mrb[0].mxu0
      %v938 = vadd.f32 0.0, %v937
      %v939 = vpop.f32.mrb[0].mxu0
      %v940 = vpop.f32.mrb[0].mxu0
      %v941 = vadd.f32 0.0, %v940
      %v942 = vpop.f32.mrb[0].mxu0
      %943 = vmatprep.mubr.bf16.mxu0 0
      %944 = vmatmul.mubr.bf16.gmra.mrb[0].mxu0 %v781
      %v945 = vpop.f32.mrb[0].mxu0
      %v946 = vadd.f32 0.0, %v945
      %v947 = vpop.f32.mrb[0].mxu0
      %v948 = vpop.f32.mrb[0].mxu0
      %v949 = vadd.f32 0.0, %v948
      %v950 = vpop.f32.mrb[0].mxu0
      %951 = vmatprep.mubr.bf16.mxu0 0
      %952 = vmatmul.mubr.bf16.gmra.mrb[0].mxu0 %v784
      %v953 = vpop.f32.mrb[0].mxu0
      %v954 = vadd.f32 0.0, %v953
      %v955 = vpop.f32.mrb[0].mxu0
      %v956 = vpop.f32.mrb[0].mxu0
      %v957 = vadd.f32 0.0, %v956
      %v958 = vpop.f32.mrb[0].mxu0
      %959 = vmatprep.mubr.bf16.mxu0 0
      %960 = vmatmul.mubr.bf16.gmra.mrb[0].mxu0 %v787
      %v961 = vpop.f32.mrb[0].mxu0
      %v962 = vadd.f32 0.0, %v961
      %v963 = vpop.f32.mrb[0].mxu0
      %v964 = vpop.f32.mrb[0].mxu0
      %v965 = vadd.f32 0.0, %v964
      %v966 = vpop.f32.mrb[0].mxu0
      %967 = vmatprep.mubr.bf16.mxu0 0
      %968 = vmatmul.mubr.bf16.gmra.mrb[0].mxu0 %v790
      %v969 = vpop.f32.mrb[0].mxu0
      %v970 = vadd.f32 0.0, %v969
      %v971 = vpop.f32.mrb[0].mxu0
      %v972 = vpop.f32.mrb[0].mxu0
      %v973 = vadd.f32 0.0, %v972
      %v974 = vpop.f32.mrb[0].mxu0
      %975 = vmatprep.mubr.bf16.mxu0 0
      %976 = vmatmul.mubr.bf16.gmra.mrb[0].mxu0 %v793
      %v977 = vpop.f32.mrb[0].mxu0
      %v978 = vadd.f32 0.0, %v977
      %v979 = vpop.f32.mrb[0].mxu0
      %v980 = vpop.f32.mrb[0].mxu0
      %v981 = vadd.f32 0.0, %v980
      %v982 = vpop.f32.mrb[0].mxu0
      %983 = vmatprep.mubr.bf16.mxu0 0
      %984 = vmatmul.mubr.bf16.gmra.mrb[0].mxu0 %v796
      %v985 = vpop.f32.mrb[0].mxu0
      %v986 = vadd.f32 0.0, %v985
      %v987 = vpop.f32.mrb[0].mxu0
      %v988 = vpop.f32.mrb[0].mxu0
      %v989 = vadd.f32 0.0, %v988
      %v990 = vpop.f32.mrb[0].mxu0
      %991 = vmatprep.mubr.bf16.mxu0 0
      %992 = vmatmul.mubr.bf16.gmra.mrb[0].mxu0 %v799
      %v993 = vpop.f32.mrb[0].mxu0
      %v994 = vadd.f32 0.0, %v993
      %v995 = vpop.f32.mrb[0].mxu0
      %v996 = vpop.f32.mrb[0].mxu0
      %v997 = vadd.f32 0.0, %v996
      %v998 = vpop.f32.mrb[0].mxu0
      %999 = vmatprep.mubr.bf16.mxu0 0
      %1000 = vmatmul.mubr.bf16.gmra.mrb[0].mxu0 %v802
      %v1001 = vpop.f32.mrb[0].mxu0
      %v1002 = vadd.f32 0.0, %v1001
      %v1003 = vpop.f32.mrb[0].mxu0
      %v1004 = vpop.f32.mrb[0].mxu0
      %v1005 = vadd.f32 0.0, %v1004
      %v1006 = vpop.f32.mrb[0].mxu0
      %1007 = vmatprep.mubr.bf16.mxu0 0
      %1008 = vmatmul.mubr.bf16.gmra.mrb[0].mxu0 %v805
      %v1009 = vpop.f32.mrb[0].mxu0
      %v1010 = vadd.f32 0.0, %v1009
      %v1011 = vpop.f32.mrb[0].mxu0
      %v1012 = vpop.f32.mrb[0].mxu0
      %v1013 = vadd.f32 0.0, %v1012
      %v1014 = vpop.f32.mrb[0].mxu0
      %1015 = vmatprep.mubr.bf16.mxu0 0
      %1016 = vmatmul.mubr.bf16.gmra.mrb[0].mxu0 %v808
      %v1017 = vpop.f32.mrb[0].mxu0
      %v1018 = vadd.f32 0.0, %v1017
      %v1019 = vpop.f32.mrb[0].mxu0
      %v1020 = vpop.f32.mrb[0].mxu0
      %v1021 = vadd.f32 0.0, %v1020
      %v1022 = vpop.f32.mrb[0].mxu0
      %1023 = vmatprep.mubr.bf16.mxu0 0
      %1024 = vmatmul.mubr.bf16.gmra.mrb[0].mxu0 %v811
      %v1025 = vpop.f32.mrb[0].mxu0
      %v1026 = vadd.f32 0.0, %v1025
      %v1027 = vpop.f32.mrb[0].mxu0
      %v1028 = vpop.f32.mrb[0].mxu0
      %v1029 = vadd.f32 0.0, %v1028
      %v1030 = vpop.f32.mrb[0].mxu0
      %1031 = vmatprep.mubr.bf16.mxu0 0
      %1032 = vmatmul.mubr.bf16.gmra.mrb[0].mxu0 %v814
      %v1033 = vpop.f32.mrb[0].mxu0
      %v1034 = vadd.f32 0.0, %v1033
      %v1035 = vpop.f32.mrb[0].mxu0
      %v1036 = vpop.f32.mrb[0].mxu0
      %v1037 = vadd.f32 0.0, %v1036
      %v1038 = vpop.f32.mrb[0].mxu0
      %1039 = vmatprep.mubr.bf16.mxu0 0
      %1040 = vmatmul.mubr.bf16.gmra.mrb[0].mxu0 %v817
      %v1041 = vpop.f32.mrb[0].mxu0
      %v1042 = vadd.f32 0.0, %v1041
      %v1043 = vpop.f32.mrb[0].mxu0
      %v1044 = vpop.f32.mrb[0].mxu0
      %v1045 = vadd.f32 0.0, %v1044
      %v1046 = vpop.f32.mrb[0].mxu0
      %1047 = vmatprep.mubr.bf16.mxu0 0
      %1048 = vmatmul.mubr.bf16.gmra.mrb[0].mxu0 %v820
      %v1049 = vpop.f32.mrb[0].mxu0
      %v1050 = vadd.f32 0.0, %v1049
      %v1051 = vpop.f32.mrb[0].mxu0
      %v1052 = vpop.f32.mrb[0].mxu0
      %v1053 = vadd.f32 0.0, %v1052
      %v1054 = vpop.f32.mrb[0].mxu0
      %1055 = vmatprep.mubr.bf16.mxu0 0
      %1056 = vmatmul.mubr.bf16.gmra.mrb[0].mxu0 %v823
      %v1057 = vpop.f32.mrb[0].mxu0
      %v1058 = vadd.f32 0.0, %v1057
      %v1059 = vpop.f32.mrb[0].mxu0
      %v1060 = vpop.f32.mrb[0].mxu0
      %v1061 = vadd.f32 0.0, %v1060
      %v1062 = vpop.f32.mrb[0].mxu0
      %1063 = vmatprep.mubr.bf16.mxu0 0
      %1064 = vmatmul.mubr.bf16.gmra.mrb[0].mxu0 %v826
      %v1065 = vpop.f32.mrb[0].mxu0
      %v1066 = vadd.f32 0.0, %v1065
      %v1067 = vpop.f32.mrb[0].mxu0
      %v1068 = vpop.f32.mrb[0].mxu0
      %v1069 = vadd.f32 0.0, %v1068
      %v1070 = vpop.f32.mrb[0].mxu0
      %1071 = vmatprep.mubr.bf16.mxu0 0
      %1072 = vmatmul.mubr.bf16.gmra.mrb[0].mxu0 %v829
      %v1073 = vpop.f32.mrb[0].mxu0
      %v1074 = vadd.f32 0.0, %v1073
      %v1075 = vpop.f32.mrb[0].mxu0
      %v1076 = vpop.f32.mrb[0].mxu0
      %v1077 = vadd.f32 0.0, %v1076
      %v1078 = vpop.f32.mrb[0].mxu0
      %1079 = vmatprep.mubr.bf16.mxu0 0
      %1080 = vmatmul.mubr.bf16.gmra.mrb[0].mxu0 %v832
      %v1081 = vpop.f32.mrb[0].mxu0
      %v1082 = vadd.f32 0.0, %v1081
      %v1083 = vpop.f32.mrb[0].mxu0
      %v1084 = vpop.f32.mrb[0].mxu0
      %v1085 = vadd.f32 0.0, %v1084
      %v1086 = vpop.f32.mrb[0].mxu0
      %1087 = vmatprep.mubr.bf16.mxu0 0
      %1088 = vmatmul.mubr.bf16.gmra.mrb[0].mxu0 %v835
      %v1089 = vpop.f32.mrb[0].mxu0
      %v1090 = vadd.f32 0.0, %v1089
      %v1091 = vpop.f32.mrb[0].mxu0
      %v1092 = vpop.f32.mrb[0].mxu0
      %v1093 = vadd.f32 0.0, %v1092
      %v1094 = vpop.f32.mrb[0].mxu0
      %1095 = vmatprep.mubr.bf16.mxu0 0
      %1096 = vmatmul.mubr.bf16.gmra.mrb[0].mxu0 %v838
      %v1097 = vpop.f32.mrb[0].mxu0
      %v1098 = vadd.f32 0.0, %v1097
      %v1099 = vpop.f32.mrb[0].mxu0
      %v1100 = vpop.f32.mrb[0].mxu0
      %v1101 = vadd.f32 0.0, %v1100
      %v1102 = vpop.f32.mrb[0].mxu0
      %1103 = vmatprep.mubr.bf16.mxu0 0
      %1104 = vmatmul.mubr.bf16.gmra.mrb[0].mxu0 %v841
      %v1105 = vpop.f32.mrb[0].mxu0
      %v1106 = vadd.f32 0.0, %v1105
      %v1107 = vpop.f32.mrb[0].mxu0
      %v1108 = vpop.f32.mrb[0].mxu0
      %v1109 = vadd.f32 0.0, %v1108
      %v1110 = vpop.f32.mrb[0].mxu0
      %1111 = vmatprep.mubr.bf16.mxu0 0
      %1112 = vmatmul.mubr.bf16.gmra.mrb[0].mxu0 %v844
      %v1113 = vpop.f32.mrb[0].mxu0
      %v1114 = vadd.f32 0.0, %v1113
      %v1115 = vpop.f32.mrb[0].mxu0
      %v1116 = vpop.f32.mrb[0].mxu0
      %v1117 = vadd.f32 0.0, %v1116
      %v1118 = vpop.f32.mrb[0].mxu0
      %1119 = vmatprep.mubr.bf16.mxu0 0
      %1120 = vmatmul.mubr.bf16.gmra.mrb[0].mxu0 %v847
      %v1121 = vpop.f32.mrb[0].mxu0
      %v1122 = vadd.f32 0.0, %v1121
      %v1123 = vpop.f32.mrb[0].mxu0
      %v1124 = vpop.f32.mrb[0].mxu0
      %v1125 = vadd.f32 0.0, %v1124
      %v1126 = vpop.f32.mrb[0].mxu0
      %1127 = vmatprep.mubr.bf16.mxu0 0
      %1128 = vmatmul.mubr.bf16.gmra.mrb[0].mxu0 %v850
      %v1129 = vpop.f32.mrb[0].mxu0
      %v1130 = vadd.f32 0.0, %v1129
      %v1131 = vpop.f32.mrb[0].mxu0
      %v1132 = vpop.f32.mrb[0].mxu0
      %v1133 = vadd.f32 0.0, %v1132
      %v1134 = vpop.f32.mrb[0].mxu0
      %1135 = vmatprep.mubr.bf16.mxu0 0
      %1136 = vmatmul.mubr.bf16.gmra.mrb[0].mxu0 %v853
      %v1137 = vpop.f32.mrb[0].mxu0
      %v1138 = vadd.f32 0.0, %v1137
      %v1139 = vpop.f32.mrb[0].mxu0
      %v1140 = vpop.f32.mrb[0].mxu0
      %v1141 = vadd.f32 0.0, %v1140
      %v1142 = vpop.f32.mrb[0].mxu0
      %1143 = vdwg.mxu0
      %v1144 = vadd.f32 %v502, %v890
      %v1145 = vadd.f32 %v503, %v893
      %v1146 = vadd.f32 %v504, %v898
      %v1147 = vadd.f32 %v505, %v901
      %v1148 = vadd.f32 %v506, %v906
      %v1149 = vadd.f32 %v507, %v909
      %v1150 = vadd.f32 %v508, %v914
      %v1151 = vadd.f32 %v509, %v917
      %v1152 = vadd.f32 %v510, %v922
      %v1153 = vadd.f32 %v511, %v925
      %v1154 = vadd.f32 %v512, %v930
      %v1155 = vadd.f32 %v513, %v933
      %v1156 = vadd.f32 %v514, %v938
      %v1157 = vadd.f32 %v515, %v941
      %v1158 = vadd.f32 %v516, %v946
      %v1159 = vadd.f32 %v517, %v949
      %v1160 = vadd.f32 %v518, %v954
      %v1161 = vadd.f32 %v519, %v957
      %v1162 = vadd.f32 %v520, %v962
      %v1163 = vadd.f32 %v521, %v965
      %v1164 = vadd.f32 %v522, %v970
      %v1165 = vadd.f32 %v523, %v973
      %v1166 = vadd.f32 %v524, %v978
      %v1167 = vadd.f32 %v525, %v981
      %v1168 = vadd.f32 %v526, %v986
      %v1169 = vadd.f32 %v527, %v989
      %v1170 = vadd.f32 %v528, %v994
      %v1171 = vadd.f32 %v529, %v997
      %v1172 = vadd.f32 %v530, %v1002
      %v1173 = vadd.f32 %v531, %v1005
      %v1174 = vadd.f32 %v532, %v1010
      %v1175 = vadd.f32 %v533, %v1013
      %v1176 = vadd.f32 %v534, %v1018
      %v1177 = vadd.f32 %v535, %v1021
      %v1178 = vadd.f32 %v536, %v1026
      %v1179 = vadd.f32 %v537, %v1029
      %v1180 = vadd.f32 %v538, %v1034
      %v1181 = vadd.f32 %v539, %v1037
      %v1182 = vadd.f32 %v540, %v1042
      %v1183 = vadd.f32 %v541, %v1045
      %v1184 = vadd.f32 %v542, %v1050
      %v1185 = vadd.f32 %v543, %v1053
      %v1186 = vadd.f32 %v544, %v1058
      %v1187 = vadd.f32 %v545, %v1061
      %v1188 = vadd.f32 %v546, %v1066
      %v1189 = vadd.f32 %v547, %v1069
      %v1190 = vadd.f32 %v548, %v1074
      %v1191 = vadd.f32 %v549, %v1077
      %v1192 = vadd.f32 %v550, %v1082
      %v1193 = vadd.f32 %v551, %v1085
      %v1194 = vadd.f32 %v552, %v1090
      %v1195 = vadd.f32 %v553, %v1093
      %v1196 = vadd.f32 %v554, %v1098
      %v1197 = vadd.f32 %v555, %v1101
      %v1198 = vadd.f32 %v556, %v1106
      %v1199 = vadd.f32 %v557, %v1109
      %v1200 = vadd.f32 %v558, %v1114
      %v1201 = vadd.f32 %v559, %v1117
      %v1202 = vadd.f32 %v560, %v1122
      %v1203 = vadd.f32 %v561, %v1125
      %v1204 = vadd.f32 %v562, %v1130
      %v1205 = vadd.f32 %v563, %v1133
      %v1206 = vadd.f32 %v564, %v1138
      %v1207 = vadd.f32 %v565, %v1141
      %vm1208 = vcmask 23552
      %1209 = vst.msk [vmem:[#allocation2] sm:$0xff] %vm1208, %v1144
      %1210 = vst.msk [vmem:[#allocation2 + $0x8] sm:$0xff] %vm1208, %v1145
      %1211 = vst.msk [vmem:[#allocation2 + $0x10] sm:$0xff] %vm1208, %v1146
      %1212 = vst.msk [vmem:[#allocation2 + $0x18] sm:$0xff] %vm1208, %v1147
      %1213 = vst.msk [vmem:[#allocation2 + $0x20] sm:$0xff] %vm1208, %v1148
      %1214 = vst.msk [vmem:[#allocation2 + $0x28] sm:$0xff] %vm1208, %v1149
      %1215 = vst.msk [vmem:[#allocation2 + $0x30] sm:$0xff] %vm1208, %v1150
      %1216 = vst.msk [vmem:[#allocation2 + $0x38] sm:$0xff] %vm1208, %v1151
      %1217 = vst.msk [vmem:[#allocation2 + $0x40] sm:$0xff] %vm1208, %v1152
      %1218 = vst.msk [vmem:[#allocation2 + $0x48] sm:$0xff] %vm1208, %v1153
      %1219 = vst.msk [vmem:[#allocation2 + $0x50] sm:$0xff] %vm1208, %v1154
      %1220 = vst.msk [vmem:[#allocation2 + $0x58] sm:$0xff] %vm1208, %v1155
      %1221 = vst.msk [vmem:[#allocation2 + $0x60] sm:$0xff] %vm1208, %v1156
      %1222 = vst.msk [vmem:[#allocation2 + $0x68] sm:$0xff] %vm1208, %v1157
      %1223 = vst.msk [vmem:[#allocation2 + $0x70] sm:$0xff] %vm1208, %v1158
      %1224 = vst.msk [vmem:[#allocation2 + $0x78] sm:$0xff] %vm1208, %v1159
      %1225 = vst.msk [vmem:[#allocation2 + $0x80] sm:$0xff] %vm1208, %v1160
      %1226 = vst.msk [vmem:[#allocation2 + $0x88] sm:$0xff] %vm1208, %v1161
      %1227 = vst.msk [vmem:[#allocation2 + $0x90] sm:$0xff] %vm1208, %v1162
      %1228 = vst.msk [vmem:[#allocation2 + $0x98] sm:$0xff] %vm1208, %v1163
      %1229 = vst.msk [vmem:[#allocation2 + $0xa0] sm:$0xff] %vm1208, %v1164
      %1230 = vst.msk [vmem:[#allocation2 + $0xa8] sm:$0xff] %vm1208, %v1165
      %1231 = vst.msk [vmem:[#allocation2 + $0xb0] sm:$0xff] %vm1208, %v1166
      %1232 = vst.msk [vmem:[#allocation2 + $0xb8] sm:$0xff] %vm1208, %v1167
      %1233 = vst.msk [vmem:[#allocation2 + $0xc0] sm:$0xff] %vm1208, %v1168
      %1234 = vst.msk [vmem:[#allocation2 + $0xc8] sm:$0xff] %vm1208, %v1169
      %1235 = vst.msk [vmem:[#allocation2 + $0xd0] sm:$0xff] %vm1208, %v1170
      %1236 = vst.msk [vmem:[#allocation2 + $0xd8] sm:$0xff] %vm1208, %v1171
      %1237 = vst.msk [vmem:[#allocation2 + $0xe0] sm:$0xff] %vm1208, %v1172
      %1238 = vst.msk [vmem:[#allocation2 + $0xe8] sm:$0xff] %vm1208, %v1173
      %1239 = vst.msk [vmem:[#allocation2 + $0xf0] sm:$0xff] %vm1208, %v1174
      %1240 = vst.msk [vmem:[#allocation2 + $0xf8] sm:$0xff] %vm1208, %v1175
      %1241 = vst.msk [vmem:[#allocation2 + $0x100] sm:$0xff] %vm1208, %v1176
      %1242 = vst.msk [vmem:[#allocation2 + $0x108] sm:$0xff] %vm1208, %v1177
      %1243 = vst.msk [vmem:[#allocation2 + $0x110] sm:$0xff] %vm1208, %v1178
      %1244 = vst.msk [vmem:[#allocation2 + $0x118] sm:$0xff] %vm1208, %v1179
      %1245 = vst.msk [vmem:[#allocation2 + $0x120] sm:$0xff] %vm1208, %v1180
      %1246 = vst.msk [vmem:[#allocation2 + $0x128] sm:$0xff] %vm1208, %v1181
      %1247 = vst.msk [vmem:[#allocation2 + $0x130] sm:$0xff] %vm1208, %v1182
      %1248 = vst.msk [vmem:[#allocation2 + $0x138] sm:$0xff] %vm1208, %v1183
      %1249 = vst.msk [vmem:[#allocation2 + $0x140] sm:$0xff] %vm1208, %v1184
      %1250 = vst.msk [vmem:[#allocation2 + $0x148] sm:$0xff] %vm1208, %v1185
      %1251 = vst.msk [vmem:[#allocation2 + $0x150] sm:$0xff] %vm1208, %v1186
      %1252 = vst.msk [vmem:[#allocation2 + $0x158] sm:$0xff] %vm1208, %v1187
      %1253 = vst.msk [vmem:[#allocation2 + $0x160] sm:$0xff] %vm1208, %v1188
      %1254 = vst.msk [vmem:[#allocation2 + $0x168] sm:$0xff] %vm1208, %v1189
      %1255 = vst.msk [vmem:[#allocation2 + $0x170] sm:$0xff] %vm1208, %v1190
      %1256 = vst.msk [vmem:[#allocation2 + $0x178] sm:$0xff] %vm1208, %v1191
      %1257 = vst.msk [vmem:[#allocation2 + $0x180] sm:$0xff] %vm1208, %v1192
      %1258 = vst.msk [vmem:[#allocation2 + $0x188] sm:$0xff] %vm1208, %v1193
      %1259 = vst.msk [vmem:[#allocation2 + $0x190] sm:$0xff] %vm1208, %v1194
      %1260 = vst.msk [vmem:[#allocation2 + $0x198] sm:$0xff] %vm1208, %v1195
      %1261 = vst.msk [vmem:[#allocation2 + $0x1a0] sm:$0xff] %vm1208, %v1196
      %1262 = vst.msk [vmem:[#allocation2 + $0x1a8] sm:$0xff] %vm1208, %v1197
      %1263 = vst.msk [vmem:[#allocation2 + $0x1b0] sm:$0xff] %vm1208, %v1198
      %1264 = vst.msk [vmem:[#allocation2 + $0x1b8] sm:$0xff] %vm1208, %v1199
      %1265 = vst.msk [vmem:[#allocation2 + $0x1c0] sm:$0xff] %vm1208, %v1200
      %1266 = vst.msk [vmem:[#allocation2 + $0x1c8] sm:$0xff] %vm1208, %v1201
      %1267 = vst.msk [vmem:[#allocation2 + $0x1d0] sm:$0xff] %vm1208, %v1202
      %1268 = vst.msk [vmem:[#allocation2 + $0x1d8] sm:$0xff] %vm1208, %v1203
      %1269 = vst.msk [vmem:[#allocation2 + $0x1e0] sm:$0xff] %vm1208, %v1204
      %1270 = vst.msk [vmem:[#allocation2 + $0x1e8] sm:$0xff] %vm1208, %v1205
      %1271 = vst.msk [vmem:[#allocation2 + $0x1f0] sm:$0xff] %vm1208, %v1206
      %1272 = vst.msk [vmem:[#allocation2 + $0x1f8] sm:$0xff] %vm1208, %v1207
      // Predicated region
      $region37: #{_lambda_.47} parent=31 // pred_check
        %p1273 = pneg %p305
      $region38: #{_lambda_.47} parent=31 // pred_check_branch
        %1275 = sbr.rel (%p1273) target = $region40
      $region39: #{_lambda_.47} parent=31 // pred_region
        %v1276 = vld [vmem:[#allocation2] sm:$0xff]
        %v1277 = vld [vmem:[#allocation2 + $0x8] sm:$0xff]
        %v1278 = vld [vmem:[#allocation2 + $0x10] sm:$0xff]
        %v1279 = vld [vmem:[#allocation2 + $0x18] sm:$0xff]
        %v1280 = vld [vmem:[#allocation2 + $0x20] sm:$0xff]
        %v1281 = vld [vmem:[#allocation2 + $0x28] sm:$0xff]
        %v1282 = vld [vmem:[#allocation2 + $0x30] sm:$0xff]
        %v1283 = vld [vmem:[#allocation2 + $0x38] sm:$0xff]
        %v1284 = vld [vmem:[#allocation2 + $0x40] sm:$0xff]
        %v1285 = vld [vmem:[#allocation2 + $0x48] sm:$0xff]
        %v1286 = vld [vmem:[#allocation2 + $0x50] sm:$0xff]
        %v1287 = vld [vmem:[#allocation2 + $0x58] sm:$0xff]
        %v1288 = vld [vmem:[#allocation2 + $0x60] sm:$0xff]
        %v1289 = vld [vmem:[#allocation2 + $0x68] sm:$0xff]
        %v1290 = vld [vmem:[#allocation2 + $0x70] sm:$0xff]
        %v1291 = vld [vmem:[#allocation2 + $0x78] sm:$0xff]
        %v1292 = vld [vmem:[#allocation2 + $0x80] sm:$0xff]
        %v1293 = vld [vmem:[#allocation2 + $0x88] sm:$0xff]
        %v1294 = vld [vmem:[#allocation2 + $0x90] sm:$0xff]
        %v1295 = vld [vmem:[#allocation2 + $0x98] sm:$0xff]
        %v1296 = vld [vmem:[#allocation2 + $0xa0] sm:$0xff]
        %v1297 = vld [vmem:[#allocation2 + $0xa8] sm:$0xff]
        %v1298 = vld [vmem:[#allocation2 + $0xb0] sm:$0xff]
        %v1299 = vld [vmem:[#allocation2 + $0xb8] sm:$0xff]
        %v1300 = vld [vmem:[#allocation2 + $0xc0] sm:$0xff]
        %v1301 = vld [vmem:[#allocation2 + $0xc8] sm:$0xff]
        %v1302 = vld [vmem:[#allocation2 + $0xd0] sm:$0xff]
        %v1303 = vld [vmem:[#allocation2 + $0xd8] sm:$0xff]
        %v1304 = vld [vmem:[#allocation2 + $0xe0] sm:$0xff]
        %v1305 = vld [vmem:[#allocation2 + $0xe8] sm:$0xff]
        %v1306 = vld [vmem:[#allocation2 + $0xf0] sm:$0xff]
        %v1307 = vld [vmem:[#allocation2 + $0xf8] sm:$0xff]
        %v1308 = vld [vmem:[#allocation2 + $0x100] sm:$0xff]
        %v1309 = vld [vmem:[#allocation2 + $0x108] sm:$0xff]
        %v1310 = vld [vmem:[#allocation2 + $0x110] sm:$0xff]
        %v1311 = vld [vmem:[#allocation2 + $0x118] sm:$0xff]
        %v1312 = vld [vmem:[#allocation2 + $0x120] sm:$0xff]
        %v1313 = vld [vmem:[#allocation2 + $0x128] sm:$0xff]
        %v1314 = vld [vmem:[#allocation2 + $0x130] sm:$0xff]
        %v1315 = vld [vmem:[#allocation2 + $0x138] sm:$0xff]
        %v1316 = vld [vmem:[#allocation2 + $0x140] sm:$0xff]
        %v1317 = vld [vmem:[#allocation2 + $0x148] sm:$0xff]
        %v1318 = vld [vmem:[#allocation2 + $0x150] sm:$0xff]
        %v1319 = vld [vmem:[#allocation2 + $0x158] sm:$0xff]
        %v1320 = vld [vmem:[#allocation2 + $0x160] sm:$0xff]
        %v1321 = vld [vmem:[#allocation2 + $0x168] sm:$0xff]
        %v1322 = vld [vmem:[#allocation2 + $0x170] sm:$0xff]
        %v1323 = vld [vmem:[#allocation2 + $0x178] sm:$0xff]
        %v1324 = vld [vmem:[#allocation2 + $0x180] sm:$0xff]
        %v1325 = vld [vmem:[#allocation2 + $0x188] sm:$0xff]
        %v1326 = vld [vmem:[#allocation2 + $0x190] sm:$0xff]
        %v1327 = vld [vmem:[#allocation2 + $0x198] sm:$0xff]
        %v1328 = vld [vmem:[#allocation2 + $0x1a0] sm:$0xff]
        %v1329 = vld [vmem:[#allocation2 + $0x1a8] sm:$0xff]
        %v1330 = vld [vmem:[#allocation2 + $0x1b0] sm:$0xff]
        %v1331 = vld [vmem:[#allocation2 + $0x1b8] sm:$0xff]
        %v1332 = vld [vmem:[#allocation2 + $0x1c0] sm:$0xff]
        %v1333 = vld [vmem:[#allocation2 + $0x1c8] sm:$0xff]
        %v1334 = vld [vmem:[#allocation2 + $0x1d0] sm:$0xff]
        %v1335 = vld [vmem:[#allocation2 + $0x1d8] sm:$0xff]
        %v1336 = vld [vmem:[#allocation2 + $0x1e0] sm:$0xff]
        %v1337 = vld [vmem:[#allocation2 + $0x1e8] sm:$0xff]
        %v1338 = vld [vmem:[#allocation2 + $0x1f0] sm:$0xff]
        %v1339 = vld [vmem:[#allocation2 + $0x1f8] sm:$0xff]
        %v1340 = vld [vmem:[%s290] sm:$0x1]
        %v1342 = vlaneseq
        %v1343 = vshrl.u32 %v1342, 7
        %v1344 = vsub.s32 0, %v1343
        %v1345 = vrot.slane %v1340, %v1344
        %v1347 = vadd.f32 %v1276, %v1345
        %v1348 = vadd.f32 %v1277, %v1345
        %v1349 = vadd.f32 %v1278, %v1345
        %v1350 = vadd.f32 %v1279, %v1345
        %v1351 = vadd.f32 %v1280, %v1345
        %v1352 = vadd.f32 %v1281, %v1345
        %v1353 = vadd.f32 %v1282, %v1345
        %v1354 = vadd.f32 %v1283, %v1345
        %v1355 = vadd.f32 %v1284, %v1345
        %v1356 = vadd.f32 %v1285, %v1345
        %v1357 = vadd.f32 %v1286, %v1345
        %v1358 = vadd.f32 %v1287, %v1345
        %v1359 = vadd.f32 %v1288, %v1345
        %v1360 = vadd.f32 %v1289, %v1345
        %v1361 = vadd.f32 %v1290, %v1345
        %v1362 = vadd.f32 %v1291, %v1345
        %v1363 = vadd.f32 %v1292, %v1345
        %v1364 = vadd.f32 %v1293, %v1345
        %v1365 = vadd.f32 %v1294, %v1345
        %v1366 = vadd.f32 %v1295, %v1345
        %v1367 = vadd.f32 %v1296, %v1345
        %v1368 = vadd.f32 %v1297, %v1345
        %v1369 = vadd.f32 %v1298, %v1345
        %v1370 = vadd.f32 %v1299, %v1345
        %v1371 = vadd.f32 %v1300, %v1345
        %v1372 = vadd.f32 %v1301, %v1345
        %v1373 = vadd.f32 %v1302, %v1345
        %v1374 = vadd.f32 %v1303, %v1345
        %v1375 = vadd.f32 %v1304, %v1345
        %v1376 = vadd.f32 %v1305, %v1345
        %v1377 = vadd.f32 %v1306, %v1345
        %v1378 = vadd.f32 %v1307, %v1345
        %v1379 = vadd.f32 %v1308, %v1345
        %v1380 = vadd.f32 %v1309, %v1345
        %v1381 = vadd.f32 %v1310, %v1345
        %v1382 = vadd.f32 %v1311, %v1345
        %v1383 = vadd.f32 %v1312, %v1345
        %v1384 = vadd.f32 %v1313, %v1345
        %v1385 = vadd.f32 %v1314, %v1345
        %v1386 = vadd.f32 %v1315, %v1345
        %v1387 = vadd.f32 %v1316, %v1345
        %v1388 = vadd.f32 %v1317, %v1345
        %v1389 = vadd.f32 %v1318, %v1345
        %v1390 = vadd.f32 %v1319, %v1345
        %v1391 = vadd.f32 %v1320, %v1345
        %v1392 = vadd.f32 %v1321, %v1345
        %v1393 = vadd.f32 %v1322, %v1345
        %v1394 = vadd.f32 %v1323, %v1345
        %v1395 = vadd.f32 %v1324, %v1345
        %v1396 = vadd.f32 %v1325, %v1345
        %v1397 = vadd.f32 %v1326, %v1345
        %v1398 = vadd.f32 %v1327, %v1345
        %v1399 = vadd.f32 %v1328, %v1345
        %v1400 = vadd.f32 %v1329, %v1345
        %v1401 = vadd.f32 %v1330, %v1345
        %v1402 = vadd.f32 %v1331, %v1345
        %v1403 = vadd.f32 %v1332, %v1345
        %v1404 = vadd.f32 %v1333, %v1345
        %v1405 = vadd.f32 %v1334, %v1345
        %v1406 = vadd.f32 %v1335, %v1345
        %v1407 = vadd.f32 %v1336, %v1345
        %v1408 = vadd.f32 %v1337, %v1345
        %v1409 = vadd.f32 %v1338, %v1345
        %v1410 = vadd.f32 %v1339, %v1345
        %v1411 = vtanh.pop %v1347
        %v1412 = vtanh.pop %v1348
        %v1413 = vtanh.pop %v1349
        %v1414 = vtanh.pop %v1350
        %v1415 = vtanh.pop %v1351
        %v1416 = vtanh.pop %v1352
        %v1417 = vtanh.pop %v1353
        %v1418 = vtanh.pop %v1354
        %v1419 = vtanh.pop %v1355
        %v1420 = vtanh.pop %v1356
        %v1421 = vtanh.pop %v1357
        %v1422 = vtanh.pop %v1358
        %v1423 = vtanh.pop %v1359
        %v1424 = vtanh.pop %v1360
        %v1425 = vtanh.pop %v1361
        %v1426 = vtanh.pop %v1362
        %v1427 = vtanh.pop %v1363
        %v1428 = vtanh.pop %v1364
        %v1429 = vtanh.pop %v1365
        %v1430 = vtanh.pop %v1366
        %v1431 = vtanh.pop %v1367
        %v1432 = vtanh.pop %v1368
        %v1433 = vtanh.pop %v1369
        %v1434 = vtanh.pop %v1370
        %v1435 = vtanh.pop %v1371
        %v1436 = vtanh.pop %v1372
        %v1437 = vtanh.pop %v1373
        %v1438 = vtanh.pop %v1374
        %v1439 = vtanh.pop %v1375
        %v1440 = vtanh.pop %v1376
        %v1441 = vtanh.pop %v1377
        %v1442 = vtanh.pop %v1378
        %v1443 = vtanh.pop %v1379
        %v1444 = vtanh.pop %v1380
        %v1445 = vtanh.pop %v1381
        %v1446 = vtanh.pop %v1382
        %v1447 = vtanh.pop %v1383
        %v1448 = vtanh.pop %v1384
        %v1449 = vtanh.pop %v1385
        %v1450 = vtanh.pop %v1386
        %v1451 = vtanh.pop %v1387
        %v1452 = vtanh.pop %v1388
        %v1453 = vtanh.pop %v1389
        %v1454 = vtanh.pop %v1390
        %v1455 = vtanh.pop %v1391
        %v1456 = vtanh.pop %v1392
        %v1457 = vtanh.pop %v1393
        %v1458 = vtanh.pop %v1394
        %v1459 = vtanh.pop %v1395
        %v1460 = vtanh.pop %v1396
        %v1461 = vtanh.pop %v1397
        %v1462 = vtanh.pop %v1398
        %v1463 = vtanh.pop %v1399
        %v1464 = vtanh.pop %v1400
        %v1465 = vtanh.pop %v1401
        %v1466 = vtanh.pop %v1402
        %v1467 = vtanh.pop %v1403
        %v1468 = vtanh.pop %v1404
        %v1469 = vtanh.pop %v1405
        %v1470 = vtanh.pop %v1406
        %v1471 = vtanh.pop %v1407
        %v1472 = vtanh.pop %v1408
        %v1473 = vtanh.pop %v1409
        %v1474 = vtanh.pop %v1410
        %1475 = vst.msk [vmem:[%s302] sm:$0xff] %vm1208, %v1411
        %1476 = vst.msk [vmem:[%s302 + $0x8] sm:$0xff] %vm1208, %v1412
        %1477 = vst.msk [vmem:[%s302 + $0x10] sm:$0xff] %vm1208, %v1413
        %1478 = vst.msk [vmem:[%s302 + $0x18] sm:$0xff] %vm1208, %v1414
        %1479 = vst.msk [vmem:[%s302 + $0x20] sm:$0xff] %vm1208, %v1415
        %1480 = vst.msk [vmem:[%s302 + $0x28] sm:$0xff] %vm1208, %v1416
        %1481 = vst.msk [vmem:[%s302 + $0x30] sm:$0xff] %vm1208, %v1417
        %1482 = vst.msk [vmem:[%s302 + $0x38] sm:$0xff] %vm1208, %v1418
        %1483 = vst.msk [vmem:[%s302 + $0x40] sm:$0xff] %vm1208, %v1419
        %1484 = vst.msk [vmem:[%s302 + $0x48] sm:$0xff] %vm1208, %v1420
        %1485 = vst.msk [vmem:[%s302 + $0x50] sm:$0xff] %vm1208, %v1421
        %1486 = vst.msk [vmem:[%s302 + $0x58] sm:$0xff] %vm1208, %v1422
        %1487 = vst.msk [vmem:[%s302 + $0x60] sm:$0xff] %vm1208, %v1423
        %1488 = vst.msk [vmem:[%s302 + $0x68] sm:$0xff] %vm1208, %v1424
        %1489 = vst.msk [vmem:[%s302 + $0x70] sm:$0xff] %vm1208, %v1425
        %1490 = vst.msk [vmem:[%s302 + $0x78] sm:$0xff] %vm1208, %v1426
        %1491 = vst.msk [vmem:[%s302 + $0x80] sm:$0xff] %vm1208, %v1427
        %1492 = vst.msk [vmem:[%s302 + $0x88] sm:$0xff] %vm1208, %v1428
        %1493 = vst.msk [vmem:[%s302 + $0x90] sm:$0xff] %vm1208, %v1429
        %1494 = vst.msk [vmem:[%s302 + $0x98] sm:$0xff] %vm1208, %v1430
        %1495 = vst.msk [vmem:[%s302 + $0xa0] sm:$0xff] %vm1208, %v1431
        %1496 = vst.msk [vmem:[%s302 + $0xa8] sm:$0xff] %vm1208, %v1432
        %1497 = vst.msk [vmem:[%s302 + $0xb0] sm:$0xff] %vm1208, %v1433
        %1498 = vst.msk [vmem:[%s302 + $0xb8] sm:$0xff] %vm1208, %v1434
        %1499 = vst.msk [vmem:[%s302 + $0xc0] sm:$0xff] %vm1208, %v1435
        %1500 = vst.msk [vmem:[%s302 + $0xc8] sm:$0xff] %vm1208, %v1436
        %1501 = vst.msk [vmem:[%s302 + $0xd0] sm:$0xff] %vm1208, %v1437
        %1502 = vst.msk [vmem:[%s302 + $0xd8] sm:$0xff] %vm1208, %v1438
        %1503 = vst.msk [vmem:[%s302 + $0xe0] sm:$0xff] %vm1208, %v1439
        %1504 = vst.msk [vmem:[%s302 + $0xe8] sm:$0xff] %vm1208, %v1440
        %1505 = vst.msk [vmem:[%s302 + $0xf0] sm:$0xff] %vm1208, %v1441
        %1506 = vst.msk [vmem:[%s302 + $0xf8] sm:$0xff] %vm1208, %v1442
        %1507 = vst.msk [vmem:[%s302 + $0x100] sm:$0xff] %vm1208, %v1443
        %1508 = vst.msk [vmem:[%s302 + $0x108] sm:$0xff] %vm1208, %v1444
        %1509 = vst.msk [vmem:[%s302 + $0x110] sm:$0xff] %vm1208, %v1445
        %1510 = vst.msk [vmem:[%s302 + $0x118] sm:$0xff] %vm1208, %v1446
        %1511 = vst.msk [vmem:[%s302 + $0x120] sm:$0xff] %vm1208, %v1447
        %1512 = vst.msk [vmem:[%s302 + $0x128] sm:$0xff] %vm1208, %v1448
        %1513 = vst.msk [vmem:[%s302 + $0x130] sm:$0xff] %vm1208, %v1449
        %1514 = vst.msk [vmem:[%s302 + $0x138] sm:$0xff] %vm1208, %v1450
        %1515 = vst.msk [vmem:[%s302 + $0x140] sm:$0xff] %vm1208, %v1451
        %1516 = vst.msk [vmem:[%s302 + $0x148] sm:$0xff] %vm1208, %v1452
        %1517 = vst.msk [vmem:[%s302 + $0x150] sm:$0xff] %vm1208, %v1453
        %1518 = vst.msk [vmem:[%s302 + $0x158] sm:$0xff] %vm1208, %v1454
        %1519 = vst.msk [vmem:[%s302 + $0x160] sm:$0xff] %vm1208, %v1455
        %1520 = vst.msk [vmem:[%s302 + $0x168] sm:$0xff] %vm1208, %v1456
        %1521 = vst.msk [vmem:[%s302 + $0x170] sm:$0xff] %vm1208, %v1457
        %1522 = vst.msk [vmem:[%s302 + $0x178] sm:$0xff] %vm1208, %v1458
        %1523 = vst.msk [vmem:[%s302 + $0x180] sm:$0xff] %vm1208, %v1459
        %1524 = vst.msk [vmem:[%s302 + $0x188] sm:$0xff] %vm1208, %v1460
        %1525 = vst.msk [vmem:[%s302 + $0x190] sm:$0xff] %vm1208, %v1461
        %1526 = vst.msk [vmem:[%s302 + $0x198] sm:$0xff] %vm1208, %v1462
        %1527 = vst.msk [vmem:[%s302 + $0x1a0] sm:$0xff] %vm1208, %v1463
        %1528 = vst.msk [vmem:[%s302 + $0x1a8] sm:$0xff] %vm1208, %v1464
        %1529 = vst.msk [vmem:[%s302 + $0x1b0] sm:$0xff] %vm1208, %v1465
        %1530 = vst.msk [vmem:[%s302 + $0x1b8] sm:$0xff] %vm1208, %v1466
        %1531 = vst.msk [vmem:[%s302 + $0x1c0] sm:$0xff] %vm1208, %v1467
        %1532 = vst.msk [vmem:[%s302 + $0x1c8] sm:$0xff] %vm1208, %v1468
        %1533 = vst.msk [vmem:[%s302 + $0x1d0] sm:$0xff] %vm1208, %v1469
        %1534 = vst.msk [vmem:[%s302 + $0x1d8] sm:$0xff] %vm1208, %v1470
        %1535 = vst.msk [vmem:[%s302 + $0x1e0] sm:$0xff] %vm1208, %v1471
        %1536 = vst.msk [vmem:[%s302 + $0x1e8] sm:$0xff] %vm1208, %v1472
        %1537 = vst.msk [vmem:[%s302 + $0x1f0] sm:$0xff] %vm1208, %v1473
        %1538 = vst.msk [vmem:[%s302 + $0x1f8] sm:$0xff] %vm1208, %v1474
      $region40: #{_lambda_.47} parent=31 // pred_fallthru
        _
      %s1539 = smul.u32 64, %s21
      %p1540 = scmp.lt.s32.totalorder %s20, 3
      %s1541 = scalar_select %p1540, %s20, 3
      %p1542 = scmp.lt.s32.totalorder %s1539, 63
      %s1543 = scalar_select %p1542, %s1539, 63
      %p1544 = scmp.lt.s32.totalorder %s22, 0
      %s1545 = scalar_select %p1544, %s22, 0
      %s1546 = sadd.s32 %s1545, %s1543
      %s1547 = smul.addr %s1541, 64
      %s1548 = sadd.s32 %s1546, %s1547
      %s1549 = smul.addr %s1548, 8
      %s1550 = scalar_lea.vmem %s3, %s1549
      // Predicated region
      $region41: #{_lambda_.47} parent=31 // pred_check
        %p1551 = pneg %p148
      $region42: #{_lambda_.47} parent=31 // pred_check_branch
        %1553 = sbr.rel (%p1551) target = $region44
      $region43: #{_lambda_.47} parent=31 // pred_region
        %s1554 = smul.u32 64, %s21
      $region44: #{_lambda_.47} parent=31 // pred_fallthru
        _
    $region32: #{_lambda_.47} parent=5 // pred_fallthru
      _
    %p1555 = scmp.le.s32.totalorder 2, %s9
    // Predicated region
    $region45: #{_lambda_.47} parent=5 // pred_check
      %p1556 = pneg %p1555
    $region46: #{_lambda_.47} parent=5 // pred_check_branch
      %1558 = sbr.rel (%p1556) target = $region48
    $region47: #{_lambda_.47} parent=5 // pred_region
      %s1559 = ssub.s32 %s9, 2
      // Predicated region
      $region49: #{_lambda_.47} parent=47 // pred_check
        %p1560 = pneg %p154
      $region50: #{_lambda_.47} parent=47 // pred_check_branch
        %1562 = sbr.rel (%p1560) target = $region52
      $region51: #{_lambda_.47} parent=47 // pred_region
        %s1563 = smul.u32 64, %s25
        %p1564 = scmp.lt.s32.totalorder %s24, 3
        %s1565 = scalar_select %p1564, %s24, 3
        %p1566 = scmp.lt.s32.totalorder %s1563, 63
        %s1567 = scalar_select %p1566, %s1563, 63
        %p1568 = scmp.lt.s32.totalorder %s26, 0
        %s1569 = scalar_select %p1568, %s26, 0
        %s1570 = sadd.s32 %s1569, %s1567
        %s1571 = smul.addr %s1565, 64
        %s1572 = sadd.s32 %s1570, %s1571
        %s1573 = smul.addr %s1572, 8
        %s1574 = scalar_lea.vmem %s3, %s1573
      $region52: #{_lambda_.47} parent=47 // pred_fallthru
        _
    $region48: #{_lambda_.47} parent=5 // pred_fallthru
      _
  $region6: #{_lambda_.47} parent=0 // loop_footer
    %s13 = sadd.s32 1, %s9
  $region7: #{_lambda_.47} parent=0 // loop_footer_branch
    %8 = sbr.rel target = $region3
  $region8: #{_lambda_.47} parent=0 // loop_exit
    _

</llo_original>
